<compile_context>
chip_gen: v6e
topology: v6e:2x2x1
jax: 0.10.0
libtpu: 0.0.40
codegen_flags: <defaults>
</compile_context>

<pallas_src>
import jax
import jax.numpy as jnp
from jax import lax
from jax.experimental import pallas as pl
from jax.experimental.pallas import tpu as pltpu


def _round_up(x, m):
    return -(-x // m) * m


def _make_conv_kernel(use_im2col):
    def kernel(alpha_ref, x_ref, w_ref, b_ref, o_ref):
        # alpha_ref: SMEM (1,) f32              scalar PReLU slope (num_parameters=1)
        # x_ref : (1, 1, TH+2, W+2, Cin) bf16   zero-padded halo row band
        # w_ref : (9*Cin, Cout_p)        bf16   im2col-flattened conv weights
        # b_ref : (1, Cout_p)            f32
        # o_ref : (1, TH*W, Cout_p)      bf16   conv + bias + PReLU, lane-dense rows
        TH = x_ref.shape[2] - 2
        W = x_ref.shape[3] - 2
        Cin = x_ref.shape[4]
        Cout_p = o_ref.shape[2]

        taps = [x_ref[0, 0, kh:kh + TH, kw:kw + W, :].reshape(TH * W, Cin)
                for kh in range(3) for kw in range(3)]

        if use_im2col:
            # In-VMEM im2col -> single MXU matmul with K = 9*Cin (no accumulator
            # round trips through VMEM, one weight push/drain per tile).
            im2col = jnp.concatenate(taps, axis=-1)            # (TH*W, 9*Cin)
            acc = jnp.dot(im2col, w_ref[...], preferred_element_type=jnp.float32)
        else:
            # Fallback: 9 accumulated small-K dots (always lowerable).
            acc = jnp.zeros((TH * W, Cout_p), jnp.float32)
            for t, tap in enumerate(taps):
                acc += jnp.dot(tap, w_ref[t * Cin:(t + 1) * Cin, :],
                               preferred_element_type=jnp.float32)

        acc = acc + b_ref[0, :][None, :]
        a = alpha_ref[0]
        o_ref[0] = jnp.where(acc >= 0, acc, a * acc).astype(o_ref.dtype)

    return kernel


def _vmem_budget_and_limit():
    cap = 64 * 1024 * 1024                       # conservative default (v7x per-TC VMEM)
    try:
        cap = int(getattr(pltpu.get_tpu_info(), "vmem_capacity_bytes", cap))
    except Exception:
        pass
    cap = max(cap, 32 * 1024 * 1024)
    return int(cap * 0.70), int(cap * 0.80)      # (tiling budget, vmem_limit_bytes)


def _pick_row_tile(H, W, Cin, Cout_p, n_batch, vmem_budget):
    """Output-image rows per grid step (multiple of 8), sized with a
    lane/sublane-padding-aware VMEM model (Cin lane-padded to 128, bf16 sublanes to 16)."""
    ru = _round_up
    Cin_l = ru(Cin, 128)
    K = 9 * Cin

    def need(th):
        band = 2 * (th + 2) * ru(W + 2, 16) * Cin_l * 2      # dbl-buffered bf16 input band
        wgt = 2 * (ru(K, 16) * Cout_p * 2 + 8 * Cout_p * 4)  # weights + bias
        outb = 2 * ru(th * W, 16) * Cout_p * 2               # dbl-buffered bf16 out tile
        im2c = ru(th * W, 16) * ru(K, 128) * 2               # in-kernel im2col temp
        accb = 2 * ru(th * W, 8) * Cout_p * 4                # f32 matmul result + temps
        return band + wgt + outb + im2c + accb

    if H <= 8:
        return H
    th = min(ru(H, 8), max(8, (2048 // max(W, 1)) // 8 * 8))
    if n_batch == 1:                             # keep >= 2 grid steps for v7x's 2 TCs
        while th > 8 and -(-H // th) < 2:
            th -= 8
    while th > 8 and need(th) > vmem_budget:
        th -= 8
    return th


def upsample_block(x_nchw, w_oihw, bias, alpha):
    """Pallas TPU implementation of PReLU(PixelShuffle(2)(Conv2d 3x3, pad=1))."""
    N, Cin, H, W = x_nchw.shape
    Cout = w_oihw.shape[0]
    assert Cout % 4 == 0, "PixelShuffle(2) requires Cout divisible by 4"
    r = 2
    Co = Cout // (r * r)
    Cout_p = _round_up(Cout, 128)                # lane-dense output columns

    vmem_budget, vmem_limit = _vmem_budget_and_limit()
    TH = _pick_row_tile(H, W, Cin, Cout_p, N, vmem_budget)
    nt = -(-H // TH)                             # ragged H handled by row padding
    H_pad = nt * TH

    # --- wrapper glue over the input (fuses into one XLA pass): NCHW -> NHWC bf16,
    #     zero-pad, gather overlapping (TH+2)-row halo bands per tile. ---
    x = jnp.transpose(x_nchw, (0, 2, 3, 1)).astype(jnp.bfloat16)
    xp = jnp.pad(x, ((0, 0), (1, 1), (1, 1), (0, 0)))            # (N, H+2, W+2, Cin)
    row_idx = jnp.minimum(
        jnp.arange(nt, dtype=jnp.int32)[:, None] * TH
        + jnp.arange(TH + 2, dtype=jnp.int32)[None, :], H + 1)
    xb = jnp.take(xp, row_idx, axis=1)                           # (N, nt, TH+2, W+2, Cin)

    # weights OIHW -> (kh, kw, Cin, Cout) -> (9*Cin, Cout_p) bf16 (matches im2col K order)
    w_t = jnp.transpose(w_oihw, (2, 3, 1, 0)).reshape(9 * Cin, Cout)
    wk = jnp.pad(w_t, ((0, 0), (0, Cout_p - Cout))).astype(jnp.bfloat16)
    bk = jnp.pad(bias.astype(jnp.float32), (0, Cout_p - Cout)).reshape(1, Cout_p)
    alpha1 = jnp.asarray(alpha, jnp.float32).reshape(1)

    cost = pl.CostEstimate(
        flops=2 * N * H_pad * W * 9 * Cin * Cout_p,
        transcendentals=0,
        bytes_accessed=(N * nt * (TH + 2) * (W + 2) * Cin * 2
                        + 9 * Cin * Cout_p * 2 + Cout_p * 4
                        + N * H_pad * W * Cout_p * 2),
    )

    def _run(kernel_fn):
        return pl.pallas_call(
            kernel_fn,
            out_shape=jax.ShapeDtypeStruct((N, H_pad * W, Cout_p), jnp.bfloat16),
            grid_spec=pltpu.PrefetchScalarGridSpec(
                num_scalar_prefetch=1,
                grid=(N, nt),
                in_specs=[
                    pl.BlockSpec((1, 1, TH + 2, W + 2, Cin),
                                 lambda n, t, alpha_ref: (n, t, 0, 0, 0)),
                    pl.BlockSpec((9 * Cin, Cout_p), lambda n, t, alpha_ref: (0, 0)),
                    pl.BlockSpec((1, Cout_p), lambda n, t, alpha_ref: (0, 0)),
                ],
                out_specs=pl.BlockSpec((1, TH * W, Cout_p),
                                       lambda n, t, alpha_ref: (n, t, 0)),
            ),
            compiler_params=pltpu.CompilerParams(
                dimension_semantics=("parallel", "parallel"),
                vmem_limit_bytes=vmem_limit,
            ),
            cost_estimate=cost,
        )(alpha1, xb, wk, bk)                                    # (N, H_pad*W, Cout_p) bf16

    try:
        conv = _run(_make_conv_kernel(use_im2col=True))
    except Exception:
        # TODO(synk): drop this fallback once unaligned minor-dim concatenate is
        # guaranteed by the installed Mosaic (fallback only triggers on eager compile).
        conv = _run(_make_conv_kernel(use_im2col=False))

    # --- glue: free row-major reshape, strip row/lane padding, PixelShuffle(2) + final
    #     NHWC->NCHW as ONE bf16 transpose pass; cast to caller dtype at the very end. ---
    conv = conv.reshape(N, H_pad, W, Cout_p)[:, :H, :, :Cout]    # (N, H, W, Cout)
    y = conv.reshape(N, H, W, Co, r, r)
    y = jnp.transpose(y, (0, 3, 1, 4, 2, 5)).reshape(N, Co, r * H, r * W)
    # TODO(synk): when Co >= 128, write the pixel-shuffled NCHW block directly from the
    # kernel via out_specs to eliminate this transpose pass as well.
    return y.astype(x_nchw.dtype)                                # (N, Co, 2H, 2W)


def _reference(x_nchw, w_oihw, bias, alpha):
    """Pure-JAX reference matching the PyTorch forward (bf16-rounded inputs to match
    the kernel's bf16-input / f32-accumulation arithmetic)."""
    xq = x_nchw.astype(jnp.bfloat16).astype(jnp.float32)
    wq = w_oihw.astype(jnp.bfloat16).astype(jnp.float32)
    y = lax.conv_general_dilated(
        xq, wq, window_strides=(1, 1), padding=((1, 1), (1, 1)),
        dimension_numbers=("NCHW", "OIHW", "NCHW"),
        precision=lax.Precision.HIGHEST)
    y = y + bias[None, :, None, None]
    N, C, H, W = y.shape
    r = 2
    Co = C // (r * r)
    y = y.reshape(N, Co, r, r, H, W)
    y = jnp.transpose(y, (0, 1, 4, 2, 5, 3)).reshape(N, Co, H * r, W * r)
    return jnp.where(y >= 0, y, alpha * y)


if __name__ == "__main__":
    # Small shapes consistent with the module: NCHW input, out_channels % 4 == 0.
    N, Cin, Cout, H, W = 2, 4, 8, 16, 16
    key = jax.random.PRNGKey(0)
    kx, kw, kb = jax.random.split(key, 3)

    x = jax.random.normal(kx, (N, Cin, H, W), dtype=jnp.float32)
    fan_in = Cin * 3 * 3
    w = jax.random.normal(kw, (Cout, Cin, 3, 3), dtype=jnp.float32) / jnp.sqrt(1.0 * fan_in)
    b = 0.01 * jax.random.normal(kb, (Cout,), dtype=jnp.float32)
    alpha = jnp.float32(0.25)  # nn.PReLU(num_parameters=1, init=0.25)

    out = jax.block_until_ready(upsample_block(x, w, b, alpha))
    ref = jax.block_until_ready(_reference(x, w, b, alpha))

    assert out.shape == (N, Cout // 4, 2 * H, 2 * W), out.shape
    err = float(jnp.max(jnp.abs(out - ref)))
    # bf16 kernel output -> relaxed tolerance (bf16 ulp of O(1) conv activations).
    assert err < 3e-2, f"max abs err {err}"
    print("KERNEL_OK")
</pallas_src>

<mosaic_0001>
module attributes {stable_mosaic.version = 11 : i64} {
  func.func @kernel(%arg0: i32, %arg1: i32, %arg2: memref<1xf32, #tpu.memory_space<smem>>, %arg3: memref<1x1x18x18x4xbf16, #tpu.memory_space<vmem>>, %arg4: memref<36x128xbf16, #tpu.memory_space<vmem>>, %arg5: memref<1x128xf32, #tpu.memory_space<vmem>>, %arg6: memref<1x256x128xbf16, #tpu.memory_space<vmem>>) attributes {dimension_semantics = [#tpu.dimension_semantics<parallel>, #tpu.dimension_semantics<parallel>], iteration_bounds = array<i64: 2, 1>, scalar_prefetch = 1 : i64, scratch_operands = 0 : i64, tpu.core_type = #tpu.core_type<tc>, window_params = [{transform_indices = @transform_0, window_bounds = array<i64: 1, 1, 18, 18, 4>}, {pipeline_mode = #tpu.pipeline_mode<synchronous>, transform_indices = @transform_1, window_bounds = array<i64: 36, 128>}, {pipeline_mode = #tpu.pipeline_mode<synchronous>, transform_indices = @transform_2, window_bounds = array<i64: 1, 128>}, {transform_indices = @transform_3, window_bounds = array<i64: 1, 256, 128>}]} {
    %c0 = arith.constant 0 : index
    %c0_0 = arith.constant 0 : index
    %c0_1 = arith.constant 0 : index
    %c0_2 = arith.constant 0 : index
    %c0_3 = arith.constant 0 : index
    %0 = vector.load %arg3[%c0, %c0_0, %c0_1, %c0_2, %c0_3] : memref<1x1x18x18x4xbf16, #tpu.memory_space<vmem>>, vector<1x1x16x16x4xbf16>
    %1 = vector.shape_cast %0 : vector<1x1x16x16x4xbf16> to vector<16x16x4xbf16>
    %2 = vector.shape_cast %1 : vector<16x16x4xbf16> to vector<256x4xbf16>
    %c0_4 = arith.constant 0 : index
    %c0_5 = arith.constant 0 : index
    %c0_6 = arith.constant 0 : index
    %c1 = arith.constant 1 : index
    %c0_7 = arith.constant 0 : index
    %3 = vector.load %arg3[%c0_4, %c0_5, %c0_6, %c1, %c0_7] : memref<1x1x18x18x4xbf16, #tpu.memory_space<vmem>>, vector<1x1x16x16x4xbf16>
    %4 = vector.shape_cast %3 : vector<1x1x16x16x4xbf16> to vector<16x16x4xbf16>
    %5 = vector.shape_cast %4 : vector<16x16x4xbf16> to vector<256x4xbf16>
    %c0_8 = arith.constant 0 : index
    %c0_9 = arith.constant 0 : index
    %c0_10 = arith.constant 0 : index
    %c2 = arith.constant 2 : index
    %c0_11 = arith.constant 0 : index
    %6 = vector.load %arg3[%c0_8, %c0_9, %c0_10, %c2, %c0_11] : memref<1x1x18x18x4xbf16, #tpu.memory_space<vmem>>, vector<1x1x16x16x4xbf16>
    %7 = vector.shape_cast %6 : vector<1x1x16x16x4xbf16> to vector<16x16x4xbf16>
    %8 = vector.shape_cast %7 : vector<16x16x4xbf16> to vector<256x4xbf16>
    %c0_12 = arith.constant 0 : index
    %c0_13 = arith.constant 0 : index
    %c1_14 = arith.constant 1 : index
    %c0_15 = arith.constant 0 : index
    %c0_16 = arith.constant 0 : index
    %9 = vector.load %arg3[%c0_12, %c0_13, %c1_14, %c0_15, %c0_16] : memref<1x1x18x18x4xbf16, #tpu.memory_space<vmem>>, vector<1x1x16x16x4xbf16>
    %10 = vector.shape_cast %9 : vector<1x1x16x16x4xbf16> to vector<16x16x4xbf16>
    %11 = vector.shape_cast %10 : vector<16x16x4xbf16> to vector<256x4xbf16>
    %c0_17 = arith.constant 0 : index
    %c0_18 = arith.constant 0 : index
    %c1_19 = arith.constant 1 : index
    %c1_20 = arith.constant 1 : index
    %c0_21 = arith.constant 0 : index
    %12 = vector.load %arg3[%c0_17, %c0_18, %c1_19, %c1_20, %c0_21] : memref<1x1x18x18x4xbf16, #tpu.memory_space<vmem>>, vector<1x1x16x16x4xbf16>
    %13 = vector.shape_cast %12 : vector<1x1x16x16x4xbf16> to vector<16x16x4xbf16>
    %14 = vector.shape_cast %13 : vector<16x16x4xbf16> to vector<256x4xbf16>
    %c0_22 = arith.constant 0 : index
    %c0_23 = arith.constant 0 : index
    %c1_24 = arith.constant 1 : index
    %c2_25 = arith.constant 2 : index
    %c0_26 = arith.constant 0 : index
    %15 = vector.load %arg3[%c0_22, %c0_23, %c1_24, %c2_25, %c0_26] : memref<1x1x18x18x4xbf16, #tpu.memory_space<vmem>>, vector<1x1x16x16x4xbf16>
    %16 = vector.shape_cast %15 : vector<1x1x16x16x4xbf16> to vector<16x16x4xbf16>
    %17 = vector.shape_cast %16 : vector<16x16x4xbf16> to vector<256x4xbf16>
    %c0_27 = arith.constant 0 : index
    %c0_28 = arith.constant 0 : index
    %c2_29 = arith.constant 2 : index
    %c0_30 = arith.constant 0 : index
    %c0_31 = arith.constant 0 : index
    %18 = vector.load %arg3[%c0_27, %c0_28, %c2_29, %c0_30, %c0_31] : memref<1x1x18x18x4xbf16, #tpu.memory_space<vmem>>, vector<1x1x16x16x4xbf16>
    %19 = vector.shape_cast %18 : vector<1x1x16x16x4xbf16> to vector<16x16x4xbf16>
    %20 = vector.shape_cast %19 : vector<16x16x4xbf16> to vector<256x4xbf16>
    %c0_32 = arith.constant 0 : index
    %c0_33 = arith.constant 0 : index
    %c2_34 = arith.constant 2 : index
    %c1_35 = arith.constant 1 : index
    %c0_36 = arith.constant 0 : index
    %21 = vector.load %arg3[%c0_32, %c0_33, %c2_34, %c1_35, %c0_36] : memref<1x1x18x18x4xbf16, #tpu.memory_space<vmem>>, vector<1x1x16x16x4xbf16>
    %22 = vector.shape_cast %21 : vector<1x1x16x16x4xbf16> to vector<16x16x4xbf16>
    %23 = vector.shape_cast %22 : vector<16x16x4xbf16> to vector<256x4xbf16>
    %c0_37 = arith.constant 0 : index
    %c0_38 = arith.constant 0 : index
    %c2_39 = arith.constant 2 : index
    %c2_40 = arith.constant 2 : index
    %c0_41 = arith.constant 0 : index
    %24 = vector.load %arg3[%c0_37, %c0_38, %c2_39, %c2_40, %c0_41] : memref<1x1x18x18x4xbf16, #tpu.memory_space<vmem>>, vector<1x1x16x16x4xbf16>
    %25 = vector.shape_cast %24 : vector<1x1x16x16x4xbf16> to vector<16x16x4xbf16>
    %26 = vector.shape_cast %25 : vector<16x16x4xbf16> to vector<256x4xbf16>
    %27 = tpu.concatenate %2, %5, %8, %11, %14, %17, %20, %23, %26 in 1 : vector<256x4xbf16>, vector<256x4xbf16>, vector<256x4xbf16>, vector<256x4xbf16>, vector<256x4xbf16>, vector<256x4xbf16>, vector<256x4xbf16>, vector<256x4xbf16>, vector<256x4xbf16> -> vector<256x36xbf16>
    %c0_42 = arith.constant 0 : index
    %c0_43 = arith.constant 0 : index
    %28 = vector.load %arg4[%c0_42, %c0_43] : memref<36x128xbf16, #tpu.memory_space<vmem>>, vector<36x128xbf16>
    %cst = arith.constant dense<0.000000e+00> : vector<256x128xf32>
    %29 = tpu.matmul %27, %28, %cst {dimension_numbers = #tpu.dot_dimension_numbers<[1], [0], [0], [1], [0, 0, 1, 1], [], []>} : vector<256x36xbf16>, vector<36x128xbf16>, vector<256x128xf32> -> vector<256x128xf32>
    %c0_44 = arith.constant 0 : index
    %c0_45 = arith.constant 0 : index
    %30 = vector.load %arg5[%c0_44, %c0_45] : memref<1x128xf32, #tpu.memory_space<vmem>>, vector<1x128xf32>
    %31 = vector.shape_cast %30 : vector<1x128xf32> to vector<128xf32>
    %32 = vector.shape_cast %31 : vector<128xf32> to vector<1x128xf32>
    %33 = vector.broadcast %32 : vector<1x128xf32> to vector<256x128xf32>
    %34 = arith.addf %29, %33 : vector<256x128xf32>
    %c0_46 = arith.constant 0 : index
    %35 = memref.load %arg2[%c0_46] : memref<1xf32, #tpu.memory_space<smem>>
    %cst_47 = arith.constant 0.000000e+00 : f32
    %36 = vector.broadcast %cst_47 : f32 to vector<256x128xf32>
    %37 = arith.cmpf oge, %34, %36 : vector<256x128xf32>
    %38 = vector.broadcast %35 : f32 to vector<256x128xf32>
    %39 = arith.mulf %38, %34 : vector<256x128xf32>
    %40 = arith.select %37, %34, %39 : vector<256x128xi1>, vector<256x128xf32>
    %41 = arith.truncf %40 : vector<256x128xf32> to vector<256x128xbf16>
    %c0_48 = arith.constant 0 : index
    %c0_49 = arith.constant 0 : index
    %c0_50 = arith.constant 0 : index
    %42 = vector.load %arg6[%c0_48, %c0_49, %c0_50] : memref<1x256x128xbf16, #tpu.memory_space<vmem>>, vector<1x256x128xbf16>
    %43 = vector.shape_cast %42 : vector<1x256x128xbf16> to vector<256x128xbf16>
    %44 = vector.shape_cast %41 : vector<256x128xbf16> to vector<1x256x128xbf16>
    tpu.vector_store %arg6[%c0_48, %c0_49, %c0_50], %44 {strides = array<i32>} : memref<1x256x128xbf16, #tpu.memory_space<vmem>>, vector<1x256x128xbf16>,
    return
  }
  func.func @transform_0(%arg0: i32, %arg1: i32, %arg2: memref<1xf32, #tpu.memory_space<smem>>) -> (i32, i32, i32, i32, i32) {
    %c0_i32 = arith.constant 0 : i32
    %c0_i32_0 = arith.constant 0 : i32
    %c0_i32_1 = arith.constant 0 : i32
    %c0_i32_2 = arith.constant 0 : i32
    return %arg0, %arg1, %c0_i32, %c0_i32_0, %c0_i32_1 : i32, i32, i32, i32, i32
  }
  func.func @transform_1(%arg0: i32, %arg1: i32, %arg2: memref<1xf32, #tpu.memory_space<smem>>) -> (i32, i32) {
    %c0_i32 = arith.constant 0 : i32
    %c0_i32_0 = arith.constant 0 : i32
    %c0_i32_1 = arith.constant 0 : i32
    return %c0_i32, %c0_i32_0 : i32, i32
  }
  func.func @transform_2(%arg0: i32, %arg1: i32, %arg2: memref<1xf32, #tpu.memory_space<smem>>) -> (i32, i32) {
    %c0_i32 = arith.constant 0 : i32
    %c0_i32_0 = arith.constant 0 : i32
    %c0_i32_1 = arith.constant 0 : i32
    return %c0_i32, %c0_i32_0 : i32, i32
  }
  func.func @transform_3(%arg0: i32, %arg1: i32, %arg2: memref<1xf32, #tpu.memory_space<smem>>) -> (i32, i32, i32) {
    %c0_i32 = arith.constant 0 : i32
    %c0_i32_0 = arith.constant 0 : i32
    return %arg0, %arg1, %c0_i32 : i32, i32, i32
  }
}

module attributes {stable_mosaic.version = 11 : i64} {
  func.func @kernel(%arg0: i32, %arg1: i32, %arg2: memref<1xf32, #tpu.memory_space<smem>>, %arg3: memref<1x1x18x18x4xbf16, #tpu.memory_space<vmem>>, %arg4: memref<36x128xbf16, #tpu.memory_space<vmem>>, %arg5: memref<1x128xf32, #tpu.memory_space<vmem>>, %arg6: memref<1x256x128xbf16, #tpu.memory_space<vmem>>) attributes {dimension_semantics = [#tpu.dimension_semantics<parallel>, #tpu.dimension_semantics<parallel>], iteration_bounds = array<i64: 2, 1>, scalar_prefetch = 1 : i64, scratch_operands = 0 : i64, tpu.core_type = #tpu.core_type<tc>, window_params = [{transform_indices = @transform_0, window_bounds = array<i64: 1, 1, 18, 18, 4>}, {pipeline_mode = #tpu.pipeline_mode<synchronous>, transform_indices = @transform_1, window_bounds = array<i64: 36, 128>}, {pipeline_mode = #tpu.pipeline_mode<synchronous>, transform_indices = @transform_2, window_bounds = array<i64: 1, 128>}, {transform_indices = @transform_3, window_bounds = array<i64: 1, 256, 128>}]} {
    %c0 = arith.constant 0 : index
    %c0_0 = arith.constant 0 : index
    %c0_1 = arith.constant 0 : index
    %c0_2 = arith.constant 0 : index
    %c0_3 = arith.constant 0 : index
    %0 = vector.load %arg3[%c0, %c0_0, %c0_1, %c0_2, %c0_3] : memref<1x1x18x18x4xbf16, #tpu.memory_space<vmem>>, vector<1x1x16x16x4xbf16>
    %1 = vector.shape_cast %0 : vector<1x1x16x16x4xbf16> to vector<16x16x4xbf16>
    %2 = vector.shape_cast %1 : vector<16x16x4xbf16> to vector<256x4xbf16>
    %c0_4 = arith.constant 0 : index
    %c0_5 = arith.constant 0 : index
    %c0_6 = arith.constant 0 : index
    %c1 = arith.constant 1 : index
    %c0_7 = arith.constant 0 : index
    %3 = vector.load %arg3[%c0_4, %c0_5, %c0_6, %c1, %c0_7] : memref<1x1x18x18x4xbf16, #tpu.memory_space<vmem>>, vector<1x1x16x16x4xbf16>
    %4 = vector.shape_cast %3 : vector<1x1x16x16x4xbf16> to vector<16x16x4xbf16>
    %5 = vector.shape_cast %4 : vector<16x16x4xbf16> to vector<256x4xbf16>
    %c0_8 = arith.constant 0 : index
    %c0_9 = arith.constant 0 : index
    %c0_10 = arith.constant 0 : index
    %c2 = arith.constant 2 : index
    %c0_11 = arith.constant 0 : index
    %6 = vector.load %arg3[%c0_8, %c0_9, %c0_10, %c2, %c0_11] : memref<1x1x18x18x4xbf16, #tpu.memory_space<vmem>>, vector<1x1x16x16x4xbf16>
    %7 = vector.shape_cast %6 : vector<1x1x16x16x4xbf16> to vector<16x16x4xbf16>
    %8 = vector.shape_cast %7 : vector<16x16x4xbf16> to vector<256x4xbf16>
    %c0_12 = arith.constant 0 : index
    %c0_13 = arith.constant 0 : index
    %c1_14 = arith.constant 1 : index
    %c0_15 = arith.constant 0 : index
    %c0_16 = arith.constant 0 : index
    %9 = vector.load %arg3[%c0_12, %c0_13, %c1_14, %c0_15, %c0_16] : memref<1x1x18x18x4xbf16, #tpu.memory_space<vmem>>, vector<1x1x16x16x4xbf16>
    %10 = vector.shape_cast %9 : vector<1x1x16x16x4xbf16> to vector<16x16x4xbf16>
    %11 = vector.shape_cast %10 : vector<16x16x4xbf16> to vector<256x4xbf16>
    %c0_17 = arith.constant 0 : index
    %c0_18 = arith.constant 0 : index
    %c1_19 = arith.constant 1 : index
    %c1_20 = arith.constant 1 : index
    %c0_21 = arith.constant 0 : index
    %12 = vector.load %arg3[%c0_17, %c0_18, %c1_19, %c1_20, %c0_21] : memref<1x1x18x18x4xbf16, #tpu.memory_space<vmem>>, vector<1x1x16x16x4xbf16>
    %13 = vector.shape_cast %12 : vector<1x1x16x16x4xbf16> to vector<16x16x4xbf16>
    %14 = vector.shape_cast %13 : vector<16x16x4xbf16> to vector<256x4xbf16>
    %c0_22 = arith.constant 0 : index
    %c0_23 = arith.constant 0 : index
    %c1_24 = arith.constant 1 : index
    %c2_25 = arith.constant 2 : index
    %c0_26 = arith.constant 0 : index
    %15 = vector.load %arg3[%c0_22, %c0_23, %c1_24, %c2_25, %c0_26] : memref<1x1x18x18x4xbf16, #tpu.memory_space<vmem>>, vector<1x1x16x16x4xbf16>
    %16 = vector.shape_cast %15 : vector<1x1x16x16x4xbf16> to vector<16x16x4xbf16>
    %17 = vector.shape_cast %16 : vector<16x16x4xbf16> to vector<256x4xbf16>
    %c0_27 = arith.constant 0 : index
    %c0_28 = arith.constant 0 : index
    %c2_29 = arith.constant 2 : index
    %c0_30 = arith.constant 0 : index
    %c0_31 = arith.constant 0 : index
    %18 = vector.load %arg3[%c0_27, %c0_28, %c2_29, %c0_30, %c0_31] : memref<1x1x18x18x4xbf16, #tpu.memory_space<vmem>>, vector<1x1x16x16x4xbf16>
    %19 = vector.shape_cast %18 : vector<1x1x16x16x4xbf16> to vector<16x16x4xbf16>
    %20 = vector.shape_cast %19 : vector<16x16x4xbf16> to vector<256x4xbf16>
    %c0_32 = arith.constant 0 : index
    %c0_33 = arith.constant 0 : index
    %c2_34 = arith.constant 2 : index
    %c1_35 = arith.constant 1 : index
    %c0_36 = arith.constant 0 : index
    %21 = vector.load %arg3[%c0_32, %c0_33, %c2_34, %c1_35, %c0_36] : memref<1x1x18x18x4xbf16, #tpu.memory_space<vmem>>, vector<1x1x16x16x4xbf16>
    %22 = vector.shape_cast %21 : vector<1x1x16x16x4xbf16> to vector<16x16x4xbf16>
    %23 = vector.shape_cast %22 : vector<16x16x4xbf16> to vector<256x4xbf16>
    %c0_37 = arith.constant 0 : index
    %c0_38 = arith.constant 0 : index
    %c2_39 = arith.constant 2 : index
    %c2_40 = arith.constant 2 : index
    %c0_41 = arith.constant 0 : index
    %24 = vector.load %arg3[%c0_37, %c0_38, %c2_39, %c2_40, %c0_41] : memref<1x1x18x18x4xbf16, #tpu.memory_space<vmem>>, vector<1x1x16x16x4xbf16>
    %25 = vector.shape_cast %24 : vector<1x1x16x16x4xbf16> to vector<16x16x4xbf16>
    %26 = vector.shape_cast %25 : vector<16x16x4xbf16> to vector<256x4xbf16>
    %cst = arith.constant 0.000000e+00 : f32
    %27 = vector.broadcast %cst : f32 to vector<256x128xf32>
    %c0_42 = arith.constant 0 : index
    %c0_43 = arith.constant 0 : index
    %28 = vector.load %arg4[%c0_42, %c0_43] : memref<36x128xbf16, #tpu.memory_space<vmem>>, vector<4x128xbf16>
    %cst_44 = arith.constant dense<0.000000e+00> : vector<256x128xf32>
    %29 = tpu.matmul %2, %28, %cst_44 {dimension_numbers = #tpu.dot_dimension_numbers<[1], [0], [0], [1], [0, 0, 1, 1], [], []>} : vector<256x4xbf16>, vector<4x128xbf16>, vector<256x128xf32> -> vector<256x128xf32>
    %30 = arith.addf %27, %29 : vector<256x128xf32>
    %c4 = arith.constant 4 : index
    %c0_45 = arith.constant 0 : index
    %31 = vector.load %arg4[%c4, %c0_45] : memref<36x128xbf16, #tpu.memory_space<vmem>>, vector<4x128xbf16>
    %cst_46 = arith.constant dense<0.000000e+00> : vector<256x128xf32>
    %32 = tpu.matmul %5, %31, %cst_46 {dimension_numbers = #tpu.dot_dimension_numbers<[1], [0], [0], [1], [0, 0, 1, 1], [], []>} : vector<256x4xbf16>, vector<4x128xbf16>, vector<256x128xf32> -> vector<256x128xf32>
    %33 = arith.addf %30, %32 : vector<256x128xf32>
    %c8 = arith.constant 8 : index
    %c0_47 = arith.constant 0 : index
    %34 = vector.load %arg4[%c8, %c0_47] : memref<36x128xbf16, #tpu.memory_space<vmem>>, vector<4x128xbf16>
    %cst_48 = arith.constant dense<0.000000e+00> : vector<256x128xf32>
    %35 = tpu.matmul %8, %34, %cst_48 {dimension_numbers = #tpu.dot_dimension_numbers<[1], [0], [0], [1], [0, 0, 1, 1], [], []>} : vector<256x4xbf16>, vector<4x128xbf16>, vector<256x128xf32> -> vector<256x128xf32>
    %36 = arith.addf %33, %35 : vector<256x128xf32>
    %c12 = arith.constant 12 : index
    %c0_49 = arith.constant 0 : index
    %37 = vector.load %arg4[%c12, %c0_49] : memref<36x128xbf16, #tpu.memory_space<vmem>>, vector<4x128xbf16>
    %cst_50 = arith.constant dense<0.000000e+00> : vector<256x128xf32>
    %38 = tpu.matmul %11, %37, %cst_50 {dimension_numbers = #tpu.dot_dimension_numbers<[1], [0], [0], [1], [0, 0, 1, 1], [], []>} : vector<256x4xbf16>, vector<4x128xbf16>, vector<256x128xf32> -> vector<256x128xf32>
    %39 = arith.addf %36, %38 : vector<256x128xf32>
    %c16 = arith.constant 16 : index
    %c0_51 = arith.constant 0 : index
    %40 = vector.load %arg4[%c16, %c0_51] : memref<36x128xbf16, #tpu.memory_space<vmem>>, vector<4x128xbf16>
    %cst_52 = arith.constant dense<0.000000e+00> : vector<256x128xf32>
    %41 = tpu.matmul %14, %40, %cst_52 {dimension_numbers = #tpu.dot_dimension_numbers<[1], [0], [0], [1], [0, 0, 1, 1], [], []>} : vector<256x4xbf16>, vector<4x128xbf16>, vector<256x128xf32> -> vector<256x128xf32>
    %42 = arith.addf %39, %41 : vector<256x128xf32>
    %c20 = arith.constant 20 : index
    %c0_53 = arith.constant 0 : index
    %43 = vector.load %arg4[%c20, %c0_53] : memref<36x128xbf16, #tpu.memory_space<vmem>>, vector<4x128xbf16>
    %cst_54 = arith.constant dense<0.000000e+00> : vector<256x128xf32>
    %44 = tpu.matmul %17, %43, %cst_54 {dimension_numbers = #tpu.dot_dimension_numbers<[1], [0], [0], [1], [0, 0, 1, 1], [], []>} : vector<256x4xbf16>, vector<4x128xbf16>, vector<256x128xf32> -> vector<256x128xf32>
    %45 = arith.addf %42, %44 : vector<256x128xf32>
    %c24 = arith.constant 24 : index
    %c0_55 = arith.constant 0 : index
    %46 = vector.load %arg4[%c24, %c0_55] : memref<36x128xbf16, #tpu.memory_space<vmem>>, vector<4x128xbf16>
    %cst_56 = arith.constant dense<0.000000e+00> : vector<256x128xf32>
    %47 = tpu.matmul %20, %46, %cst_56 {dimension_numbers = #tpu.dot_dimension_numbers<[1], [0], [0], [1], [0, 0, 1, 1], [], []>} : vector<256x4xbf16>, vector<4x128xbf16>, vector<256x128xf32> -> vector<256x128xf32>
    %48 = arith.addf %45, %47 : vector<256x128xf32>
    %c28 = arith.constant 28 : index
    %c0_57 = arith.constant 0 : index
    %49 = vector.load %arg4[%c28, %c0_57] : memref<36x128xbf16, #tpu.memory_space<vmem>>, vector<4x128xbf16>
    %cst_58 = arith.constant dense<0.000000e+00> : vector<256x128xf32>
    %50 = tpu.matmul %23, %49, %cst_58 {dimension_numbers = #tpu.dot_dimension_numbers<[1], [0], [0], [1], [0, 0, 1, 1], [], []>} : vector<256x4xbf16>, vector<4x128xbf16>, vector<256x128xf32> -> vector<256x128xf32>
    %51 = arith.addf %48, %50 : vector<256x128xf32>
    %c32 = arith.constant 32 : index
    %c0_59 = arith.constant 0 : index
    %52 = vector.load %arg4[%c32, %c0_59] : memref<36x128xbf16, #tpu.memory_space<vmem>>, vector<4x128xbf16>
    %cst_60 = arith.constant dense<0.000000e+00> : vector<256x128xf32>
    %53 = tpu.matmul %26, %52, %cst_60 {dimension_numbers = #tpu.dot_dimension_numbers<[1], [0], [0], [1], [0, 0, 1, 1], [], []>} : vector<256x4xbf16>, vector<4x128xbf16>, vector<256x128xf32> -> vector<256x128xf32>
    %54 = arith.addf %51, %53 : vector<256x128xf32>
    %c0_61 = arith.constant 0 : index
    %c0_62 = arith.constant 0 : index
    %55 = vector.load %arg5[%c0_61, %c0_62] : memref<1x128xf32, #tpu.memory_space<vmem>>, vector<1x128xf32>
    %56 = vector.shape_cast %55 : vector<1x128xf32> to vector<128xf32>
    %57 = vector.shape_cast %56 : vector<128xf32> to vector<1x128xf32>
    %58 = vector.broadcast %57 : vector<1x128xf32> to vector<256x128xf32>
    %59 = arith.addf %54, %58 : vector<256x128xf32>
    %c0_63 = arith.constant 0 : index
    %60 = memref.load %arg2[%c0_63] : memref<1xf32, #tpu.memory_space<smem>>
    %cst_64 = arith.constant 0.000000e+00 : f32
    %61 = vector.broadcast %cst_64 : f32 to vector<256x128xf32>
    %62 = arith.cmpf oge, %59, %61 : vector<256x128xf32>
    %63 = vector.broadcast %60 : f32 to vector<256x128xf32>
    %64 = arith.mulf %63, %59 : vector<256x128xf32>
    %65 = arith.select %62, %59, %64 : vector<256x128xi1>, vector<256x128xf32>
    %66 = arith.truncf %65 : vector<256x128xf32> to vector<256x128xbf16>
    %c0_65 = arith.constant 0 : index
    %c0_66 = arith.constant 0 : index
    %c0_67 = arith.constant 0 : index
    %67 = vector.load %arg6[%c0_65, %c0_66, %c0_67] : memref<1x256x128xbf16, #tpu.memory_space<vmem>>, vector<1x256x128xbf16>
    %68 = vector.shape_cast %67 : vector<1x256x128xbf16> to vector<256x128xbf16>
    %69 = vector.shape_cast %66 : vector<256x128xbf16> to vector<1x256x128xbf16>
    tpu.vector_store %arg6[%c0_65, %c0_66, %c0_67], %69 {strides = array<i32>} : memref<1x256x128xbf16, #tpu.memory_space<vmem>>, vector<1x256x128xbf16>,
    return
  }
  func.func @transform_0(%arg0: i32, %arg1: i32, %arg2: memref<1xf32, #tpu.memory_space<smem>>) -> (i32, i32, i32, i32, i32) {
    %c0_i32 = arith.constant 0 : i32
    %c0_i32_0 = arith.constant 0 : i32
    %c0_i32_1 = arith.constant 0 : i32
    %c0_i32_2 = arith.constant 0 : i32
    return %arg0, %arg1, %c0_i32, %c0_i32_0, %c0_i32_1 : i32, i32, i32, i32, i32
  }
  func.func @transform_1(%arg0: i32, %arg1: i32, %arg2: memref<1xf32, #tpu.memory_space<smem>>) -> (i32, i32) {
    %c0_i32 = arith.constant 0 : i32
    %c0_i32_0 = arith.constant 0 : i32
    %c0_i32_1 = arith.constant 0 : i32
    return %c0_i32, %c0_i32_0 : i32, i32
  }
  func.func @transform_2(%arg0: i32, %arg1: i32, %arg2: memref<1xf32, #tpu.memory_space<smem>>) -> (i32, i32) {
    %c0_i32 = arith.constant 0 : i32
    %c0_i32_0 = arith.constant 0 : i32
    %c0_i32_1 = arith.constant 0 : i32
    return %c0_i32, %c0_i32_0 : i32, i32
  }
  func.func @transform_3(%arg0: i32, %arg1: i32, %arg2: memref<1xf32, #tpu.memory_space<smem>>) -> (i32, i32, i32) {
    %c0_i32 = arith.constant 0 : i32
    %c0_i32_0 = arith.constant 0 : i32
    return %arg0, %arg1, %c0_i32 : i32, i32, i32
  }
}

</mosaic_0001>

<llo_original>
// kernel: tpu_custom_call.1
$region0: #{tpu_custom_call.1}
  #allocation0 [shape = 'u32[]', space=smem, size = 0x4, offset = 0x4, fixed_abs, tag = 'smem constant byte address 0x4 - core index']
  #allocation1 [shape = 'u32[144,128]{1,0:T(1,128)}', space=vmem, size = 0x12000, scoped, tag = 'internal scratch']
  #allocation2 [shape = 's32[1]{0}', space=sflag, size = 0x4, scoped, tag = 'scoped memory for tpu_custom_call.1']
  #allocation3 [shape = 'f32[1]{0:T(128)S(6)}', space=smem, size = 0x200, scoped, tag = 'prefetched SMEM operand 0']
  %s0 = inlined_call_operand.<no memory space> [shape: f32[1], index: 0, kind: input, shape index: {}]
  %s1 = inlined_call_operand.vmem [shape: bf16[2,1,18,18,4], index: 1, kind: input, shape index: {}]
  %s2 = inlined_call_operand.vmem [shape: bf16[36,128], index: 2, kind: input, shape index: {}]
  %s3 = inlined_call_operand.vmem [shape: f32[1,128], index: 3, kind: input, shape index: {}]
  %s4 = inlined_call_operand.hbm [shape: bf16[2,256,128], index: 4, kind: output, shape index: {}]
  %s5 = sld [smem:[#allocation0]]
  $region45: #{tpu_custom_call.1} parent=0
    _
  %s7 = ssub.s32 1, %s5
  %s8 = scalar_select 0, %s7, %s5
  %9 = sst [smem:[#allocation3]] %s0
  $region1: #{tpu_custom_call.1} parent=0
    #allocation4 [shape = 'u8[131072]{0}', space=vmem, size = 0x20000, scoped, tag = 'output window, operand 0']
    #allocation5 [shape = 's32[2]{0}', space=sflag, size = 0x8, scoped, tag = 'scoped memory for tpu_custom_call.1']
    %10 = vsyncpa [#allocation5], 0
    %s11 = scalar_lea.sflag [#allocation5], 1
    %12 = vsyncpa %s11, 0
    loop: start=0, step=1, limit=4
    $region2: #{tpu_custom_call.1} parent=1 // loop_pre_header
      _
    $region3: #{tpu_custom_call.1} parent=1 // loop_header
      %s14 = sphi 0, %s18
      %p15 = scmp.ge.s32.totalorder %s14, 4
      %s21 = sphi 0, %s33
      %s22 = sphi 0, %s29
      %s23 = sphi 0, %s21
      %s24 = sphi 0, %s22
      %s25 = sphi 0, %s23
      %s26 = sphi 0, %s24
      %s38 = sphi 0, %s40
      %s41 = sphi 0, %s38
      %s42 = sphi 0, %s41
      %s58 = sphi 0, %s42
      %s62 = sphi 0, %s62
      %s64 = sphi 0, %s62
      %s65 = sphi 0, %s64
      %s79 = sphi 0, %s65
      %s83 = sphi 0, %s83
      %s85 = sphi 0, %s83
      %s86 = sphi 0, %s85
      %s100 = sphi 0, %s86
      %s108 = sphi 0, %s110
      %s111 = sphi 0, %s108
      %s112 = sphi 0, %s111
      %s128 = sphi 0, %s112
    $region4: #{tpu_custom_call.1} parent=1 // loop_header_branch
      %17 = sbr.rel (%p15) target = $region8
    $region5: #{tpu_custom_call.1} parent=1 // loop_body
      %s19 = ssub.s32 %s14, 1
      %s20 = ssub.s32 %s14, 2
      %s27 = sadd.s32 1, %s22
      %p28 = scmp.ge.s32.totalorder %s27, 1
      %s29 = scalar_select %p28, 0, %s27
      %s30 = sadd.s32 1, %s21
      %s31 = scalar_select %p28, %s30, %s21
      %p32 = scmp.ge.s32.totalorder %s31, 2
      %s33 = scalar_select %p32, 0, %s31
      %s34 = ssub.s32 %s21, %s33
      %s35 = ssub.s32 %s22, %s29
      %s36 = sor.u32 %s34, %s35
      %p37 = scmp.eq.s32.totalorder %s36, 0
      %s39 = sadd.s32 %s38, 1
      %s40 = scalar_select %p37, %s38, %s39
      %p43 = pneg %p37
      %p44 = scmp.eq.s32.totalorder %s14, 1
      %p45 = por %p43, %p44
      %p46 = scmp.ne.s32.totalorder %s38, %s41
      %p47 = scmp.eq.s32.totalorder %s14, 0
      %p48 = por %p46, %p47
      %p49 = scmp.ne.s32.totalorder %s38, %s41
      %p50 = scmp.eq.s32.totalorder %s19, 1
      %p51 = por %p49, %p50
      %p52 = scmp.ne.s32.totalorder %s41, %s42
      %p53 = scmp.eq.s32.totalorder %s19, 0
      %p54 = por %p52, %p53
      %p55 = scmp.ne.s32.totalorder %s41, %s42
      %p56 = scmp.eq.s32.totalorder %s20, 1
      %p57 = por %p55, %p56
      %p59 = scmp.ne.s32.totalorder %s42, %s58
      %p60 = scmp.eq.s32.totalorder %s20, 0
      %p61 = por %p59, %p60
      %s63 = sadd.s32 %s62, 1
      %p66 = scmp.eq.s32.totalorder %s14, 1
      %p67 = scmp.ne.s32.totalorder %s62, %s64
      %p68 = scmp.eq.s32.totalorder %s14, 0
      %p69 = por %p67, %p68
      %p70 = scmp.ne.s32.totalorder %s62, %s64
      %p71 = scmp.eq.s32.totalorder %s19, 1
      %p72 = por %p70, %p71
      %p73 = scmp.ne.s32.totalorder %s64, %s65
      %p74 = scmp.eq.s32.totalorder %s19, 0
      %p75 = por %p73, %p74
      %p76 = scmp.ne.s32.totalorder %s64, %s65
      %p77 = scmp.eq.s32.totalorder %s20, 1
      %p78 = por %p76, %p77
      %p80 = scmp.ne.s32.totalorder %s65, %s79
      %p81 = scmp.eq.s32.totalorder %s20, 0
      %p82 = por %p80, %p81
      %s84 = sadd.s32 %s83, 1
      %p87 = scmp.eq.s32.totalorder %s14, 1
      %p88 = scmp.ne.s32.totalorder %s83, %s85
      %p89 = scmp.eq.s32.totalorder %s14, 0
      %p90 = por %p88, %p89
      %p91 = scmp.ne.s32.totalorder %s83, %s85
      %p92 = scmp.eq.s32.totalorder %s19, 1
      %p93 = por %p91, %p92
      %p94 = scmp.ne.s32.totalorder %s85, %s86
      %p95 = scmp.eq.s32.totalorder %s19, 0
      %p96 = por %p94, %p95
      %p97 = scmp.ne.s32.totalorder %s85, %s86
      %p98 = scmp.eq.s32.totalorder %s20, 1
      %p99 = por %p97, %p98
      %p101 = scmp.ne.s32.totalorder %s86, %s100
      %p102 = scmp.eq.s32.totalorder %s20, 0
      %p103 = por %p101, %p102
      %s104 = ssub.s32 %s21, %s33
      %s105 = ssub.s32 %s22, %s29
      %s106 = sor.u32 %s104, %s105
      %p107 = scmp.eq.s32.totalorder %s106, 0
      %s109 = sadd.s32 %s108, 1
      %s110 = scalar_select %p107, %s108, %s109
      %p113 = pneg %p107
      %p114 = scmp.eq.s32.totalorder %s14, 1
      %p115 = por %p113, %p114
      %p116 = scmp.ne.s32.totalorder %s108, %s111
      %p117 = scmp.eq.s32.totalorder %s14, 0
      %p118 = por %p116, %p117
      %p119 = scmp.ne.s32.totalorder %s108, %s111
      %p120 = scmp.eq.s32.totalorder %s19, 1
      %p121 = por %p119, %p120
      %p122 = scmp.ne.s32.totalorder %s111, %s112
      %p123 = scmp.eq.s32.totalorder %s19, 0
      %p124 = por %p122, %p123
      %p125 = scmp.ne.s32.totalorder %s111, %s112
      %p126 = scmp.eq.s32.totalorder %s20, 1
      %p127 = por %p125, %p126
      %p129 = scmp.ne.s32.totalorder %s112, %s128
      %p130 = scmp.eq.s32.totalorder %s20, 0
      %p131 = por %p129, %p130
      %p132 = scmp.le.s32.totalorder 1, %s14
      %p133 = scmp.lt.s32.totalorder %s14, 3
      %p134 = pnand %p132, %p133
      %p135 = pneg %p134
      // Predicated region
      $region9: #{tpu_custom_call.1} parent=5 // pred_check
        _
      $region10: #{tpu_custom_call.1} parent=5 // pred_check_branch
        %137 = sbr.rel (%p134) target = $region12
      $region11: #{tpu_custom_call.1} parent=5 // pred_region
        %s138 = ssub.s32 %s14, 1
        // Predicated region
        $region13: #{tpu_custom_call.1} parent=11 // pred_check
          %p139 = pneg %p75
        $region14: #{tpu_custom_call.1} parent=11 // pred_check_branch
          %141 = sbr.rel (%p139) target = $region16
        $region15: #{tpu_custom_call.1} parent=11 // pred_region
          _
        $region16: #{tpu_custom_call.1} parent=11 // pred_fallthru
          _
        // Predicated region
        $region17: #{tpu_custom_call.1} parent=11 // pred_check
          %p142 = pneg %p96
        $region18: #{tpu_custom_call.1} parent=11 // pred_check_branch
          %144 = sbr.rel (%p142) target = $region20
        $region19: #{tpu_custom_call.1} parent=11 // pred_region
          _
        $region20: #{tpu_custom_call.1} parent=11 // pred_fallthru
          _
      $region12: #{tpu_custom_call.1} parent=5 // pred_fallthru
        _
      %p145 = scmp.lt.s32.totalorder %s14, 2
      // Predicated region
      $region21: #{tpu_custom_call.1} parent=5 // pred_check
        %p146 = pneg %p145
      $region22: #{tpu_custom_call.1} parent=5 // pred_check_branch
        %148 = sbr.rel (%p146) target = $region24
      $region23: #{tpu_custom_call.1} parent=5 // pred_region
        // Predicated region
        $region25: #{tpu_custom_call.1} parent=23 // pred_check
          %p149 = pneg %p48
        $region26: #{tpu_custom_call.1} parent=23 // pred_check_branch
          %151 = sbr.rel (%p149) target = $region28
        $region27: #{tpu_custom_call.1} parent=23 // pred_region
          %p152 = scmp.lt.s32.totalorder %s21, 1
          %s153 = scalar_select %p152, %s21, 1
          %p154 = scmp.lt.s32.totalorder %s22, 0
          %s155 = scalar_select %p154, %s22, 0
          %s156 = smul.addr %s155, 54
          %s157 = smul.addr %s153, 54
          %s158 = sadd.s32 %s156, %s157
          %s159 = smul.addr %s158, 4
          %s160 = scalar_lea.vmem %s1, %s159
        $region28: #{tpu_custom_call.1} parent=23 // pred_fallthru
          _
      $region24: #{tpu_custom_call.1} parent=5 // pred_fallthru
        _
      %p161 = scmp.le.s32.totalorder 1, %s14
      %p162 = scmp.lt.s32.totalorder %s14, 3
      %p163 = pnand %p161, %p162
      %p164 = pneg %p163
      // Predicated region
      $region29: #{tpu_custom_call.1} parent=5 // pred_check
        _
      $region30: #{tpu_custom_call.1} parent=5 // pred_check_branch
        %166 = sbr.rel (%p163) target = $region32
      $region31: #{tpu_custom_call.1} parent=5 // pred_region
        %s167 = ssub.s32 %s14, 1
        %p168 = scmp.lt.s32.totalorder %s23, 1
        %s169 = scalar_select %p168, %s23, 1
        %p170 = scmp.lt.s32.totalorder %s24, 0
        %s171 = scalar_select %p170, %s24, 0
        %s172 = smul.addr %s171, 54
        %s173 = smul.addr %s169, 54
        %s174 = sadd.s32 %s172, %s173
        %s175 = smul.addr %s174, 4
        %s176 = scalar_lea.vmem %s1, %s175
        %p177 = pneg %p54
        %p178 = pneg %p51
        %p179 = pneg %p75
        %p180 = pneg %p72
        %p181 = pneg %p96
        %p182 = pneg %p93
        %p183 = pneg %p124
        %p184 = pneg %p121
        %s185 = sand.u32 %s111, 1
        %s186 = scalar_lea.sflag [#allocation5], %s185
        %s187 = sand.u32 %s111, 1
        %s188 = smul.addr %s187, 128
        %s189 = scalar_lea.vmem [#allocation4], %s188
        %p190 = scmp.lt.s32.totalorder %s23, 1
        %s191 = scalar_select %p190, %s23, 1
        %p192 = scmp.lt.s32.totalorder %s24, 0
        %s193 = scalar_select %p192, %s24, 0
        %s194 = smul.addr %s193, 54
        %s195 = smul.addr %s191, 54
        %s196 = sadd.s32 %s194, %s195
        %s197 = smul.addr %s196, 4
        %s198 = scalar_lea.vmem %s1, %s197
        %s199 = smul.u32 32, %s24
        %v201 = vld [vmem:[%s198] sm:$0xf]
        %v202 = vld [vmem:[%s198 + $0x4] sm:$0xf]
        %v203 = vld [vmem:[%s198 + $0xc] sm:$0xf]
        %v204 = vld [vmem:[%s198 + $0x10] sm:$0xf]
        %v205 = vld [vmem:[%s198 + $0x18] sm:$0xf]
        %v206 = vld [vmem:[%s198 + $0x1c] sm:$0xf]
        %v207 = vld [vmem:[%s198 + $0x24] sm:$0xf]
        %v208 = vld [vmem:[%s198 + $0x28] sm:$0xf]
        %v209 = vld [vmem:[%s198 + $0x30] sm:$0xf]
        %v210 = vld [vmem:[%s198 + $0x34] sm:$0xf]
        %v211 = vld [vmem:[%s198 + $0x3c] sm:$0xf]
        %v212 = vld [vmem:[%s198 + $0x40] sm:$0xf]
        %v213 = vld [vmem:[%s198 + $0x48] sm:$0xf]
        %v214 = vld [vmem:[%s198 + $0x4c] sm:$0xf]
        %v215 = vld [vmem:[%s198 + $0x54] sm:$0xf]
        %v216 = vld [vmem:[%s198 + $0x58] sm:$0xf]
        %v217 = vld [vmem:[%s198 + $0x60] sm:$0xf]
        %v218 = vld [vmem:[%s198 + $0x64] sm:$0xf]
        %v219 = vld [vmem:[%s198 + $0x6c] sm:$0xf]
        %v220 = vld [vmem:[%s198 + $0x70] sm:$0xf]
        %v221 = vld [vmem:[%s198 + $0x78] sm:$0xf]
        %v222 = vld [vmem:[%s198 + $0x7c] sm:$0xf]
        %v223 = vld [vmem:[%s198 + $0x84] sm:$0xf]
        %v224 = vld [vmem:[%s198 + $0x88] sm:$0xf]
        %v225 = vld [vmem:[%s198 + $0x90] sm:$0xf]
        %v226 = vld [vmem:[%s198 + $0x94] sm:$0xf]
        %v227 = vld [vmem:[%s198 + $0x9c] sm:$0xf]
        %v228 = vld [vmem:[%s198 + $0xa0] sm:$0xf]
        %v229 = vld [vmem:[%s198 + $0xa8] sm:$0xf]
        %v230 = vld [vmem:[%s198 + $0xac] sm:$0xf]
        %v231 = vld [vmem:[%s198 + $0xb4] sm:$0xf]
        %v232 = vld [vmem:[%s198 + $0xb8] sm:$0xf]
        %v233 = vld [vmem:[%s198 + $0x8] sm:$0x1]
        %v234 = vld [vmem:[%s198 + $0x14] sm:$0x1]
        %v235 = vld [vmem:[%s198 + $0x20] sm:$0x1]
        %v236 = vld [vmem:[%s198 + $0x2c] sm:$0x1]
        %v237 = vld [vmem:[%s198 + $0x38] sm:$0x1]
        %v238 = vld [vmem:[%s198 + $0x44] sm:$0x1]
        %v239 = vld [vmem:[%s198 + $0x50] sm:$0x1]
        %v240 = vld [vmem:[%s198 + $0x5c] sm:$0x1]
        %v241 = vld [vmem:[%s198 + $0x68] sm:$0x1]
        %v242 = vld [vmem:[%s198 + $0x74] sm:$0x1]
        %v243 = vld [vmem:[%s198 + $0x80] sm:$0x1]
        %v244 = vld [vmem:[%s198 + $0x8c] sm:$0x1]
        %v245 = vld [vmem:[%s198 + $0x98] sm:$0x1]
        %v246 = vld [vmem:[%s198 + $0xa4] sm:$0x1]
        %v247 = vld [vmem:[%s198 + $0xb0] sm:$0x1]
        %v248 = vld [vmem:[%s198 + $0xbc] sm:$0x1]
        %vm249 = vsmask.f32 3328
        %vm250 = vsmask.f32 7440
        %vm251 = vmor %vm249, %vm250
        %v253 = vshrl.u32 %v201, 16
        %v255 = vrot.slane %v253, 4
        %v256 = vshll.u32 %v201, 16
        %v258 = vrot.slane %v256, 5
        %v259 = vor.u32 %v255, %v258
        %v260 = vrot.slane %v259, 4
        %v262 = vshll.u32 %v202, 16
        %v264 = vrot.slane %v262, 5
        %v265 = vsel %vm251, %v260, %v264
        %v266 = vshrl.u32 %v202, 16
        %v268 = vrot.slane %v266, 4
        %v269 = vor.u32 %v268, %v264
        %v270 = vrot.slane %v269, 4
        %v272 = vshll.u32 %v233, 16
        %v274 = vrot.slane %v272, 5
        %v275 = vsel %vm251, %v270, %v274
        %v277 = vshrl.u32 %v203, 16
        %v279 = vrot.slane %v277, 4
        %v280 = vshll.u32 %v203, 16
        %v282 = vrot.slane %v280, 5
        %v283 = vor.u32 %v279, %v282
        %v284 = vrot.slane %v283, 4
        %v286 = vshll.u32 %v204, 16
        %v288 = vrot.slane %v286, 5
        %v289 = vsel %vm251, %v284, %v288
        %v290 = vshrl.u32 %v204, 16
        %v292 = vrot.slane %v290, 4
        %v293 = vor.u32 %v292, %v288
        %v294 = vrot.slane %v293, 4
        %v296 = vshll.u32 %v234, 16
        %v298 = vrot.slane %v296, 5
        %v299 = vsel %vm251, %v294, %v298
        %v301 = vshrl.u32 %v205, 16
        %v303 = vrot.slane %v301, 4
        %v304 = vshll.u32 %v205, 16
        %v306 = vrot.slane %v304, 5
        %v307 = vor.u32 %v303, %v306
        %v308 = vrot.slane %v307, 4
        %v310 = vshll.u32 %v206, 16
        %v312 = vrot.slane %v310, 5
        %v313 = vsel %vm251, %v308, %v312
        %v314 = vshrl.u32 %v206, 16
        %v316 = vrot.slane %v314, 4
        %v317 = vor.u32 %v316, %v312
        %v318 = vrot.slane %v317, 4
        %v320 = vshll.u32 %v235, 16
        %v322 = vrot.slane %v320, 5
        %v323 = vsel %vm251, %v318, %v322
        %v325 = vshrl.u32 %v207, 16
        %v327 = vrot.slane %v325, 4
        %v328 = vshll.u32 %v207, 16
        %v330 = vrot.slane %v328, 5
        %v331 = vor.u32 %v327, %v330
        %v332 = vrot.slane %v331, 4
        %v334 = vshll.u32 %v208, 16
        %v336 = vrot.slane %v334, 5
        %v337 = vsel %vm251, %v332, %v336
        %v338 = vshrl.u32 %v208, 16
        %v340 = vrot.slane %v338, 4
        %v341 = vor.u32 %v340, %v336
        %v342 = vrot.slane %v341, 4
        %v344 = vshll.u32 %v236, 16
        %v346 = vrot.slane %v344, 5
        %v347 = vsel %vm251, %v342, %v346
        %v349 = vshrl.u32 %v209, 16
        %v351 = vrot.slane %v349, 4
        %v352 = vshll.u32 %v209, 16
        %v354 = vrot.slane %v352, 5
        %v355 = vor.u32 %v351, %v354
        %v356 = vrot.slane %v355, 4
        %v358 = vshll.u32 %v210, 16
        %v360 = vrot.slane %v358, 5
        %v361 = vsel %vm251, %v356, %v360
        %v362 = vshrl.u32 %v210, 16
        %v364 = vrot.slane %v362, 4
        %v365 = vor.u32 %v364, %v360
        %v366 = vrot.slane %v365, 4
        %v368 = vshll.u32 %v237, 16
        %v370 = vrot.slane %v368, 5
        %v371 = vsel %vm251, %v366, %v370
        %v373 = vshrl.u32 %v211, 16
        %v375 = vrot.slane %v373, 4
        %v376 = vshll.u32 %v211, 16
        %v378 = vrot.slane %v376, 5
        %v379 = vor.u32 %v375, %v378
        %v380 = vrot.slane %v379, 4
        %v382 = vshll.u32 %v212, 16
        %v384 = vrot.slane %v382, 5
        %v385 = vsel %vm251, %v380, %v384
        %v386 = vshrl.u32 %v212, 16
        %v388 = vrot.slane %v386, 4
        %v389 = vor.u32 %v388, %v384
        %v390 = vrot.slane %v389, 4
        %v392 = vshll.u32 %v238, 16
        %v394 = vrot.slane %v392, 5
        %v395 = vsel %vm251, %v390, %v394
        %v397 = vshrl.u32 %v213, 16
        %v399 = vrot.slane %v397, 4
        %v400 = vshll.u32 %v213, 16
        %v402 = vrot.slane %v400, 5
        %v403 = vor.u32 %v399, %v402
        %v404 = vrot.slane %v403, 4
        %v406 = vshll.u32 %v214, 16
        %v408 = vrot.slane %v406, 5
        %v409 = vsel %vm251, %v404, %v408
        %v410 = vshrl.u32 %v214, 16
        %v412 = vrot.slane %v410, 4
        %v413 = vor.u32 %v412, %v408
        %v414 = vrot.slane %v413, 4
        %v416 = vshll.u32 %v239, 16
        %v418 = vrot.slane %v416, 5
        %v419 = vsel %vm251, %v414, %v418
        %v421 = vshrl.u32 %v215, 16
        %v423 = vrot.slane %v421, 4
        %v424 = vshll.u32 %v215, 16
        %v426 = vrot.slane %v424, 5
        %v427 = vor.u32 %v423, %v426
        %v428 = vrot.slane %v427, 4
        %v430 = vshll.u32 %v216, 16
        %v432 = vrot.slane %v430, 5
        %v433 = vsel %vm251, %v428, %v432
        %v434 = vshrl.u32 %v216, 16
        %v436 = vrot.slane %v434, 4
        %v437 = vor.u32 %v436, %v432
        %v438 = vrot.slane %v437, 4
        %v440 = vshll.u32 %v240, 16
        %v442 = vrot.slane %v440, 5
        %v443 = vsel %vm251, %v438, %v442
        %v445 = vshrl.u32 %v217, 16
        %v447 = vrot.slane %v445, 4
        %v448 = vshll.u32 %v217, 16
        %v450 = vrot.slane %v448, 5
        %v451 = vor.u32 %v447, %v450
        %v452 = vrot.slane %v451, 4
        %v454 = vshll.u32 %v218, 16
        %v456 = vrot.slane %v454, 5
        %v457 = vsel %vm251, %v452, %v456
        %v458 = vshrl.u32 %v218, 16
        %v460 = vrot.slane %v458, 4
        %v461 = vor.u32 %v460, %v456
        %v462 = vrot.slane %v461, 4
        %v464 = vshll.u32 %v241, 16
        %v466 = vrot.slane %v464, 5
        %v467 = vsel %vm251, %v462, %v466
        %v469 = vshrl.u32 %v219, 16
        %v471 = vrot.slane %v469, 4
        %v472 = vshll.u32 %v219, 16
        %v474 = vrot.slane %v472, 5
        %v475 = vor.u32 %v471, %v474
        %v476 = vrot.slane %v475, 4
        %v478 = vshll.u32 %v220, 16
        %v480 = vrot.slane %v478, 5
        %v481 = vsel %vm251, %v476, %v480
        %v482 = vshrl.u32 %v220, 16
        %v484 = vrot.slane %v482, 4
        %v485 = vor.u32 %v484, %v480
        %v486 = vrot.slane %v485, 4
        %v488 = vshll.u32 %v242, 16
        %v490 = vrot.slane %v488, 5
        %v491 = vsel %vm251, %v486, %v490
        %v493 = vshrl.u32 %v221, 16
        %v495 = vrot.slane %v493, 4
        %v496 = vshll.u32 %v221, 16
        %v498 = vrot.slane %v496, 5
        %v499 = vor.u32 %v495, %v498
        %v500 = vrot.slane %v499, 4
        %v502 = vshll.u32 %v222, 16
        %v504 = vrot.slane %v502, 5
        %v505 = vsel %vm251, %v500, %v504
        %v506 = vshrl.u32 %v222, 16
        %v508 = vrot.slane %v506, 4
        %v509 = vor.u32 %v508, %v504
        %v510 = vrot.slane %v509, 4
        %v512 = vshll.u32 %v243, 16
        %v514 = vrot.slane %v512, 5
        %v515 = vsel %vm251, %v510, %v514
        %v517 = vshrl.u32 %v223, 16
        %v519 = vrot.slane %v517, 4
        %v520 = vshll.u32 %v223, 16
        %v522 = vrot.slane %v520, 5
        %v523 = vor.u32 %v519, %v522
        %v524 = vrot.slane %v523, 4
        %v526 = vshll.u32 %v224, 16
        %v528 = vrot.slane %v526, 5
        %v529 = vsel %vm251, %v524, %v528
        %v530 = vshrl.u32 %v224, 16
        %v532 = vrot.slane %v530, 4
        %v533 = vor.u32 %v532, %v528
        %v534 = vrot.slane %v533, 4
        %v536 = vshll.u32 %v244, 16
        %v538 = vrot.slane %v536, 5
        %v539 = vsel %vm251, %v534, %v538
        %v541 = vshrl.u32 %v225, 16
        %v543 = vrot.slane %v541, 4
        %v544 = vshll.u32 %v225, 16
        %v546 = vrot.slane %v544, 5
        %v547 = vor.u32 %v543, %v546
        %v548 = vrot.slane %v547, 4
        %v550 = vshll.u32 %v226, 16
        %v552 = vrot.slane %v550, 5
        %v553 = vsel %vm251, %v548, %v552
        %v554 = vshrl.u32 %v226, 16
        %v556 = vrot.slane %v554, 4
        %v557 = vor.u32 %v556, %v552
        %v558 = vrot.slane %v557, 4
        %v560 = vshll.u32 %v245, 16
        %v562 = vrot.slane %v560, 5
        %v563 = vsel %vm251, %v558, %v562
        %v565 = vshrl.u32 %v227, 16
        %v567 = vrot.slane %v565, 4
        %v568 = vshll.u32 %v227, 16
        %v570 = vrot.slane %v568, 5
        %v571 = vor.u32 %v567, %v570
        %v572 = vrot.slane %v571, 4
        %v574 = vshll.u32 %v228, 16
        %v576 = vrot.slane %v574, 5
        %v577 = vsel %vm251, %v572, %v576
        %v578 = vshrl.u32 %v228, 16
        %v580 = vrot.slane %v578, 4
        %v581 = vor.u32 %v580, %v576
        %v582 = vrot.slane %v581, 4
        %v584 = vshll.u32 %v246, 16
        %v586 = vrot.slane %v584, 5
        %v587 = vsel %vm251, %v582, %v586
        %v589 = vshrl.u32 %v229, 16
        %v591 = vrot.slane %v589, 4
        %v592 = vshll.u32 %v229, 16
        %v594 = vrot.slane %v592, 5
        %v595 = vor.u32 %v591, %v594
        %v596 = vrot.slane %v595, 4
        %v598 = vshll.u32 %v230, 16
        %v600 = vrot.slane %v598, 5
        %v601 = vsel %vm251, %v596, %v600
        %v602 = vshrl.u32 %v230, 16
        %v604 = vrot.slane %v602, 4
        %v605 = vor.u32 %v604, %v600
        %v606 = vrot.slane %v605, 4
        %v608 = vshll.u32 %v247, 16
        %v610 = vrot.slane %v608, 5
        %v611 = vsel %vm251, %v606, %v610
        %v613 = vshrl.u32 %v231, 16
        %v615 = vrot.slane %v613, 4
        %v616 = vshll.u32 %v231, 16
        %v618 = vrot.slane %v616, 5
        %v619 = vor.u32 %v615, %v618
        %v620 = vrot.slane %v619, 4
        %v622 = vshll.u32 %v232, 16
        %v624 = vrot.slane %v622, 5
        %v625 = vsel %vm251, %v620, %v624
        %v626 = vshrl.u32 %v232, 16
        %v628 = vrot.slane %v626, 4
        %v629 = vor.u32 %v628, %v624
        %v630 = vrot.slane %v629, 4
        %v632 = vshll.u32 %v248, 16
        %v634 = vrot.slane %v632, 5
        %v635 = vsel %vm251, %v630, %v634
        %v636 = vld [vmem:[%s198] sm:$0xe]
        %v637 = vld [vmem:[%s198 + $0xc] sm:$0xe]
        %v638 = vld [vmem:[%s198 + $0x18] sm:$0xe]
        %v639 = vld [vmem:[%s198 + $0x24] sm:$0xe]
        %v640 = vld [vmem:[%s198 + $0x30] sm:$0xe]
        %v641 = vld [vmem:[%s198 + $0x3c] sm:$0xe]
        %v642 = vld [vmem:[%s198 + $0x48] sm:$0xe]
        %v643 = vld [vmem:[%s198 + $0x54] sm:$0xe]
        %v644 = vld [vmem:[%s198 + $0x60] sm:$0xe]
        %v645 = vld [vmem:[%s198 + $0x6c] sm:$0xe]
        %v646 = vld [vmem:[%s198 + $0x78] sm:$0xe]
        %v647 = vld [vmem:[%s198 + $0x84] sm:$0xe]
        %v648 = vld [vmem:[%s198 + $0x90] sm:$0xe]
        %v649 = vld [vmem:[%s198 + $0x9c] sm:$0xe]
        %v650 = vld [vmem:[%s198 + $0xa8] sm:$0xe]
        %v651 = vld [vmem:[%s198 + $0xb4] sm:$0xe]
        %vm700 = vcmask 1042432
        %vm701 = vcmask 1046532
        %vm702 = vmor %vm700, %vm701
        %v703 = vrot.slane %v636, 5
        %v704 = vrot.slane %v703, 4
        %v705 = vrot.slane %v202, 5
        %v706 = vsel %vm702, %v704, %v705
        %v707 = vrot.slane %v705, 4
        %v708 = vrot.slane %v233, 5
        %v709 = vsel %vm702, %v707, %v708
        %v710 = vrot.slane %v637, 5
        %v711 = vrot.slane %v710, 4
        %v712 = vrot.slane %v204, 5
        %v713 = vsel %vm702, %v711, %v712
        %v714 = vrot.slane %v712, 4
        %v715 = vrot.slane %v234, 5
        %v716 = vsel %vm702, %v714, %v715
        %v717 = vrot.slane %v638, 5
        %v718 = vrot.slane %v717, 4
        %v719 = vrot.slane %v206, 5
        %v720 = vsel %vm702, %v718, %v719
        %v721 = vrot.slane %v719, 4
        %v722 = vrot.slane %v235, 5
        %v723 = vsel %vm702, %v721, %v722
        %v724 = vrot.slane %v639, 5
        %v725 = vrot.slane %v724, 4
        %v726 = vrot.slane %v208, 5
        %v727 = vsel %vm702, %v725, %v726
        %v728 = vrot.slane %v726, 4
        %v729 = vrot.slane %v236, 5
        %v730 = vsel %vm702, %v728, %v729
        %v731 = vrot.slane %v640, 5
        %v732 = vrot.slane %v731, 4
        %v733 = vrot.slane %v210, 5
        %v734 = vsel %vm702, %v732, %v733
        %v735 = vrot.slane %v733, 4
        %v736 = vrot.slane %v237, 5
        %v737 = vsel %vm702, %v735, %v736
        %v738 = vrot.slane %v641, 5
        %v739 = vrot.slane %v738, 4
        %v740 = vrot.slane %v212, 5
        %v741 = vsel %vm702, %v739, %v740
        %v742 = vrot.slane %v740, 4
        %v743 = vrot.slane %v238, 5
        %v744 = vsel %vm702, %v742, %v743
        %v745 = vrot.slane %v642, 5
        %v746 = vrot.slane %v745, 4
        %v747 = vrot.slane %v214, 5
        %v748 = vsel %vm702, %v746, %v747
        %v749 = vrot.slane %v747, 4
        %v750 = vrot.slane %v239, 5
        %v751 = vsel %vm702, %v749, %v750
        %v752 = vrot.slane %v643, 5
        %v753 = vrot.slane %v752, 4
        %v754 = vrot.slane %v216, 5
        %v755 = vsel %vm702, %v753, %v754
        %v756 = vrot.slane %v754, 4
        %v757 = vrot.slane %v240, 5
        %v758 = vsel %vm702, %v756, %v757
        %v759 = vrot.slane %v644, 5
        %v760 = vrot.slane %v759, 4
        %v761 = vrot.slane %v218, 5
        %v762 = vsel %vm702, %v760, %v761
        %v763 = vrot.slane %v761, 4
        %v764 = vrot.slane %v241, 5
        %v765 = vsel %vm702, %v763, %v764
        %v766 = vrot.slane %v645, 5
        %v767 = vrot.slane %v766, 4
        %v768 = vrot.slane %v220, 5
        %v769 = vsel %vm702, %v767, %v768
        %v770 = vrot.slane %v768, 4
        %v771 = vrot.slane %v242, 5
        %v772 = vsel %vm702, %v770, %v771
        %v773 = vrot.slane %v646, 5
        %v774 = vrot.slane %v773, 4
        %v775 = vrot.slane %v222, 5
        %v776 = vsel %vm702, %v774, %v775
        %v777 = vrot.slane %v775, 4
        %v778 = vrot.slane %v243, 5
        %v779 = vsel %vm702, %v777, %v778
        %v780 = vrot.slane %v647, 5
        %v781 = vrot.slane %v780, 4
        %v782 = vrot.slane %v224, 5
        %v783 = vsel %vm702, %v781, %v782
        %v784 = vrot.slane %v782, 4
        %v785 = vrot.slane %v244, 5
        %v786 = vsel %vm702, %v784, %v785
        %v787 = vrot.slane %v648, 5
        %v788 = vrot.slane %v787, 4
        %v789 = vrot.slane %v226, 5
        %v790 = vsel %vm702, %v788, %v789
        %v791 = vrot.slane %v789, 4
        %v792 = vrot.slane %v245, 5
        %v793 = vsel %vm702, %v791, %v792
        %v794 = vrot.slane %v649, 5
        %v795 = vrot.slane %v794, 4
        %v796 = vrot.slane %v228, 5
        %v797 = vsel %vm702, %v795, %v796
        %v798 = vrot.slane %v796, 4
        %v799 = vrot.slane %v246, 5
        %v800 = vsel %vm702, %v798, %v799
        %v801 = vrot.slane %v650, 5
        %v802 = vrot.slane %v801, 4
        %v803 = vrot.slane %v230, 5
        %v804 = vsel %vm702, %v802, %v803
        %v805 = vrot.slane %v803, 4
        %v806 = vrot.slane %v247, 5
        %v807 = vsel %vm702, %v805, %v806
        %v808 = vrot.slane %v651, 5
        %v809 = vrot.slane %v808, 4
        %v810 = vrot.slane %v232, 5
        %v811 = vsel %vm702, %v809, %v810
        %v812 = vrot.slane %v810, 4
        %v813 = vrot.slane %v248, 5
        %v814 = vsel %vm702, %v812, %v813
        %s815 = scalar_lea.vmem %s198, 12
        %v816 = vld [vmem:[%s815] sm:$0xf]
        %v817 = vld [vmem:[%s815 + $0x4] sm:$0xf]
        %v818 = vld [vmem:[%s815 + $0xc] sm:$0xf]
        %v819 = vld [vmem:[%s815 + $0x10] sm:$0xf]
        %v820 = vld [vmem:[%s815 + $0x18] sm:$0xf]
        %v821 = vld [vmem:[%s815 + $0x1c] sm:$0xf]
        %v822 = vld [vmem:[%s815 + $0x24] sm:$0xf]
        %v823 = vld [vmem:[%s815 + $0x28] sm:$0xf]
        %v824 = vld [vmem:[%s815 + $0x30] sm:$0xf]
        %v825 = vld [vmem:[%s815 + $0x34] sm:$0xf]
        %v826 = vld [vmem:[%s815 + $0x3c] sm:$0xf]
        %v827 = vld [vmem:[%s815 + $0x40] sm:$0xf]
        %v828 = vld [vmem:[%s815 + $0x48] sm:$0xf]
        %v829 = vld [vmem:[%s815 + $0x4c] sm:$0xf]
        %v830 = vld [vmem:[%s815 + $0x54] sm:$0xf]
        %v831 = vld [vmem:[%s815 + $0x58] sm:$0xf]
        %v832 = vld [vmem:[%s815 + $0x60] sm:$0xf]
        %v833 = vld [vmem:[%s815 + $0x64] sm:$0xf]
        %v834 = vld [vmem:[%s815 + $0x6c] sm:$0xf]
        %v835 = vld [vmem:[%s815 + $0x70] sm:$0xf]
        %v836 = vld [vmem:[%s815 + $0x78] sm:$0xf]
        %v837 = vld [vmem:[%s815 + $0x7c] sm:$0xf]
        %v838 = vld [vmem:[%s815 + $0x84] sm:$0xf]
        %v839 = vld [vmem:[%s815 + $0x88] sm:$0xf]
        %v840 = vld [vmem:[%s815 + $0x90] sm:$0xf]
        %v841 = vld [vmem:[%s815 + $0x94] sm:$0xf]
        %v842 = vld [vmem:[%s815 + $0x9c] sm:$0xf]
        %v843 = vld [vmem:[%s815 + $0xa0] sm:$0xf]
        %v844 = vld [vmem:[%s815 + $0xa8] sm:$0xf]
        %v845 = vld [vmem:[%s815 + $0xac] sm:$0xf]
        %v846 = vld [vmem:[%s815 + $0xb4] sm:$0xf]
        %v847 = vld [vmem:[%s815 + $0xb8] sm:$0xf]
        %v848 = vld [vmem:[%s815 + $0x8] sm:$0x1]
        %v849 = vld [vmem:[%s815 + $0x14] sm:$0x1]
        %v850 = vld [vmem:[%s815 + $0x20] sm:$0x1]
        %v851 = vld [vmem:[%s815 + $0x2c] sm:$0x1]
        %v852 = vld [vmem:[%s815 + $0x38] sm:$0x1]
        %v853 = vld [vmem:[%s815 + $0x44] sm:$0x1]
        %v854 = vld [vmem:[%s815 + $0x50] sm:$0x1]
        %v855 = vld [vmem:[%s815 + $0x5c] sm:$0x1]
        %v856 = vld [vmem:[%s815 + $0x68] sm:$0x1]
        %v857 = vld [vmem:[%s815 + $0x74] sm:$0x1]
        %v858 = vld [vmem:[%s815 + $0x80] sm:$0x1]
        %v859 = vld [vmem:[%s815 + $0x8c] sm:$0x1]
        %v860 = vld [vmem:[%s815 + $0x98] sm:$0x1]
        %v861 = vld [vmem:[%s815 + $0xa4] sm:$0x1]
        %v862 = vld [vmem:[%s815 + $0xb0] sm:$0x1]
        %v863 = vld [vmem:[%s815 + $0xbc] sm:$0x1]
        %v865 = vshrl.u32 %v816, 16
        %v867 = vrot.slane %v865, 4
        %v868 = vshll.u32 %v816, 16
        %v870 = vrot.slane %v868, 5
        %v871 = vor.u32 %v867, %v870
        %v872 = vrot.slane %v871, 4
        %v874 = vshll.u32 %v817, 16
        %v876 = vrot.slane %v874, 5
        %v877 = vsel %vm251, %v872, %v876
        %v878 = vshrl.u32 %v817, 16
        %v880 = vrot.slane %v878, 4
        %v881 = vor.u32 %v880, %v876
        %v882 = vrot.slane %v881, 4
        %v884 = vshll.u32 %v848, 16
        %v886 = vrot.slane %v884, 5
        %v887 = vsel %vm251, %v882, %v886
        %v889 = vshrl.u32 %v818, 16
        %v891 = vrot.slane %v889, 4
        %v892 = vshll.u32 %v818, 16
        %v894 = vrot.slane %v892, 5
        %v895 = vor.u32 %v891, %v894
        %v896 = vrot.slane %v895, 4
        %v898 = vshll.u32 %v819, 16
        %v900 = vrot.slane %v898, 5
        %v901 = vsel %vm251, %v896, %v900
        %v902 = vshrl.u32 %v819, 16
        %v904 = vrot.slane %v902, 4
        %v905 = vor.u32 %v904, %v900
        %v906 = vrot.slane %v905, 4
        %v908 = vshll.u32 %v849, 16
        %v910 = vrot.slane %v908, 5
        %v911 = vsel %vm251, %v906, %v910
        %v913 = vshrl.u32 %v820, 16
        %v915 = vrot.slane %v913, 4
        %v916 = vshll.u32 %v820, 16
        %v918 = vrot.slane %v916, 5
        %v919 = vor.u32 %v915, %v918
        %v920 = vrot.slane %v919, 4
        %v922 = vshll.u32 %v821, 16
        %v924 = vrot.slane %v922, 5
        %v925 = vsel %vm251, %v920, %v924
        %v926 = vshrl.u32 %v821, 16
        %v928 = vrot.slane %v926, 4
        %v929 = vor.u32 %v928, %v924
        %v930 = vrot.slane %v929, 4
        %v932 = vshll.u32 %v850, 16
        %v934 = vrot.slane %v932, 5
        %v935 = vsel %vm251, %v930, %v934
        %v937 = vshrl.u32 %v822, 16
        %v939 = vrot.slane %v937, 4
        %v940 = vshll.u32 %v822, 16
        %v942 = vrot.slane %v940, 5
        %v943 = vor.u32 %v939, %v942
        %v944 = vrot.slane %v943, 4
        %v946 = vshll.u32 %v823, 16
        %v948 = vrot.slane %v946, 5
        %v949 = vsel %vm251, %v944, %v948
        %v950 = vshrl.u32 %v823, 16
        %v952 = vrot.slane %v950, 4
        %v953 = vor.u32 %v952, %v948
        %v954 = vrot.slane %v953, 4
        %v956 = vshll.u32 %v851, 16
        %v958 = vrot.slane %v956, 5
        %v959 = vsel %vm251, %v954, %v958
        %v961 = vshrl.u32 %v824, 16
        %v963 = vrot.slane %v961, 4
        %v964 = vshll.u32 %v824, 16
        %v966 = vrot.slane %v964, 5
        %v967 = vor.u32 %v963, %v966
        %v968 = vrot.slane %v967, 4
        %v970 = vshll.u32 %v825, 16
        %v972 = vrot.slane %v970, 5
        %v973 = vsel %vm251, %v968, %v972
        %v974 = vshrl.u32 %v825, 16
        %v976 = vrot.slane %v974, 4
        %v977 = vor.u32 %v976, %v972
        %v978 = vrot.slane %v977, 4
        %v980 = vshll.u32 %v852, 16
        %v982 = vrot.slane %v980, 5
        %v983 = vsel %vm251, %v978, %v982
        %v985 = vshrl.u32 %v826, 16
        %v987 = vrot.slane %v985, 4
        %v988 = vshll.u32 %v826, 16
        %v990 = vrot.slane %v988, 5
        %v991 = vor.u32 %v987, %v990
        %v992 = vrot.slane %v991, 4
        %v994 = vshll.u32 %v827, 16
        %v996 = vrot.slane %v994, 5
        %v997 = vsel %vm251, %v992, %v996
        %v998 = vshrl.u32 %v827, 16
        %v1000 = vrot.slane %v998, 4
        %v1001 = vor.u32 %v1000, %v996
        %v1002 = vrot.slane %v1001, 4
        %v1004 = vshll.u32 %v853, 16
        %v1006 = vrot.slane %v1004, 5
        %v1007 = vsel %vm251, %v1002, %v1006
        %v1009 = vshrl.u32 %v828, 16
        %v1011 = vrot.slane %v1009, 4
        %v1012 = vshll.u32 %v828, 16
        %v1014 = vrot.slane %v1012, 5
        %v1015 = vor.u32 %v1011, %v1014
        %v1016 = vrot.slane %v1015, 4
        %v1018 = vshll.u32 %v829, 16
        %v1020 = vrot.slane %v1018, 5
        %v1021 = vsel %vm251, %v1016, %v1020
        %v1022 = vshrl.u32 %v829, 16
        %v1024 = vrot.slane %v1022, 4
        %v1025 = vor.u32 %v1024, %v1020
        %v1026 = vrot.slane %v1025, 4
        %v1028 = vshll.u32 %v854, 16
        %v1030 = vrot.slane %v1028, 5
        %v1031 = vsel %vm251, %v1026, %v1030
        %v1033 = vshrl.u32 %v830, 16
        %v1035 = vrot.slane %v1033, 4
        %v1036 = vshll.u32 %v830, 16
        %v1038 = vrot.slane %v1036, 5
        %v1039 = vor.u32 %v1035, %v1038
        %v1040 = vrot.slane %v1039, 4
        %v1042 = vshll.u32 %v831, 16
        %v1044 = vrot.slane %v1042, 5
        %v1045 = vsel %vm251, %v1040, %v1044
        %v1046 = vshrl.u32 %v831, 16
        %v1048 = vrot.slane %v1046, 4
        %v1049 = vor.u32 %v1048, %v1044
        %v1050 = vrot.slane %v1049, 4
        %v1052 = vshll.u32 %v855, 16
        %v1054 = vrot.slane %v1052, 5
        %v1055 = vsel %vm251, %v1050, %v1054
        %v1057 = vshrl.u32 %v832, 16
        %v1059 = vrot.slane %v1057, 4
        %v1060 = vshll.u32 %v832, 16
        %v1062 = vrot.slane %v1060, 5
        %v1063 = vor.u32 %v1059, %v1062
        %v1064 = vrot.slane %v1063, 4
        %v1066 = vshll.u32 %v833, 16
        %v1068 = vrot.slane %v1066, 5
        %v1069 = vsel %vm251, %v1064, %v1068
        %v1070 = vshrl.u32 %v833, 16
        %v1072 = vrot.slane %v1070, 4
        %v1073 = vor.u32 %v1072, %v1068
        %v1074 = vrot.slane %v1073, 4
        %v1076 = vshll.u32 %v856, 16
        %v1078 = vrot.slane %v1076, 5
        %v1079 = vsel %vm251, %v1074, %v1078
        %v1081 = vshrl.u32 %v834, 16
        %v1083 = vrot.slane %v1081, 4
        %v1084 = vshll.u32 %v834, 16
        %v1086 = vrot.slane %v1084, 5
        %v1087 = vor.u32 %v1083, %v1086
        %v1088 = vrot.slane %v1087, 4
        %v1090 = vshll.u32 %v835, 16
        %v1092 = vrot.slane %v1090, 5
        %v1093 = vsel %vm251, %v1088, %v1092
        %v1094 = vshrl.u32 %v835, 16
        %v1096 = vrot.slane %v1094, 4
        %v1097 = vor.u32 %v1096, %v1092
        %v1098 = vrot.slane %v1097, 4
        %v1100 = vshll.u32 %v857, 16
        %v1102 = vrot.slane %v1100, 5
        %v1103 = vsel %vm251, %v1098, %v1102
        %v1105 = vshrl.u32 %v836, 16
        %v1107 = vrot.slane %v1105, 4
        %v1108 = vshll.u32 %v836, 16
        %v1110 = vrot.slane %v1108, 5
        %v1111 = vor.u32 %v1107, %v1110
        %v1112 = vrot.slane %v1111, 4
        %v1114 = vshll.u32 %v837, 16
        %v1116 = vrot.slane %v1114, 5
        %v1117 = vsel %vm251, %v1112, %v1116
        %v1118 = vshrl.u32 %v837, 16
        %v1120 = vrot.slane %v1118, 4
        %v1121 = vor.u32 %v1120, %v1116
        %v1122 = vrot.slane %v1121, 4
        %v1124 = vshll.u32 %v858, 16
        %v1126 = vrot.slane %v1124, 5
        %v1127 = vsel %vm251, %v1122, %v1126
        %v1129 = vshrl.u32 %v838, 16
        %v1131 = vrot.slane %v1129, 4
        %v1132 = vshll.u32 %v838, 16
        %v1134 = vrot.slane %v1132, 5
        %v1135 = vor.u32 %v1131, %v1134
        %v1136 = vrot.slane %v1135, 4
        %v1138 = vshll.u32 %v839, 16
        %v1140 = vrot.slane %v1138, 5
        %v1141 = vsel %vm251, %v1136, %v1140
        %v1142 = vshrl.u32 %v839, 16
        %v1144 = vrot.slane %v1142, 4
        %v1145 = vor.u32 %v1144, %v1140
        %v1146 = vrot.slane %v1145, 4
        %v1148 = vshll.u32 %v859, 16
        %v1150 = vrot.slane %v1148, 5
        %v1151 = vsel %vm251, %v1146, %v1150
        %v1153 = vshrl.u32 %v840, 16
        %v1155 = vrot.slane %v1153, 4
        %v1156 = vshll.u32 %v840, 16
        %v1158 = vrot.slane %v1156, 5
        %v1159 = vor.u32 %v1155, %v1158
        %v1160 = vrot.slane %v1159, 4
        %v1162 = vshll.u32 %v841, 16
        %v1164 = vrot.slane %v1162, 5
        %v1165 = vsel %vm251, %v1160, %v1164
        %v1166 = vshrl.u32 %v841, 16
        %v1168 = vrot.slane %v1166, 4
        %v1169 = vor.u32 %v1168, %v1164
        %v1170 = vrot.slane %v1169, 4
        %v1172 = vshll.u32 %v860, 16
        %v1174 = vrot.slane %v1172, 5
        %v1175 = vsel %vm251, %v1170, %v1174
        %v1177 = vshrl.u32 %v842, 16
        %v1179 = vrot.slane %v1177, 4
        %v1180 = vshll.u32 %v842, 16
        %v1182 = vrot.slane %v1180, 5
        %v1183 = vor.u32 %v1179, %v1182
        %v1184 = vrot.slane %v1183, 4
        %v1186 = vshll.u32 %v843, 16
        %v1188 = vrot.slane %v1186, 5
        %v1189 = vsel %vm251, %v1184, %v1188
        %v1190 = vshrl.u32 %v843, 16
        %v1192 = vrot.slane %v1190, 4
        %v1193 = vor.u32 %v1192, %v1188
        %v1194 = vrot.slane %v1193, 4
        %v1196 = vshll.u32 %v861, 16
        %v1198 = vrot.slane %v1196, 5
        %v1199 = vsel %vm251, %v1194, %v1198
        %v1201 = vshrl.u32 %v844, 16
        %v1203 = vrot.slane %v1201, 4
        %v1204 = vshll.u32 %v844, 16
        %v1206 = vrot.slane %v1204, 5
        %v1207 = vor.u32 %v1203, %v1206
        %v1208 = vrot.slane %v1207, 4
        %v1210 = vshll.u32 %v845, 16
        %v1212 = vrot.slane %v1210, 5
        %v1213 = vsel %vm251, %v1208, %v1212
        %v1214 = vshrl.u32 %v845, 16
        %v1216 = vrot.slane %v1214, 4
        %v1217 = vor.u32 %v1216, %v1212
        %v1218 = vrot.slane %v1217, 4
        %v1220 = vshll.u32 %v862, 16
        %v1222 = vrot.slane %v1220, 5
        %v1223 = vsel %vm251, %v1218, %v1222
        %v1225 = vshrl.u32 %v846, 16
        %v1227 = vrot.slane %v1225, 4
        %v1228 = vshll.u32 %v846, 16
        %v1230 = vrot.slane %v1228, 5
        %v1231 = vor.u32 %v1227, %v1230
        %v1232 = vrot.slane %v1231, 4
        %v1234 = vshll.u32 %v847, 16
        %v1236 = vrot.slane %v1234, 5
        %v1237 = vsel %vm251, %v1232, %v1236
        %v1238 = vshrl.u32 %v847, 16
        %v1240 = vrot.slane %v1238, 4
        %v1241 = vor.u32 %v1240, %v1236
        %v1242 = vrot.slane %v1241, 4
        %v1244 = vshll.u32 %v863, 16
        %v1246 = vrot.slane %v1244, 5
        %v1247 = vsel %vm251, %v1242, %v1246
        %v1248 = vld [vmem:[%s815] sm:$0xe]
        %v1249 = vld [vmem:[%s815 + $0xc] sm:$0xe]
        %v1250 = vld [vmem:[%s815 + $0x18] sm:$0xe]
        %v1251 = vld [vmem:[%s815 + $0x24] sm:$0xe]
        %v1252 = vld [vmem:[%s815 + $0x30] sm:$0xe]
        %v1253 = vld [vmem:[%s815 + $0x3c] sm:$0xe]
        %v1254 = vld [vmem:[%s815 + $0x48] sm:$0xe]
        %v1255 = vld [vmem:[%s815 + $0x54] sm:$0xe]
        %v1256 = vld [vmem:[%s815 + $0x60] sm:$0xe]
        %v1257 = vld [vmem:[%s815 + $0x6c] sm:$0xe]
        %v1258 = vld [vmem:[%s815 + $0x78] sm:$0xe]
        %v1259 = vld [vmem:[%s815 + $0x84] sm:$0xe]
        %v1260 = vld [vmem:[%s815 + $0x90] sm:$0xe]
        %v1261 = vld [vmem:[%s815 + $0x9c] sm:$0xe]
        %v1262 = vld [vmem:[%s815 + $0xa8] sm:$0xe]
        %v1263 = vld [vmem:[%s815 + $0xb4] sm:$0xe]
        %v1312 = vrot.slane %v1248, 5
        %v1313 = vrot.slane %v1312, 4
        %v1314 = vrot.slane %v817, 5
        %v1315 = vsel %vm702, %v1313, %v1314
        %v1316 = vrot.slane %v1314, 4
        %v1317 = vrot.slane %v848, 5
        %v1318 = vsel %vm702, %v1316, %v1317
        %v1319 = vrot.slane %v1249, 5
        %v1320 = vrot.slane %v1319, 4
        %v1321 = vrot.slane %v819, 5
        %v1322 = vsel %vm702, %v1320, %v1321
        %v1323 = vrot.slane %v1321, 4
        %v1324 = vrot.slane %v849, 5
        %v1325 = vsel %vm702, %v1323, %v1324
        %v1326 = vrot.slane %v1250, 5
        %v1327 = vrot.slane %v1326, 4
        %v1328 = vrot.slane %v821, 5
        %v1329 = vsel %vm702, %v1327, %v1328
        %v1330 = vrot.slane %v1328, 4
        %v1331 = vrot.slane %v850, 5
        %v1332 = vsel %vm702, %v1330, %v1331
        %v1333 = vrot.slane %v1251, 5
        %v1334 = vrot.slane %v1333, 4
        %v1335 = vrot.slane %v823, 5
        %v1336 = vsel %vm702, %v1334, %v1335
        %v1337 = vrot.slane %v1335, 4
        %v1338 = vrot.slane %v851, 5
        %v1339 = vsel %vm702, %v1337, %v1338
        %v1340 = vrot.slane %v1252, 5
        %v1341 = vrot.slane %v1340, 4
        %v1342 = vrot.slane %v825, 5
        %v1343 = vsel %vm702, %v1341, %v1342
        %v1344 = vrot.slane %v1342, 4
        %v1345 = vrot.slane %v852, 5
        %v1346 = vsel %vm702, %v1344, %v1345
        %v1347 = vrot.slane %v1253, 5
        %v1348 = vrot.slane %v1347, 4
        %v1349 = vrot.slane %v827, 5
        %v1350 = vsel %vm702, %v1348, %v1349
        %v1351 = vrot.slane %v1349, 4
        %v1352 = vrot.slane %v853, 5
        %v1353 = vsel %vm702, %v1351, %v1352
        %v1354 = vrot.slane %v1254, 5
        %v1355 = vrot.slane %v1354, 4
        %v1356 = vrot.slane %v829, 5
        %v1357 = vsel %vm702, %v1355, %v1356
        %v1358 = vrot.slane %v1356, 4
        %v1359 = vrot.slane %v854, 5
        %v1360 = vsel %vm702, %v1358, %v1359
        %v1361 = vrot.slane %v1255, 5
        %v1362 = vrot.slane %v1361, 4
        %v1363 = vrot.slane %v831, 5
        %v1364 = vsel %vm702, %v1362, %v1363
        %v1365 = vrot.slane %v1363, 4
        %v1366 = vrot.slane %v855, 5
        %v1367 = vsel %vm702, %v1365, %v1366
        %v1368 = vrot.slane %v1256, 5
        %v1369 = vrot.slane %v1368, 4
        %v1370 = vrot.slane %v833, 5
        %v1371 = vsel %vm702, %v1369, %v1370
        %v1372 = vrot.slane %v1370, 4
        %v1373 = vrot.slane %v856, 5
        %v1374 = vsel %vm702, %v1372, %v1373
        %v1375 = vrot.slane %v1257, 5
        %v1376 = vrot.slane %v1375, 4
        %v1377 = vrot.slane %v835, 5
        %v1378 = vsel %vm702, %v1376, %v1377
        %v1379 = vrot.slane %v1377, 4
        %v1380 = vrot.slane %v857, 5
        %v1381 = vsel %vm702, %v1379, %v1380
        %v1382 = vrot.slane %v1258, 5
        %v1383 = vrot.slane %v1382, 4
        %v1384 = vrot.slane %v837, 5
        %v1385 = vsel %vm702, %v1383, %v1384
        %v1386 = vrot.slane %v1384, 4
        %v1387 = vrot.slane %v858, 5
        %v1388 = vsel %vm702, %v1386, %v1387
        %v1389 = vrot.slane %v1259, 5
        %v1390 = vrot.slane %v1389, 4
        %v1391 = vrot.slane %v839, 5
        %v1392 = vsel %vm702, %v1390, %v1391
        %v1393 = vrot.slane %v1391, 4
        %v1394 = vrot.slane %v859, 5
        %v1395 = vsel %vm702, %v1393, %v1394
        %v1396 = vrot.slane %v1260, 5
        %v1397 = vrot.slane %v1396, 4
        %v1398 = vrot.slane %v841, 5
        %v1399 = vsel %vm702, %v1397, %v1398
        %v1400 = vrot.slane %v1398, 4
        %v1401 = vrot.slane %v860, 5
        %v1402 = vsel %vm702, %v1400, %v1401
        %v1403 = vrot.slane %v1261, 5
        %v1404 = vrot.slane %v1403, 4
        %v1405 = vrot.slane %v843, 5
        %v1406 = vsel %vm702, %v1404, %v1405
        %v1407 = vrot.slane %v1405, 4
        %v1408 = vrot.slane %v861, 5
        %v1409 = vsel %vm702, %v1407, %v1408
        %v1410 = vrot.slane %v1262, 5
        %v1411 = vrot.slane %v1410, 4
        %v1412 = vrot.slane %v845, 5
        %v1413 = vsel %vm702, %v1411, %v1412
        %v1414 = vrot.slane %v1412, 4
        %v1415 = vrot.slane %v862, 5
        %v1416 = vsel %vm702, %v1414, %v1415
        %v1417 = vrot.slane %v1263, 5
        %v1418 = vrot.slane %v1417, 4
        %v1419 = vrot.slane %v847, 5
        %v1420 = vsel %vm702, %v1418, %v1419
        %v1421 = vrot.slane %v1419, 4
        %v1422 = vrot.slane %v863, 5
        %v1423 = vsel %vm702, %v1421, %v1422
        %s1424 = scalar_lea.vmem %s198, 24
        %v1425 = vld [vmem:[%s1424] sm:$0xf]
        %v1426 = vld [vmem:[%s1424 + $0x4] sm:$0xf]
        %v1427 = vld [vmem:[%s1424 + $0xc] sm:$0xf]
        %v1428 = vld [vmem:[%s1424 + $0x10] sm:$0xf]
        %v1429 = vld [vmem:[%s1424 + $0x18] sm:$0xf]
        %v1430 = vld [vmem:[%s1424 + $0x1c] sm:$0xf]
        %v1431 = vld [vmem:[%s1424 + $0x24] sm:$0xf]
        %v1432 = vld [vmem:[%s1424 + $0x28] sm:$0xf]
        %v1433 = vld [vmem:[%s1424 + $0x30] sm:$0xf]
        %v1434 = vld [vmem:[%s1424 + $0x34] sm:$0xf]
        %v1435 = vld [vmem:[%s1424 + $0x3c] sm:$0xf]
        %v1436 = vld [vmem:[%s1424 + $0x40] sm:$0xf]
        %v1437 = vld [vmem:[%s1424 + $0x48] sm:$0xf]
        %v1438 = vld [vmem:[%s1424 + $0x4c] sm:$0xf]
        %v1439 = vld [vmem:[%s1424 + $0x54] sm:$0xf]
        %v1440 = vld [vmem:[%s1424 + $0x58] sm:$0xf]
        %v1441 = vld [vmem:[%s1424 + $0x60] sm:$0xf]
        %v1442 = vld [vmem:[%s1424 + $0x64] sm:$0xf]
        %v1443 = vld [vmem:[%s1424 + $0x6c] sm:$0xf]
        %v1444 = vld [vmem:[%s1424 + $0x70] sm:$0xf]
        %v1445 = vld [vmem:[%s1424 + $0x78] sm:$0xf]
        %v1446 = vld [vmem:[%s1424 + $0x7c] sm:$0xf]
        %v1447 = vld [vmem:[%s1424 + $0x84] sm:$0xf]
        %v1448 = vld [vmem:[%s1424 + $0x88] sm:$0xf]
        %v1449 = vld [vmem:[%s1424 + $0x90] sm:$0xf]
        %v1450 = vld [vmem:[%s1424 + $0x94] sm:$0xf]
        %v1451 = vld [vmem:[%s1424 + $0x9c] sm:$0xf]
        %v1452 = vld [vmem:[%s1424 + $0xa0] sm:$0xf]
        %v1453 = vld [vmem:[%s1424 + $0xa8] sm:$0xf]
        %v1454 = vld [vmem:[%s1424 + $0xac] sm:$0xf]
        %v1455 = vld [vmem:[%s1424 + $0xb4] sm:$0xf]
        %v1456 = vld [vmem:[%s1424 + $0xb8] sm:$0xf]
        %v1457 = vld [vmem:[%s1424 + $0x8] sm:$0x1]
        %v1458 = vld [vmem:[%s1424 + $0x14] sm:$0x1]
        %v1459 = vld [vmem:[%s1424 + $0x20] sm:$0x1]
        %v1460 = vld [vmem:[%s1424 + $0x2c] sm:$0x1]
        %v1461 = vld [vmem:[%s1424 + $0x38] sm:$0x1]
        %v1462 = vld [vmem:[%s1424 + $0x44] sm:$0x1]
        %v1463 = vld [vmem:[%s1424 + $0x50] sm:$0x1]
        %v1464 = vld [vmem:[%s1424 + $0x5c] sm:$0x1]
        %v1465 = vld [vmem:[%s1424 + $0x68] sm:$0x1]
        %v1466 = vld [vmem:[%s1424 + $0x74] sm:$0x1]
        %v1467 = vld [vmem:[%s1424 + $0x80] sm:$0x1]
        %v1468 = vld [vmem:[%s1424 + $0x8c] sm:$0x1]
        %v1469 = vld [vmem:[%s1424 + $0x98] sm:$0x1]
        %v1470 = vld [vmem:[%s1424 + $0xa4] sm:$0x1]
        %v1471 = vld [vmem:[%s1424 + $0xb0] sm:$0x1]
        %v1472 = vld [vmem:[%s1424 + $0xbc] sm:$0x1]
        %v1474 = vshrl.u32 %v1425, 16
        %v1476 = vrot.slane %v1474, 4
        %v1477 = vshll.u32 %v1425, 16
        %v1479 = vrot.slane %v1477, 5
        %v1480 = vor.u32 %v1476, %v1479
        %v1481 = vrot.slane %v1480, 4
        %v1483 = vshll.u32 %v1426, 16
        %v1485 = vrot.slane %v1483, 5
        %v1486 = vsel %vm251, %v1481, %v1485
        %v1487 = vshrl.u32 %v1426, 16
        %v1489 = vrot.slane %v1487, 4
        %v1490 = vor.u32 %v1489, %v1485
        %v1491 = vrot.slane %v1490, 4
        %v1493 = vshll.u32 %v1457, 16
        %v1495 = vrot.slane %v1493, 5
        %v1496 = vsel %vm251, %v1491, %v1495
        %v1498 = vshrl.u32 %v1427, 16
        %v1500 = vrot.slane %v1498, 4
        %v1501 = vshll.u32 %v1427, 16
        %v1503 = vrot.slane %v1501, 5
        %v1504 = vor.u32 %v1500, %v1503
        %v1505 = vrot.slane %v1504, 4
        %v1507 = vshll.u32 %v1428, 16
        %v1509 = vrot.slane %v1507, 5
        %v1510 = vsel %vm251, %v1505, %v1509
        %v1511 = vshrl.u32 %v1428, 16
        %v1513 = vrot.slane %v1511, 4
        %v1514 = vor.u32 %v1513, %v1509
        %v1515 = vrot.slane %v1514, 4
        %v1517 = vshll.u32 %v1458, 16
        %v1519 = vrot.slane %v1517, 5
        %v1520 = vsel %vm251, %v1515, %v1519
        %v1522 = vshrl.u32 %v1429, 16
        %v1524 = vrot.slane %v1522, 4
        %v1525 = vshll.u32 %v1429, 16
        %v1527 = vrot.slane %v1525, 5
        %v1528 = vor.u32 %v1524, %v1527
        %v1529 = vrot.slane %v1528, 4
        %v1531 = vshll.u32 %v1430, 16
        %v1533 = vrot.slane %v1531, 5
        %v1534 = vsel %vm251, %v1529, %v1533
        %v1535 = vshrl.u32 %v1430, 16
        %v1537 = vrot.slane %v1535, 4
        %v1538 = vor.u32 %v1537, %v1533
        %v1539 = vrot.slane %v1538, 4
        %v1541 = vshll.u32 %v1459, 16
        %v1543 = vrot.slane %v1541, 5
        %v1544 = vsel %vm251, %v1539, %v1543
        %v1546 = vshrl.u32 %v1431, 16
        %v1548 = vrot.slane %v1546, 4
        %v1549 = vshll.u32 %v1431, 16
        %v1551 = vrot.slane %v1549, 5
        %v1552 = vor.u32 %v1548, %v1551
        %v1553 = vrot.slane %v1552, 4
        %v1555 = vshll.u32 %v1432, 16
        %v1557 = vrot.slane %v1555, 5
        %v1558 = vsel %vm251, %v1553, %v1557
        %v1559 = vshrl.u32 %v1432, 16
        %v1561 = vrot.slane %v1559, 4
        %v1562 = vor.u32 %v1561, %v1557
        %v1563 = vrot.slane %v1562, 4
        %v1565 = vshll.u32 %v1460, 16
        %v1567 = vrot.slane %v1565, 5
        %v1568 = vsel %vm251, %v1563, %v1567
        %v1570 = vshrl.u32 %v1433, 16
        %v1572 = vrot.slane %v1570, 4
        %v1573 = vshll.u32 %v1433, 16
        %v1575 = vrot.slane %v1573, 5
        %v1576 = vor.u32 %v1572, %v1575
        %v1577 = vrot.slane %v1576, 4
        %v1579 = vshll.u32 %v1434, 16
        %v1581 = vrot.slane %v1579, 5
        %v1582 = vsel %vm251, %v1577, %v1581
        %v1583 = vshrl.u32 %v1434, 16
        %v1585 = vrot.slane %v1583, 4
        %v1586 = vor.u32 %v1585, %v1581
        %v1587 = vrot.slane %v1586, 4
        %v1589 = vshll.u32 %v1461, 16
        %v1591 = vrot.slane %v1589, 5
        %v1592 = vsel %vm251, %v1587, %v1591
        %v1594 = vshrl.u32 %v1435, 16
        %v1596 = vrot.slane %v1594, 4
        %v1597 = vshll.u32 %v1435, 16
        %v1599 = vrot.slane %v1597, 5
        %v1600 = vor.u32 %v1596, %v1599
        %v1601 = vrot.slane %v1600, 4
        %v1603 = vshll.u32 %v1436, 16
        %v1605 = vrot.slane %v1603, 5
        %v1606 = vsel %vm251, %v1601, %v1605
        %v1607 = vshrl.u32 %v1436, 16
        %v1609 = vrot.slane %v1607, 4
        %v1610 = vor.u32 %v1609, %v1605
        %v1611 = vrot.slane %v1610, 4
        %v1613 = vshll.u32 %v1462, 16
        %v1615 = vrot.slane %v1613, 5
        %v1616 = vsel %vm251, %v1611, %v1615
        %v1618 = vshrl.u32 %v1437, 16
        %v1620 = vrot.slane %v1618, 4
        %v1621 = vshll.u32 %v1437, 16
        %v1623 = vrot.slane %v1621, 5
        %v1624 = vor.u32 %v1620, %v1623
        %v1625 = vrot.slane %v1624, 4
        %v1627 = vshll.u32 %v1438, 16
        %v1629 = vrot.slane %v1627, 5
        %v1630 = vsel %vm251, %v1625, %v1629
        %v1631 = vshrl.u32 %v1438, 16
        %v1633 = vrot.slane %v1631, 4
        %v1634 = vor.u32 %v1633, %v1629
        %v1635 = vrot.slane %v1634, 4
        %v1637 = vshll.u32 %v1463, 16
        %v1639 = vrot.slane %v1637, 5
        %v1640 = vsel %vm251, %v1635, %v1639
        %v1642 = vshrl.u32 %v1439, 16
        %v1644 = vrot.slane %v1642, 4
        %v1645 = vshll.u32 %v1439, 16
        %v1647 = vrot.slane %v1645, 5
        %v1648 = vor.u32 %v1644, %v1647
        %v1649 = vrot.slane %v1648, 4
        %v1651 = vshll.u32 %v1440, 16
        %v1653 = vrot.slane %v1651, 5
        %v1654 = vsel %vm251, %v1649, %v1653
        %v1655 = vshrl.u32 %v1440, 16
        %v1657 = vrot.slane %v1655, 4
        %v1658 = vor.u32 %v1657, %v1653
        %v1659 = vrot.slane %v1658, 4
        %v1661 = vshll.u32 %v1464, 16
        %v1663 = vrot.slane %v1661, 5
        %v1664 = vsel %vm251, %v1659, %v1663
        %v1666 = vshrl.u32 %v1441, 16
        %v1668 = vrot.slane %v1666, 4
        %v1669 = vshll.u32 %v1441, 16
        %v1671 = vrot.slane %v1669, 5
        %v1672 = vor.u32 %v1668, %v1671
        %v1673 = vrot.slane %v1672, 4
        %v1675 = vshll.u32 %v1442, 16
        %v1677 = vrot.slane %v1675, 5
        %v1678 = vsel %vm251, %v1673, %v1677
        %v1679 = vshrl.u32 %v1442, 16
        %v1681 = vrot.slane %v1679, 4
        %v1682 = vor.u32 %v1681, %v1677
        %v1683 = vrot.slane %v1682, 4
        %v1685 = vshll.u32 %v1465, 16
        %v1687 = vrot.slane %v1685, 5
        %v1688 = vsel %vm251, %v1683, %v1687
        %v1690 = vshrl.u32 %v1443, 16
        %v1692 = vrot.slane %v1690, 4
        %v1693 = vshll.u32 %v1443, 16
        %v1695 = vrot.slane %v1693, 5
        %v1696 = vor.u32 %v1692, %v1695
        %v1697 = vrot.slane %v1696, 4
        %v1699 = vshll.u32 %v1444, 16
        %v1701 = vrot.slane %v1699, 5
        %v1702 = vsel %vm251, %v1697, %v1701
        %v1703 = vshrl.u32 %v1444, 16
        %v1705 = vrot.slane %v1703, 4
        %v1706 = vor.u32 %v1705, %v1701
        %v1707 = vrot.slane %v1706, 4
        %v1709 = vshll.u32 %v1466, 16
        %v1711 = vrot.slane %v1709, 5
        %v1712 = vsel %vm251, %v1707, %v1711
        %v1714 = vshrl.u32 %v1445, 16
        %v1716 = vrot.slane %v1714, 4
        %v1717 = vshll.u32 %v1445, 16
        %v1719 = vrot.slane %v1717, 5
        %v1720 = vor.u32 %v1716, %v1719
        %v1721 = vrot.slane %v1720, 4
        %v1723 = vshll.u32 %v1446, 16
        %v1725 = vrot.slane %v1723, 5
        %v1726 = vsel %vm251, %v1721, %v1725
        %v1727 = vshrl.u32 %v1446, 16
        %v1729 = vrot.slane %v1727, 4
        %v1730 = vor.u32 %v1729, %v1725
        %v1731 = vrot.slane %v1730, 4
        %v1733 = vshll.u32 %v1467, 16
        %v1735 = vrot.slane %v1733, 5
        %v1736 = vsel %vm251, %v1731, %v1735
        %v1738 = vshrl.u32 %v1447, 16
        %v1740 = vrot.slane %v1738, 4
        %v1741 = vshll.u32 %v1447, 16
        %v1743 = vrot.slane %v1741, 5
        %v1744 = vor.u32 %v1740, %v1743
        %v1745 = vrot.slane %v1744, 4
        %v1747 = vshll.u32 %v1448, 16
        %v1749 = vrot.slane %v1747, 5
        %v1750 = vsel %vm251, %v1745, %v1749
        %v1751 = vshrl.u32 %v1448, 16
        %v1753 = vrot.slane %v1751, 4
        %v1754 = vor.u32 %v1753, %v1749
        %v1755 = vrot.slane %v1754, 4
        %v1757 = vshll.u32 %v1468, 16
        %v1759 = vrot.slane %v1757, 5
        %v1760 = vsel %vm251, %v1755, %v1759
        %v1762 = vshrl.u32 %v1449, 16
        %v1764 = vrot.slane %v1762, 4
        %v1765 = vshll.u32 %v1449, 16
        %v1767 = vrot.slane %v1765, 5
        %v1768 = vor.u32 %v1764, %v1767
        %v1769 = vrot.slane %v1768, 4
        %v1771 = vshll.u32 %v1450, 16
        %v1773 = vrot.slane %v1771, 5
        %v1774 = vsel %vm251, %v1769, %v1773
        %v1775 = vshrl.u32 %v1450, 16
        %v1777 = vrot.slane %v1775, 4
        %v1778 = vor.u32 %v1777, %v1773
        %v1779 = vrot.slane %v1778, 4
        %v1781 = vshll.u32 %v1469, 16
        %v1783 = vrot.slane %v1781, 5
        %v1784 = vsel %vm251, %v1779, %v1783
        %v1786 = vshrl.u32 %v1451, 16
        %v1788 = vrot.slane %v1786, 4
        %v1789 = vshll.u32 %v1451, 16
        %v1791 = vrot.slane %v1789, 5
        %v1792 = vor.u32 %v1788, %v1791
        %v1793 = vrot.slane %v1792, 4
        %v1795 = vshll.u32 %v1452, 16
        %v1797 = vrot.slane %v1795, 5
        %v1798 = vsel %vm251, %v1793, %v1797
        %v1799 = vshrl.u32 %v1452, 16
        %v1801 = vrot.slane %v1799, 4
        %v1802 = vor.u32 %v1801, %v1797
        %v1803 = vrot.slane %v1802, 4
        %v1805 = vshll.u32 %v1470, 16
        %v1807 = vrot.slane %v1805, 5
        %v1808 = vsel %vm251, %v1803, %v1807
        %v1810 = vshrl.u32 %v1453, 16
        %v1812 = vrot.slane %v1810, 4
        %v1813 = vshll.u32 %v1453, 16
        %v1815 = vrot.slane %v1813, 5
        %v1816 = vor.u32 %v1812, %v1815
        %v1817 = vrot.slane %v1816, 4
        %v1819 = vshll.u32 %v1454, 16
        %v1821 = vrot.slane %v1819, 5
        %v1822 = vsel %vm251, %v1817, %v1821
        %v1823 = vshrl.u32 %v1454, 16
        %v1825 = vrot.slane %v1823, 4
        %v1826 = vor.u32 %v1825, %v1821
        %v1827 = vrot.slane %v1826, 4
        %v1829 = vshll.u32 %v1471, 16
        %v1831 = vrot.slane %v1829, 5
        %v1832 = vsel %vm251, %v1827, %v1831
        %v1834 = vshrl.u32 %v1455, 16
        %v1836 = vrot.slane %v1834, 4
        %v1837 = vshll.u32 %v1455, 16
        %v1839 = vrot.slane %v1837, 5
        %v1840 = vor.u32 %v1836, %v1839
        %v1841 = vrot.slane %v1840, 4
        %v1843 = vshll.u32 %v1456, 16
        %v1845 = vrot.slane %v1843, 5
        %v1846 = vsel %vm251, %v1841, %v1845
        %v1847 = vshrl.u32 %v1456, 16
        %v1849 = vrot.slane %v1847, 4
        %v1850 = vor.u32 %v1849, %v1845
        %v1851 = vrot.slane %v1850, 4
        %v1853 = vshll.u32 %v1472, 16
        %v1855 = vrot.slane %v1853, 5
        %v1856 = vsel %vm251, %v1851, %v1855
        %v1857 = vld [vmem:[%s1424] sm:$0xe]
        %v1858 = vld [vmem:[%s1424 + $0xc] sm:$0xe]
        %v1859 = vld [vmem:[%s1424 + $0x18] sm:$0xe]
        %v1860 = vld [vmem:[%s1424 + $0x24] sm:$0xe]
        %v1861 = vld [vmem:[%s1424 + $0x30] sm:$0xe]
        %v1862 = vld [vmem:[%s1424 + $0x3c] sm:$0xe]
        %v1863 = vld [vmem:[%s1424 + $0x48] sm:$0xe]
        %v1864 = vld [vmem:[%s1424 + $0x54] sm:$0xe]
        %v1865 = vld [vmem:[%s1424 + $0x60] sm:$0xe]
        %v1866 = vld [vmem:[%s1424 + $0x6c] sm:$0xe]
        %v1867 = vld [vmem:[%s1424 + $0x78] sm:$0xe]
        %v1868 = vld [vmem:[%s1424 + $0x84] sm:$0xe]
        %v1869 = vld [vmem:[%s1424 + $0x90] sm:$0xe]
        %v1870 = vld [vmem:[%s1424 + $0x9c] sm:$0xe]
        %v1871 = vld [vmem:[%s1424 + $0xa8] sm:$0xe]
        %v1872 = vld [vmem:[%s1424 + $0xb4] sm:$0xe]
        %v1921 = vrot.slane %v1857, 5
        %v1922 = vrot.slane %v1921, 4
        %v1923 = vrot.slane %v1426, 5
        %v1924 = vsel %vm702, %v1922, %v1923
        %v1925 = vrot.slane %v1923, 4
        %v1926 = vrot.slane %v1457, 5
        %v1927 = vsel %vm702, %v1925, %v1926
        %v1928 = vrot.slane %v1858, 5
        %v1929 = vrot.slane %v1928, 4
        %v1930 = vrot.slane %v1428, 5
        %v1931 = vsel %vm702, %v1929, %v1930
        %v1932 = vrot.slane %v1930, 4
        %v1933 = vrot.slane %v1458, 5
        %v1934 = vsel %vm702, %v1932, %v1933
        %v1935 = vrot.slane %v1859, 5
        %v1936 = vrot.slane %v1935, 4
        %v1937 = vrot.slane %v1430, 5
        %v1938 = vsel %vm702, %v1936, %v1937
        %v1939 = vrot.slane %v1937, 4
        %v1940 = vrot.slane %v1459, 5
        %v1941 = vsel %vm702, %v1939, %v1940
        %v1942 = vrot.slane %v1860, 5
        %v1943 = vrot.slane %v1942, 4
        %v1944 = vrot.slane %v1432, 5
        %v1945 = vsel %vm702, %v1943, %v1944
        %v1946 = vrot.slane %v1944, 4
        %v1947 = vrot.slane %v1460, 5
        %v1948 = vsel %vm702, %v1946, %v1947
        %v1949 = vrot.slane %v1861, 5
        %v1950 = vrot.slane %v1949, 4
        %v1951 = vrot.slane %v1434, 5
        %v1952 = vsel %vm702, %v1950, %v1951
        %v1953 = vrot.slane %v1951, 4
        %v1954 = vrot.slane %v1461, 5
        %v1955 = vsel %vm702, %v1953, %v1954
        %v1956 = vrot.slane %v1862, 5
        %v1957 = vrot.slane %v1956, 4
        %v1958 = vrot.slane %v1436, 5
        %v1959 = vsel %vm702, %v1957, %v1958
        %v1960 = vrot.slane %v1958, 4
        %v1961 = vrot.slane %v1462, 5
        %v1962 = vsel %vm702, %v1960, %v1961
        %v1963 = vrot.slane %v1863, 5
        %v1964 = vrot.slane %v1963, 4
        %v1965 = vrot.slane %v1438, 5
        %v1966 = vsel %vm702, %v1964, %v1965
        %v1967 = vrot.slane %v1965, 4
        %v1968 = vrot.slane %v1463, 5
        %v1969 = vsel %vm702, %v1967, %v1968
        %v1970 = vrot.slane %v1864, 5
        %v1971 = vrot.slane %v1970, 4
        %v1972 = vrot.slane %v1440, 5
        %v1973 = vsel %vm702, %v1971, %v1972
        %v1974 = vrot.slane %v1972, 4
        %v1975 = vrot.slane %v1464, 5
        %v1976 = vsel %vm702, %v1974, %v1975
        %v1977 = vrot.slane %v1865, 5
        %v1978 = vrot.slane %v1977, 4
        %v1979 = vrot.slane %v1442, 5
        %v1980 = vsel %vm702, %v1978, %v1979
        %v1981 = vrot.slane %v1979, 4
        %v1982 = vrot.slane %v1465, 5
        %v1983 = vsel %vm702, %v1981, %v1982
        %v1984 = vrot.slane %v1866, 5
        %v1985 = vrot.slane %v1984, 4
        %v1986 = vrot.slane %v1444, 5
        %v1987 = vsel %vm702, %v1985, %v1986
        %v1988 = vrot.slane %v1986, 4
        %v1989 = vrot.slane %v1466, 5
        %v1990 = vsel %vm702, %v1988, %v1989
        %v1991 = vrot.slane %v1867, 5
        %v1992 = vrot.slane %v1991, 4
        %v1993 = vrot.slane %v1446, 5
        %v1994 = vsel %vm702, %v1992, %v1993
        %v1995 = vrot.slane %v1993, 4
        %v1996 = vrot.slane %v1467, 5
        %v1997 = vsel %vm702, %v1995, %v1996
        %v1998 = vrot.slane %v1868, 5
        %v1999 = vrot.slane %v1998, 4
        %v2000 = vrot.slane %v1448, 5
        %v2001 = vsel %vm702, %v1999, %v2000
        %v2002 = vrot.slane %v2000, 4
        %v2003 = vrot.slane %v1468, 5
        %v2004 = vsel %vm702, %v2002, %v2003
        %v2005 = vrot.slane %v1869, 5
        %v2006 = vrot.slane %v2005, 4
        %v2007 = vrot.slane %v1450, 5
        %v2008 = vsel %vm702, %v2006, %v2007
        %v2009 = vrot.slane %v2007, 4
        %v2010 = vrot.slane %v1469, 5
        %v2011 = vsel %vm702, %v2009, %v2010
        %v2012 = vrot.slane %v1870, 5
        %v2013 = vrot.slane %v2012, 4
        %v2014 = vrot.slane %v1452, 5
        %v2015 = vsel %vm702, %v2013, %v2014
        %v2016 = vrot.slane %v2014, 4
        %v2017 = vrot.slane %v1470, 5
        %v2018 = vsel %vm702, %v2016, %v2017
        %v2019 = vrot.slane %v1871, 5
        %v2020 = vrot.slane %v2019, 4
        %v2021 = vrot.slane %v1454, 5
        %v2022 = vsel %vm702, %v2020, %v2021
        %v2023 = vrot.slane %v2021, 4
        %v2024 = vrot.slane %v1471, 5
        %v2025 = vsel %vm702, %v2023, %v2024
        %v2026 = vrot.slane %v1872, 5
        %v2027 = vrot.slane %v2026, 4
        %v2028 = vrot.slane %v1456, 5
        %v2029 = vsel %vm702, %v2027, %v2028
        %v2030 = vrot.slane %v2028, 4
        %v2031 = vrot.slane %v1472, 5
        %v2032 = vsel %vm702, %v2030, %v2031
        %v2049 = vunpack.c.l.b16 %v201
        %v2050 = vunpack.c.l.b16 %v202
        %v2051 = vunpack.c.l.b16 %v203
        %v2052 = vunpack.c.l.b16 %v204
        %v2053 = vunpack.c.l.b16 %v205
        %v2054 = vunpack.c.l.b16 %v206
        %v2055 = vunpack.c.l.b16 %v207
        %v2056 = vunpack.c.l.b16 %v208
        %v2057 = vunpack.c.l.b16 %v209
        %v2058 = vunpack.c.l.b16 %v210
        %v2059 = vunpack.c.l.b16 %v211
        %v2060 = vunpack.c.l.b16 %v212
        %v2061 = vunpack.c.l.b16 %v213
        %v2062 = vunpack.c.l.b16 %v214
        %v2063 = vunpack.c.l.b16 %v215
        %v2064 = vunpack.c.l.b16 %v216
        %v2065 = vunpack.c.l.b16 %v217
        %v2066 = vunpack.c.l.b16 %v218
        %v2067 = vunpack.c.l.b16 %v219
        %v2068 = vunpack.c.l.b16 %v220
        %v2069 = vunpack.c.l.b16 %v221
        %v2070 = vunpack.c.l.b16 %v222
        %v2071 = vunpack.c.l.b16 %v223
        %v2072 = vunpack.c.l.b16 %v224
        %v2073 = vunpack.c.l.b16 %v225
        %v2074 = vunpack.c.l.b16 %v226
        %v2075 = vunpack.c.l.b16 %v227
        %v2076 = vunpack.c.l.b16 %v228
        %v2077 = vunpack.c.l.b16 %v229
        %v2078 = vunpack.c.l.b16 %v230
        %v2079 = vunpack.c.l.b16 %v231
        %v2080 = vunpack.c.l.b16 %v232
        %v2081 = vpack.c.b16 %v2050, %v2049
        %v2082 = vpack.c.b16 %v2052, %v2051
        %v2083 = vpack.c.b16 %v2054, %v2053
        %v2084 = vpack.c.b16 %v2056, %v2055
        %v2085 = vpack.c.b16 %v2058, %v2057
        %v2086 = vpack.c.b16 %v2060, %v2059
        %v2087 = vpack.c.b16 %v2062, %v2061
        %v2088 = vpack.c.b16 %v2064, %v2063
        %v2089 = vpack.c.b16 %v2066, %v2065
        %v2090 = vpack.c.b16 %v2068, %v2067
        %v2091 = vpack.c.b16 %v2070, %v2069
        %v2092 = vpack.c.b16 %v2072, %v2071
        %v2093 = vpack.c.b16 %v2074, %v2073
        %v2094 = vpack.c.b16 %v2076, %v2075
        %v2095 = vpack.c.b16 %v2078, %v2077
        %v2096 = vpack.c.b16 %v2080, %v2079
        %v2097 = vunpack.c.l.b16 %v265
        %v2098 = vunpack.c.l.b16 %v275
        %v2099 = vunpack.c.l.b16 %v289
        %v2100 = vunpack.c.l.b16 %v299
        %v2101 = vunpack.c.l.b16 %v313
        %v2102 = vunpack.c.l.b16 %v323
        %v2103 = vunpack.c.l.b16 %v337
        %v2104 = vunpack.c.l.b16 %v347
        %v2105 = vunpack.c.l.b16 %v361
        %v2106 = vunpack.c.l.b16 %v371
        %v2107 = vunpack.c.l.b16 %v385
        %v2108 = vunpack.c.l.b16 %v395
        %v2109 = vunpack.c.l.b16 %v409
        %v2110 = vunpack.c.l.b16 %v419
        %v2111 = vunpack.c.l.b16 %v433
        %v2112 = vunpack.c.l.b16 %v443
        %v2113 = vunpack.c.l.b16 %v457
        %v2114 = vunpack.c.l.b16 %v467
        %v2115 = vunpack.c.l.b16 %v481
        %v2116 = vunpack.c.l.b16 %v491
        %v2117 = vunpack.c.l.b16 %v505
        %v2118 = vunpack.c.l.b16 %v515
        %v2119 = vunpack.c.l.b16 %v529
        %v2120 = vunpack.c.l.b16 %v539
        %v2121 = vunpack.c.l.b16 %v553
        %v2122 = vunpack.c.l.b16 %v563
        %v2123 = vunpack.c.l.b16 %v577
        %v2124 = vunpack.c.l.b16 %v587
        %v2125 = vunpack.c.l.b16 %v601
        %v2126 = vunpack.c.l.b16 %v611
        %v2127 = vunpack.c.l.b16 %v625
        %v2128 = vunpack.c.l.b16 %v635
        %v2129 = vpack.c.b16 %v2098, %v2097
        %v2130 = vpack.c.b16 %v2100, %v2099
        %v2131 = vpack.c.b16 %v2102, %v2101
        %v2132 = vpack.c.b16 %v2104, %v2103
        %v2133 = vpack.c.b16 %v2106, %v2105
        %v2134 = vpack.c.b16 %v2108, %v2107
        %v2135 = vpack.c.b16 %v2110, %v2109
        %v2136 = vpack.c.b16 %v2112, %v2111
        %v2137 = vpack.c.b16 %v2114, %v2113
        %v2138 = vpack.c.b16 %v2116, %v2115
        %v2139 = vpack.c.b16 %v2118, %v2117
        %v2140 = vpack.c.b16 %v2120, %v2119
        %v2141 = vpack.c.b16 %v2122, %v2121
        %v2142 = vpack.c.b16 %v2124, %v2123
        %v2143 = vpack.c.b16 %v2126, %v2125
        %v2144 = vpack.c.b16 %v2128, %v2127
        %2145 = vrot.lane.b32.xlu0 %v2129, 4
        %v2146 = vpop.permute.xlu0 %2145
        %2147 = vrot.lane.b32.xlu0 %v2130, 4
        %v2148 = vpop.permute.xlu0 %2147
        %2149 = vrot.lane.b32.xlu0 %v2131, 4
        %v2150 = vpop.permute.xlu0 %2149
        %2151 = vrot.lane.b32.xlu0 %v2132, 4
        %v2152 = vpop.permute.xlu0 %2151
        %2153 = vrot.lane.b32.xlu0 %v2133, 4
        %v2154 = vpop.permute.xlu0 %2153
        %2155 = vrot.lane.b32.xlu0 %v2134, 4
        %v2156 = vpop.permute.xlu0 %2155
        %2157 = vrot.lane.b32.xlu0 %v2135, 4
        %v2158 = vpop.permute.xlu0 %2157
        %2159 = vrot.lane.b32.xlu0 %v2136, 4
        %v2160 = vpop.permute.xlu0 %2159
        %2161 = vrot.lane.b32.xlu0 %v2137, 4
        %v2162 = vpop.permute.xlu0 %2161
        %2163 = vrot.lane.b32.xlu0 %v2138, 4
        %v2164 = vpop.permute.xlu0 %2163
        %2165 = vrot.lane.b32.xlu0 %v2139, 4
        %v2166 = vpop.permute.xlu0 %2165
        %2167 = vrot.lane.b32.xlu0 %v2140, 4
        %v2168 = vpop.permute.xlu0 %2167
        %2169 = vrot.lane.b32.xlu0 %v2141, 4
        %v2170 = vpop.permute.xlu0 %2169
        %2171 = vrot.lane.b32.xlu0 %v2142, 4
        %v2172 = vpop.permute.xlu0 %2171
        %2173 = vrot.lane.b32.xlu0 %v2143, 4
        %v2174 = vpop.permute.xlu0 %2173
        %2175 = vrot.lane.b32.xlu0 %v2144, 4
        %v2176 = vpop.permute.xlu0 %2175
        %v2177 = vunpack.c.l.b16 %v706
        %v2178 = vunpack.c.l.b16 %v709
        %v2179 = vunpack.c.l.b16 %v713
        %v2180 = vunpack.c.l.b16 %v716
        %v2181 = vunpack.c.l.b16 %v720
        %v2182 = vunpack.c.l.b16 %v723
        %v2183 = vunpack.c.l.b16 %v727
        %v2184 = vunpack.c.l.b16 %v730
        %v2185 = vunpack.c.l.b16 %v734
        %v2186 = vunpack.c.l.b16 %v737
        %v2187 = vunpack.c.l.b16 %v741
        %v2188 = vunpack.c.l.b16 %v744
        %v2189 = vunpack.c.l.b16 %v748
        %v2190 = vunpack.c.l.b16 %v751
        %v2191 = vunpack.c.l.b16 %v755
        %v2192 = vunpack.c.l.b16 %v758
        %v2193 = vunpack.c.l.b16 %v762
        %v2194 = vunpack.c.l.b16 %v765
        %v2195 = vunpack.c.l.b16 %v769
        %v2196 = vunpack.c.l.b16 %v772
        %v2197 = vunpack.c.l.b16 %v776
        %v2198 = vunpack.c.l.b16 %v779
        %v2199 = vunpack.c.l.b16 %v783
        %v2200 = vunpack.c.l.b16 %v786
        %v2201 = vunpack.c.l.b16 %v790
        %v2202 = vunpack.c.l.b16 %v793
        %v2203 = vunpack.c.l.b16 %v797
        %v2204 = vunpack.c.l.b16 %v800
        %v2205 = vunpack.c.l.b16 %v804
        %v2206 = vunpack.c.l.b16 %v807
        %v2207 = vunpack.c.l.b16 %v811
        %v2208 = vunpack.c.l.b16 %v814
        %v2209 = vpack.c.b16 %v2178, %v2177
        %v2210 = vpack.c.b16 %v2180, %v2179
        %v2211 = vpack.c.b16 %v2182, %v2181
        %v2212 = vpack.c.b16 %v2184, %v2183
        %v2213 = vpack.c.b16 %v2186, %v2185
        %v2214 = vpack.c.b16 %v2188, %v2187
        %v2215 = vpack.c.b16 %v2190, %v2189
        %v2216 = vpack.c.b16 %v2192, %v2191
        %v2217 = vpack.c.b16 %v2194, %v2193
        %v2218 = vpack.c.b16 %v2196, %v2195
        %v2219 = vpack.c.b16 %v2198, %v2197
        %v2220 = vpack.c.b16 %v2200, %v2199
        %v2221 = vpack.c.b16 %v2202, %v2201
        %v2222 = vpack.c.b16 %v2204, %v2203
        %v2223 = vpack.c.b16 %v2206, %v2205
        %v2224 = vpack.c.b16 %v2208, %v2207
        %2225 = vrot.lane.b32.xlu0 %v2209, 8
        %v2226 = vpop.permute.xlu0 %2225
        %2227 = vrot.lane.b32.xlu0 %v2210, 8
        %v2228 = vpop.permute.xlu0 %2227
        %2229 = vrot.lane.b32.xlu0 %v2211, 8
        %v2230 = vpop.permute.xlu0 %2229
        %2231 = vrot.lane.b32.xlu0 %v2212, 8
        %v2232 = vpop.permute.xlu0 %2231
        %2233 = vrot.lane.b32.xlu0 %v2213, 8
        %v2234 = vpop.permute.xlu0 %2233
        %2235 = vrot.lane.b32.xlu0 %v2214, 8
        %v2236 = vpop.permute.xlu0 %2235
        %2237 = vrot.lane.b32.xlu0 %v2215, 8
        %v2238 = vpop.permute.xlu0 %2237
        %2239 = vrot.lane.b32.xlu0 %v2216, 8
        %v2240 = vpop.permute.xlu0 %2239
        %2241 = vrot.lane.b32.xlu0 %v2217, 8
        %v2242 = vpop.permute.xlu0 %2241
        %2243 = vrot.lane.b32.xlu0 %v2218, 8
        %v2244 = vpop.permute.xlu0 %2243
        %2245 = vrot.lane.b32.xlu0 %v2219, 8
        %v2246 = vpop.permute.xlu0 %2245
        %2247 = vrot.lane.b32.xlu0 %v2220, 8
        %v2248 = vpop.permute.xlu0 %2247
        %2249 = vrot.lane.b32.xlu0 %v2221, 8
        %v2250 = vpop.permute.xlu0 %2249
        %2251 = vrot.lane.b32.xlu0 %v2222, 8
        %v2252 = vpop.permute.xlu0 %2251
        %2253 = vrot.lane.b32.xlu0 %v2223, 8
        %v2254 = vpop.permute.xlu0 %2253
        %2255 = vrot.lane.b32.xlu0 %v2224, 8
        %v2256 = vpop.permute.xlu0 %2255
        %v2273 = vunpack.c.l.b16 %v816
        %v2274 = vunpack.c.l.b16 %v817
        %v2275 = vunpack.c.l.b16 %v818
        %v2276 = vunpack.c.l.b16 %v819
        %v2277 = vunpack.c.l.b16 %v820
        %v2278 = vunpack.c.l.b16 %v821
        %v2279 = vunpack.c.l.b16 %v822
        %v2280 = vunpack.c.l.b16 %v823
        %v2281 = vunpack.c.l.b16 %v824
        %v2282 = vunpack.c.l.b16 %v825
        %v2283 = vunpack.c.l.b16 %v826
        %v2284 = vunpack.c.l.b16 %v827
        %v2285 = vunpack.c.l.b16 %v828
        %v2286 = vunpack.c.l.b16 %v829
        %v2287 = vunpack.c.l.b16 %v830
        %v2288 = vunpack.c.l.b16 %v831
        %v2289 = vunpack.c.l.b16 %v832
        %v2290 = vunpack.c.l.b16 %v833
        %v2291 = vunpack.c.l.b16 %v834
        %v2292 = vunpack.c.l.b16 %v835
        %v2293 = vunpack.c.l.b16 %v836
        %v2294 = vunpack.c.l.b16 %v837
        %v2295 = vunpack.c.l.b16 %v838
        %v2296 = vunpack.c.l.b16 %v839
        %v2297 = vunpack.c.l.b16 %v840
        %v2298 = vunpack.c.l.b16 %v841
        %v2299 = vunpack.c.l.b16 %v842
        %v2300 = vunpack.c.l.b16 %v843
        %v2301 = vunpack.c.l.b16 %v844
        %v2302 = vunpack.c.l.b16 %v845
        %v2303 = vunpack.c.l.b16 %v846
        %v2304 = vunpack.c.l.b16 %v847
        %v2305 = vpack.c.b16 %v2274, %v2273
        %v2306 = vpack.c.b16 %v2276, %v2275
        %v2307 = vpack.c.b16 %v2278, %v2277
        %v2308 = vpack.c.b16 %v2280, %v2279
        %v2309 = vpack.c.b16 %v2282, %v2281
        %v2310 = vpack.c.b16 %v2284, %v2283
        %v2311 = vpack.c.b16 %v2286, %v2285
        %v2312 = vpack.c.b16 %v2288, %v2287
        %v2313 = vpack.c.b16 %v2290, %v2289
        %v2314 = vpack.c.b16 %v2292, %v2291
        %v2315 = vpack.c.b16 %v2294, %v2293
        %v2316 = vpack.c.b16 %v2296, %v2295
        %v2317 = vpack.c.b16 %v2298, %v2297
        %v2318 = vpack.c.b16 %v2300, %v2299
        %v2319 = vpack.c.b16 %v2302, %v2301
        %v2320 = vpack.c.b16 %v2304, %v2303
        %2321 = vrot.lane.b32.xlu0 %v2305, 12
        %v2322 = vpop.permute.xlu0 %2321
        %2323 = vrot.lane.b32.xlu0 %v2306, 12
        %v2324 = vpop.permute.xlu0 %2323
        %2325 = vrot.lane.b32.xlu0 %v2307, 12
        %v2326 = vpop.permute.xlu0 %2325
        %2327 = vrot.lane.b32.xlu0 %v2308, 12
        %v2328 = vpop.permute.xlu0 %2327
        %2329 = vrot.lane.b32.xlu0 %v2309, 12
        %v2330 = vpop.permute.xlu0 %2329
        %2331 = vrot.lane.b32.xlu0 %v2310, 12
        %v2332 = vpop.permute.xlu0 %2331
        %2333 = vrot.lane.b32.xlu0 %v2311, 12
        %v2334 = vpop.permute.xlu0 %2333
        %2335 = vrot.lane.b32.xlu0 %v2312, 12
        %v2336 = vpop.permute.xlu0 %2335
        %2337 = vrot.lane.b32.xlu0 %v2313, 12
        %v2338 = vpop.permute.xlu0 %2337
        %2339 = vrot.lane.b32.xlu0 %v2314, 12
        %v2340 = vpop.permute.xlu0 %2339
        %2341 = vrot.lane.b32.xlu0 %v2315, 12
        %v2342 = vpop.permute.xlu0 %2341
        %2343 = vrot.lane.b32.xlu0 %v2316, 12
        %v2344 = vpop.permute.xlu0 %2343
        %2345 = vrot.lane.b32.xlu0 %v2317, 12
        %v2346 = vpop.permute.xlu0 %2345
        %2347 = vrot.lane.b32.xlu0 %v2318, 12
        %v2348 = vpop.permute.xlu0 %2347
        %2349 = vrot.lane.b32.xlu0 %v2319, 12
        %v2350 = vpop.permute.xlu0 %2349
        %2351 = vrot.lane.b32.xlu0 %v2320, 12
        %v2352 = vpop.permute.xlu0 %2351
        %v2353 = vunpack.c.l.b16 %v877
        %v2354 = vunpack.c.l.b16 %v887
        %v2355 = vunpack.c.l.b16 %v901
        %v2356 = vunpack.c.l.b16 %v911
        %v2357 = vunpack.c.l.b16 %v925
        %v2358 = vunpack.c.l.b16 %v935
        %v2359 = vunpack.c.l.b16 %v949
        %v2360 = vunpack.c.l.b16 %v959
        %v2361 = vunpack.c.l.b16 %v973
        %v2362 = vunpack.c.l.b16 %v983
        %v2363 = vunpack.c.l.b16 %v997
        %v2364 = vunpack.c.l.b16 %v1007
        %v2365 = vunpack.c.l.b16 %v1021
        %v2366 = vunpack.c.l.b16 %v1031
        %v2367 = vunpack.c.l.b16 %v1045
        %v2368 = vunpack.c.l.b16 %v1055
        %v2369 = vunpack.c.l.b16 %v1069
        %v2370 = vunpack.c.l.b16 %v1079
        %v2371 = vunpack.c.l.b16 %v1093
        %v2372 = vunpack.c.l.b16 %v1103
        %v2373 = vunpack.c.l.b16 %v1117
        %v2374 = vunpack.c.l.b16 %v1127
        %v2375 = vunpack.c.l.b16 %v1141
        %v2376 = vunpack.c.l.b16 %v1151
        %v2377 = vunpack.c.l.b16 %v1165
        %v2378 = vunpack.c.l.b16 %v1175
        %v2379 = vunpack.c.l.b16 %v1189
        %v2380 = vunpack.c.l.b16 %v1199
        %v2381 = vunpack.c.l.b16 %v1213
        %v2382 = vunpack.c.l.b16 %v1223
        %v2383 = vunpack.c.l.b16 %v1237
        %v2384 = vunpack.c.l.b16 %v1247
        %v2385 = vpack.c.b16 %v2354, %v2353
        %v2386 = vpack.c.b16 %v2356, %v2355
        %v2387 = vpack.c.b16 %v2358, %v2357
        %v2388 = vpack.c.b16 %v2360, %v2359
        %v2389 = vpack.c.b16 %v2362, %v2361
        %v2390 = vpack.c.b16 %v2364, %v2363
        %v2391 = vpack.c.b16 %v2366, %v2365
        %v2392 = vpack.c.b16 %v2368, %v2367
        %v2393 = vpack.c.b16 %v2370, %v2369
        %v2394 = vpack.c.b16 %v2372, %v2371
        %v2395 = vpack.c.b16 %v2374, %v2373
        %v2396 = vpack.c.b16 %v2376, %v2375
        %v2397 = vpack.c.b16 %v2378, %v2377
        %v2398 = vpack.c.b16 %v2380, %v2379
        %v2399 = vpack.c.b16 %v2382, %v2381
        %v2400 = vpack.c.b16 %v2384, %v2383
        %2401 = vrot.lane.b32.xlu0 %v2385, 16
        %v2402 = vpop.permute.xlu0 %2401
        %2403 = vrot.lane.b32.xlu0 %v2386, 16
        %v2404 = vpop.permute.xlu0 %2403
        %2405 = vrot.lane.b32.xlu0 %v2387, 16
        %v2406 = vpop.permute.xlu0 %2405
        %2407 = vrot.lane.b32.xlu0 %v2388, 16
        %v2408 = vpop.permute.xlu0 %2407
        %2409 = vrot.lane.b32.xlu0 %v2389, 16
        %v2410 = vpop.permute.xlu0 %2409
        %2411 = vrot.lane.b32.xlu0 %v2390, 16
        %v2412 = vpop.permute.xlu0 %2411
        %2413 = vrot.lane.b32.xlu0 %v2391, 16
        %v2414 = vpop.permute.xlu0 %2413
        %2415 = vrot.lane.b32.xlu0 %v2392, 16
        %v2416 = vpop.permute.xlu0 %2415
        %2417 = vrot.lane.b32.xlu0 %v2393, 16
        %v2418 = vpop.permute.xlu0 %2417
        %2419 = vrot.lane.b32.xlu0 %v2394, 16
        %v2420 = vpop.permute.xlu0 %2419
        %2421 = vrot.lane.b32.xlu0 %v2395, 16
        %v2422 = vpop.permute.xlu0 %2421
        %2423 = vrot.lane.b32.xlu0 %v2396, 16
        %v2424 = vpop.permute.xlu0 %2423
        %2425 = vrot.lane.b32.xlu0 %v2397, 16
        %v2426 = vpop.permute.xlu0 %2425
        %2427 = vrot.lane.b32.xlu0 %v2398, 16
        %v2428 = vpop.permute.xlu0 %2427
        %2429 = vrot.lane.b32.xlu0 %v2399, 16
        %v2430 = vpop.permute.xlu0 %2429
        %2431 = vrot.lane.b32.xlu0 %v2400, 16
        %v2432 = vpop.permute.xlu0 %2431
        %v2433 = vunpack.c.l.b16 %v1315
        %v2434 = vunpack.c.l.b16 %v1318
        %v2435 = vunpack.c.l.b16 %v1322
        %v2436 = vunpack.c.l.b16 %v1325
        %v2437 = vunpack.c.l.b16 %v1329
        %v2438 = vunpack.c.l.b16 %v1332
        %v2439 = vunpack.c.l.b16 %v1336
        %v2440 = vunpack.c.l.b16 %v1339
        %v2441 = vunpack.c.l.b16 %v1343
        %v2442 = vunpack.c.l.b16 %v1346
        %v2443 = vunpack.c.l.b16 %v1350
        %v2444 = vunpack.c.l.b16 %v1353
        %v2445 = vunpack.c.l.b16 %v1357
        %v2446 = vunpack.c.l.b16 %v1360
        %v2447 = vunpack.c.l.b16 %v1364
        %v2448 = vunpack.c.l.b16 %v1367
        %v2449 = vunpack.c.l.b16 %v1371
        %v2450 = vunpack.c.l.b16 %v1374
        %v2451 = vunpack.c.l.b16 %v1378
        %v2452 = vunpack.c.l.b16 %v1381
        %v2453 = vunpack.c.l.b16 %v1385
        %v2454 = vunpack.c.l.b16 %v1388
        %v2455 = vunpack.c.l.b16 %v1392
        %v2456 = vunpack.c.l.b16 %v1395
        %v2457 = vunpack.c.l.b16 %v1399
        %v2458 = vunpack.c.l.b16 %v1402
        %v2459 = vunpack.c.l.b16 %v1406
        %v2460 = vunpack.c.l.b16 %v1409
        %v2461 = vunpack.c.l.b16 %v1413
        %v2462 = vunpack.c.l.b16 %v1416
        %v2463 = vunpack.c.l.b16 %v1420
        %v2464 = vunpack.c.l.b16 %v1423
        %v2465 = vpack.c.b16 %v2434, %v2433
        %v2466 = vpack.c.b16 %v2436, %v2435
        %v2467 = vpack.c.b16 %v2438, %v2437
        %v2468 = vpack.c.b16 %v2440, %v2439
        %v2469 = vpack.c.b16 %v2442, %v2441
        %v2470 = vpack.c.b16 %v2444, %v2443
        %v2471 = vpack.c.b16 %v2446, %v2445
        %v2472 = vpack.c.b16 %v2448, %v2447
        %v2473 = vpack.c.b16 %v2450, %v2449
        %v2474 = vpack.c.b16 %v2452, %v2451
        %v2475 = vpack.c.b16 %v2454, %v2453
        %v2476 = vpack.c.b16 %v2456, %v2455
        %v2477 = vpack.c.b16 %v2458, %v2457
        %v2478 = vpack.c.b16 %v2460, %v2459
        %v2479 = vpack.c.b16 %v2462, %v2461
        %v2480 = vpack.c.b16 %v2464, %v2463
        %2481 = vrot.lane.b32.xlu0 %v2465, 20
        %v2482 = vpop.permute.xlu0 %2481
        %2483 = vrot.lane.b32.xlu0 %v2466, 20
        %v2484 = vpop.permute.xlu0 %2483
        %2485 = vrot.lane.b32.xlu0 %v2467, 20
        %v2486 = vpop.permute.xlu0 %2485
        %2487 = vrot.lane.b32.xlu0 %v2468, 20
        %v2488 = vpop.permute.xlu0 %2487
        %2489 = vrot.lane.b32.xlu0 %v2469, 20
        %v2490 = vpop.permute.xlu0 %2489
        %2491 = vrot.lane.b32.xlu0 %v2470, 20
        %v2492 = vpop.permute.xlu0 %2491
        %2493 = vrot.lane.b32.xlu0 %v2471, 20
        %v2494 = vpop.permute.xlu0 %2493
        %2495 = vrot.lane.b32.xlu0 %v2472, 20
        %v2496 = vpop.permute.xlu0 %2495
        %2497 = vrot.lane.b32.xlu0 %v2473, 20
        %v2498 = vpop.permute.xlu0 %2497
        %2499 = vrot.lane.b32.xlu0 %v2474, 20
        %v2500 = vpop.permute.xlu0 %2499
        %2501 = vrot.lane.b32.xlu0 %v2475, 20
        %v2502 = vpop.permute.xlu0 %2501
        %2503 = vrot.lane.b32.xlu0 %v2476, 20
        %v2504 = vpop.permute.xlu0 %2503
        %2505 = vrot.lane.b32.xlu0 %v2477, 20
        %v2506 = vpop.permute.xlu0 %2505
        %2507 = vrot.lane.b32.xlu0 %v2478, 20
        %v2508 = vpop.permute.xlu0 %2507
        %2509 = vrot.lane.b32.xlu0 %v2479, 20
        %v2510 = vpop.permute.xlu0 %2509
        %2511 = vrot.lane.b32.xlu0 %v2480, 20
        %v2512 = vpop.permute.xlu0 %2511
        %v2529 = vunpack.c.l.b16 %v1425
        %v2530 = vunpack.c.l.b16 %v1426
        %v2531 = vunpack.c.l.b16 %v1427
        %v2532 = vunpack.c.l.b16 %v1428
        %v2533 = vunpack.c.l.b16 %v1429
        %v2534 = vunpack.c.l.b16 %v1430
        %v2535 = vunpack.c.l.b16 %v1431
        %v2536 = vunpack.c.l.b16 %v1432
        %v2537 = vunpack.c.l.b16 %v1433
        %v2538 = vunpack.c.l.b16 %v1434
        %v2539 = vunpack.c.l.b16 %v1435
        %v2540 = vunpack.c.l.b16 %v1436
        %v2541 = vunpack.c.l.b16 %v1437
        %v2542 = vunpack.c.l.b16 %v1438
        %v2543 = vunpack.c.l.b16 %v1439
        %v2544 = vunpack.c.l.b16 %v1440
        %v2545 = vunpack.c.l.b16 %v1441
        %v2546 = vunpack.c.l.b16 %v1442
        %v2547 = vunpack.c.l.b16 %v1443
        %v2548 = vunpack.c.l.b16 %v1444
        %v2549 = vunpack.c.l.b16 %v1445
        %v2550 = vunpack.c.l.b16 %v1446
        %v2551 = vunpack.c.l.b16 %v1447
        %v2552 = vunpack.c.l.b16 %v1448
        %v2553 = vunpack.c.l.b16 %v1449
        %v2554 = vunpack.c.l.b16 %v1450
        %v2555 = vunpack.c.l.b16 %v1451
        %v2556 = vunpack.c.l.b16 %v1452
        %v2557 = vunpack.c.l.b16 %v1453
        %v2558 = vunpack.c.l.b16 %v1454
        %v2559 = vunpack.c.l.b16 %v1455
        %v2560 = vunpack.c.l.b16 %v1456
        %v2561 = vpack.c.b16 %v2530, %v2529
        %v2562 = vpack.c.b16 %v2532, %v2531
        %v2563 = vpack.c.b16 %v2534, %v2533
        %v2564 = vpack.c.b16 %v2536, %v2535
        %v2565 = vpack.c.b16 %v2538, %v2537
        %v2566 = vpack.c.b16 %v2540, %v2539
        %v2567 = vpack.c.b16 %v2542, %v2541
        %v2568 = vpack.c.b16 %v2544, %v2543
        %v2569 = vpack.c.b16 %v2546, %v2545
        %v2570 = vpack.c.b16 %v2548, %v2547
        %v2571 = vpack.c.b16 %v2550, %v2549
        %v2572 = vpack.c.b16 %v2552, %v2551
        %v2573 = vpack.c.b16 %v2554, %v2553
        %v2574 = vpack.c.b16 %v2556, %v2555
        %v2575 = vpack.c.b16 %v2558, %v2557
        %v2576 = vpack.c.b16 %v2560, %v2559
        %2577 = vrot.lane.b32.xlu0 %v2561, 24
        %v2578 = vpop.permute.xlu0 %2577
        %2579 = vrot.lane.b32.xlu0 %v2562, 24
        %v2580 = vpop.permute.xlu0 %2579
        %2581 = vrot.lane.b32.xlu0 %v2563, 24
        %v2582 = vpop.permute.xlu0 %2581
        %2583 = vrot.lane.b32.xlu0 %v2564, 24
        %v2584 = vpop.permute.xlu0 %2583
        %2585 = vrot.lane.b32.xlu0 %v2565, 24
        %v2586 = vpop.permute.xlu0 %2585
        %2587 = vrot.lane.b32.xlu0 %v2566, 24
        %v2588 = vpop.permute.xlu0 %2587
        %2589 = vrot.lane.b32.xlu0 %v2567, 24
        %v2590 = vpop.permute.xlu0 %2589
        %2591 = vrot.lane.b32.xlu0 %v2568, 24
        %v2592 = vpop.permute.xlu0 %2591
        %2593 = vrot.lane.b32.xlu0 %v2569, 24
        %v2594 = vpop.permute.xlu0 %2593
        %2595 = vrot.lane.b32.xlu0 %v2570, 24
        %v2596 = vpop.permute.xlu0 %2595
        %2597 = vrot.lane.b32.xlu0 %v2571, 24
        %v2598 = vpop.permute.xlu0 %2597
        %2599 = vrot.lane.b32.xlu0 %v2572, 24
        %v2600 = vpop.permute.xlu0 %2599
        %2601 = vrot.lane.b32.xlu0 %v2573, 24
        %v2602 = vpop.permute.xlu0 %2601
        %2603 = vrot.lane.b32.xlu0 %v2574, 24
        %v2604 = vpop.permute.xlu0 %2603
        %2605 = vrot.lane.b32.xlu0 %v2575, 24
        %v2606 = vpop.permute.xlu0 %2605
        %2607 = vrot.lane.b32.xlu0 %v2576, 24
        %v2608 = vpop.permute.xlu0 %2607
        %v2609 = vunpack.c.l.b16 %v1486
        %v2610 = vunpack.c.l.b16 %v1496
        %v2611 = vunpack.c.l.b16 %v1510
        %v2612 = vunpack.c.l.b16 %v1520
        %v2613 = vunpack.c.l.b16 %v1534
        %v2614 = vunpack.c.l.b16 %v1544
        %v2615 = vunpack.c.l.b16 %v1558
        %v2616 = vunpack.c.l.b16 %v1568
        %v2617 = vunpack.c.l.b16 %v1582
        %v2618 = vunpack.c.l.b16 %v1592
        %v2619 = vunpack.c.l.b16 %v1606
        %v2620 = vunpack.c.l.b16 %v1616
        %v2621 = vunpack.c.l.b16 %v1630
        %v2622 = vunpack.c.l.b16 %v1640
        %v2623 = vunpack.c.l.b16 %v1654
        %v2624 = vunpack.c.l.b16 %v1664
        %v2625 = vunpack.c.l.b16 %v1678
        %v2626 = vunpack.c.l.b16 %v1688
        %v2627 = vunpack.c.l.b16 %v1702
        %v2628 = vunpack.c.l.b16 %v1712
        %v2629 = vunpack.c.l.b16 %v1726
        %v2630 = vunpack.c.l.b16 %v1736
        %v2631 = vunpack.c.l.b16 %v1750
        %v2632 = vunpack.c.l.b16 %v1760
        %v2633 = vunpack.c.l.b16 %v1774
        %v2634 = vunpack.c.l.b16 %v1784
        %v2635 = vunpack.c.l.b16 %v1798
        %v2636 = vunpack.c.l.b16 %v1808
        %v2637 = vunpack.c.l.b16 %v1822
        %v2638 = vunpack.c.l.b16 %v1832
        %v2639 = vunpack.c.l.b16 %v1846
        %v2640 = vunpack.c.l.b16 %v1856
        %v2641 = vpack.c.b16 %v2610, %v2609
        %v2642 = vpack.c.b16 %v2612, %v2611
        %v2643 = vpack.c.b16 %v2614, %v2613
        %v2644 = vpack.c.b16 %v2616, %v2615
        %v2645 = vpack.c.b16 %v2618, %v2617
        %v2646 = vpack.c.b16 %v2620, %v2619
        %v2647 = vpack.c.b16 %v2622, %v2621
        %v2648 = vpack.c.b16 %v2624, %v2623
        %v2649 = vpack.c.b16 %v2626, %v2625
        %v2650 = vpack.c.b16 %v2628, %v2627
        %v2651 = vpack.c.b16 %v2630, %v2629
        %v2652 = vpack.c.b16 %v2632, %v2631
        %v2653 = vpack.c.b16 %v2634, %v2633
        %v2654 = vpack.c.b16 %v2636, %v2635
        %v2655 = vpack.c.b16 %v2638, %v2637
        %v2656 = vpack.c.b16 %v2640, %v2639
        %2657 = vrot.lane.b32.xlu0 %v2641, 28
        %v2658 = vpop.permute.xlu0 %2657
        %2659 = vrot.lane.b32.xlu0 %v2642, 28
        %v2660 = vpop.permute.xlu0 %2659
        %2661 = vrot.lane.b32.xlu0 %v2643, 28
        %v2662 = vpop.permute.xlu0 %2661
        %2663 = vrot.lane.b32.xlu0 %v2644, 28
        %v2664 = vpop.permute.xlu0 %2663
        %2665 = vrot.lane.b32.xlu0 %v2645, 28
        %v2666 = vpop.permute.xlu0 %2665
        %2667 = vrot.lane.b32.xlu0 %v2646, 28
        %v2668 = vpop.permute.xlu0 %2667
        %2669 = vrot.lane.b32.xlu0 %v2647, 28
        %v2670 = vpop.permute.xlu0 %2669
        %2671 = vrot.lane.b32.xlu0 %v2648, 28
        %v2672 = vpop.permute.xlu0 %2671
        %2673 = vrot.lane.b32.xlu0 %v2649, 28
        %v2674 = vpop.permute.xlu0 %2673
        %2675 = vrot.lane.b32.xlu0 %v2650, 28
        %v2676 = vpop.permute.xlu0 %2675
        %2677 = vrot.lane.b32.xlu0 %v2651, 28
        %v2678 = vpop.permute.xlu0 %2677
        %2679 = vrot.lane.b32.xlu0 %v2652, 28
        %v2680 = vpop.permute.xlu0 %2679
        %2681 = vrot.lane.b32.xlu0 %v2653, 28
        %v2682 = vpop.permute.xlu0 %2681
        %2683 = vrot.lane.b32.xlu0 %v2654, 28
        %v2684 = vpop.permute.xlu0 %2683
        %2685 = vrot.lane.b32.xlu0 %v2655, 28
        %v2686 = vpop.permute.xlu0 %2685
        %2687 = vrot.lane.b32.xlu0 %v2656, 28
        %v2688 = vpop.permute.xlu0 %2687
        %v2689 = vunpack.c.l.b16 %v1924
        %v2690 = vunpack.c.l.b16 %v1927
        %v2691 = vunpack.c.l.b16 %v1931
        %v2692 = vunpack.c.l.b16 %v1934
        %v2693 = vunpack.c.l.b16 %v1938
        %v2694 = vunpack.c.l.b16 %v1941
        %v2695 = vunpack.c.l.b16 %v1945
        %v2696 = vunpack.c.l.b16 %v1948
        %v2697 = vunpack.c.l.b16 %v1952
        %v2698 = vunpack.c.l.b16 %v1955
        %v2699 = vunpack.c.l.b16 %v1959
        %v2700 = vunpack.c.l.b16 %v1962
        %v2701 = vunpack.c.l.b16 %v1966
        %v2702 = vunpack.c.l.b16 %v1969
        %v2703 = vunpack.c.l.b16 %v1973
        %v2704 = vunpack.c.l.b16 %v1976
        %v2705 = vunpack.c.l.b16 %v1980
        %v2706 = vunpack.c.l.b16 %v1983
        %v2707 = vunpack.c.l.b16 %v1987
        %v2708 = vunpack.c.l.b16 %v1990
        %v2709 = vunpack.c.l.b16 %v1994
        %v2710 = vunpack.c.l.b16 %v1997
        %v2711 = vunpack.c.l.b16 %v2001
        %v2712 = vunpack.c.l.b16 %v2004
        %v2713 = vunpack.c.l.b16 %v2008
        %v2714 = vunpack.c.l.b16 %v2011
        %v2715 = vunpack.c.l.b16 %v2015
        %v2716 = vunpack.c.l.b16 %v2018
        %v2717 = vunpack.c.l.b16 %v2022
        %v2718 = vunpack.c.l.b16 %v2025
        %v2719 = vunpack.c.l.b16 %v2029
        %v2720 = vunpack.c.l.b16 %v2032
        %v2721 = vpack.c.b16 %v2690, %v2689
        %v2722 = vpack.c.b16 %v2692, %v2691
        %v2723 = vpack.c.b16 %v2694, %v2693
        %v2724 = vpack.c.b16 %v2696, %v2695
        %v2725 = vpack.c.b16 %v2698, %v2697
        %v2726 = vpack.c.b16 %v2700, %v2699
        %v2727 = vpack.c.b16 %v2702, %v2701
        %v2728 = vpack.c.b16 %v2704, %v2703
        %v2729 = vpack.c.b16 %v2706, %v2705
        %v2730 = vpack.c.b16 %v2708, %v2707
        %v2731 = vpack.c.b16 %v2710, %v2709
        %v2732 = vpack.c.b16 %v2712, %v2711
        %v2733 = vpack.c.b16 %v2714, %v2713
        %v2734 = vpack.c.b16 %v2716, %v2715
        %v2735 = vpack.c.b16 %v2718, %v2717
        %v2736 = vpack.c.b16 %v2720, %v2719
        %2737 = vrot.lane.b32.xlu0 %v2721, 32
        %v2738 = vpop.permute.xlu0 %2737
        %2739 = vrot.lane.b32.xlu0 %v2722, 32
        %v2740 = vpop.permute.xlu0 %2739
        %2741 = vrot.lane.b32.xlu0 %v2723, 32
        %v2742 = vpop.permute.xlu0 %2741
        %2743 = vrot.lane.b32.xlu0 %v2724, 32
        %v2744 = vpop.permute.xlu0 %2743
        %2745 = vrot.lane.b32.xlu0 %v2725, 32
        %v2746 = vpop.permute.xlu0 %2745
        %2747 = vrot.lane.b32.xlu0 %v2726, 32
        %v2748 = vpop.permute.xlu0 %2747
        %2749 = vrot.lane.b32.xlu0 %v2727, 32
        %v2750 = vpop.permute.xlu0 %2749
        %2751 = vrot.lane.b32.xlu0 %v2728, 32
        %v2752 = vpop.permute.xlu0 %2751
        %2753 = vrot.lane.b32.xlu0 %v2729, 32
        %v2754 = vpop.permute.xlu0 %2753
        %2755 = vrot.lane.b32.xlu0 %v2730, 32
        %v2756 = vpop.permute.xlu0 %2755
        %2757 = vrot.lane.b32.xlu0 %v2731, 32
        %v2758 = vpop.permute.xlu0 %2757
        %2759 = vrot.lane.b32.xlu0 %v2732, 32
        %v2760 = vpop.permute.xlu0 %2759
        %2761 = vrot.lane.b32.xlu0 %v2733, 32
        %v2762 = vpop.permute.xlu0 %2761
        %2763 = vrot.lane.b32.xlu0 %v2734, 32
        %v2764 = vpop.permute.xlu0 %2763
        %2765 = vrot.lane.b32.xlu0 %v2735, 32
        %v2766 = vpop.permute.xlu0 %2765
        %2767 = vrot.lane.b32.xlu0 %v2736, 32
        %v2768 = vpop.permute.xlu0 %2767
        %vm2769 = vcmask 31744
        %v2772 = vsel %vm2769, %v2081, %v2146
        %v2775 = vsel %vm2769, %v2082, %v2148
        %v2778 = vsel %vm2769, %v2083, %v2150
        %v2781 = vsel %vm2769, %v2084, %v2152
        %v2784 = vsel %vm2769, %v2085, %v2154
        %v2787 = vsel %vm2769, %v2086, %v2156
        %v2790 = vsel %vm2769, %v2087, %v2158
        %v2793 = vsel %vm2769, %v2088, %v2160
        %v2796 = vsel %vm2769, %v2089, %v2162
        %v2799 = vsel %vm2769, %v2090, %v2164
        %v2802 = vsel %vm2769, %v2091, %v2166
        %v2805 = vsel %vm2769, %v2092, %v2168
        %v2808 = vsel %vm2769, %v2093, %v2170
        %v2811 = vsel %vm2769, %v2094, %v2172
        %v2814 = vsel %vm2769, %v2095, %v2174
        %v2817 = vsel %vm2769, %v2096, %v2176
        %vm2818 = vcmask 64512
        %v2820 = vsel %vm2818, %v2772, %v2226
        %v2822 = vsel %vm2818, %v2775, %v2228
        %v2824 = vsel %vm2818, %v2778, %v2230
        %v2826 = vsel %vm2818, %v2781, %v2232
        %v2828 = vsel %vm2818, %v2784, %v2234
        %v2830 = vsel %vm2818, %v2787, %v2236
        %v2832 = vsel %vm2818, %v2790, %v2238
        %v2834 = vsel %vm2818, %v2793, %v2240
        %v2836 = vsel %vm2818, %v2796, %v2242
        %v2838 = vsel %vm2818, %v2799, %v2244
        %v2840 = vsel %vm2818, %v2802, %v2246
        %v2842 = vsel %vm2818, %v2805, %v2248
        %v2844 = vsel %vm2818, %v2808, %v2250
        %v2846 = vsel %vm2818, %v2811, %v2252
        %v2848 = vsel %vm2818, %v2814, %v2254
        %v2850 = vsel %vm2818, %v2817, %v2256
        %vm2851 = vcmask 97280
        %v2853 = vsel %vm2851, %v2820, %v2322
        %v2855 = vsel %vm2851, %v2822, %v2324
        %v2857 = vsel %vm2851, %v2824, %v2326
        %v2859 = vsel %vm2851, %v2826, %v2328
        %v2861 = vsel %vm2851, %v2828, %v2330
        %v2863 = vsel %vm2851, %v2830, %v2332
        %v2865 = vsel %vm2851, %v2832, %v2334
        %v2867 = vsel %vm2851, %v2834, %v2336
        %v2869 = vsel %vm2851, %v2836, %v2338
        %v2871 = vsel %vm2851, %v2838, %v2340
        %v2873 = vsel %vm2851, %v2840, %v2342
        %v2875 = vsel %vm2851, %v2842, %v2344
        %v2877 = vsel %vm2851, %v2844, %v2346
        %v2879 = vsel %vm2851, %v2846, %v2348
        %v2881 = vsel %vm2851, %v2848, %v2350
        %v2883 = vsel %vm2851, %v2850, %v2352
        %vm2884 = vcmask 130048
        %v2886 = vsel %vm2884, %v2853, %v2402
        %v2888 = vsel %vm2884, %v2855, %v2404
        %v2890 = vsel %vm2884, %v2857, %v2406
        %v2892 = vsel %vm2884, %v2859, %v2408
        %v2894 = vsel %vm2884, %v2861, %v2410
        %v2896 = vsel %vm2884, %v2863, %v2412
        %v2898 = vsel %vm2884, %v2865, %v2414
        %v2900 = vsel %vm2884, %v2867, %v2416
        %v2902 = vsel %vm2884, %v2869, %v2418
        %v2904 = vsel %vm2884, %v2871, %v2420
        %v2906 = vsel %vm2884, %v2873, %v2422
        %v2908 = vsel %vm2884, %v2875, %v2424
        %v2910 = vsel %vm2884, %v2877, %v2426
        %v2912 = vsel %vm2884, %v2879, %v2428
        %v2914 = vsel %vm2884, %v2881, %v2430
        %v2916 = vsel %vm2884, %v2883, %v2432
        %vm2917 = vcmask 162816
        %v2919 = vsel %vm2917, %v2886, %v2482
        %v2921 = vsel %vm2917, %v2888, %v2484
        %v2923 = vsel %vm2917, %v2890, %v2486
        %v2925 = vsel %vm2917, %v2892, %v2488
        %v2927 = vsel %vm2917, %v2894, %v2490
        %v2929 = vsel %vm2917, %v2896, %v2492
        %v2931 = vsel %vm2917, %v2898, %v2494
        %v2933 = vsel %vm2917, %v2900, %v2496
        %v2935 = vsel %vm2917, %v2902, %v2498
        %v2937 = vsel %vm2917, %v2904, %v2500
        %v2939 = vsel %vm2917, %v2906, %v2502
        %v2941 = vsel %vm2917, %v2908, %v2504
        %v2943 = vsel %vm2917, %v2910, %v2506
        %v2945 = vsel %vm2917, %v2912, %v2508
        %v2947 = vsel %vm2917, %v2914, %v2510
        %v2949 = vsel %vm2917, %v2916, %v2512
        %vm2950 = vcmask 195584
        %v2952 = vsel %vm2950, %v2919, %v2578
        %v2954 = vsel %vm2950, %v2921, %v2580
        %v2956 = vsel %vm2950, %v2923, %v2582
        %v2958 = vsel %vm2950, %v2925, %v2584
        %v2960 = vsel %vm2950, %v2927, %v2586
        %v2962 = vsel %vm2950, %v2929, %v2588
        %v2964 = vsel %vm2950, %v2931, %v2590
        %v2966 = vsel %vm2950, %v2933, %v2592
        %v2968 = vsel %vm2950, %v2935, %v2594
        %v2970 = vsel %vm2950, %v2937, %v2596
        %v2972 = vsel %vm2950, %v2939, %v2598
        %v2974 = vsel %vm2950, %v2941, %v2600
        %v2976 = vsel %vm2950, %v2943, %v2602
        %v2978 = vsel %vm2950, %v2945, %v2604
        %v2980 = vsel %vm2950, %v2947, %v2606
        %v2982 = vsel %vm2950, %v2949, %v2608
        %vm2983 = vcmask 228352
        %v2985 = vsel %vm2983, %v2952, %v2658
        %v2987 = vsel %vm2983, %v2954, %v2660
        %v2989 = vsel %vm2983, %v2956, %v2662
        %v2991 = vsel %vm2983, %v2958, %v2664
        %v2993 = vsel %vm2983, %v2960, %v2666
        %v2995 = vsel %vm2983, %v2962, %v2668
        %v2997 = vsel %vm2983, %v2964, %v2670
        %v2999 = vsel %vm2983, %v2966, %v2672
        %v3001 = vsel %vm2983, %v2968, %v2674
        %v3003 = vsel %vm2983, %v2970, %v2676
        %v3005 = vsel %vm2983, %v2972, %v2678
        %v3007 = vsel %vm2983, %v2974, %v2680
        %v3009 = vsel %vm2983, %v2976, %v2682
        %v3011 = vsel %vm2983, %v2978, %v2684
        %v3013 = vsel %vm2983, %v2980, %v2686
        %v3015 = vsel %vm2983, %v2982, %v2688
        %vm3016 = vcmask 261120
        %v3018 = vsel %vm3016, %v2985, %v2738
        %v3020 = vsel %vm3016, %v2987, %v2740
        %v3022 = vsel %vm3016, %v2989, %v2742
        %v3024 = vsel %vm3016, %v2991, %v2744
        %v3026 = vsel %vm3016, %v2993, %v2746
        %v3028 = vsel %vm3016, %v2995, %v2748
        %v3030 = vsel %vm3016, %v2997, %v2750
        %v3032 = vsel %vm3016, %v2999, %v2752
        %v3034 = vsel %vm3016, %v3001, %v2754
        %v3036 = vsel %vm3016, %v3003, %v2756
        %v3038 = vsel %vm3016, %v3005, %v2758
        %v3040 = vsel %vm3016, %v3007, %v2760
        %v3042 = vsel %vm3016, %v3009, %v2762
        %v3044 = vsel %vm3016, %v3011, %v2764
        %v3046 = vsel %vm3016, %v3013, %v2766
        %v3048 = vsel %vm3016, %v3015, %v2768
        %v3049 = vld [vmem:[%s2] sm:$0xf]
        %v3050 = vld [vmem:[%s2 + $0x4] sm:$0xf]
        %v3051 = vld [vmem:[%s2 + $0x8] sm:$0xf]
        %v3052 = vld [vmem:[%s2 + $0xc] sm:$0xf]
        %v3053 = vld [vmem:[%s2 + $0x10] sm:$0x3]
        %v3054 = vld [vmem:[%s3] sm:$0x1]
        %v3056 = vlaneseq
        %v3057 = vshrl.u32 %v3056, 7
        %v3058 = vsub.s32 0, %v3057
        %v3059 = vrot.slane %v3054, %v3058
        %v3066 = vunpack.c.l.b16 %v3049
        %v3067 = vunpack.c.l.b16 %v3050
        %v3068 = vunpack.c.l.b16 %v3051
        %v3069 = vunpack.c.l.b16 %v3052
        %v3070 = vunpack.c.l.b16 %v3053
        %v3071 = vpack.c.b16 %v3067, %v3066
        %v3072 = vpack.c.b16 %v3069, %v3068
        %v3073 = vpack.c.b16 %v3070, %v3070
        %vm3076 = vcmask 293888
        %v3077 = vsel %vm3076, %v3018, 0
        %v3079 = vsel %vm3076, %v3020, 0
        %v3081 = vsel %vm3076, %v3022, 0
        %v3083 = vsel %vm3076, %v3024, 0
        %v3085 = vsel %vm3076, %v3026, 0
        %v3087 = vsel %vm3076, %v3028, 0
        %v3089 = vsel %vm3076, %v3030, 0
        %v3091 = vsel %vm3076, %v3032, 0
        %v3093 = vsel %vm3076, %v3034, 0
        %v3095 = vsel %vm3076, %v3036, 0
        %v3097 = vsel %vm3076, %v3038, 0
        %v3099 = vsel %vm3076, %v3040, 0
        %v3101 = vsel %vm3076, %v3042, 0
        %v3103 = vsel %vm3076, %v3044, 0
        %v3105 = vsel %vm3076, %v3046, 0
        %v3107 = vsel %vm3076, %v3048, 0
        %vm3109 = vcmask 1041408
        %v3111 = vsel %vm3109, %v3073, 0
        %3113 = vmatprep.subr.bf16.mxu0 0
        %3114 = vmatpush1.bf16.msra.mxu0 0
        %3115 = vmatprep.subr.bf16.mxu0 0
        %3116 = vmatpush1.bf16.msra.mxu0 0
        %3117 = vmatprep.subr.bf16.mxu0 0
        %3118 = vmatpush1.bf16.msra.mxu0 0
        %3119 = vmatprep.subr.bf16.mxu0 0
        %3120 = vmatpush1.bf16.msra.mxu0 0
        %3121 = vmatprep.subr.bf16.mxu0 0
        %3122 = vmatpush1.bf16.msra.mxu0 0
        %3123 = vmatprep.subr.bf16.mxu0 0
        %3124 = vmatpush1.bf16.msra.mxu0 %v3111
        %3125 = vmatprep.subr.bf16.mxu0 0
        %3126 = vmatpush1.bf16.msra.mxu0 %v3072
        %3127 = vmatprep.subr.bf16.mxu0 0
        %3128 = vmatpush1.bf16.msra.mxu0 %v3071
        %3129 = vmatprep.subr.bf16.mxu0 0
        %3130 = vmatpush2.bf16.msra.mxu0 0
        %3131 = vmatprep.subr.bf16.mxu0 0
        %3132 = vmatpush2.bf16.msra.mxu0 0
        %3133 = vmatprep.subr.bf16.mxu0 0
        %3134 = vmatpush2.bf16.msra.mxu0 0
        %3135 = vmatprep.subr.bf16.mxu0 0
        %3136 = vmatpush2.bf16.msra.mxu0 0
        %3137 = vmatprep.subr.bf16.mxu0 0
        %3138 = vmatpush2.bf16.msra.mxu0 0
        %3139 = vmatprep.subr.bf16.mxu0 0
        %3140 = vmatpush2.bf16.msra.mxu0 0
        %3141 = vmatprep.subr.bf16.mxu0 0
        %3142 = vmatpush2.bf16.msra.mxu0 0
        %3143 = vmatprep.subr.bf16.mxu0 0
        %3144 = vmatpush2.bf16.msra.mxu0 0
        %3145 = vmatprep.mubr.bf16.mxu0 0
        %3146 = vmatmul.mubr.bf16.gmra.mxu0 %v3077
        %v3147 = vpop.f32.mrf.mxu0
        %v3148 = vadd.f32 %v3059, %v3147
        %v3149 = vpop.f32.mrf.mxu0
        %v3150 = vpop.f32.mrf.mxu0
        %v3151 = vadd.f32 %v3059, %v3150
        %v3152 = vpop.f32.mrf.mxu0
        %3153 = vmatprep.mubr.bf16.mxu0 0
        %3154 = vmatmul.mubr.bf16.gmra.mxu0 %v3079
        %v3155 = vpop.f32.mrf.mxu0
        %v3156 = vadd.f32 %v3059, %v3155
        %v3157 = vpop.f32.mrf.mxu0
        %v3158 = vpop.f32.mrf.mxu0
        %v3159 = vadd.f32 %v3059, %v3158
        %v3160 = vpop.f32.mrf.mxu0
        %3161 = vmatprep.mubr.bf16.mxu0 0
        %3162 = vmatmul.mubr.bf16.gmra.mxu0 %v3081
        %v3163 = vpop.f32.mrf.mxu0
        %v3164 = vadd.f32 %v3059, %v3163
        %v3165 = vpop.f32.mrf.mxu0
        %v3166 = vpop.f32.mrf.mxu0
        %v3167 = vadd.f32 %v3059, %v3166
        %v3168 = vpop.f32.mrf.mxu0
        %3169 = vmatprep.mubr.bf16.mxu0 0
        %3170 = vmatmul.mubr.bf16.gmra.mxu0 %v3083
        %v3171 = vpop.f32.mrf.mxu0
        %v3172 = vadd.f32 %v3059, %v3171
        %v3173 = vpop.f32.mrf.mxu0
        %v3174 = vpop.f32.mrf.mxu0
        %v3175 = vadd.f32 %v3059, %v3174
        %v3176 = vpop.f32.mrf.mxu0
        %3177 = vmatprep.mubr.bf16.mxu0 0
        %3178 = vmatmul.mubr.bf16.gmra.mxu0 %v3085
        %v3179 = vpop.f32.mrf.mxu0
        %v3180 = vadd.f32 %v3059, %v3179
        %v3181 = vpop.f32.mrf.mxu0
        %v3182 = vpop.f32.mrf.mxu0
        %v3183 = vadd.f32 %v3059, %v3182
        %v3184 = vpop.f32.mrf.mxu0
        %3185 = vmatprep.mubr.bf16.mxu0 0
        %3186 = vmatmul.mubr.bf16.gmra.mxu0 %v3087
        %v3187 = vpop.f32.mrf.mxu0
        %v3188 = vadd.f32 %v3059, %v3187
        %v3189 = vpop.f32.mrf.mxu0
        %v3190 = vpop.f32.mrf.mxu0
        %v3191 = vadd.f32 %v3059, %v3190
        %v3192 = vpop.f32.mrf.mxu0
        %3193 = vmatprep.mubr.bf16.mxu0 0
        %3194 = vmatmul.mubr.bf16.gmra.mxu0 %v3089
        %v3195 = vpop.f32.mrf.mxu0
        %v3196 = vadd.f32 %v3059, %v3195
        %v3197 = vpop.f32.mrf.mxu0
        %v3198 = vpop.f32.mrf.mxu0
        %v3199 = vadd.f32 %v3059, %v3198
        %v3200 = vpop.f32.mrf.mxu0
        %3201 = vmatprep.mubr.bf16.mxu0 0
        %3202 = vmatmul.mubr.bf16.gmra.mxu0 %v3091
        %v3203 = vpop.f32.mrf.mxu0
        %v3204 = vadd.f32 %v3059, %v3203
        %v3205 = vpop.f32.mrf.mxu0
        %v3206 = vpop.f32.mrf.mxu0
        %v3207 = vadd.f32 %v3059, %v3206
        %v3208 = vpop.f32.mrf.mxu0
        %3209 = vmatprep.mubr.bf16.mxu0 0
        %3210 = vmatmul.mubr.bf16.gmra.mxu0 %v3093
        %v3211 = vpop.f32.mrf.mxu0
        %v3212 = vadd.f32 %v3059, %v3211
        %v3213 = vpop.f32.mrf.mxu0
        %v3214 = vpop.f32.mrf.mxu0
        %v3215 = vadd.f32 %v3059, %v3214
        %v3216 = vpop.f32.mrf.mxu0
        %3217 = vmatprep.mubr.bf16.mxu0 0
        %3218 = vmatmul.mubr.bf16.gmra.mxu0 %v3095
        %v3219 = vpop.f32.mrf.mxu0
        %v3220 = vadd.f32 %v3059, %v3219
        %v3221 = vpop.f32.mrf.mxu0
        %v3222 = vpop.f32.mrf.mxu0
        %v3223 = vadd.f32 %v3059, %v3222
        %v3224 = vpop.f32.mrf.mxu0
        %3225 = vmatprep.mubr.bf16.mxu0 0
        %3226 = vmatmul.mubr.bf16.gmra.mxu0 %v3097
        %v3227 = vpop.f32.mrf.mxu0
        %v3228 = vadd.f32 %v3059, %v3227
        %v3229 = vpop.f32.mrf.mxu0
        %v3230 = vpop.f32.mrf.mxu0
        %v3231 = vadd.f32 %v3059, %v3230
        %v3232 = vpop.f32.mrf.mxu0
        %3233 = vmatprep.mubr.bf16.mxu0 0
        %3234 = vmatmul.mubr.bf16.gmra.mxu0 %v3099
        %v3235 = vpop.f32.mrf.mxu0
        %v3236 = vadd.f32 %v3059, %v3235
        %v3237 = vpop.f32.mrf.mxu0
        %v3238 = vpop.f32.mrf.mxu0
        %v3239 = vadd.f32 %v3059, %v3238
        %v3240 = vpop.f32.mrf.mxu0
        %3241 = vmatprep.mubr.bf16.mxu0 0
        %3242 = vmatmul.mubr.bf16.gmra.mxu0 %v3101
        %v3243 = vpop.f32.mrf.mxu0
        %v3244 = vadd.f32 %v3059, %v3243
        %v3245 = vpop.f32.mrf.mxu0
        %v3246 = vpop.f32.mrf.mxu0
        %v3247 = vadd.f32 %v3059, %v3246
        %v3248 = vpop.f32.mrf.mxu0
        %3249 = vmatprep.mubr.bf16.mxu0 0
        %3250 = vmatmul.mubr.bf16.gmra.mxu0 %v3103
        %v3251 = vpop.f32.mrf.mxu0
        %v3252 = vadd.f32 %v3059, %v3251
        %v3253 = vpop.f32.mrf.mxu0
        %v3254 = vpop.f32.mrf.mxu0
        %v3255 = vadd.f32 %v3059, %v3254
        %v3256 = vpop.f32.mrf.mxu0
        %3257 = vmatprep.mubr.bf16.mxu0 0
        %3258 = vmatmul.mubr.bf16.gmra.mxu0 %v3105
        %v3259 = vpop.f32.mrf.mxu0
        %v3260 = vadd.f32 %v3059, %v3259
        %v3261 = vpop.f32.mrf.mxu0
        %v3262 = vpop.f32.mrf.mxu0
        %v3263 = vadd.f32 %v3059, %v3262
        %v3264 = vpop.f32.mrf.mxu0
        %3265 = vmatprep.mubr.bf16.mxu0 0
        %3266 = vmatmul.mubr.bf16.gmra.mxu0 %v3107
        %v3267 = vpop.f32.mrf.mxu0
        %v3268 = vadd.f32 %v3059, %v3267
        %v3269 = vpop.f32.mrf.mxu0
        %v3270 = vpop.f32.mrf.mxu0
        %v3271 = vadd.f32 %v3059, %v3270
        %v3272 = vpop.f32.mrf.mxu0
        %3273 = vdwg.mxu0
        %s3274 = sld [smem:[#allocation3]]
        %vm3275 = vcmp.ge.f32.partialorder %v3148, 0.0
        %vm3276 = vcmp.ge.f32.partialorder %v3151, 0.0
        %vm3277 = vcmp.ge.f32.partialorder %v3156, 0.0
        %vm3278 = vcmp.ge.f32.partialorder %v3159, 0.0
        %vm3279 = vcmp.ge.f32.partialorder %v3164, 0.0
        %vm3280 = vcmp.ge.f32.partialorder %v3167, 0.0
        %vm3281 = vcmp.ge.f32.partialorder %v3172, 0.0
        %vm3282 = vcmp.ge.f32.partialorder %v3175, 0.0
        %vm3283 = vcmp.ge.f32.partialorder %v3180, 0.0
        %vm3284 = vcmp.ge.f32.partialorder %v3183, 0.0
        %vm3285 = vcmp.ge.f32.partialorder %v3188, 0.0
        %vm3286 = vcmp.ge.f32.partialorder %v3191, 0.0
        %vm3287 = vcmp.ge.f32.partialorder %v3196, 0.0
        %vm3288 = vcmp.ge.f32.partialorder %v3199, 0.0
        %vm3289 = vcmp.ge.f32.partialorder %v3204, 0.0
        %vm3290 = vcmp.ge.f32.partialorder %v3207, 0.0
        %vm3291 = vcmp.ge.f32.partialorder %v3212, 0.0
        %vm3292 = vcmp.ge.f32.partialorder %v3215, 0.0
        %vm3293 = vcmp.ge.f32.partialorder %v3220, 0.0
        %vm3294 = vcmp.ge.f32.partialorder %v3223, 0.0
        %vm3295 = vcmp.ge.f32.partialorder %v3228, 0.0
        %vm3296 = vcmp.ge.f32.partialorder %v3231, 0.0
        %vm3297 = vcmp.ge.f32.partialorder %v3236, 0.0
        %vm3298 = vcmp.ge.f32.partialorder %v3239, 0.0
        %vm3299 = vcmp.ge.f32.partialorder %v3244, 0.0
        %vm3300 = vcmp.ge.f32.partialorder %v3247, 0.0
        %vm3301 = vcmp.ge.f32.partialorder %v3252, 0.0
        %vm3302 = vcmp.ge.f32.partialorder %v3255, 0.0
        %vm3303 = vcmp.ge.f32.partialorder %v3260, 0.0
        %vm3304 = vcmp.ge.f32.partialorder %v3263, 0.0
        %vm3305 = vcmp.ge.f32.partialorder %v3268, 0.0
        %vm3306 = vcmp.ge.f32.partialorder %v3271, 0.0
        %v3307 = vstv %s3274
        %v3308 = vmul.f32 %v3307, %v3148
        %v3309 = vmul.f32 %v3307, %v3151
        %v3310 = vmul.f32 %v3307, %v3156
        %v3311 = vmul.f32 %v3307, %v3159
        %v3312 = vmul.f32 %v3307, %v3164
        %v3313 = vmul.f32 %v3307, %v3167
        %v3314 = vmul.f32 %v3307, %v3172
        %v3315 = vmul.f32 %v3307, %v3175
        %v3316 = vmul.f32 %v3307, %v3180
        %v3317 = vmul.f32 %v3307, %v3183
        %v3318 = vmul.f32 %v3307, %v3188
        %v3319 = vmul.f32 %v3307, %v3191
        %v3320 = vmul.f32 %v3307, %v3196
        %v3321 = vmul.f32 %v3307, %v3199
        %v3322 = vmul.f32 %v3307, %v3204
        %v3323 = vmul.f32 %v3307, %v3207
        %v3324 = vmul.f32 %v3307, %v3212
        %v3325 = vmul.f32 %v3307, %v3215
        %v3326 = vmul.f32 %v3307, %v3220
        %v3327 = vmul.f32 %v3307, %v3223
        %v3328 = vmul.f32 %v3307, %v3228
        %v3329 = vmul.f32 %v3307, %v3231
        %v3330 = vmul.f32 %v3307, %v3236
        %v3331 = vmul.f32 %v3307, %v3239
        %v3332 = vmul.f32 %v3307, %v3244
        %v3333 = vmul.f32 %v3307, %v3247
        %v3334 = vmul.f32 %v3307, %v3252
        %v3335 = vmul.f32 %v3307, %v3255
        %v3336 = vmul.f32 %v3307, %v3260
        %v3337 = vmul.f32 %v3307, %v3263
        %v3338 = vmul.f32 %v3307, %v3268
        %v3339 = vmul.f32 %v3307, %v3271
        %v3340 = vsel %vm3275, %v3148, %v3308
        %v3341 = vsel %vm3276, %v3151, %v3309
        %v3342 = vsel %vm3277, %v3156, %v3310
        %v3343 = vsel %vm3278, %v3159, %v3311
        %v3344 = vsel %vm3279, %v3164, %v3312
        %v3345 = vsel %vm3280, %v3167, %v3313
        %v3346 = vsel %vm3281, %v3172, %v3314
        %v3347 = vsel %vm3282, %v3175, %v3315
        %v3348 = vsel %vm3283, %v3180, %v3316
        %v3349 = vsel %vm3284, %v3183, %v3317
        %v3350 = vsel %vm3285, %v3188, %v3318
        %v3351 = vsel %vm3286, %v3191, %v3319
        %v3352 = vsel %vm3287, %v3196, %v3320
        %v3353 = vsel %vm3288, %v3199, %v3321
        %v3354 = vsel %vm3289, %v3204, %v3322
        %v3355 = vsel %vm3290, %v3207, %v3323
        %v3356 = vsel %vm3291, %v3212, %v3324
        %v3357 = vsel %vm3292, %v3215, %v3325
        %v3358 = vsel %vm3293, %v3220, %v3326
        %v3359 = vsel %vm3294, %v3223, %v3327
        %v3360 = vsel %vm3295, %v3228, %v3328
        %v3361 = vsel %vm3296, %v3231, %v3329
        %v3362 = vsel %vm3297, %v3236, %v3330
        %v3363 = vsel %vm3298, %v3239, %v3331
        %v3364 = vsel %vm3299, %v3244, %v3332
        %v3365 = vsel %vm3300, %v3247, %v3333
        %v3366 = vsel %vm3301, %v3252, %v3334
        %v3367 = vsel %vm3302, %v3255, %v3335
        %v3368 = vsel %vm3303, %v3260, %v3336
        %v3369 = vsel %vm3304, %v3263, %v3337
        %v3370 = vsel %vm3305, %v3268, %v3338
        %v3371 = vsel %vm3306, %v3271, %v3339
        %v3372 = vpack.c.bf16 %v3341, %v3340
        %v3373 = vpack.c.bf16 %v3343, %v3342
        %v3374 = vpack.c.bf16 %v3345, %v3344
        %v3375 = vpack.c.bf16 %v3347, %v3346
        %v3376 = vpack.c.bf16 %v3349, %v3348
        %v3377 = vpack.c.bf16 %v3351, %v3350
        %v3378 = vpack.c.bf16 %v3353, %v3352
        %v3379 = vpack.c.bf16 %v3355, %v3354
        %v3380 = vpack.c.bf16 %v3357, %v3356
        %v3381 = vpack.c.bf16 %v3359, %v3358
        %v3382 = vpack.c.bf16 %v3361, %v3360
        %v3383 = vpack.c.bf16 %v3363, %v3362
        %v3384 = vpack.c.bf16 %v3365, %v3364
        %v3385 = vpack.c.bf16 %v3367, %v3366
        %v3386 = vpack.c.bf16 %v3369, %v3368
        %v3387 = vpack.c.bf16 %v3371, %v3370
        %v3404 = vunpack.c.l.b16 %v3372
        %v3405 = vunpack.c.h.b16 %v3372
        %v3406 = vunpack.c.l.b16 %v3373
        %v3407 = vunpack.c.h.b16 %v3373
        %v3408 = vunpack.c.l.b16 %v3374
        %v3409 = vunpack.c.h.b16 %v3374
        %v3410 = vunpack.c.l.b16 %v3375
        %v3411 = vunpack.c.h.b16 %v3375
        %v3412 = vunpack.c.l.b16 %v3376
        %v3413 = vunpack.c.h.b16 %v3376
        %v3414 = vunpack.c.l.b16 %v3377
        %v3415 = vunpack.c.h.b16 %v3377
        %v3416 = vunpack.c.l.b16 %v3378
        %v3417 = vunpack.c.h.b16 %v3378
        %v3418 = vunpack.c.l.b16 %v3379
        %v3419 = vunpack.c.h.b16 %v3379
        %v3420 = vunpack.c.l.b16 %v3380
        %v3421 = vunpack.c.h.b16 %v3380
        %v3422 = vunpack.c.l.b16 %v3381
        %v3423 = vunpack.c.h.b16 %v3381
        %v3424 = vunpack.c.l.b16 %v3382
        %v3425 = vunpack.c.h.b16 %v3382
        %v3426 = vunpack.c.l.b16 %v3383
        %v3427 = vunpack.c.h.b16 %v3383
        %v3428 = vunpack.c.l.b16 %v3384
        %v3429 = vunpack.c.h.b16 %v3384
        %v3430 = vunpack.c.l.b16 %v3385
        %v3431 = vunpack.c.h.b16 %v3385
        %v3432 = vunpack.c.l.b16 %v3386
        %v3433 = vunpack.c.h.b16 %v3386
        %v3434 = vunpack.c.l.b16 %v3387
        %v3435 = vunpack.c.h.b16 %v3387
        %v3436 = vpack.c.b16 %v3404, %v3404
        %v3437 = vpack.c.b16 %v3405, %v3405
        %v3438 = vpack.c.b16 %v3406, %v3406
        %v3439 = vpack.c.b16 %v3407, %v3407
        %v3440 = vpack.c.b16 %v3408, %v3408
        %v3441 = vpack.c.b16 %v3409, %v3409
        %v3442 = vpack.c.b16 %v3410, %v3410
        %v3443 = vpack.c.b16 %v3411, %v3411
        %v3444 = vpack.c.b16 %v3412, %v3412
        %v3445 = vpack.c.b16 %v3413, %v3413
        %v3446 = vpack.c.b16 %v3414, %v3414
        %v3447 = vpack.c.b16 %v3415, %v3415
        %v3448 = vpack.c.b16 %v3416, %v3416
        %v3449 = vpack.c.b16 %v3417, %v3417
        %v3450 = vpack.c.b16 %v3418, %v3418
        %v3451 = vpack.c.b16 %v3419, %v3419
        %v3452 = vpack.c.b16 %v3420, %v3420
        %v3453 = vpack.c.b16 %v3421, %v3421
        %v3454 = vpack.c.b16 %v3422, %v3422
        %v3455 = vpack.c.b16 %v3423, %v3423
        %v3456 = vpack.c.b16 %v3424, %v3424
        %v3457 = vpack.c.b16 %v3425, %v3425
        %v3458 = vpack.c.b16 %v3426, %v3426
        %v3459 = vpack.c.b16 %v3427, %v3427
        %v3460 = vpack.c.b16 %v3428, %v3428
        %v3461 = vpack.c.b16 %v3429, %v3429
        %v3462 = vpack.c.b16 %v3430, %v3430
        %v3463 = vpack.c.b16 %v3431, %v3431
        %v3464 = vpack.c.b16 %v3432, %v3432
        %v3465 = vpack.c.b16 %v3433, %v3433
        %v3466 = vpack.c.b16 %v3434, %v3434
        %v3467 = vpack.c.b16 %v3435, %v3435
        %3500 = vst [vmem:[%s189] sm:$0xf] %v3436
        %3501 = vst [vmem:[%s189 + $0x4] sm:$0xf] %v3437
        %3502 = vst [vmem:[%s189 + $0x8] sm:$0xf] %v3438
        %3503 = vst [vmem:[%s189 + $0xc] sm:$0xf] %v3439
        %3504 = vst [vmem:[%s189 + $0x10] sm:$0xf] %v3440
        %3505 = vst [vmem:[%s189 + $0x14] sm:$0xf] %v3441
        %3506 = vst [vmem:[%s189 + $0x18] sm:$0xf] %v3442
        %3507 = vst [vmem:[%s189 + $0x1c] sm:$0xf] %v3443
        %3508 = vst [vmem:[%s189 + $0x20] sm:$0xf] %v3444
        %3509 = vst [vmem:[%s189 + $0x24] sm:$0xf] %v3445
        %3510 = vst [vmem:[%s189 + $0x28] sm:$0xf] %v3446
        %3511 = vst [vmem:[%s189 + $0x2c] sm:$0xf] %v3447
        %3512 = vst [vmem:[%s189 + $0x30] sm:$0xf] %v3448
        %3513 = vst [vmem:[%s189 + $0x34] sm:$0xf] %v3449
        %3514 = vst [vmem:[%s189 + $0x38] sm:$0xf] %v3450
        %3515 = vst [vmem:[%s189 + $0x3c] sm:$0xf] %v3451
        %3516 = vst [vmem:[%s189 + $0x40] sm:$0xf] %v3452
        %3517 = vst [vmem:[%s189 + $0x44] sm:$0xf] %v3453
        %3518 = vst [vmem:[%s189 + $0x48] sm:$0xf] %v3454
        %3519 = vst [vmem:[%s189 + $0x4c] sm:$0xf] %v3455
        %3520 = vst [vmem:[%s189 + $0x50] sm:$0xf] %v3456
        %3521 = vst [vmem:[%s189 + $0x54] sm:$0xf] %v3457
        %3522 = vst [vmem:[%s189 + $0x58] sm:$0xf] %v3458
        %3523 = vst [vmem:[%s189 + $0x5c] sm:$0xf] %v3459
        %3524 = vst [vmem:[%s189 + $0x60] sm:$0xf] %v3460
        %3525 = vst [vmem:[%s189 + $0x64] sm:$0xf] %v3461
        %3526 = vst [vmem:[%s189 + $0x68] sm:$0xf] %v3462
        %3527 = vst [vmem:[%s189 + $0x6c] sm:$0xf] %v3463
        %3528 = vst [vmem:[%s189 + $0x70] sm:$0xf] %v3464
        %3529 = vst [vmem:[%s189 + $0x74] sm:$0xf] %v3465
        %3530 = vst [vmem:[%s189 + $0x78] sm:$0xf] %v3466
        %3531 = vst [vmem:[%s189 + $0x7c] sm:$0xf] %v3467
        %s3532 = sand.u32 %s111, 1
        %s3533 = scalar_lea.sflag [#allocation5], %s3532
        %s3534 = sand.u32 %s111, 1
        %s3535 = smul.addr %s3534, 128
        %s3536 = scalar_lea.vmem [#allocation4], %s3535
        // Predicated region
        $region33: #{tpu_custom_call.1} parent=31 // pred_check
          %p3537 = pneg %p121
        $region34: #{tpu_custom_call.1} parent=31 // pred_check_branch
          %3539 = sbr.rel (%p3537) target = $region36
        $region35: #{tpu_custom_call.1} parent=31 // pred_region
          %s3540 = smul.u32 32, %s24
          %s3542 = ssub.s32 2048, 2048
          %3543 = vsyncadd %s3533, %s3542
          %s3544 = smul.addr %s23, 32
          %s3545 = sadd.s32 %s3540, %s3544
          %s3546 = smul.addr %s3545, 64
          %s3547 = scalar_lea.hbm %s4, %s3546
          %s3548 = sshll.u32 %s3536, 4
          %s3549 = int_to_ptr.vmem [resolvable:$true] %s3548
          %3554 = dma.vmem_to_hbm [thread:$0]  %s3549, 2048, %s3547, %s3533, 64, 64, 4
        $region36: #{tpu_custom_call.1} parent=31 // pred_fallthru
          _
      $region32: #{tpu_custom_call.1} parent=5 // pred_fallthru
        _
      %p3555 = scmp.le.s32.totalorder 2, %s14
      // Predicated region
      $region37: #{tpu_custom_call.1} parent=5 // pred_check
        %p3556 = pneg %p3555
      $region38: #{tpu_custom_call.1} parent=5 // pred_check_branch
        %3558 = sbr.rel (%p3556) target = $region40
      $region39: #{tpu_custom_call.1} parent=5 // pred_region
        %s3559 = ssub.s32 %s14, 2
        // Predicated region
        $region41: #{tpu_custom_call.1} parent=39 // pred_check
          %p3560 = pneg %p127
        $region42: #{tpu_custom_call.1} parent=39 // pred_check_branch
          %3562 = sbr.rel (%p3560) target = $region44
        $region43: #{tpu_custom_call.1} parent=39 // pred_region
          %s3563 = sand.u32 %s112, 1
          %s3564 = scalar_lea.sflag [#allocation5], %s3563
          %s3565 = sand.u32 %s112, 1
          %s3566 = smul.addr %s3565, 128
          %s3567 = scalar_lea.vmem [#allocation4], %s3566
          %3568 = dma.done %s3564, 2048
        $region44: #{tpu_custom_call.1} parent=39 // pred_fallthru
          _
      $region40: #{tpu_custom_call.1} parent=5 // pred_fallthru
        _
    $region6: #{tpu_custom_call.1} parent=1 // loop_footer
      %s18 = sadd.s32 1, %s14
    $region7: #{tpu_custom_call.1} parent=1 // loop_footer_branch
      %13 = sbr.rel target = $region3
    $region8: #{tpu_custom_call.1} parent=1 // loop_exit
      _
    %3569 = vsyncpa [#allocation5], 1
    %s3570 = scalar_lea.sflag [#allocation5], 1
    %3571 = vsyncpa %s3570, 1

// kernel: tpu_custom_call.1
$region0: #{tpu_custom_call.1}
  #allocation0 [shape = 'u32[]', space=smem, size = 0x4, offset = 0x4, fixed_abs, tag = 'smem constant byte address 0x4 - core index']
  #allocation1 [shape = 'u32[144,128]{1,0:T(1,128)}', space=vmem, size = 0x12000, scoped, tag = 'internal scratch']
  #allocation2 [shape = 's32[1]{0}', space=sflag, size = 0x4, scoped, tag = 'scoped memory for tpu_custom_call.1']
  #allocation3 [shape = 'f32[1]{0:T(128)S(6)}', space=smem, size = 0x200, scoped, tag = 'prefetched SMEM operand 0']
  %s0 = inlined_call_operand.<no memory space> [shape: f32[1], index: 0, kind: input, shape index: {}]
  %s1 = inlined_call_operand.vmem [shape: bf16[2,1,18,18,4], index: 1, kind: input, shape index: {}]
  %s2 = inlined_call_operand.vmem [shape: bf16[36,128], index: 2, kind: input, shape index: {}]
  %s3 = inlined_call_operand.vmem [shape: f32[1,128], index: 3, kind: input, shape index: {}]
  %s4 = inlined_call_operand.hbm [shape: bf16[2,256,128], index: 4, kind: output, shape index: {}]
  %s5 = sld [smem:[#allocation0]]
  $region45: #{tpu_custom_call.1} parent=0
    _
  %s7 = ssub.s32 1, %s5
  %s8 = scalar_select 0, %s7, %s5
  %9 = sst [smem:[#allocation3]] %s0
  $region1: #{tpu_custom_call.1} parent=0
    #allocation4 [shape = 'u8[131072]{0}', space=vmem, size = 0x20000, scoped, tag = 'output window, operand 0']
    #allocation5 [shape = 's32[2]{0}', space=sflag, size = 0x8, scoped, tag = 'scoped memory for tpu_custom_call.1']
    %10 = vsyncpa [#allocation5], 0
    %s11 = scalar_lea.sflag [#allocation5], 1
    %12 = vsyncpa %s11, 0
    loop: start=0, step=1, limit=4
    $region2: #{tpu_custom_call.1} parent=1 // loop_pre_header
      _
    $region3: #{tpu_custom_call.1} parent=1 // loop_header
      %s14 = sphi 0, %s18
      %p15 = scmp.ge.s32.totalorder %s14, 4
      %s21 = sphi 0, %s33
      %s22 = sphi 0, %s29
      %s23 = sphi 0, %s21
      %s24 = sphi 0, %s22
      %s25 = sphi 0, %s23
      %s26 = sphi 0, %s24
      %s38 = sphi 0, %s40
      %s41 = sphi 0, %s38
      %s42 = sphi 0, %s41
      %s58 = sphi 0, %s42
      %s62 = sphi 0, %s62
      %s64 = sphi 0, %s62
      %s65 = sphi 0, %s64
      %s79 = sphi 0, %s65
      %s83 = sphi 0, %s83
      %s85 = sphi 0, %s83
      %s86 = sphi 0, %s85
      %s100 = sphi 0, %s86
      %s108 = sphi 0, %s110
      %s111 = sphi 0, %s108
      %s112 = sphi 0, %s111
      %s128 = sphi 0, %s112
    $region4: #{tpu_custom_call.1} parent=1 // loop_header_branch
      %17 = sbr.rel (%p15) target = $region8
    $region5: #{tpu_custom_call.1} parent=1 // loop_body
      %s19 = ssub.s32 %s14, 1
      %s20 = ssub.s32 %s14, 2
      %s27 = sadd.s32 1, %s22
      %p28 = scmp.ge.s32.totalorder %s27, 1
      %s29 = scalar_select %p28, 0, %s27
      %s30 = sadd.s32 1, %s21
      %s31 = scalar_select %p28, %s30, %s21
      %p32 = scmp.ge.s32.totalorder %s31, 2
      %s33 = scalar_select %p32, 0, %s31
      %s34 = ssub.s32 %s21, %s33
      %s35 = ssub.s32 %s22, %s29
      %s36 = sor.u32 %s34, %s35
      %p37 = scmp.eq.s32.totalorder %s36, 0
      %s39 = sadd.s32 %s38, 1
      %s40 = scalar_select %p37, %s38, %s39
      %p43 = pneg %p37
      %p44 = scmp.eq.s32.totalorder %s14, 1
      %p45 = por %p43, %p44
      %p46 = scmp.ne.s32.totalorder %s38, %s41
      %p47 = scmp.eq.s32.totalorder %s14, 0
      %p48 = por %p46, %p47
      %p49 = scmp.ne.s32.totalorder %s38, %s41
      %p50 = scmp.eq.s32.totalorder %s19, 1
      %p51 = por %p49, %p50
      %p52 = scmp.ne.s32.totalorder %s41, %s42
      %p53 = scmp.eq.s32.totalorder %s19, 0
      %p54 = por %p52, %p53
      %p55 = scmp.ne.s32.totalorder %s41, %s42
      %p56 = scmp.eq.s32.totalorder %s20, 1
      %p57 = por %p55, %p56
      %p59 = scmp.ne.s32.totalorder %s42, %s58
      %p60 = scmp.eq.s32.totalorder %s20, 0
      %p61 = por %p59, %p60
      %s63 = sadd.s32 %s62, 1
      %p66 = scmp.eq.s32.totalorder %s14, 1
      %p67 = scmp.ne.s32.totalorder %s62, %s64
      %p68 = scmp.eq.s32.totalorder %s14, 0
      %p69 = por %p67, %p68
      %p70 = scmp.ne.s32.totalorder %s62, %s64
      %p71 = scmp.eq.s32.totalorder %s19, 1
      %p72 = por %p70, %p71
      %p73 = scmp.ne.s32.totalorder %s64, %s65
      %p74 = scmp.eq.s32.totalorder %s19, 0
      %p75 = por %p73, %p74
      %p76 = scmp.ne.s32.totalorder %s64, %s65
      %p77 = scmp.eq.s32.totalorder %s20, 1
      %p78 = por %p76, %p77
      %p80 = scmp.ne.s32.totalorder %s65, %s79
      %p81 = scmp.eq.s32.totalorder %s20, 0
      %p82 = por %p80, %p81
      %s84 = sadd.s32 %s83, 1
      %p87 = scmp.eq.s32.totalorder %s14, 1
      %p88 = scmp.ne.s32.totalorder %s83, %s85
      %p89 = scmp.eq.s32.totalorder %s14, 0
      %p90 = por %p88, %p89
      %p91 = scmp.ne.s32.totalorder %s83, %s85
      %p92 = scmp.eq.s32.totalorder %s19, 1
      %p93 = por %p91, %p92
      %p94 = scmp.ne.s32.totalorder %s85, %s86
      %p95 = scmp.eq.s32.totalorder %s19, 0
      %p96 = por %p94, %p95
      %p97 = scmp.ne.s32.totalorder %s85, %s86
      %p98 = scmp.eq.s32.totalorder %s20, 1
      %p99 = por %p97, %p98
      %p101 = scmp.ne.s32.totalorder %s86, %s100
      %p102 = scmp.eq.s32.totalorder %s20, 0
      %p103 = por %p101, %p102
      %s104 = ssub.s32 %s21, %s33
      %s105 = ssub.s32 %s22, %s29
      %s106 = sor.u32 %s104, %s105
      %p107 = scmp.eq.s32.totalorder %s106, 0
      %s109 = sadd.s32 %s108, 1
      %s110 = scalar_select %p107, %s108, %s109
      %p113 = pneg %p107
      %p114 = scmp.eq.s32.totalorder %s14, 1
      %p115 = por %p113, %p114
      %p116 = scmp.ne.s32.totalorder %s108, %s111
      %p117 = scmp.eq.s32.totalorder %s14, 0
      %p118 = por %p116, %p117
      %p119 = scmp.ne.s32.totalorder %s108, %s111
      %p120 = scmp.eq.s32.totalorder %s19, 1
      %p121 = por %p119, %p120
      %p122 = scmp.ne.s32.totalorder %s111, %s112
      %p123 = scmp.eq.s32.totalorder %s19, 0
      %p124 = por %p122, %p123
      %p125 = scmp.ne.s32.totalorder %s111, %s112
      %p126 = scmp.eq.s32.totalorder %s20, 1
      %p127 = por %p125, %p126
      %p129 = scmp.ne.s32.totalorder %s112, %s128
      %p130 = scmp.eq.s32.totalorder %s20, 0
      %p131 = por %p129, %p130
      %p132 = scmp.le.s32.totalorder 1, %s14
      %p133 = scmp.lt.s32.totalorder %s14, 3
      %p134 = pnand %p132, %p133
      %p135 = pneg %p134
      // Predicated region
      $region9: #{tpu_custom_call.1} parent=5 // pred_check
        _
      $region10: #{tpu_custom_call.1} parent=5 // pred_check_branch
        %137 = sbr.rel (%p134) target = $region12
      $region11: #{tpu_custom_call.1} parent=5 // pred_region
        %s138 = ssub.s32 %s14, 1
        // Predicated region
        $region13: #{tpu_custom_call.1} parent=11 // pred_check
          %p139 = pneg %p75
        $region14: #{tpu_custom_call.1} parent=11 // pred_check_branch
          %141 = sbr.rel (%p139) target = $region16
        $region15: #{tpu_custom_call.1} parent=11 // pred_region
          _
        $region16: #{tpu_custom_call.1} parent=11 // pred_fallthru
          _
        // Predicated region
        $region17: #{tpu_custom_call.1} parent=11 // pred_check
          %p142 = pneg %p96
        $region18: #{tpu_custom_call.1} parent=11 // pred_check_branch
          %144 = sbr.rel (%p142) target = $region20
        $region19: #{tpu_custom_call.1} parent=11 // pred_region
          _
        $region20: #{tpu_custom_call.1} parent=11 // pred_fallthru
          _
      $region12: #{tpu_custom_call.1} parent=5 // pred_fallthru
        _
      %p145 = scmp.lt.s32.totalorder %s14, 2
      // Predicated region
      $region21: #{tpu_custom_call.1} parent=5 // pred_check
        %p146 = pneg %p145
      $region22: #{tpu_custom_call.1} parent=5 // pred_check_branch
        %148 = sbr.rel (%p146) target = $region24
      $region23: #{tpu_custom_call.1} parent=5 // pred_region
        // Predicated region
        $region25: #{tpu_custom_call.1} parent=23 // pred_check
          %p149 = pneg %p48
        $region26: #{tpu_custom_call.1} parent=23 // pred_check_branch
          %151 = sbr.rel (%p149) target = $region28
        $region27: #{tpu_custom_call.1} parent=23 // pred_region
          %p152 = scmp.lt.s32.totalorder %s21, 1
          %s153 = scalar_select %p152, %s21, 1
          %p154 = scmp.lt.s32.totalorder %s22, 0
          %s155 = scalar_select %p154, %s22, 0
          %s156 = smul.addr %s155, 54
          %s157 = smul.addr %s153, 54
          %s158 = sadd.s32 %s156, %s157
          %s159 = smul.addr %s158, 4
          %s160 = scalar_lea.vmem %s1, %s159
        $region28: #{tpu_custom_call.1} parent=23 // pred_fallthru
          _
      $region24: #{tpu_custom_call.1} parent=5 // pred_fallthru
        _
      %p161 = scmp.le.s32.totalorder 1, %s14
      %p162 = scmp.lt.s32.totalorder %s14, 3
      %p163 = pnand %p161, %p162
      %p164 = pneg %p163
      // Predicated region
      $region29: #{tpu_custom_call.1} parent=5 // pred_check
        _
      $region30: #{tpu_custom_call.1} parent=5 // pred_check_branch
        %166 = sbr.rel (%p163) target = $region32
      $region31: #{tpu_custom_call.1} parent=5 // pred_region
        %s167 = ssub.s32 %s14, 1
        %p168 = scmp.lt.s32.totalorder %s23, 1
        %s169 = scalar_select %p168, %s23, 1
        %p170 = scmp.lt.s32.totalorder %s24, 0
        %s171 = scalar_select %p170, %s24, 0
        %s172 = smul.addr %s171, 54
        %s173 = smul.addr %s169, 54
        %s174 = sadd.s32 %s172, %s173
        %s175 = smul.addr %s174, 4
        %s176 = scalar_lea.vmem %s1, %s175
        %p177 = pneg %p54
        %p178 = pneg %p51
        %p179 = pneg %p75
        %p180 = pneg %p72
        %p181 = pneg %p96
        %p182 = pneg %p93
        %p183 = pneg %p124
        %p184 = pneg %p121
        %s185 = sand.u32 %s111, 1
        %s186 = scalar_lea.sflag [#allocation5], %s185
        %s187 = sand.u32 %s111, 1
        %s188 = smul.addr %s187, 128
        %s189 = scalar_lea.vmem [#allocation4], %s188
        %p190 = scmp.lt.s32.totalorder %s23, 1
        %s191 = scalar_select %p190, %s23, 1
        %p192 = scmp.lt.s32.totalorder %s24, 0
        %s193 = scalar_select %p192, %s24, 0
        %s194 = smul.addr %s193, 54
        %s195 = smul.addr %s191, 54
        %s196 = sadd.s32 %s194, %s195
        %s197 = smul.addr %s196, 4
        %s198 = scalar_lea.vmem %s1, %s197
        %s199 = smul.u32 32, %s24
        %v201 = vld [vmem:[%s198] sm:$0xf]
        %v202 = vld [vmem:[%s198 + $0x4] sm:$0xf]
        %v203 = vld [vmem:[%s198 + $0xc] sm:$0xf]
        %v204 = vld [vmem:[%s198 + $0x10] sm:$0xf]
        %v205 = vld [vmem:[%s198 + $0x18] sm:$0xf]
        %v206 = vld [vmem:[%s198 + $0x1c] sm:$0xf]
        %v207 = vld [vmem:[%s198 + $0x24] sm:$0xf]
        %v208 = vld [vmem:[%s198 + $0x28] sm:$0xf]
        %v209 = vld [vmem:[%s198 + $0x30] sm:$0xf]
        %v210 = vld [vmem:[%s198 + $0x34] sm:$0xf]
        %v211 = vld [vmem:[%s198 + $0x3c] sm:$0xf]
        %v212 = vld [vmem:[%s198 + $0x40] sm:$0xf]
        %v213 = vld [vmem:[%s198 + $0x48] sm:$0xf]
        %v214 = vld [vmem:[%s198 + $0x4c] sm:$0xf]
        %v215 = vld [vmem:[%s198 + $0x54] sm:$0xf]
        %v216 = vld [vmem:[%s198 + $0x58] sm:$0xf]
        %v217 = vld [vmem:[%s198 + $0x60] sm:$0xf]
        %v218 = vld [vmem:[%s198 + $0x64] sm:$0xf]
        %v219 = vld [vmem:[%s198 + $0x6c] sm:$0xf]
        %v220 = vld [vmem:[%s198 + $0x70] sm:$0xf]
        %v221 = vld [vmem:[%s198 + $0x78] sm:$0xf]
        %v222 = vld [vmem:[%s198 + $0x7c] sm:$0xf]
        %v223 = vld [vmem:[%s198 + $0x84] sm:$0xf]
        %v224 = vld [vmem:[%s198 + $0x88] sm:$0xf]
        %v225 = vld [vmem:[%s198 + $0x90] sm:$0xf]
        %v226 = vld [vmem:[%s198 + $0x94] sm:$0xf]
        %v227 = vld [vmem:[%s198 + $0x9c] sm:$0xf]
        %v228 = vld [vmem:[%s198 + $0xa0] sm:$0xf]
        %v229 = vld [vmem:[%s198 + $0xa8] sm:$0xf]
        %v230 = vld [vmem:[%s198 + $0xac] sm:$0xf]
        %v231 = vld [vmem:[%s198 + $0xb4] sm:$0xf]
        %v232 = vld [vmem:[%s198 + $0xb8] sm:$0xf]
        %v233 = vld [vmem:[%s198 + $0x8] sm:$0x1]
        %v234 = vld [vmem:[%s198 + $0x14] sm:$0x1]
        %v235 = vld [vmem:[%s198 + $0x20] sm:$0x1]
        %v236 = vld [vmem:[%s198 + $0x2c] sm:$0x1]
        %v237 = vld [vmem:[%s198 + $0x38] sm:$0x1]
        %v238 = vld [vmem:[%s198 + $0x44] sm:$0x1]
        %v239 = vld [vmem:[%s198 + $0x50] sm:$0x1]
        %v240 = vld [vmem:[%s198 + $0x5c] sm:$0x1]
        %v241 = vld [vmem:[%s198 + $0x68] sm:$0x1]
        %v242 = vld [vmem:[%s198 + $0x74] sm:$0x1]
        %v243 = vld [vmem:[%s198 + $0x80] sm:$0x1]
        %v244 = vld [vmem:[%s198 + $0x8c] sm:$0x1]
        %v245 = vld [vmem:[%s198 + $0x98] sm:$0x1]
        %v246 = vld [vmem:[%s198 + $0xa4] sm:$0x1]
        %v247 = vld [vmem:[%s198 + $0xb0] sm:$0x1]
        %v248 = vld [vmem:[%s198 + $0xbc] sm:$0x1]
        %vm249 = vsmask.f32 3328
        %vm250 = vsmask.f32 7440
        %vm251 = vmor %vm249, %vm250
        %v253 = vshrl.u32 %v201, 16
        %v255 = vrot.slane %v253, 4
        %v256 = vshll.u32 %v201, 16
        %v258 = vrot.slane %v256, 5
        %v259 = vor.u32 %v255, %v258
        %v260 = vrot.slane %v259, 4
        %v262 = vshll.u32 %v202, 16
        %v264 = vrot.slane %v262, 5
        %v265 = vsel %vm251, %v260, %v264
        %v266 = vshrl.u32 %v202, 16
        %v268 = vrot.slane %v266, 4
        %v269 = vor.u32 %v268, %v264
        %v270 = vrot.slane %v269, 4
        %v272 = vshll.u32 %v233, 16
        %v274 = vrot.slane %v272, 5
        %v275 = vsel %vm251, %v270, %v274
        %v277 = vshrl.u32 %v203, 16
        %v279 = vrot.slane %v277, 4
        %v280 = vshll.u32 %v203, 16
        %v282 = vrot.slane %v280, 5
        %v283 = vor.u32 %v279, %v282
        %v284 = vrot.slane %v283, 4
        %v286 = vshll.u32 %v204, 16
        %v288 = vrot.slane %v286, 5
        %v289 = vsel %vm251, %v284, %v288
        %v290 = vshrl.u32 %v204, 16
        %v292 = vrot.slane %v290, 4
        %v293 = vor.u32 %v292, %v288
        %v294 = vrot.slane %v293, 4
        %v296 = vshll.u32 %v234, 16
        %v298 = vrot.slane %v296, 5
        %v299 = vsel %vm251, %v294, %v298
        %v301 = vshrl.u32 %v205, 16
        %v303 = vrot.slane %v301, 4
        %v304 = vshll.u32 %v205, 16
        %v306 = vrot.slane %v304, 5
        %v307 = vor.u32 %v303, %v306
        %v308 = vrot.slane %v307, 4
        %v310 = vshll.u32 %v206, 16
        %v312 = vrot.slane %v310, 5
        %v313 = vsel %vm251, %v308, %v312
        %v314 = vshrl.u32 %v206, 16
        %v316 = vrot.slane %v314, 4
        %v317 = vor.u32 %v316, %v312
        %v318 = vrot.slane %v317, 4
        %v320 = vshll.u32 %v235, 16
        %v322 = vrot.slane %v320, 5
        %v323 = vsel %vm251, %v318, %v322
        %v325 = vshrl.u32 %v207, 16
        %v327 = vrot.slane %v325, 4
        %v328 = vshll.u32 %v207, 16
        %v330 = vrot.slane %v328, 5
        %v331 = vor.u32 %v327, %v330
        %v332 = vrot.slane %v331, 4
        %v334 = vshll.u32 %v208, 16
        %v336 = vrot.slane %v334, 5
        %v337 = vsel %vm251, %v332, %v336
        %v338 = vshrl.u32 %v208, 16
        %v340 = vrot.slane %v338, 4
        %v341 = vor.u32 %v340, %v336
        %v342 = vrot.slane %v341, 4
        %v344 = vshll.u32 %v236, 16
        %v346 = vrot.slane %v344, 5
        %v347 = vsel %vm251, %v342, %v346
        %v349 = vshrl.u32 %v209, 16
        %v351 = vrot.slane %v349, 4
        %v352 = vshll.u32 %v209, 16
        %v354 = vrot.slane %v352, 5
        %v355 = vor.u32 %v351, %v354
        %v356 = vrot.slane %v355, 4
        %v358 = vshll.u32 %v210, 16
        %v360 = vrot.slane %v358, 5
        %v361 = vsel %vm251, %v356, %v360
        %v362 = vshrl.u32 %v210, 16
        %v364 = vrot.slane %v362, 4
        %v365 = vor.u32 %v364, %v360
        %v366 = vrot.slane %v365, 4
        %v368 = vshll.u32 %v237, 16
        %v370 = vrot.slane %v368, 5
        %v371 = vsel %vm251, %v366, %v370
        %v373 = vshrl.u32 %v211, 16
        %v375 = vrot.slane %v373, 4
        %v376 = vshll.u32 %v211, 16
        %v378 = vrot.slane %v376, 5
        %v379 = vor.u32 %v375, %v378
        %v380 = vrot.slane %v379, 4
        %v382 = vshll.u32 %v212, 16
        %v384 = vrot.slane %v382, 5
        %v385 = vsel %vm251, %v380, %v384
        %v386 = vshrl.u32 %v212, 16
        %v388 = vrot.slane %v386, 4
        %v389 = vor.u32 %v388, %v384
        %v390 = vrot.slane %v389, 4
        %v392 = vshll.u32 %v238, 16
        %v394 = vrot.slane %v392, 5
        %v395 = vsel %vm251, %v390, %v394
        %v397 = vshrl.u32 %v213, 16
        %v399 = vrot.slane %v397, 4
        %v400 = vshll.u32 %v213, 16
        %v402 = vrot.slane %v400, 5
        %v403 = vor.u32 %v399, %v402
        %v404 = vrot.slane %v403, 4
        %v406 = vshll.u32 %v214, 16
        %v408 = vrot.slane %v406, 5
        %v409 = vsel %vm251, %v404, %v408
        %v410 = vshrl.u32 %v214, 16
        %v412 = vrot.slane %v410, 4
        %v413 = vor.u32 %v412, %v408
        %v414 = vrot.slane %v413, 4
        %v416 = vshll.u32 %v239, 16
        %v418 = vrot.slane %v416, 5
        %v419 = vsel %vm251, %v414, %v418
        %v421 = vshrl.u32 %v215, 16
        %v423 = vrot.slane %v421, 4
        %v424 = vshll.u32 %v215, 16
        %v426 = vrot.slane %v424, 5
        %v427 = vor.u32 %v423, %v426
        %v428 = vrot.slane %v427, 4
        %v430 = vshll.u32 %v216, 16
        %v432 = vrot.slane %v430, 5
        %v433 = vsel %vm251, %v428, %v432
        %v434 = vshrl.u32 %v216, 16
        %v436 = vrot.slane %v434, 4
        %v437 = vor.u32 %v436, %v432
        %v438 = vrot.slane %v437, 4
        %v440 = vshll.u32 %v240, 16
        %v442 = vrot.slane %v440, 5
        %v443 = vsel %vm251, %v438, %v442
        %v445 = vshrl.u32 %v217, 16
        %v447 = vrot.slane %v445, 4
        %v448 = vshll.u32 %v217, 16
        %v450 = vrot.slane %v448, 5
        %v451 = vor.u32 %v447, %v450
        %v452 = vrot.slane %v451, 4
        %v454 = vshll.u32 %v218, 16
        %v456 = vrot.slane %v454, 5
        %v457 = vsel %vm251, %v452, %v456
        %v458 = vshrl.u32 %v218, 16
        %v460 = vrot.slane %v458, 4
        %v461 = vor.u32 %v460, %v456
        %v462 = vrot.slane %v461, 4
        %v464 = vshll.u32 %v241, 16
        %v466 = vrot.slane %v464, 5
        %v467 = vsel %vm251, %v462, %v466
        %v469 = vshrl.u32 %v219, 16
        %v471 = vrot.slane %v469, 4
        %v472 = vshll.u32 %v219, 16
        %v474 = vrot.slane %v472, 5
        %v475 = vor.u32 %v471, %v474
        %v476 = vrot.slane %v475, 4
        %v478 = vshll.u32 %v220, 16
        %v480 = vrot.slane %v478, 5
        %v481 = vsel %vm251, %v476, %v480
        %v482 = vshrl.u32 %v220, 16
        %v484 = vrot.slane %v482, 4
        %v485 = vor.u32 %v484, %v480
        %v486 = vrot.slane %v485, 4
        %v488 = vshll.u32 %v242, 16
        %v490 = vrot.slane %v488, 5
        %v491 = vsel %vm251, %v486, %v490
        %v493 = vshrl.u32 %v221, 16
        %v495 = vrot.slane %v493, 4
        %v496 = vshll.u32 %v221, 16
        %v498 = vrot.slane %v496, 5
        %v499 = vor.u32 %v495, %v498
        %v500 = vrot.slane %v499, 4
        %v502 = vshll.u32 %v222, 16
        %v504 = vrot.slane %v502, 5
        %v505 = vsel %vm251, %v500, %v504
        %v506 = vshrl.u32 %v222, 16
        %v508 = vrot.slane %v506, 4
        %v509 = vor.u32 %v508, %v504
        %v510 = vrot.slane %v509, 4
        %v512 = vshll.u32 %v243, 16
        %v514 = vrot.slane %v512, 5
        %v515 = vsel %vm251, %v510, %v514
        %v517 = vshrl.u32 %v223, 16
        %v519 = vrot.slane %v517, 4
        %v520 = vshll.u32 %v223, 16
        %v522 = vrot.slane %v520, 5
        %v523 = vor.u32 %v519, %v522
        %v524 = vrot.slane %v523, 4
        %v526 = vshll.u32 %v224, 16
        %v528 = vrot.slane %v526, 5
        %v529 = vsel %vm251, %v524, %v528
        %v530 = vshrl.u32 %v224, 16
        %v532 = vrot.slane %v530, 4
        %v533 = vor.u32 %v532, %v528
        %v534 = vrot.slane %v533, 4
        %v536 = vshll.u32 %v244, 16
        %v538 = vrot.slane %v536, 5
        %v539 = vsel %vm251, %v534, %v538
        %v541 = vshrl.u32 %v225, 16
        %v543 = vrot.slane %v541, 4
        %v544 = vshll.u32 %v225, 16
        %v546 = vrot.slane %v544, 5
        %v547 = vor.u32 %v543, %v546
        %v548 = vrot.slane %v547, 4
        %v550 = vshll.u32 %v226, 16
        %v552 = vrot.slane %v550, 5
        %v553 = vsel %vm251, %v548, %v552
        %v554 = vshrl.u32 %v226, 16
        %v556 = vrot.slane %v554, 4
        %v557 = vor.u32 %v556, %v552
        %v558 = vrot.slane %v557, 4
        %v560 = vshll.u32 %v245, 16
        %v562 = vrot.slane %v560, 5
        %v563 = vsel %vm251, %v558, %v562
        %v565 = vshrl.u32 %v227, 16
        %v567 = vrot.slane %v565, 4
        %v568 = vshll.u32 %v227, 16
        %v570 = vrot.slane %v568, 5
        %v571 = vor.u32 %v567, %v570
        %v572 = vrot.slane %v571, 4
        %v574 = vshll.u32 %v228, 16
        %v576 = vrot.slane %v574, 5
        %v577 = vsel %vm251, %v572, %v576
        %v578 = vshrl.u32 %v228, 16
        %v580 = vrot.slane %v578, 4
        %v581 = vor.u32 %v580, %v576
        %v582 = vrot.slane %v581, 4
        %v584 = vshll.u32 %v246, 16
        %v586 = vrot.slane %v584, 5
        %v587 = vsel %vm251, %v582, %v586
        %v589 = vshrl.u32 %v229, 16
        %v591 = vrot.slane %v589, 4
        %v592 = vshll.u32 %v229, 16
        %v594 = vrot.slane %v592, 5
        %v595 = vor.u32 %v591, %v594
        %v596 = vrot.slane %v595, 4
        %v598 = vshll.u32 %v230, 16
        %v600 = vrot.slane %v598, 5
        %v601 = vsel %vm251, %v596, %v600
        %v602 = vshrl.u32 %v230, 16
        %v604 = vrot.slane %v602, 4
        %v605 = vor.u32 %v604, %v600
        %v606 = vrot.slane %v605, 4
        %v608 = vshll.u32 %v247, 16
        %v610 = vrot.slane %v608, 5
        %v611 = vsel %vm251, %v606, %v610
        %v613 = vshrl.u32 %v231, 16
        %v615 = vrot.slane %v613, 4
        %v616 = vshll.u32 %v231, 16
        %v618 = vrot.slane %v616, 5
        %v619 = vor.u32 %v615, %v618
        %v620 = vrot.slane %v619, 4
        %v622 = vshll.u32 %v232, 16
        %v624 = vrot.slane %v622, 5
        %v625 = vsel %vm251, %v620, %v624
        %v626 = vshrl.u32 %v232, 16
        %v628 = vrot.slane %v626, 4
        %v629 = vor.u32 %v628, %v624
        %v630 = vrot.slane %v629, 4
        %v632 = vshll.u32 %v248, 16
        %v634 = vrot.slane %v632, 5
        %v635 = vsel %vm251, %v630, %v634
        %v636 = vld [vmem:[%s198] sm:$0xe]
        %v637 = vld [vmem:[%s198 + $0xc] sm:$0xe]
        %v638 = vld [vmem:[%s198 + $0x18] sm:$0xe]
        %v639 = vld [vmem:[%s198 + $0x24] sm:$0xe]
        %v640 = vld [vmem:[%s198 + $0x30] sm:$0xe]
        %v641 = vld [vmem:[%s198 + $0x3c] sm:$0xe]
        %v642 = vld [vmem:[%s198 + $0x48] sm:$0xe]
        %v643 = vld [vmem:[%s198 + $0x54] sm:$0xe]
        %v644 = vld [vmem:[%s198 + $0x60] sm:$0xe]
        %v645 = vld [vmem:[%s198 + $0x6c] sm:$0xe]
        %v646 = vld [vmem:[%s198 + $0x78] sm:$0xe]
        %v647 = vld [vmem:[%s198 + $0x84] sm:$0xe]
        %v648 = vld [vmem:[%s198 + $0x90] sm:$0xe]
        %v649 = vld [vmem:[%s198 + $0x9c] sm:$0xe]
        %v650 = vld [vmem:[%s198 + $0xa8] sm:$0xe]
        %v651 = vld [vmem:[%s198 + $0xb4] sm:$0xe]
        %vm700 = vcmask 1042432
        %vm701 = vcmask 1046532
        %vm702 = vmor %vm700, %vm701
        %v703 = vrot.slane %v636, 5
        %v704 = vrot.slane %v703, 4
        %v705 = vrot.slane %v202, 5
        %v706 = vsel %vm702, %v704, %v705
        %v707 = vrot.slane %v705, 4
        %v708 = vrot.slane %v233, 5
        %v709 = vsel %vm702, %v707, %v708
        %v710 = vrot.slane %v637, 5
        %v711 = vrot.slane %v710, 4
        %v712 = vrot.slane %v204, 5
        %v713 = vsel %vm702, %v711, %v712
        %v714 = vrot.slane %v712, 4
        %v715 = vrot.slane %v234, 5
        %v716 = vsel %vm702, %v714, %v715
        %v717 = vrot.slane %v638, 5
        %v718 = vrot.slane %v717, 4
        %v719 = vrot.slane %v206, 5
        %v720 = vsel %vm702, %v718, %v719
        %v721 = vrot.slane %v719, 4
        %v722 = vrot.slane %v235, 5
        %v723 = vsel %vm702, %v721, %v722
        %v724 = vrot.slane %v639, 5
        %v725 = vrot.slane %v724, 4
        %v726 = vrot.slane %v208, 5
        %v727 = vsel %vm702, %v725, %v726
        %v728 = vrot.slane %v726, 4
        %v729 = vrot.slane %v236, 5
        %v730 = vsel %vm702, %v728, %v729
        %v731 = vrot.slane %v640, 5
        %v732 = vrot.slane %v731, 4
        %v733 = vrot.slane %v210, 5
        %v734 = vsel %vm702, %v732, %v733
        %v735 = vrot.slane %v733, 4
        %v736 = vrot.slane %v237, 5
        %v737 = vsel %vm702, %v735, %v736
        %v738 = vrot.slane %v641, 5
        %v739 = vrot.slane %v738, 4
        %v740 = vrot.slane %v212, 5
        %v741 = vsel %vm702, %v739, %v740
        %v742 = vrot.slane %v740, 4
        %v743 = vrot.slane %v238, 5
        %v744 = vsel %vm702, %v742, %v743
        %v745 = vrot.slane %v642, 5
        %v746 = vrot.slane %v745, 4
        %v747 = vrot.slane %v214, 5
        %v748 = vsel %vm702, %v746, %v747
        %v749 = vrot.slane %v747, 4
        %v750 = vrot.slane %v239, 5
        %v751 = vsel %vm702, %v749, %v750
        %v752 = vrot.slane %v643, 5
        %v753 = vrot.slane %v752, 4
        %v754 = vrot.slane %v216, 5
        %v755 = vsel %vm702, %v753, %v754
        %v756 = vrot.slane %v754, 4
        %v757 = vrot.slane %v240, 5
        %v758 = vsel %vm702, %v756, %v757
        %v759 = vrot.slane %v644, 5
        %v760 = vrot.slane %v759, 4
        %v761 = vrot.slane %v218, 5
        %v762 = vsel %vm702, %v760, %v761
        %v763 = vrot.slane %v761, 4
        %v764 = vrot.slane %v241, 5
        %v765 = vsel %vm702, %v763, %v764
        %v766 = vrot.slane %v645, 5
        %v767 = vrot.slane %v766, 4
        %v768 = vrot.slane %v220, 5
        %v769 = vsel %vm702, %v767, %v768
        %v770 = vrot.slane %v768, 4
        %v771 = vrot.slane %v242, 5
        %v772 = vsel %vm702, %v770, %v771
        %v773 = vrot.slane %v646, 5
        %v774 = vrot.slane %v773, 4
        %v775 = vrot.slane %v222, 5
        %v776 = vsel %vm702, %v774, %v775
        %v777 = vrot.slane %v775, 4
        %v778 = vrot.slane %v243, 5
        %v779 = vsel %vm702, %v777, %v778
        %v780 = vrot.slane %v647, 5
        %v781 = vrot.slane %v780, 4
        %v782 = vrot.slane %v224, 5
        %v783 = vsel %vm702, %v781, %v782
        %v784 = vrot.slane %v782, 4
        %v785 = vrot.slane %v244, 5
        %v786 = vsel %vm702, %v784, %v785
        %v787 = vrot.slane %v648, 5
        %v788 = vrot.slane %v787, 4
        %v789 = vrot.slane %v226, 5
        %v790 = vsel %vm702, %v788, %v789
        %v791 = vrot.slane %v789, 4
        %v792 = vrot.slane %v245, 5
        %v793 = vsel %vm702, %v791, %v792
        %v794 = vrot.slane %v649, 5
        %v795 = vrot.slane %v794, 4
        %v796 = vrot.slane %v228, 5
        %v797 = vsel %vm702, %v795, %v796
        %v798 = vrot.slane %v796, 4
        %v799 = vrot.slane %v246, 5
        %v800 = vsel %vm702, %v798, %v799
        %v801 = vrot.slane %v650, 5
        %v802 = vrot.slane %v801, 4
        %v803 = vrot.slane %v230, 5
        %v804 = vsel %vm702, %v802, %v803
        %v805 = vrot.slane %v803, 4
        %v806 = vrot.slane %v247, 5
        %v807 = vsel %vm702, %v805, %v806
        %v808 = vrot.slane %v651, 5
        %v809 = vrot.slane %v808, 4
        %v810 = vrot.slane %v232, 5
        %v811 = vsel %vm702, %v809, %v810
        %v812 = vrot.slane %v810, 4
        %v813 = vrot.slane %v248, 5
        %v814 = vsel %vm702, %v812, %v813
        %s815 = scalar_lea.vmem %s198, 12
        %v816 = vld [vmem:[%s815] sm:$0xf]
        %v817 = vld [vmem:[%s815 + $0x4] sm:$0xf]
        %v818 = vld [vmem:[%s815 + $0xc] sm:$0xf]
        %v819 = vld [vmem:[%s815 + $0x10] sm:$0xf]
        %v820 = vld [vmem:[%s815 + $0x18] sm:$0xf]
        %v821 = vld [vmem:[%s815 + $0x1c] sm:$0xf]
        %v822 = vld [vmem:[%s815 + $0x24] sm:$0xf]
        %v823 = vld [vmem:[%s815 + $0x28] sm:$0xf]
        %v824 = vld [vmem:[%s815 + $0x30] sm:$0xf]
        %v825 = vld [vmem:[%s815 + $0x34] sm:$0xf]
        %v826 = vld [vmem:[%s815 + $0x3c] sm:$0xf]
        %v827 = vld [vmem:[%s815 + $0x40] sm:$0xf]
        %v828 = vld [vmem:[%s815 + $0x48] sm:$0xf]
        %v829 = vld [vmem:[%s815 + $0x4c] sm:$0xf]
        %v830 = vld [vmem:[%s815 + $0x54] sm:$0xf]
        %v831 = vld [vmem:[%s815 + $0x58] sm:$0xf]
        %v832 = vld [vmem:[%s815 + $0x60] sm:$0xf]
        %v833 = vld [vmem:[%s815 + $0x64] sm:$0xf]
        %v834 = vld [vmem:[%s815 + $0x6c] sm:$0xf]
        %v835 = vld [vmem:[%s815 + $0x70] sm:$0xf]
        %v836 = vld [vmem:[%s815 + $0x78] sm:$0xf]
        %v837 = vld [vmem:[%s815 + $0x7c] sm:$0xf]
        %v838 = vld [vmem:[%s815 + $0x84] sm:$0xf]
        %v839 = vld [vmem:[%s815 + $0x88] sm:$0xf]
        %v840 = vld [vmem:[%s815 + $0x90] sm:$0xf]
        %v841 = vld [vmem:[%s815 + $0x94] sm:$0xf]
        %v842 = vld [vmem:[%s815 + $0x9c] sm:$0xf]
        %v843 = vld [vmem:[%s815 + $0xa0] sm:$0xf]
        %v844 = vld [vmem:[%s815 + $0xa8] sm:$0xf]
        %v845 = vld [vmem:[%s815 + $0xac] sm:$0xf]
        %v846 = vld [vmem:[%s815 + $0xb4] sm:$0xf]
        %v847 = vld [vmem:[%s815 + $0xb8] sm:$0xf]
        %v848 = vld [vmem:[%s815 + $0x8] sm:$0x1]
        %v849 = vld [vmem:[%s815 + $0x14] sm:$0x1]
        %v850 = vld [vmem:[%s815 + $0x20] sm:$0x1]
        %v851 = vld [vmem:[%s815 + $0x2c] sm:$0x1]
        %v852 = vld [vmem:[%s815 + $0x38] sm:$0x1]
        %v853 = vld [vmem:[%s815 + $0x44] sm:$0x1]
        %v854 = vld [vmem:[%s815 + $0x50] sm:$0x1]
        %v855 = vld [vmem:[%s815 + $0x5c] sm:$0x1]
        %v856 = vld [vmem:[%s815 + $0x68] sm:$0x1]
        %v857 = vld [vmem:[%s815 + $0x74] sm:$0x1]
        %v858 = vld [vmem:[%s815 + $0x80] sm:$0x1]
        %v859 = vld [vmem:[%s815 + $0x8c] sm:$0x1]
        %v860 = vld [vmem:[%s815 + $0x98] sm:$0x1]
        %v861 = vld [vmem:[%s815 + $0xa4] sm:$0x1]
        %v862 = vld [vmem:[%s815 + $0xb0] sm:$0x1]
        %v863 = vld [vmem:[%s815 + $0xbc] sm:$0x1]
        %v865 = vshrl.u32 %v816, 16
        %v867 = vrot.slane %v865, 4
        %v868 = vshll.u32 %v816, 16
        %v870 = vrot.slane %v868, 5
        %v871 = vor.u32 %v867, %v870
        %v872 = vrot.slane %v871, 4
        %v874 = vshll.u32 %v817, 16
        %v876 = vrot.slane %v874, 5
        %v877 = vsel %vm251, %v872, %v876
        %v878 = vshrl.u32 %v817, 16
        %v880 = vrot.slane %v878, 4
        %v881 = vor.u32 %v880, %v876
        %v882 = vrot.slane %v881, 4
        %v884 = vshll.u32 %v848, 16
        %v886 = vrot.slane %v884, 5
        %v887 = vsel %vm251, %v882, %v886
        %v889 = vshrl.u32 %v818, 16
        %v891 = vrot.slane %v889, 4
        %v892 = vshll.u32 %v818, 16
        %v894 = vrot.slane %v892, 5
        %v895 = vor.u32 %v891, %v894
        %v896 = vrot.slane %v895, 4
        %v898 = vshll.u32 %v819, 16
        %v900 = vrot.slane %v898, 5
        %v901 = vsel %vm251, %v896, %v900
        %v902 = vshrl.u32 %v819, 16
        %v904 = vrot.slane %v902, 4
        %v905 = vor.u32 %v904, %v900
        %v906 = vrot.slane %v905, 4
        %v908 = vshll.u32 %v849, 16
        %v910 = vrot.slane %v908, 5
        %v911 = vsel %vm251, %v906, %v910
        %v913 = vshrl.u32 %v820, 16
        %v915 = vrot.slane %v913, 4
        %v916 = vshll.u32 %v820, 16
        %v918 = vrot.slane %v916, 5
        %v919 = vor.u32 %v915, %v918
        %v920 = vrot.slane %v919, 4
        %v922 = vshll.u32 %v821, 16
        %v924 = vrot.slane %v922, 5
        %v925 = vsel %vm251, %v920, %v924
        %v926 = vshrl.u32 %v821, 16
        %v928 = vrot.slane %v926, 4
        %v929 = vor.u32 %v928, %v924
        %v930 = vrot.slane %v929, 4
        %v932 = vshll.u32 %v850, 16
        %v934 = vrot.slane %v932, 5
        %v935 = vsel %vm251, %v930, %v934
        %v937 = vshrl.u32 %v822, 16
        %v939 = vrot.slane %v937, 4
        %v940 = vshll.u32 %v822, 16
        %v942 = vrot.slane %v940, 5
        %v943 = vor.u32 %v939, %v942
        %v944 = vrot.slane %v943, 4
        %v946 = vshll.u32 %v823, 16
        %v948 = vrot.slane %v946, 5
        %v949 = vsel %vm251, %v944, %v948
        %v950 = vshrl.u32 %v823, 16
        %v952 = vrot.slane %v950, 4
        %v953 = vor.u32 %v952, %v948
        %v954 = vrot.slane %v953, 4
        %v956 = vshll.u32 %v851, 16
        %v958 = vrot.slane %v956, 5
        %v959 = vsel %vm251, %v954, %v958
        %v961 = vshrl.u32 %v824, 16
        %v963 = vrot.slane %v961, 4
        %v964 = vshll.u32 %v824, 16
        %v966 = vrot.slane %v964, 5
        %v967 = vor.u32 %v963, %v966
        %v968 = vrot.slane %v967, 4
        %v970 = vshll.u32 %v825, 16
        %v972 = vrot.slane %v970, 5
        %v973 = vsel %vm251, %v968, %v972
        %v974 = vshrl.u32 %v825, 16
        %v976 = vrot.slane %v974, 4
        %v977 = vor.u32 %v976, %v972
        %v978 = vrot.slane %v977, 4
        %v980 = vshll.u32 %v852, 16
        %v982 = vrot.slane %v980, 5
        %v983 = vsel %vm251, %v978, %v982
        %v985 = vshrl.u32 %v826, 16
        %v987 = vrot.slane %v985, 4
        %v988 = vshll.u32 %v826, 16
        %v990 = vrot.slane %v988, 5
        %v991 = vor.u32 %v987, %v990
        %v992 = vrot.slane %v991, 4
        %v994 = vshll.u32 %v827, 16
        %v996 = vrot.slane %v994, 5
        %v997 = vsel %vm251, %v992, %v996
        %v998 = vshrl.u32 %v827, 16
        %v1000 = vrot.slane %v998, 4
        %v1001 = vor.u32 %v1000, %v996
        %v1002 = vrot.slane %v1001, 4
        %v1004 = vshll.u32 %v853, 16
        %v1006 = vrot.slane %v1004, 5
        %v1007 = vsel %vm251, %v1002, %v1006
        %v1009 = vshrl.u32 %v828, 16
        %v1011 = vrot.slane %v1009, 4
        %v1012 = vshll.u32 %v828, 16
        %v1014 = vrot.slane %v1012, 5
        %v1015 = vor.u32 %v1011, %v1014
        %v1016 = vrot.slane %v1015, 4
        %v1018 = vshll.u32 %v829, 16
        %v1020 = vrot.slane %v1018, 5
        %v1021 = vsel %vm251, %v1016, %v1020
        %v1022 = vshrl.u32 %v829, 16
        %v1024 = vrot.slane %v1022, 4
        %v1025 = vor.u32 %v1024, %v1020
        %v1026 = vrot.slane %v1025, 4
        %v1028 = vshll.u32 %v854, 16
        %v1030 = vrot.slane %v1028, 5
        %v1031 = vsel %vm251, %v1026, %v1030
        %v1033 = vshrl.u32 %v830, 16
        %v1035 = vrot.slane %v1033, 4
        %v1036 = vshll.u32 %v830, 16
        %v1038 = vrot.slane %v1036, 5
        %v1039 = vor.u32 %v1035, %v1038
        %v1040 = vrot.slane %v1039, 4
        %v1042 = vshll.u32 %v831, 16
        %v1044 = vrot.slane %v1042, 5
        %v1045 = vsel %vm251, %v1040, %v1044
        %v1046 = vshrl.u32 %v831, 16
        %v1048 = vrot.slane %v1046, 4
        %v1049 = vor.u32 %v1048, %v1044
        %v1050 = vrot.slane %v1049, 4
        %v1052 = vshll.u32 %v855, 16
        %v1054 = vrot.slane %v1052, 5
        %v1055 = vsel %vm251, %v1050, %v1054
        %v1057 = vshrl.u32 %v832, 16
        %v1059 = vrot.slane %v1057, 4
        %v1060 = vshll.u32 %v832, 16
        %v1062 = vrot.slane %v1060, 5
        %v1063 = vor.u32 %v1059, %v1062
        %v1064 = vrot.slane %v1063, 4
        %v1066 = vshll.u32 %v833, 16
        %v1068 = vrot.slane %v1066, 5
        %v1069 = vsel %vm251, %v1064, %v1068
        %v1070 = vshrl.u32 %v833, 16
        %v1072 = vrot.slane %v1070, 4
        %v1073 = vor.u32 %v1072, %v1068
        %v1074 = vrot.slane %v1073, 4
        %v1076 = vshll.u32 %v856, 16
        %v1078 = vrot.slane %v1076, 5
        %v1079 = vsel %vm251, %v1074, %v1078
        %v1081 = vshrl.u32 %v834, 16
        %v1083 = vrot.slane %v1081, 4
        %v1084 = vshll.u32 %v834, 16
        %v1086 = vrot.slane %v1084, 5
        %v1087 = vor.u32 %v1083, %v1086
        %v1088 = vrot.slane %v1087, 4
        %v1090 = vshll.u32 %v835, 16
        %v1092 = vrot.slane %v1090, 5
        %v1093 = vsel %vm251, %v1088, %v1092
        %v1094 = vshrl.u32 %v835, 16
        %v1096 = vrot.slane %v1094, 4
        %v1097 = vor.u32 %v1096, %v1092
        %v1098 = vrot.slane %v1097, 4
        %v1100 = vshll.u32 %v857, 16
        %v1102 = vrot.slane %v1100, 5
        %v1103 = vsel %vm251, %v1098, %v1102
        %v1105 = vshrl.u32 %v836, 16
        %v1107 = vrot.slane %v1105, 4
        %v1108 = vshll.u32 %v836, 16
        %v1110 = vrot.slane %v1108, 5
        %v1111 = vor.u32 %v1107, %v1110
        %v1112 = vrot.slane %v1111, 4
        %v1114 = vshll.u32 %v837, 16
        %v1116 = vrot.slane %v1114, 5
        %v1117 = vsel %vm251, %v1112, %v1116
        %v1118 = vshrl.u32 %v837, 16
        %v1120 = vrot.slane %v1118, 4
        %v1121 = vor.u32 %v1120, %v1116
        %v1122 = vrot.slane %v1121, 4
        %v1124 = vshll.u32 %v858, 16
        %v1126 = vrot.slane %v1124, 5
        %v1127 = vsel %vm251, %v1122, %v1126
        %v1129 = vshrl.u32 %v838, 16
        %v1131 = vrot.slane %v1129, 4
        %v1132 = vshll.u32 %v838, 16
        %v1134 = vrot.slane %v1132, 5
        %v1135 = vor.u32 %v1131, %v1134
        %v1136 = vrot.slane %v1135, 4
        %v1138 = vshll.u32 %v839, 16
        %v1140 = vrot.slane %v1138, 5
        %v1141 = vsel %vm251, %v1136, %v1140
        %v1142 = vshrl.u32 %v839, 16
        %v1144 = vrot.slane %v1142, 4
        %v1145 = vor.u32 %v1144, %v1140
        %v1146 = vrot.slane %v1145, 4
        %v1148 = vshll.u32 %v859, 16
        %v1150 = vrot.slane %v1148, 5
        %v1151 = vsel %vm251, %v1146, %v1150
        %v1153 = vshrl.u32 %v840, 16
        %v1155 = vrot.slane %v1153, 4
        %v1156 = vshll.u32 %v840, 16
        %v1158 = vrot.slane %v1156, 5
        %v1159 = vor.u32 %v1155, %v1158
        %v1160 = vrot.slane %v1159, 4
        %v1162 = vshll.u32 %v841, 16
        %v1164 = vrot.slane %v1162, 5
        %v1165 = vsel %vm251, %v1160, %v1164
        %v1166 = vshrl.u32 %v841, 16
        %v1168 = vrot.slane %v1166, 4
        %v1169 = vor.u32 %v1168, %v1164
        %v1170 = vrot.slane %v1169, 4
        %v1172 = vshll.u32 %v860, 16
        %v1174 = vrot.slane %v1172, 5
        %v1175 = vsel %vm251, %v1170, %v1174
        %v1177 = vshrl.u32 %v842, 16
        %v1179 = vrot.slane %v1177, 4
        %v1180 = vshll.u32 %v842, 16
        %v1182 = vrot.slane %v1180, 5
        %v1183 = vor.u32 %v1179, %v1182
        %v1184 = vrot.slane %v1183, 4
        %v1186 = vshll.u32 %v843, 16
        %v1188 = vrot.slane %v1186, 5
        %v1189 = vsel %vm251, %v1184, %v1188
        %v1190 = vshrl.u32 %v843, 16
        %v1192 = vrot.slane %v1190, 4
        %v1193 = vor.u32 %v1192, %v1188
        %v1194 = vrot.slane %v1193, 4
        %v1196 = vshll.u32 %v861, 16
        %v1198 = vrot.slane %v1196, 5
        %v1199 = vsel %vm251, %v1194, %v1198
        %v1201 = vshrl.u32 %v844, 16
        %v1203 = vrot.slane %v1201, 4
        %v1204 = vshll.u32 %v844, 16
        %v1206 = vrot.slane %v1204, 5
        %v1207 = vor.u32 %v1203, %v1206
        %v1208 = vrot.slane %v1207, 4
        %v1210 = vshll.u32 %v845, 16
        %v1212 = vrot.slane %v1210, 5
        %v1213 = vsel %vm251, %v1208, %v1212
        %v1214 = vshrl.u32 %v845, 16
        %v1216 = vrot.slane %v1214, 4
        %v1217 = vor.u32 %v1216, %v1212
        %v1218 = vrot.slane %v1217, 4
        %v1220 = vshll.u32 %v862, 16
        %v1222 = vrot.slane %v1220, 5
        %v1223 = vsel %vm251, %v1218, %v1222
        %v1225 = vshrl.u32 %v846, 16
        %v1227 = vrot.slane %v1225, 4
        %v1228 = vshll.u32 %v846, 16
        %v1230 = vrot.slane %v1228, 5
        %v1231 = vor.u32 %v1227, %v1230
        %v1232 = vrot.slane %v1231, 4
        %v1234 = vshll.u32 %v847, 16
        %v1236 = vrot.slane %v1234, 5
        %v1237 = vsel %vm251, %v1232, %v1236
        %v1238 = vshrl.u32 %v847, 16
        %v1240 = vrot.slane %v1238, 4
        %v1241 = vor.u32 %v1240, %v1236
        %v1242 = vrot.slane %v1241, 4
        %v1244 = vshll.u32 %v863, 16
        %v1246 = vrot.slane %v1244, 5
        %v1247 = vsel %vm251, %v1242, %v1246
        %v1248 = vld [vmem:[%s815] sm:$0xe]
        %v1249 = vld [vmem:[%s815 + $0xc] sm:$0xe]
        %v1250 = vld [vmem:[%s815 + $0x18] sm:$0xe]
        %v1251 = vld [vmem:[%s815 + $0x24] sm:$0xe]
        %v1252 = vld [vmem:[%s815 + $0x30] sm:$0xe]
        %v1253 = vld [vmem:[%s815 + $0x3c] sm:$0xe]
        %v1254 = vld [vmem:[%s815 + $0x48] sm:$0xe]
        %v1255 = vld [vmem:[%s815 + $0x54] sm:$0xe]
        %v1256 = vld [vmem:[%s815 + $0x60] sm:$0xe]
        %v1257 = vld [vmem:[%s815 + $0x6c] sm:$0xe]
        %v1258 = vld [vmem:[%s815 + $0x78] sm:$0xe]
        %v1259 = vld [vmem:[%s815 + $0x84] sm:$0xe]
        %v1260 = vld [vmem:[%s815 + $0x90] sm:$0xe]
        %v1261 = vld [vmem:[%s815 + $0x9c] sm:$0xe]
        %v1262 = vld [vmem:[%s815 + $0xa8] sm:$0xe]
        %v1263 = vld [vmem:[%s815 + $0xb4] sm:$0xe]
        %v1312 = vrot.slane %v1248, 5
        %v1313 = vrot.slane %v1312, 4
        %v1314 = vrot.slane %v817, 5
        %v1315 = vsel %vm702, %v1313, %v1314
        %v1316 = vrot.slane %v1314, 4
        %v1317 = vrot.slane %v848, 5
        %v1318 = vsel %vm702, %v1316, %v1317
        %v1319 = vrot.slane %v1249, 5
        %v1320 = vrot.slane %v1319, 4
        %v1321 = vrot.slane %v819, 5
        %v1322 = vsel %vm702, %v1320, %v1321
        %v1323 = vrot.slane %v1321, 4
        %v1324 = vrot.slane %v849, 5
        %v1325 = vsel %vm702, %v1323, %v1324
        %v1326 = vrot.slane %v1250, 5
        %v1327 = vrot.slane %v1326, 4
        %v1328 = vrot.slane %v821, 5
        %v1329 = vsel %vm702, %v1327, %v1328
        %v1330 = vrot.slane %v1328, 4
        %v1331 = vrot.slane %v850, 5
        %v1332 = vsel %vm702, %v1330, %v1331
        %v1333 = vrot.slane %v1251, 5
        %v1334 = vrot.slane %v1333, 4
        %v1335 = vrot.slane %v823, 5
        %v1336 = vsel %vm702, %v1334, %v1335
        %v1337 = vrot.slane %v1335, 4
        %v1338 = vrot.slane %v851, 5
        %v1339 = vsel %vm702, %v1337, %v1338
        %v1340 = vrot.slane %v1252, 5
        %v1341 = vrot.slane %v1340, 4
        %v1342 = vrot.slane %v825, 5
        %v1343 = vsel %vm702, %v1341, %v1342
        %v1344 = vrot.slane %v1342, 4
        %v1345 = vrot.slane %v852, 5
        %v1346 = vsel %vm702, %v1344, %v1345
        %v1347 = vrot.slane %v1253, 5
        %v1348 = vrot.slane %v1347, 4
        %v1349 = vrot.slane %v827, 5
        %v1350 = vsel %vm702, %v1348, %v1349
        %v1351 = vrot.slane %v1349, 4
        %v1352 = vrot.slane %v853, 5
        %v1353 = vsel %vm702, %v1351, %v1352
        %v1354 = vrot.slane %v1254, 5
        %v1355 = vrot.slane %v1354, 4
        %v1356 = vrot.slane %v829, 5
        %v1357 = vsel %vm702, %v1355, %v1356
        %v1358 = vrot.slane %v1356, 4
        %v1359 = vrot.slane %v854, 5
        %v1360 = vsel %vm702, %v1358, %v1359
        %v1361 = vrot.slane %v1255, 5
        %v1362 = vrot.slane %v1361, 4
        %v1363 = vrot.slane %v831, 5
        %v1364 = vsel %vm702, %v1362, %v1363
        %v1365 = vrot.slane %v1363, 4
        %v1366 = vrot.slane %v855, 5
        %v1367 = vsel %vm702, %v1365, %v1366
        %v1368 = vrot.slane %v1256, 5
        %v1369 = vrot.slane %v1368, 4
        %v1370 = vrot.slane %v833, 5
        %v1371 = vsel %vm702, %v1369, %v1370
        %v1372 = vrot.slane %v1370, 4
        %v1373 = vrot.slane %v856, 5
        %v1374 = vsel %vm702, %v1372, %v1373
        %v1375 = vrot.slane %v1257, 5
        %v1376 = vrot.slane %v1375, 4
        %v1377 = vrot.slane %v835, 5
        %v1378 = vsel %vm702, %v1376, %v1377
        %v1379 = vrot.slane %v1377, 4
        %v1380 = vrot.slane %v857, 5
        %v1381 = vsel %vm702, %v1379, %v1380
        %v1382 = vrot.slane %v1258, 5
        %v1383 = vrot.slane %v1382, 4
        %v1384 = vrot.slane %v837, 5
        %v1385 = vsel %vm702, %v1383, %v1384
        %v1386 = vrot.slane %v1384, 4
        %v1387 = vrot.slane %v858, 5
        %v1388 = vsel %vm702, %v1386, %v1387
        %v1389 = vrot.slane %v1259, 5
        %v1390 = vrot.slane %v1389, 4
        %v1391 = vrot.slane %v839, 5
        %v1392 = vsel %vm702, %v1390, %v1391
        %v1393 = vrot.slane %v1391, 4
        %v1394 = vrot.slane %v859, 5
        %v1395 = vsel %vm702, %v1393, %v1394
        %v1396 = vrot.slane %v1260, 5
        %v1397 = vrot.slane %v1396, 4
        %v1398 = vrot.slane %v841, 5
        %v1399 = vsel %vm702, %v1397, %v1398
        %v1400 = vrot.slane %v1398, 4
        %v1401 = vrot.slane %v860, 5
        %v1402 = vsel %vm702, %v1400, %v1401
        %v1403 = vrot.slane %v1261, 5
        %v1404 = vrot.slane %v1403, 4
        %v1405 = vrot.slane %v843, 5
        %v1406 = vsel %vm702, %v1404, %v1405
        %v1407 = vrot.slane %v1405, 4
        %v1408 = vrot.slane %v861, 5
        %v1409 = vsel %vm702, %v1407, %v1408
        %v1410 = vrot.slane %v1262, 5
        %v1411 = vrot.slane %v1410, 4
        %v1412 = vrot.slane %v845, 5
        %v1413 = vsel %vm702, %v1411, %v1412
        %v1414 = vrot.slane %v1412, 4
        %v1415 = vrot.slane %v862, 5
        %v1416 = vsel %vm702, %v1414, %v1415
        %v1417 = vrot.slane %v1263, 5
        %v1418 = vrot.slane %v1417, 4
        %v1419 = vrot.slane %v847, 5
        %v1420 = vsel %vm702, %v1418, %v1419
        %v1421 = vrot.slane %v1419, 4
        %v1422 = vrot.slane %v863, 5
        %v1423 = vsel %vm702, %v1421, %v1422
        %s1424 = scalar_lea.vmem %s198, 24
        %v1425 = vld [vmem:[%s1424] sm:$0xf]
        %v1426 = vld [vmem:[%s1424 + $0x4] sm:$0xf]
        %v1427 = vld [vmem:[%s1424 + $0xc] sm:$0xf]
        %v1428 = vld [vmem:[%s1424 + $0x10] sm:$0xf]
        %v1429 = vld [vmem:[%s1424 + $0x18] sm:$0xf]
        %v1430 = vld [vmem:[%s1424 + $0x1c] sm:$0xf]
        %v1431 = vld [vmem:[%s1424 + $0x24] sm:$0xf]
        %v1432 = vld [vmem:[%s1424 + $0x28] sm:$0xf]
        %v1433 = vld [vmem:[%s1424 + $0x30] sm:$0xf]
        %v1434 = vld [vmem:[%s1424 + $0x34] sm:$0xf]
        %v1435 = vld [vmem:[%s1424 + $0x3c] sm:$0xf]
        %v1436 = vld [vmem:[%s1424 + $0x40] sm:$0xf]
        %v1437 = vld [vmem:[%s1424 + $0x48] sm:$0xf]
        %v1438 = vld [vmem:[%s1424 + $0x4c] sm:$0xf]
        %v1439 = vld [vmem:[%s1424 + $0x54] sm:$0xf]
        %v1440 = vld [vmem:[%s1424 + $0x58] sm:$0xf]
        %v1441 = vld [vmem:[%s1424 + $0x60] sm:$0xf]
        %v1442 = vld [vmem:[%s1424 + $0x64] sm:$0xf]
        %v1443 = vld [vmem:[%s1424 + $0x6c] sm:$0xf]
        %v1444 = vld [vmem:[%s1424 + $0x70] sm:$0xf]
        %v1445 = vld [vmem:[%s1424 + $0x78] sm:$0xf]
        %v1446 = vld [vmem:[%s1424 + $0x7c] sm:$0xf]
        %v1447 = vld [vmem:[%s1424 + $0x84] sm:$0xf]
        %v1448 = vld [vmem:[%s1424 + $0x88] sm:$0xf]
        %v1449 = vld [vmem:[%s1424 + $0x90] sm:$0xf]
        %v1450 = vld [vmem:[%s1424 + $0x94] sm:$0xf]
        %v1451 = vld [vmem:[%s1424 + $0x9c] sm:$0xf]
        %v1452 = vld [vmem:[%s1424 + $0xa0] sm:$0xf]
        %v1453 = vld [vmem:[%s1424 + $0xa8] sm:$0xf]
        %v1454 = vld [vmem:[%s1424 + $0xac] sm:$0xf]
        %v1455 = vld [vmem:[%s1424 + $0xb4] sm:$0xf]
        %v1456 = vld [vmem:[%s1424 + $0xb8] sm:$0xf]
        %v1457 = vld [vmem:[%s1424 + $0x8] sm:$0x1]
        %v1458 = vld [vmem:[%s1424 + $0x14] sm:$0x1]
        %v1459 = vld [vmem:[%s1424 + $0x20] sm:$0x1]
        %v1460 = vld [vmem:[%s1424 + $0x2c] sm:$0x1]
        %v1461 = vld [vmem:[%s1424 + $0x38] sm:$0x1]
        %v1462 = vld [vmem:[%s1424 + $0x44] sm:$0x1]
        %v1463 = vld [vmem:[%s1424 + $0x50] sm:$0x1]
        %v1464 = vld [vmem:[%s1424 + $0x5c] sm:$0x1]
        %v1465 = vld [vmem:[%s1424 + $0x68] sm:$0x1]
        %v1466 = vld [vmem:[%s1424 + $0x74] sm:$0x1]
        %v1467 = vld [vmem:[%s1424 + $0x80] sm:$0x1]
        %v1468 = vld [vmem:[%s1424 + $0x8c] sm:$0x1]
        %v1469 = vld [vmem:[%s1424 + $0x98] sm:$0x1]
        %v1470 = vld [vmem:[%s1424 + $0xa4] sm:$0x1]
        %v1471 = vld [vmem:[%s1424 + $0xb0] sm:$0x1]
        %v1472 = vld [vmem:[%s1424 + $0xbc] sm:$0x1]
        %v1474 = vshrl.u32 %v1425, 16
        %v1476 = vrot.slane %v1474, 4
        %v1477 = vshll.u32 %v1425, 16
        %v1479 = vrot.slane %v1477, 5
        %v1480 = vor.u32 %v1476, %v1479
        %v1481 = vrot.slane %v1480, 4
        %v1483 = vshll.u32 %v1426, 16
        %v1485 = vrot.slane %v1483, 5
        %v1486 = vsel %vm251, %v1481, %v1485
        %v1487 = vshrl.u32 %v1426, 16
        %v1489 = vrot.slane %v1487, 4
        %v1490 = vor.u32 %v1489, %v1485
        %v1491 = vrot.slane %v1490, 4
        %v1493 = vshll.u32 %v1457, 16
        %v1495 = vrot.slane %v1493, 5
        %v1496 = vsel %vm251, %v1491, %v1495
        %v1498 = vshrl.u32 %v1427, 16
        %v1500 = vrot.slane %v1498, 4
        %v1501 = vshll.u32 %v1427, 16
        %v1503 = vrot.slane %v1501, 5
        %v1504 = vor.u32 %v1500, %v1503
        %v1505 = vrot.slane %v1504, 4
        %v1507 = vshll.u32 %v1428, 16
        %v1509 = vrot.slane %v1507, 5
        %v1510 = vsel %vm251, %v1505, %v1509
        %v1511 = vshrl.u32 %v1428, 16
        %v1513 = vrot.slane %v1511, 4
        %v1514 = vor.u32 %v1513, %v1509
        %v1515 = vrot.slane %v1514, 4
        %v1517 = vshll.u32 %v1458, 16
        %v1519 = vrot.slane %v1517, 5
        %v1520 = vsel %vm251, %v1515, %v1519
        %v1522 = vshrl.u32 %v1429, 16
        %v1524 = vrot.slane %v1522, 4
        %v1525 = vshll.u32 %v1429, 16
        %v1527 = vrot.slane %v1525, 5
        %v1528 = vor.u32 %v1524, %v1527
        %v1529 = vrot.slane %v1528, 4
        %v1531 = vshll.u32 %v1430, 16
        %v1533 = vrot.slane %v1531, 5
        %v1534 = vsel %vm251, %v1529, %v1533
        %v1535 = vshrl.u32 %v1430, 16
        %v1537 = vrot.slane %v1535, 4
        %v1538 = vor.u32 %v1537, %v1533
        %v1539 = vrot.slane %v1538, 4
        %v1541 = vshll.u32 %v1459, 16
        %v1543 = vrot.slane %v1541, 5
        %v1544 = vsel %vm251, %v1539, %v1543
        %v1546 = vshrl.u32 %v1431, 16
        %v1548 = vrot.slane %v1546, 4
        %v1549 = vshll.u32 %v1431, 16
        %v1551 = vrot.slane %v1549, 5
        %v1552 = vor.u32 %v1548, %v1551
        %v1553 = vrot.slane %v1552, 4
        %v1555 = vshll.u32 %v1432, 16
        %v1557 = vrot.slane %v1555, 5
        %v1558 = vsel %vm251, %v1553, %v1557
        %v1559 = vshrl.u32 %v1432, 16
        %v1561 = vrot.slane %v1559, 4
        %v1562 = vor.u32 %v1561, %v1557
        %v1563 = vrot.slane %v1562, 4
        %v1565 = vshll.u32 %v1460, 16
        %v1567 = vrot.slane %v1565, 5
        %v1568 = vsel %vm251, %v1563, %v1567
        %v1570 = vshrl.u32 %v1433, 16
        %v1572 = vrot.slane %v1570, 4
        %v1573 = vshll.u32 %v1433, 16
        %v1575 = vrot.slane %v1573, 5
        %v1576 = vor.u32 %v1572, %v1575
        %v1577 = vrot.slane %v1576, 4
        %v1579 = vshll.u32 %v1434, 16
        %v1581 = vrot.slane %v1579, 5
        %v1582 = vsel %vm251, %v1577, %v1581
        %v1583 = vshrl.u32 %v1434, 16
        %v1585 = vrot.slane %v1583, 4
        %v1586 = vor.u32 %v1585, %v1581
        %v1587 = vrot.slane %v1586, 4
        %v1589 = vshll.u32 %v1461, 16
        %v1591 = vrot.slane %v1589, 5
        %v1592 = vsel %vm251, %v1587, %v1591
        %v1594 = vshrl.u32 %v1435, 16
        %v1596 = vrot.slane %v1594, 4
        %v1597 = vshll.u32 %v1435, 16
        %v1599 = vrot.slane %v1597, 5
        %v1600 = vor.u32 %v1596, %v1599
        %v1601 = vrot.slane %v1600, 4
        %v1603 = vshll.u32 %v1436, 16
        %v1605 = vrot.slane %v1603, 5
        %v1606 = vsel %vm251, %v1601, %v1605
        %v1607 = vshrl.u32 %v1436, 16
        %v1609 = vrot.slane %v1607, 4
        %v1610 = vor.u32 %v1609, %v1605
        %v1611 = vrot.slane %v1610, 4
        %v1613 = vshll.u32 %v1462, 16
        %v1615 = vrot.slane %v1613, 5
        %v1616 = vsel %vm251, %v1611, %v1615
        %v1618 = vshrl.u32 %v1437, 16
        %v1620 = vrot.slane %v1618, 4
        %v1621 = vshll.u32 %v1437, 16
        %v1623 = vrot.slane %v1621, 5
        %v1624 = vor.u32 %v1620, %v1623
        %v1625 = vrot.slane %v1624, 4
        %v1627 = vshll.u32 %v1438, 16
        %v1629 = vrot.slane %v1627, 5
        %v1630 = vsel %vm251, %v1625, %v1629
        %v1631 = vshrl.u32 %v1438, 16
        %v1633 = vrot.slane %v1631, 4
        %v1634 = vor.u32 %v1633, %v1629
        %v1635 = vrot.slane %v1634, 4
        %v1637 = vshll.u32 %v1463, 16
        %v1639 = vrot.slane %v1637, 5
        %v1640 = vsel %vm251, %v1635, %v1639
        %v1642 = vshrl.u32 %v1439, 16
        %v1644 = vrot.slane %v1642, 4
        %v1645 = vshll.u32 %v1439, 16
        %v1647 = vrot.slane %v1645, 5
        %v1648 = vor.u32 %v1644, %v1647
        %v1649 = vrot.slane %v1648, 4
        %v1651 = vshll.u32 %v1440, 16
        %v1653 = vrot.slane %v1651, 5
        %v1654 = vsel %vm251, %v1649, %v1653
        %v1655 = vshrl.u32 %v1440, 16
        %v1657 = vrot.slane %v1655, 4
        %v1658 = vor.u32 %v1657, %v1653
        %v1659 = vrot.slane %v1658, 4
        %v1661 = vshll.u32 %v1464, 16
        %v1663 = vrot.slane %v1661, 5
        %v1664 = vsel %vm251, %v1659, %v1663
        %v1666 = vshrl.u32 %v1441, 16
        %v1668 = vrot.slane %v1666, 4
        %v1669 = vshll.u32 %v1441, 16
        %v1671 = vrot.slane %v1669, 5
        %v1672 = vor.u32 %v1668, %v1671
        %v1673 = vrot.slane %v1672, 4
        %v1675 = vshll.u32 %v1442, 16
        %v1677 = vrot.slane %v1675, 5
        %v1678 = vsel %vm251, %v1673, %v1677
        %v1679 = vshrl.u32 %v1442, 16
        %v1681 = vrot.slane %v1679, 4
        %v1682 = vor.u32 %v1681, %v1677
        %v1683 = vrot.slane %v1682, 4
        %v1685 = vshll.u32 %v1465, 16
        %v1687 = vrot.slane %v1685, 5
        %v1688 = vsel %vm251, %v1683, %v1687
        %v1690 = vshrl.u32 %v1443, 16
        %v1692 = vrot.slane %v1690, 4
        %v1693 = vshll.u32 %v1443, 16
        %v1695 = vrot.slane %v1693, 5
        %v1696 = vor.u32 %v1692, %v1695
        %v1697 = vrot.slane %v1696, 4
        %v1699 = vshll.u32 %v1444, 16
        %v1701 = vrot.slane %v1699, 5
        %v1702 = vsel %vm251, %v1697, %v1701
        %v1703 = vshrl.u32 %v1444, 16
        %v1705 = vrot.slane %v1703, 4
        %v1706 = vor.u32 %v1705, %v1701
        %v1707 = vrot.slane %v1706, 4
        %v1709 = vshll.u32 %v1466, 16
        %v1711 = vrot.slane %v1709, 5
        %v1712 = vsel %vm251, %v1707, %v1711
        %v1714 = vshrl.u32 %v1445, 16
        %v1716 = vrot.slane %v1714, 4
        %v1717 = vshll.u32 %v1445, 16
        %v1719 = vrot.slane %v1717, 5
        %v1720 = vor.u32 %v1716, %v1719
        %v1721 = vrot.slane %v1720, 4
        %v1723 = vshll.u32 %v1446, 16
        %v1725 = vrot.slane %v1723, 5
        %v1726 = vsel %vm251, %v1721, %v1725
        %v1727 = vshrl.u32 %v1446, 16
        %v1729 = vrot.slane %v1727, 4
        %v1730 = vor.u32 %v1729, %v1725
        %v1731 = vrot.slane %v1730, 4
        %v1733 = vshll.u32 %v1467, 16
        %v1735 = vrot.slane %v1733, 5
        %v1736 = vsel %vm251, %v1731, %v1735
        %v1738 = vshrl.u32 %v1447, 16
        %v1740 = vrot.slane %v1738, 4
        %v1741 = vshll.u32 %v1447, 16
        %v1743 = vrot.slane %v1741, 5
        %v1744 = vor.u32 %v1740, %v1743
        %v1745 = vrot.slane %v1744, 4
        %v1747 = vshll.u32 %v1448, 16
        %v1749 = vrot.slane %v1747, 5
        %v1750 = vsel %vm251, %v1745, %v1749
        %v1751 = vshrl.u32 %v1448, 16
        %v1753 = vrot.slane %v1751, 4
        %v1754 = vor.u32 %v1753, %v1749
        %v1755 = vrot.slane %v1754, 4
        %v1757 = vshll.u32 %v1468, 16
        %v1759 = vrot.slane %v1757, 5
        %v1760 = vsel %vm251, %v1755, %v1759
        %v1762 = vshrl.u32 %v1449, 16
        %v1764 = vrot.slane %v1762, 4
        %v1765 = vshll.u32 %v1449, 16
        %v1767 = vrot.slane %v1765, 5
        %v1768 = vor.u32 %v1764, %v1767
        %v1769 = vrot.slane %v1768, 4
        %v1771 = vshll.u32 %v1450, 16
        %v1773 = vrot.slane %v1771, 5
        %v1774 = vsel %vm251, %v1769, %v1773
        %v1775 = vshrl.u32 %v1450, 16
        %v1777 = vrot.slane %v1775, 4
        %v1778 = vor.u32 %v1777, %v1773
        %v1779 = vrot.slane %v1778, 4
        %v1781 = vshll.u32 %v1469, 16
        %v1783 = vrot.slane %v1781, 5
        %v1784 = vsel %vm251, %v1779, %v1783
        %v1786 = vshrl.u32 %v1451, 16
        %v1788 = vrot.slane %v1786, 4
        %v1789 = vshll.u32 %v1451, 16
        %v1791 = vrot.slane %v1789, 5
        %v1792 = vor.u32 %v1788, %v1791
        %v1793 = vrot.slane %v1792, 4
        %v1795 = vshll.u32 %v1452, 16
        %v1797 = vrot.slane %v1795, 5
        %v1798 = vsel %vm251, %v1793, %v1797
        %v1799 = vshrl.u32 %v1452, 16
        %v1801 = vrot.slane %v1799, 4
        %v1802 = vor.u32 %v1801, %v1797
        %v1803 = vrot.slane %v1802, 4
        %v1805 = vshll.u32 %v1470, 16
        %v1807 = vrot.slane %v1805, 5
        %v1808 = vsel %vm251, %v1803, %v1807
        %v1810 = vshrl.u32 %v1453, 16
        %v1812 = vrot.slane %v1810, 4
        %v1813 = vshll.u32 %v1453, 16
        %v1815 = vrot.slane %v1813, 5
        %v1816 = vor.u32 %v1812, %v1815
        %v1817 = vrot.slane %v1816, 4
        %v1819 = vshll.u32 %v1454, 16
        %v1821 = vrot.slane %v1819, 5
        %v1822 = vsel %vm251, %v1817, %v1821
        %v1823 = vshrl.u32 %v1454, 16
        %v1825 = vrot.slane %v1823, 4
        %v1826 = vor.u32 %v1825, %v1821
        %v1827 = vrot.slane %v1826, 4
        %v1829 = vshll.u32 %v1471, 16
        %v1831 = vrot.slane %v1829, 5
        %v1832 = vsel %vm251, %v1827, %v1831
        %v1834 = vshrl.u32 %v1455, 16
        %v1836 = vrot.slane %v1834, 4
        %v1837 = vshll.u32 %v1455, 16
        %v1839 = vrot.slane %v1837, 5
        %v1840 = vor.u32 %v1836, %v1839
        %v1841 = vrot.slane %v1840, 4
        %v1843 = vshll.u32 %v1456, 16
        %v1845 = vrot.slane %v1843, 5
        %v1846 = vsel %vm251, %v1841, %v1845
        %v1847 = vshrl.u32 %v1456, 16
        %v1849 = vrot.slane %v1847, 4
        %v1850 = vor.u32 %v1849, %v1845
        %v1851 = vrot.slane %v1850, 4
        %v1853 = vshll.u32 %v1472, 16
        %v1855 = vrot.slane %v1853, 5
        %v1856 = vsel %vm251, %v1851, %v1855
        %v1857 = vld [vmem:[%s1424] sm:$0xe]
        %v1858 = vld [vmem:[%s1424 + $0xc] sm:$0xe]
        %v1859 = vld [vmem:[%s1424 + $0x18] sm:$0xe]
        %v1860 = vld [vmem:[%s1424 + $0x24] sm:$0xe]
        %v1861 = vld [vmem:[%s1424 + $0x30] sm:$0xe]
        %v1862 = vld [vmem:[%s1424 + $0x3c] sm:$0xe]
        %v1863 = vld [vmem:[%s1424 + $0x48] sm:$0xe]
        %v1864 = vld [vmem:[%s1424 + $0x54] sm:$0xe]
        %v1865 = vld [vmem:[%s1424 + $0x60] sm:$0xe]
        %v1866 = vld [vmem:[%s1424 + $0x6c] sm:$0xe]
        %v1867 = vld [vmem:[%s1424 + $0x78] sm:$0xe]
        %v1868 = vld [vmem:[%s1424 + $0x84] sm:$0xe]
        %v1869 = vld [vmem:[%s1424 + $0x90] sm:$0xe]
        %v1870 = vld [vmem:[%s1424 + $0x9c] sm:$0xe]
        %v1871 = vld [vmem:[%s1424 + $0xa8] sm:$0xe]
        %v1872 = vld [vmem:[%s1424 + $0xb4] sm:$0xe]
        %v1921 = vrot.slane %v1857, 5
        %v1922 = vrot.slane %v1921, 4
        %v1923 = vrot.slane %v1426, 5
        %v1924 = vsel %vm702, %v1922, %v1923
        %v1925 = vrot.slane %v1923, 4
        %v1926 = vrot.slane %v1457, 5
        %v1927 = vsel %vm702, %v1925, %v1926
        %v1928 = vrot.slane %v1858, 5
        %v1929 = vrot.slane %v1928, 4
        %v1930 = vrot.slane %v1428, 5
        %v1931 = vsel %vm702, %v1929, %v1930
        %v1932 = vrot.slane %v1930, 4
        %v1933 = vrot.slane %v1458, 5
        %v1934 = vsel %vm702, %v1932, %v1933
        %v1935 = vrot.slane %v1859, 5
        %v1936 = vrot.slane %v1935, 4
        %v1937 = vrot.slane %v1430, 5
        %v1938 = vsel %vm702, %v1936, %v1937
        %v1939 = vrot.slane %v1937, 4
        %v1940 = vrot.slane %v1459, 5
        %v1941 = vsel %vm702, %v1939, %v1940
        %v1942 = vrot.slane %v1860, 5
        %v1943 = vrot.slane %v1942, 4
        %v1944 = vrot.slane %v1432, 5
        %v1945 = vsel %vm702, %v1943, %v1944
        %v1946 = vrot.slane %v1944, 4
        %v1947 = vrot.slane %v1460, 5
        %v1948 = vsel %vm702, %v1946, %v1947
        %v1949 = vrot.slane %v1861, 5
        %v1950 = vrot.slane %v1949, 4
        %v1951 = vrot.slane %v1434, 5
        %v1952 = vsel %vm702, %v1950, %v1951
        %v1953 = vrot.slane %v1951, 4
        %v1954 = vrot.slane %v1461, 5
        %v1955 = vsel %vm702, %v1953, %v1954
        %v1956 = vrot.slane %v1862, 5
        %v1957 = vrot.slane %v1956, 4
        %v1958 = vrot.slane %v1436, 5
        %v1959 = vsel %vm702, %v1957, %v1958
        %v1960 = vrot.slane %v1958, 4
        %v1961 = vrot.slane %v1462, 5
        %v1962 = vsel %vm702, %v1960, %v1961
        %v1963 = vrot.slane %v1863, 5
        %v1964 = vrot.slane %v1963, 4
        %v1965 = vrot.slane %v1438, 5
        %v1966 = vsel %vm702, %v1964, %v1965
        %v1967 = vrot.slane %v1965, 4
        %v1968 = vrot.slane %v1463, 5
        %v1969 = vsel %vm702, %v1967, %v1968
        %v1970 = vrot.slane %v1864, 5
        %v1971 = vrot.slane %v1970, 4
        %v1972 = vrot.slane %v1440, 5
        %v1973 = vsel %vm702, %v1971, %v1972
        %v1974 = vrot.slane %v1972, 4
        %v1975 = vrot.slane %v1464, 5
        %v1976 = vsel %vm702, %v1974, %v1975
        %v1977 = vrot.slane %v1865, 5
        %v1978 = vrot.slane %v1977, 4
        %v1979 = vrot.slane %v1442, 5
        %v1980 = vsel %vm702, %v1978, %v1979
        %v1981 = vrot.slane %v1979, 4
        %v1982 = vrot.slane %v1465, 5
        %v1983 = vsel %vm702, %v1981, %v1982
        %v1984 = vrot.slane %v1866, 5
        %v1985 = vrot.slane %v1984, 4
        %v1986 = vrot.slane %v1444, 5
        %v1987 = vsel %vm702, %v1985, %v1986
        %v1988 = vrot.slane %v1986, 4
        %v1989 = vrot.slane %v1466, 5
        %v1990 = vsel %vm702, %v1988, %v1989
        %v1991 = vrot.slane %v1867, 5
        %v1992 = vrot.slane %v1991, 4
        %v1993 = vrot.slane %v1446, 5
        %v1994 = vsel %vm702, %v1992, %v1993
        %v1995 = vrot.slane %v1993, 4
        %v1996 = vrot.slane %v1467, 5
        %v1997 = vsel %vm702, %v1995, %v1996
        %v1998 = vrot.slane %v1868, 5
        %v1999 = vrot.slane %v1998, 4
        %v2000 = vrot.slane %v1448, 5
        %v2001 = vsel %vm702, %v1999, %v2000
        %v2002 = vrot.slane %v2000, 4
        %v2003 = vrot.slane %v1468, 5
        %v2004 = vsel %vm702, %v2002, %v2003
        %v2005 = vrot.slane %v1869, 5
        %v2006 = vrot.slane %v2005, 4
        %v2007 = vrot.slane %v1450, 5
        %v2008 = vsel %vm702, %v2006, %v2007
        %v2009 = vrot.slane %v2007, 4
        %v2010 = vrot.slane %v1469, 5
        %v2011 = vsel %vm702, %v2009, %v2010
        %v2012 = vrot.slane %v1870, 5
        %v2013 = vrot.slane %v2012, 4
        %v2014 = vrot.slane %v1452, 5
        %v2015 = vsel %vm702, %v2013, %v2014
        %v2016 = vrot.slane %v2014, 4
        %v2017 = vrot.slane %v1470, 5
        %v2018 = vsel %vm702, %v2016, %v2017
        %v2019 = vrot.slane %v1871, 5
        %v2020 = vrot.slane %v2019, 4
        %v2021 = vrot.slane %v1454, 5
        %v2022 = vsel %vm702, %v2020, %v2021
        %v2023 = vrot.slane %v2021, 4
        %v2024 = vrot.slane %v1471, 5
        %v2025 = vsel %vm702, %v2023, %v2024
        %v2026 = vrot.slane %v1872, 5
        %v2027 = vrot.slane %v2026, 4
        %v2028 = vrot.slane %v1456, 5
        %v2029 = vsel %vm702, %v2027, %v2028
        %v2030 = vrot.slane %v2028, 4
        %v2031 = vrot.slane %v1472, 5
        %v2032 = vsel %vm702, %v2030, %v2031
        %v2033 = vld [vmem:[%s2] sm:$0x3]
        %v2034 = vld [vmem:[%s2] sm:$0xc]
        %v2035 = vunpack.c.l.b16 %v265
        %v2036 = vunpack.c.l.b16 %v275
        %v2037 = vunpack.c.l.b16 %v289
        %v2038 = vunpack.c.l.b16 %v299
        %v2039 = vunpack.c.l.b16 %v313
        %v2040 = vunpack.c.l.b16 %v323
        %v2041 = vunpack.c.l.b16 %v337
        %v2042 = vunpack.c.l.b16 %v347
        %v2043 = vunpack.c.l.b16 %v361
        %v2044 = vunpack.c.l.b16 %v371
        %v2045 = vunpack.c.l.b16 %v385
        %v2046 = vunpack.c.l.b16 %v395
        %v2047 = vunpack.c.l.b16 %v409
        %v2048 = vunpack.c.l.b16 %v419
        %v2049 = vunpack.c.l.b16 %v433
        %v2050 = vunpack.c.l.b16 %v443
        %v2051 = vunpack.c.l.b16 %v457
        %v2052 = vunpack.c.l.b16 %v467
        %v2053 = vunpack.c.l.b16 %v481
        %v2054 = vunpack.c.l.b16 %v491
        %v2055 = vunpack.c.l.b16 %v505
        %v2056 = vunpack.c.l.b16 %v515
        %v2057 = vunpack.c.l.b16 %v529
        %v2058 = vunpack.c.l.b16 %v539
        %v2059 = vunpack.c.l.b16 %v553
        %v2060 = vunpack.c.l.b16 %v563
        %v2061 = vunpack.c.l.b16 %v577
        %v2062 = vunpack.c.l.b16 %v587
        %v2063 = vunpack.c.l.b16 %v601
        %v2064 = vunpack.c.l.b16 %v611
        %v2065 = vunpack.c.l.b16 %v625
        %v2066 = vunpack.c.l.b16 %v635
        %v2067 = vpack.c.b16 %v2036, %v2035
        %v2068 = vpack.c.b16 %v2038, %v2037
        %v2069 = vpack.c.b16 %v2040, %v2039
        %v2070 = vpack.c.b16 %v2042, %v2041
        %v2071 = vpack.c.b16 %v2044, %v2043
        %v2072 = vpack.c.b16 %v2046, %v2045
        %v2073 = vpack.c.b16 %v2048, %v2047
        %v2074 = vpack.c.b16 %v2050, %v2049
        %v2075 = vpack.c.b16 %v2052, %v2051
        %v2076 = vpack.c.b16 %v2054, %v2053
        %v2077 = vpack.c.b16 %v2056, %v2055
        %v2078 = vpack.c.b16 %v2058, %v2057
        %v2079 = vpack.c.b16 %v2060, %v2059
        %v2080 = vpack.c.b16 %v2062, %v2061
        %v2081 = vpack.c.b16 %v2064, %v2063
        %v2082 = vpack.c.b16 %v2066, %v2065
        %v2084 = vunpack.c.l.b16 %v2034
        %v2085 = vpack.c.b16 %v2084, %v2084
        %v2086 = vrot.slane %v2085, 2
        %vm2087 = vcmask 31744
        %v2089 = vsel %vm2087, %v2067, 0
        %v2092 = vsel %vm2087, %v2068, 0
        %v2095 = vsel %vm2087, %v2069, 0
        %v2098 = vsel %vm2087, %v2070, 0
        %v2101 = vsel %vm2087, %v2071, 0
        %v2104 = vsel %vm2087, %v2072, 0
        %v2107 = vsel %vm2087, %v2073, 0
        %v2110 = vsel %vm2087, %v2074, 0
        %v2113 = vsel %vm2087, %v2075, 0
        %v2116 = vsel %vm2087, %v2076, 0
        %v2119 = vsel %vm2087, %v2077, 0
        %v2122 = vsel %vm2087, %v2078, 0
        %v2125 = vsel %vm2087, %v2079, 0
        %v2128 = vsel %vm2087, %v2080, 0
        %v2131 = vsel %vm2087, %v2081, 0
        %v2134 = vsel %vm2087, %v2082, 0
        %vm2136 = vcmask 1041408
        %v2138 = vsel %vm2136, %v2086, 0
        %2140 = vmatprep.subr.bf16.mxu0 0
        %2141 = vmatpush1.bf16.msra.mxu0 0
        %2142 = vmatprep.subr.bf16.mxu0 0
        %2143 = vmatpush1.bf16.msra.mxu0 0
        %2144 = vmatprep.subr.bf16.mxu0 0
        %2145 = vmatpush1.bf16.msra.mxu0 0
        %2146 = vmatprep.subr.bf16.mxu0 0
        %2147 = vmatpush1.bf16.msra.mxu0 0
        %2148 = vmatprep.subr.bf16.mxu0 0
        %2149 = vmatpush1.bf16.msra.mxu0 0
        %2150 = vmatprep.subr.bf16.mxu0 0
        %2151 = vmatpush1.bf16.msra.mxu0 0
        %2152 = vmatprep.subr.bf16.mxu0 0
        %2153 = vmatpush1.bf16.msra.mxu0 0
        %2154 = vmatprep.subr.bf16.mxu0 0
        %2155 = vmatpush1.bf16.msra.mxu0 %v2138
        %2156 = vmatprep.subr.bf16.mxu0 0
        %2157 = vmatpush2.bf16.msra.mxu0 0
        %2158 = vmatprep.subr.bf16.mxu0 0
        %2159 = vmatpush2.bf16.msra.mxu0 0
        %2160 = vmatprep.subr.bf16.mxu0 0
        %2161 = vmatpush2.bf16.msra.mxu0 0
        %2162 = vmatprep.subr.bf16.mxu0 0
        %2163 = vmatpush2.bf16.msra.mxu0 0
        %2164 = vmatprep.subr.bf16.mxu0 0
        %2165 = vmatpush2.bf16.msra.mxu0 0
        %2166 = vmatprep.subr.bf16.mxu0 0
        %2167 = vmatpush2.bf16.msra.mxu0 0
        %2168 = vmatprep.subr.bf16.mxu0 0
        %2169 = vmatpush2.bf16.msra.mxu0 0
        %2170 = vmatprep.subr.bf16.mxu0 0
        %2171 = vmatpush2.bf16.msra.mxu0 0
        %2172 = vmatprep.mubr.bf16.mxu0 0
        %2173 = vmatmul.mubr.bf16.gmra.mxu0 %v2089
        %v2174 = vpop.f32.mrf.mxu0
        %v2175 = vadd.f32 0.0, %v2174
        %v2176 = vpop.f32.mrf.mxu0
        %v2177 = vpop.f32.mrf.mxu0
        %v2178 = vadd.f32 0.0, %v2177
        %v2179 = vpop.f32.mrf.mxu0
        %2180 = vmatprep.mubr.bf16.mxu0 0
        %2181 = vmatmul.mubr.bf16.gmra.mxu0 %v2092
        %v2182 = vpop.f32.mrf.mxu0
        %v2183 = vadd.f32 0.0, %v2182
        %v2184 = vpop.f32.mrf.mxu0
        %v2185 = vpop.f32.mrf.mxu0
        %v2186 = vadd.f32 0.0, %v2185
        %v2187 = vpop.f32.mrf.mxu0
        %2188 = vmatprep.mubr.bf16.mxu0 0
        %2189 = vmatmul.mubr.bf16.gmra.mxu0 %v2095
        %v2190 = vpop.f32.mrf.mxu0
        %v2191 = vadd.f32 0.0, %v2190
        %v2192 = vpop.f32.mrf.mxu0
        %v2193 = vpop.f32.mrf.mxu0
        %v2194 = vadd.f32 0.0, %v2193
        %v2195 = vpop.f32.mrf.mxu0
        %2196 = vmatprep.mubr.bf16.mxu0 0
        %2197 = vmatmul.mubr.bf16.gmra.mxu0 %v2098
        %v2198 = vpop.f32.mrf.mxu0
        %v2199 = vadd.f32 0.0, %v2198
        %v2200 = vpop.f32.mrf.mxu0
        %v2201 = vpop.f32.mrf.mxu0
        %v2202 = vadd.f32 0.0, %v2201
        %v2203 = vpop.f32.mrf.mxu0
        %2204 = vmatprep.mubr.bf16.mxu0 0
        %2205 = vmatmul.mubr.bf16.gmra.mxu0 %v2101
        %v2206 = vpop.f32.mrf.mxu0
        %v2207 = vadd.f32 0.0, %v2206
        %v2208 = vpop.f32.mrf.mxu0
        %v2209 = vpop.f32.mrf.mxu0
        %v2210 = vadd.f32 0.0, %v2209
        %v2211 = vpop.f32.mrf.mxu0
        %2212 = vmatprep.mubr.bf16.mxu0 0
        %2213 = vmatmul.mubr.bf16.gmra.mxu0 %v2104
        %v2214 = vpop.f32.mrf.mxu0
        %v2215 = vadd.f32 0.0, %v2214
        %v2216 = vpop.f32.mrf.mxu0
        %v2217 = vpop.f32.mrf.mxu0
        %v2218 = vadd.f32 0.0, %v2217
        %v2219 = vpop.f32.mrf.mxu0
        %2220 = vmatprep.mubr.bf16.mxu0 0
        %2221 = vmatmul.mubr.bf16.gmra.mxu0 %v2107
        %v2222 = vpop.f32.mrf.mxu0
        %v2223 = vadd.f32 0.0, %v2222
        %v2224 = vpop.f32.mrf.mxu0
        %v2225 = vpop.f32.mrf.mxu0
        %v2226 = vadd.f32 0.0, %v2225
        %v2227 = vpop.f32.mrf.mxu0
        %2228 = vmatprep.mubr.bf16.mxu0 0
        %2229 = vmatmul.mubr.bf16.gmra.mxu0 %v2110
        %v2230 = vpop.f32.mrf.mxu0
        %v2231 = vadd.f32 0.0, %v2230
        %v2232 = vpop.f32.mrf.mxu0
        %v2233 = vpop.f32.mrf.mxu0
        %v2234 = vadd.f32 0.0, %v2233
        %v2235 = vpop.f32.mrf.mxu0
        %2236 = vmatprep.mubr.bf16.mxu0 0
        %2237 = vmatmul.mubr.bf16.gmra.mxu0 %v2113
        %v2238 = vpop.f32.mrf.mxu0
        %v2239 = vadd.f32 0.0, %v2238
        %v2240 = vpop.f32.mrf.mxu0
        %v2241 = vpop.f32.mrf.mxu0
        %v2242 = vadd.f32 0.0, %v2241
        %v2243 = vpop.f32.mrf.mxu0
        %2244 = vmatprep.mubr.bf16.mxu0 0
        %2245 = vmatmul.mubr.bf16.gmra.mxu0 %v2116
        %v2246 = vpop.f32.mrf.mxu0
        %v2247 = vadd.f32 0.0, %v2246
        %v2248 = vpop.f32.mrf.mxu0
        %v2249 = vpop.f32.mrf.mxu0
        %v2250 = vadd.f32 0.0, %v2249
        %v2251 = vpop.f32.mrf.mxu0
        %2252 = vmatprep.mubr.bf16.mxu0 0
        %2253 = vmatmul.mubr.bf16.gmra.mxu0 %v2119
        %v2254 = vpop.f32.mrf.mxu0
        %v2255 = vadd.f32 0.0, %v2254
        %v2256 = vpop.f32.mrf.mxu0
        %v2257 = vpop.f32.mrf.mxu0
        %v2258 = vadd.f32 0.0, %v2257
        %v2259 = vpop.f32.mrf.mxu0
        %2260 = vmatprep.mubr.bf16.mxu0 0
        %2261 = vmatmul.mubr.bf16.gmra.mxu0 %v2122
        %v2262 = vpop.f32.mrf.mxu0
        %v2263 = vadd.f32 0.0, %v2262
        %v2264 = vpop.f32.mrf.mxu0
        %v2265 = vpop.f32.mrf.mxu0
        %v2266 = vadd.f32 0.0, %v2265
        %v2267 = vpop.f32.mrf.mxu0
        %2268 = vmatprep.mubr.bf16.mxu0 0
        %2269 = vmatmul.mubr.bf16.gmra.mxu0 %v2125
        %v2270 = vpop.f32.mrf.mxu0
        %v2271 = vadd.f32 0.0, %v2270
        %v2272 = vpop.f32.mrf.mxu0
        %v2273 = vpop.f32.mrf.mxu0
        %v2274 = vadd.f32 0.0, %v2273
        %v2275 = vpop.f32.mrf.mxu0
        %2276 = vmatprep.mubr.bf16.mxu0 0
        %2277 = vmatmul.mubr.bf16.gmra.mxu0 %v2128
        %v2278 = vpop.f32.mrf.mxu0
        %v2279 = vadd.f32 0.0, %v2278
        %v2280 = vpop.f32.mrf.mxu0
        %v2281 = vpop.f32.mrf.mxu0
        %v2282 = vadd.f32 0.0, %v2281
        %v2283 = vpop.f32.mrf.mxu0
        %2284 = vmatprep.mubr.bf16.mxu0 0
        %2285 = vmatmul.mubr.bf16.gmra.mxu0 %v2131
        %v2286 = vpop.f32.mrf.mxu0
        %v2287 = vadd.f32 0.0, %v2286
        %v2288 = vpop.f32.mrf.mxu0
        %v2289 = vpop.f32.mrf.mxu0
        %v2290 = vadd.f32 0.0, %v2289
        %v2291 = vpop.f32.mrf.mxu0
        %2292 = vmatprep.mubr.bf16.mxu0 0
        %2293 = vmatmul.mubr.bf16.gmra.mxu0 %v2134
        %v2294 = vpop.f32.mrf.mxu0
        %v2295 = vadd.f32 0.0, %v2294
        %v2296 = vpop.f32.mrf.mxu0
        %v2297 = vpop.f32.mrf.mxu0
        %v2298 = vadd.f32 0.0, %v2297
        %v2299 = vpop.f32.mrf.mxu0
        %2300 = vdwg.mxu0
        %v2317 = vunpack.c.l.b16 %v201
        %v2318 = vunpack.c.l.b16 %v202
        %v2319 = vunpack.c.l.b16 %v203
        %v2320 = vunpack.c.l.b16 %v204
        %v2321 = vunpack.c.l.b16 %v205
        %v2322 = vunpack.c.l.b16 %v206
        %v2323 = vunpack.c.l.b16 %v207
        %v2324 = vunpack.c.l.b16 %v208
        %v2325 = vunpack.c.l.b16 %v209
        %v2326 = vunpack.c.l.b16 %v210
        %v2327 = vunpack.c.l.b16 %v211
        %v2328 = vunpack.c.l.b16 %v212
        %v2329 = vunpack.c.l.b16 %v213
        %v2330 = vunpack.c.l.b16 %v214
        %v2331 = vunpack.c.l.b16 %v215
        %v2332 = vunpack.c.l.b16 %v216
        %v2333 = vunpack.c.l.b16 %v217
        %v2334 = vunpack.c.l.b16 %v218
        %v2335 = vunpack.c.l.b16 %v219
        %v2336 = vunpack.c.l.b16 %v220
        %v2337 = vunpack.c.l.b16 %v221
        %v2338 = vunpack.c.l.b16 %v222
        %v2339 = vunpack.c.l.b16 %v223
        %v2340 = vunpack.c.l.b16 %v224
        %v2341 = vunpack.c.l.b16 %v225
        %v2342 = vunpack.c.l.b16 %v226
        %v2343 = vunpack.c.l.b16 %v227
        %v2344 = vunpack.c.l.b16 %v228
        %v2345 = vunpack.c.l.b16 %v229
        %v2346 = vunpack.c.l.b16 %v230
        %v2347 = vunpack.c.l.b16 %v231
        %v2348 = vunpack.c.l.b16 %v232
        %v2349 = vpack.c.b16 %v2318, %v2317
        %v2350 = vpack.c.b16 %v2320, %v2319
        %v2351 = vpack.c.b16 %v2322, %v2321
        %v2352 = vpack.c.b16 %v2324, %v2323
        %v2353 = vpack.c.b16 %v2326, %v2325
        %v2354 = vpack.c.b16 %v2328, %v2327
        %v2355 = vpack.c.b16 %v2330, %v2329
        %v2356 = vpack.c.b16 %v2332, %v2331
        %v2357 = vpack.c.b16 %v2334, %v2333
        %v2358 = vpack.c.b16 %v2336, %v2335
        %v2359 = vpack.c.b16 %v2338, %v2337
        %v2360 = vpack.c.b16 %v2340, %v2339
        %v2361 = vpack.c.b16 %v2342, %v2341
        %v2362 = vpack.c.b16 %v2344, %v2343
        %v2363 = vpack.c.b16 %v2346, %v2345
        %v2364 = vpack.c.b16 %v2348, %v2347
        %v2366 = vsel %vm2087, %v2349, 0
        %v2369 = vsel %vm2087, %v2350, 0
        %v2372 = vsel %vm2087, %v2351, 0
        %v2375 = vsel %vm2087, %v2352, 0
        %v2378 = vsel %vm2087, %v2353, 0
        %v2381 = vsel %vm2087, %v2354, 0
        %v2384 = vsel %vm2087, %v2355, 0
        %v2387 = vsel %vm2087, %v2356, 0
        %v2390 = vsel %vm2087, %v2357, 0
        %v2393 = vsel %vm2087, %v2358, 0
        %v2396 = vsel %vm2087, %v2359, 0
        %v2399 = vsel %vm2087, %v2360, 0
        %v2402 = vsel %vm2087, %v2361, 0
        %v2405 = vsel %vm2087, %v2362, 0
        %v2408 = vsel %vm2087, %v2363, 0
        %v2411 = vsel %vm2087, %v2364, 0
        %v2414 = vsel %vm2136, %v2033, 0
        %2416 = vmatprep.subr.bf16.mxu0 0
        %2417 = vmatpush1.bf16.msra.mxu0 0
        %2418 = vmatprep.subr.bf16.mxu0 0
        %2419 = vmatpush1.bf16.msra.mxu0 0
        %2420 = vmatprep.subr.bf16.mxu0 0
        %2421 = vmatpush1.bf16.msra.mxu0 0
        %2422 = vmatprep.subr.bf16.mxu0 0
        %2423 = vmatpush1.bf16.msra.mxu0 0
        %2424 = vmatprep.subr.bf16.mxu0 0
        %2425 = vmatpush1.bf16.msra.mxu0 0
        %2426 = vmatprep.subr.bf16.mxu0 0
        %2427 = vmatpush1.bf16.msra.mxu0 0
        %2428 = vmatprep.subr.bf16.mxu0 0
        %2429 = vmatpush1.bf16.msra.mxu0 0
        %2430 = vmatprep.subr.bf16.mxu0 0
        %2431 = vmatpush1.bf16.msra.mxu0 %v2414
        %2432 = vmatprep.subr.bf16.mxu0 0
        %2433 = vmatpush2.bf16.msra.mxu0 0
        %2434 = vmatprep.subr.bf16.mxu0 0
        %2435 = vmatpush2.bf16.msra.mxu0 0
        %2436 = vmatprep.subr.bf16.mxu0 0
        %2437 = vmatpush2.bf16.msra.mxu0 0
        %2438 = vmatprep.subr.bf16.mxu0 0
        %2439 = vmatpush2.bf16.msra.mxu0 0
        %2440 = vmatprep.subr.bf16.mxu0 0
        %2441 = vmatpush2.bf16.msra.mxu0 0
        %2442 = vmatprep.subr.bf16.mxu0 0
        %2443 = vmatpush2.bf16.msra.mxu0 0
        %2444 = vmatprep.subr.bf16.mxu0 0
        %2445 = vmatpush2.bf16.msra.mxu0 0
        %2446 = vmatprep.subr.bf16.mxu0 0
        %2447 = vmatpush2.bf16.msra.mxu0 0
        %2448 = vmatprep.mubr.bf16.mxu0 0
        %2449 = vmatmul.mubr.bf16.gmra.mxu0 %v2366
        %v2450 = vpop.f32.mrf.mxu0
        %v2451 = vadd.f32 %v2175, %v2450
        %v2452 = vpop.f32.mrf.mxu0
        %v2453 = vpop.f32.mrf.mxu0
        %v2454 = vadd.f32 %v2178, %v2453
        %v2455 = vpop.f32.mrf.mxu0
        %2456 = vmatprep.mubr.bf16.mxu0 0
        %2457 = vmatmul.mubr.bf16.gmra.mxu0 %v2369
        %v2458 = vpop.f32.mrf.mxu0
        %v2459 = vadd.f32 %v2183, %v2458
        %v2460 = vpop.f32.mrf.mxu0
        %v2461 = vpop.f32.mrf.mxu0
        %v2462 = vadd.f32 %v2186, %v2461
        %v2463 = vpop.f32.mrf.mxu0
        %2464 = vmatprep.mubr.bf16.mxu0 0
        %2465 = vmatmul.mubr.bf16.gmra.mxu0 %v2372
        %v2466 = vpop.f32.mrf.mxu0
        %v2467 = vadd.f32 %v2191, %v2466
        %v2468 = vpop.f32.mrf.mxu0
        %v2469 = vpop.f32.mrf.mxu0
        %v2470 = vadd.f32 %v2194, %v2469
        %v2471 = vpop.f32.mrf.mxu0
        %2472 = vmatprep.mubr.bf16.mxu0 0
        %2473 = vmatmul.mubr.bf16.gmra.mxu0 %v2375
        %v2474 = vpop.f32.mrf.mxu0
        %v2475 = vadd.f32 %v2199, %v2474
        %v2476 = vpop.f32.mrf.mxu0
        %v2477 = vpop.f32.mrf.mxu0
        %v2478 = vadd.f32 %v2202, %v2477
        %v2479 = vpop.f32.mrf.mxu0
        %2480 = vmatprep.mubr.bf16.mxu0 0
        %2481 = vmatmul.mubr.bf16.gmra.mxu0 %v2378
        %v2482 = vpop.f32.mrf.mxu0
        %v2483 = vadd.f32 %v2207, %v2482
        %v2484 = vpop.f32.mrf.mxu0
        %v2485 = vpop.f32.mrf.mxu0
        %v2486 = vadd.f32 %v2210, %v2485
        %v2487 = vpop.f32.mrf.mxu0
        %2488 = vmatprep.mubr.bf16.mxu0 0
        %2489 = vmatmul.mubr.bf16.gmra.mxu0 %v2381
        %v2490 = vpop.f32.mrf.mxu0
        %v2491 = vadd.f32 %v2215, %v2490
        %v2492 = vpop.f32.mrf.mxu0
        %v2493 = vpop.f32.mrf.mxu0
        %v2494 = vadd.f32 %v2218, %v2493
        %v2495 = vpop.f32.mrf.mxu0
        %2496 = vmatprep.mubr.bf16.mxu0 0
        %2497 = vmatmul.mubr.bf16.gmra.mxu0 %v2384
        %v2498 = vpop.f32.mrf.mxu0
        %v2499 = vadd.f32 %v2223, %v2498
        %v2500 = vpop.f32.mrf.mxu0
        %v2501 = vpop.f32.mrf.mxu0
        %v2502 = vadd.f32 %v2226, %v2501
        %v2503 = vpop.f32.mrf.mxu0
        %2504 = vmatprep.mubr.bf16.mxu0 0
        %2505 = vmatmul.mubr.bf16.gmra.mxu0 %v2387
        %v2506 = vpop.f32.mrf.mxu0
        %v2507 = vadd.f32 %v2231, %v2506
        %v2508 = vpop.f32.mrf.mxu0
        %v2509 = vpop.f32.mrf.mxu0
        %v2510 = vadd.f32 %v2234, %v2509
        %v2511 = vpop.f32.mrf.mxu0
        %2512 = vmatprep.mubr.bf16.mxu0 0
        %2513 = vmatmul.mubr.bf16.gmra.mxu0 %v2390
        %v2514 = vpop.f32.mrf.mxu0
        %v2515 = vadd.f32 %v2239, %v2514
        %v2516 = vpop.f32.mrf.mxu0
        %v2517 = vpop.f32.mrf.mxu0
        %v2518 = vadd.f32 %v2242, %v2517
        %v2519 = vpop.f32.mrf.mxu0
        %2520 = vmatprep.mubr.bf16.mxu0 0
        %2521 = vmatmul.mubr.bf16.gmra.mxu0 %v2393
        %v2522 = vpop.f32.mrf.mxu0
        %v2523 = vadd.f32 %v2247, %v2522
        %v2524 = vpop.f32.mrf.mxu0
        %v2525 = vpop.f32.mrf.mxu0
        %v2526 = vadd.f32 %v2250, %v2525
        %v2527 = vpop.f32.mrf.mxu0
        %2528 = vmatprep.mubr.bf16.mxu0 0
        %2529 = vmatmul.mubr.bf16.gmra.mxu0 %v2396
        %v2530 = vpop.f32.mrf.mxu0
        %v2531 = vadd.f32 %v2255, %v2530
        %v2532 = vpop.f32.mrf.mxu0
        %v2533 = vpop.f32.mrf.mxu0
        %v2534 = vadd.f32 %v2258, %v2533
        %v2535 = vpop.f32.mrf.mxu0
        %2536 = vmatprep.mubr.bf16.mxu0 0
        %2537 = vmatmul.mubr.bf16.gmra.mxu0 %v2399
        %v2538 = vpop.f32.mrf.mxu0
        %v2539 = vadd.f32 %v2263, %v2538
        %v2540 = vpop.f32.mrf.mxu0
        %v2541 = vpop.f32.mrf.mxu0
        %v2542 = vadd.f32 %v2266, %v2541
        %v2543 = vpop.f32.mrf.mxu0
        %2544 = vmatprep.mubr.bf16.mxu0 0
        %2545 = vmatmul.mubr.bf16.gmra.mxu0 %v2402
        %v2546 = vpop.f32.mrf.mxu0
        %v2547 = vadd.f32 %v2271, %v2546
        %v2548 = vpop.f32.mrf.mxu0
        %v2549 = vpop.f32.mrf.mxu0
        %v2550 = vadd.f32 %v2274, %v2549
        %v2551 = vpop.f32.mrf.mxu0
        %2552 = vmatprep.mubr.bf16.mxu0 0
        %2553 = vmatmul.mubr.bf16.gmra.mxu0 %v2405
        %v2554 = vpop.f32.mrf.mxu0
        %v2555 = vadd.f32 %v2279, %v2554
        %v2556 = vpop.f32.mrf.mxu0
        %v2557 = vpop.f32.mrf.mxu0
        %v2558 = vadd.f32 %v2282, %v2557
        %v2559 = vpop.f32.mrf.mxu0
        %2560 = vmatprep.mubr.bf16.mxu0 0
        %2561 = vmatmul.mubr.bf16.gmra.mxu0 %v2408
        %v2562 = vpop.f32.mrf.mxu0
        %v2563 = vadd.f32 %v2287, %v2562
        %v2564 = vpop.f32.mrf.mxu0
        %v2565 = vpop.f32.mrf.mxu0
        %v2566 = vadd.f32 %v2290, %v2565
        %v2567 = vpop.f32.mrf.mxu0
        %2568 = vmatprep.mubr.bf16.mxu0 0
        %2569 = vmatmul.mubr.bf16.gmra.mxu0 %v2411
        %v2570 = vpop.f32.mrf.mxu0
        %v2571 = vadd.f32 %v2295, %v2570
        %v2572 = vpop.f32.mrf.mxu0
        %v2573 = vpop.f32.mrf.mxu0
        %v2574 = vadd.f32 %v2298, %v2573
        %v2575 = vpop.f32.mrf.mxu0
        %2576 = vdwg.mxu0
        %v2577 = vld [vmem:[%s2 + $0x4] sm:$0x3]
        %v2578 = vunpack.c.l.b16 %v706
        %v2579 = vunpack.c.l.b16 %v709
        %v2580 = vunpack.c.l.b16 %v713
        %v2581 = vunpack.c.l.b16 %v716
        %v2582 = vunpack.c.l.b16 %v720
        %v2583 = vunpack.c.l.b16 %v723
        %v2584 = vunpack.c.l.b16 %v727
        %v2585 = vunpack.c.l.b16 %v730
        %v2586 = vunpack.c.l.b16 %v734
        %v2587 = vunpack.c.l.b16 %v737
        %v2588 = vunpack.c.l.b16 %v741
        %v2589 = vunpack.c.l.b16 %v744
        %v2590 = vunpack.c.l.b16 %v748
        %v2591 = vunpack.c.l.b16 %v751
        %v2592 = vunpack.c.l.b16 %v755
        %v2593 = vunpack.c.l.b16 %v758
        %v2594 = vunpack.c.l.b16 %v762
        %v2595 = vunpack.c.l.b16 %v765
        %v2596 = vunpack.c.l.b16 %v769
        %v2597 = vunpack.c.l.b16 %v772
        %v2598 = vunpack.c.l.b16 %v776
        %v2599 = vunpack.c.l.b16 %v779
        %v2600 = vunpack.c.l.b16 %v783
        %v2601 = vunpack.c.l.b16 %v786
        %v2602 = vunpack.c.l.b16 %v790
        %v2603 = vunpack.c.l.b16 %v793
        %v2604 = vunpack.c.l.b16 %v797
        %v2605 = vunpack.c.l.b16 %v800
        %v2606 = vunpack.c.l.b16 %v804
        %v2607 = vunpack.c.l.b16 %v807
        %v2608 = vunpack.c.l.b16 %v811
        %v2609 = vunpack.c.l.b16 %v814
        %v2610 = vpack.c.b16 %v2579, %v2578
        %v2611 = vpack.c.b16 %v2581, %v2580
        %v2612 = vpack.c.b16 %v2583, %v2582
        %v2613 = vpack.c.b16 %v2585, %v2584
        %v2614 = vpack.c.b16 %v2587, %v2586
        %v2615 = vpack.c.b16 %v2589, %v2588
        %v2616 = vpack.c.b16 %v2591, %v2590
        %v2617 = vpack.c.b16 %v2593, %v2592
        %v2618 = vpack.c.b16 %v2595, %v2594
        %v2619 = vpack.c.b16 %v2597, %v2596
        %v2620 = vpack.c.b16 %v2599, %v2598
        %v2621 = vpack.c.b16 %v2601, %v2600
        %v2622 = vpack.c.b16 %v2603, %v2602
        %v2623 = vpack.c.b16 %v2605, %v2604
        %v2624 = vpack.c.b16 %v2607, %v2606
        %v2625 = vpack.c.b16 %v2609, %v2608
        %v2627 = vsel %vm2087, %v2610, 0
        %v2630 = vsel %vm2087, %v2611, 0
        %v2633 = vsel %vm2087, %v2612, 0
        %v2636 = vsel %vm2087, %v2613, 0
        %v2639 = vsel %vm2087, %v2614, 0
        %v2642 = vsel %vm2087, %v2615, 0
        %v2645 = vsel %vm2087, %v2616, 0
        %v2648 = vsel %vm2087, %v2617, 0
        %v2651 = vsel %vm2087, %v2618, 0
        %v2654 = vsel %vm2087, %v2619, 0
        %v2657 = vsel %vm2087, %v2620, 0
        %v2660 = vsel %vm2087, %v2621, 0
        %v2663 = vsel %vm2087, %v2622, 0
        %v2666 = vsel %vm2087, %v2623, 0
        %v2669 = vsel %vm2087, %v2624, 0
        %v2672 = vsel %vm2087, %v2625, 0
        %v2675 = vsel %vm2136, %v2577, 0
        %2677 = vmatprep.subr.bf16.mxu0 0
        %2678 = vmatpush1.bf16.msra.mxu0 0
        %2679 = vmatprep.subr.bf16.mxu0 0
        %2680 = vmatpush1.bf16.msra.mxu0 0
        %2681 = vmatprep.subr.bf16.mxu0 0
        %2682 = vmatpush1.bf16.msra.mxu0 0
        %2683 = vmatprep.subr.bf16.mxu0 0
        %2684 = vmatpush1.bf16.msra.mxu0 0
        %2685 = vmatprep.subr.bf16.mxu0 0
        %2686 = vmatpush1.bf16.msra.mxu0 0
        %2687 = vmatprep.subr.bf16.mxu0 0
        %2688 = vmatpush1.bf16.msra.mxu0 0
        %2689 = vmatprep.subr.bf16.mxu0 0
        %2690 = vmatpush1.bf16.msra.mxu0 0
        %2691 = vmatprep.subr.bf16.mxu0 0
        %2692 = vmatpush1.bf16.msra.mxu0 %v2675
        %2693 = vmatprep.subr.bf16.mxu0 0
        %2694 = vmatpush2.bf16.msra.mxu0 0
        %2695 = vmatprep.subr.bf16.mxu0 0
        %2696 = vmatpush2.bf16.msra.mxu0 0
        %2697 = vmatprep.subr.bf16.mxu0 0
        %2698 = vmatpush2.bf16.msra.mxu0 0
        %2699 = vmatprep.subr.bf16.mxu0 0
        %2700 = vmatpush2.bf16.msra.mxu0 0
        %2701 = vmatprep.subr.bf16.mxu0 0
        %2702 = vmatpush2.bf16.msra.mxu0 0
        %2703 = vmatprep.subr.bf16.mxu0 0
        %2704 = vmatpush2.bf16.msra.mxu0 0
        %2705 = vmatprep.subr.bf16.mxu0 0
        %2706 = vmatpush2.bf16.msra.mxu0 0
        %2707 = vmatprep.subr.bf16.mxu0 0
        %2708 = vmatpush2.bf16.msra.mxu0 0
        %2709 = vmatprep.mubr.bf16.mxu0 0
        %2710 = vmatmul.mubr.bf16.gmra.mxu0 %v2627
        %v2711 = vpop.f32.mrf.mxu0
        %v2712 = vadd.f32 0.0, %v2711
        %v2713 = vpop.f32.mrf.mxu0
        %v2714 = vpop.f32.mrf.mxu0
        %v2715 = vadd.f32 0.0, %v2714
        %v2716 = vpop.f32.mrf.mxu0
        %2717 = vmatprep.mubr.bf16.mxu0 0
        %2718 = vmatmul.mubr.bf16.gmra.mxu0 %v2630
        %v2719 = vpop.f32.mrf.mxu0
        %v2720 = vadd.f32 0.0, %v2719
        %v2721 = vpop.f32.mrf.mxu0
        %v2722 = vpop.f32.mrf.mxu0
        %v2723 = vadd.f32 0.0, %v2722
        %v2724 = vpop.f32.mrf.mxu0
        %2725 = vmatprep.mubr.bf16.mxu0 0
        %2726 = vmatmul.mubr.bf16.gmra.mxu0 %v2633
        %v2727 = vpop.f32.mrf.mxu0
        %v2728 = vadd.f32 0.0, %v2727
        %v2729 = vpop.f32.mrf.mxu0
        %v2730 = vpop.f32.mrf.mxu0
        %v2731 = vadd.f32 0.0, %v2730
        %v2732 = vpop.f32.mrf.mxu0
        %2733 = vmatprep.mubr.bf16.mxu0 0
        %2734 = vmatmul.mubr.bf16.gmra.mxu0 %v2636
        %v2735 = vpop.f32.mrf.mxu0
        %v2736 = vadd.f32 0.0, %v2735
        %v2737 = vpop.f32.mrf.mxu0
        %v2738 = vpop.f32.mrf.mxu0
        %v2739 = vadd.f32 0.0, %v2738
        %v2740 = vpop.f32.mrf.mxu0
        %2741 = vmatprep.mubr.bf16.mxu0 0
        %2742 = vmatmul.mubr.bf16.gmra.mxu0 %v2639
        %v2743 = vpop.f32.mrf.mxu0
        %v2744 = vadd.f32 0.0, %v2743
        %v2745 = vpop.f32.mrf.mxu0
        %v2746 = vpop.f32.mrf.mxu0
        %v2747 = vadd.f32 0.0, %v2746
        %v2748 = vpop.f32.mrf.mxu0
        %2749 = vmatprep.mubr.bf16.mxu0 0
        %2750 = vmatmul.mubr.bf16.gmra.mxu0 %v2642
        %v2751 = vpop.f32.mrf.mxu0
        %v2752 = vadd.f32 0.0, %v2751
        %v2753 = vpop.f32.mrf.mxu0
        %v2754 = vpop.f32.mrf.mxu0
        %v2755 = vadd.f32 0.0, %v2754
        %v2756 = vpop.f32.mrf.mxu0
        %2757 = vmatprep.mubr.bf16.mxu0 0
        %2758 = vmatmul.mubr.bf16.gmra.mxu0 %v2645
        %v2759 = vpop.f32.mrf.mxu0
        %v2760 = vadd.f32 0.0, %v2759
        %v2761 = vpop.f32.mrf.mxu0
        %v2762 = vpop.f32.mrf.mxu0
        %v2763 = vadd.f32 0.0, %v2762
        %v2764 = vpop.f32.mrf.mxu0
        %2765 = vmatprep.mubr.bf16.mxu0 0
        %2766 = vmatmul.mubr.bf16.gmra.mxu0 %v2648
        %v2767 = vpop.f32.mrf.mxu0
        %v2768 = vadd.f32 0.0, %v2767
        %v2769 = vpop.f32.mrf.mxu0
        %v2770 = vpop.f32.mrf.mxu0
        %v2771 = vadd.f32 0.0, %v2770
        %v2772 = vpop.f32.mrf.mxu0
        %2773 = vmatprep.mubr.bf16.mxu0 0
        %2774 = vmatmul.mubr.bf16.gmra.mxu0 %v2651
        %v2775 = vpop.f32.mrf.mxu0
        %v2776 = vadd.f32 0.0, %v2775
        %v2777 = vpop.f32.mrf.mxu0
        %v2778 = vpop.f32.mrf.mxu0
        %v2779 = vadd.f32 0.0, %v2778
        %v2780 = vpop.f32.mrf.mxu0
        %2781 = vmatprep.mubr.bf16.mxu0 0
        %2782 = vmatmul.mubr.bf16.gmra.mxu0 %v2654
        %v2783 = vpop.f32.mrf.mxu0
        %v2784 = vadd.f32 0.0, %v2783
        %v2785 = vpop.f32.mrf.mxu0
        %v2786 = vpop.f32.mrf.mxu0
        %v2787 = vadd.f32 0.0, %v2786
        %v2788 = vpop.f32.mrf.mxu0
        %2789 = vmatprep.mubr.bf16.mxu0 0
        %2790 = vmatmul.mubr.bf16.gmra.mxu0 %v2657
        %v2791 = vpop.f32.mrf.mxu0
        %v2792 = vadd.f32 0.0, %v2791
        %v2793 = vpop.f32.mrf.mxu0
        %v2794 = vpop.f32.mrf.mxu0
        %v2795 = vadd.f32 0.0, %v2794
        %v2796 = vpop.f32.mrf.mxu0
        %2797 = vmatprep.mubr.bf16.mxu0 0
        %2798 = vmatmul.mubr.bf16.gmra.mxu0 %v2660
        %v2799 = vpop.f32.mrf.mxu0
        %v2800 = vadd.f32 0.0, %v2799
        %v2801 = vpop.f32.mrf.mxu0
        %v2802 = vpop.f32.mrf.mxu0
        %v2803 = vadd.f32 0.0, %v2802
        %v2804 = vpop.f32.mrf.mxu0
        %2805 = vmatprep.mubr.bf16.mxu0 0
        %2806 = vmatmul.mubr.bf16.gmra.mxu0 %v2663
        %v2807 = vpop.f32.mrf.mxu0
        %v2808 = vadd.f32 0.0, %v2807
        %v2809 = vpop.f32.mrf.mxu0
        %v2810 = vpop.f32.mrf.mxu0
        %v2811 = vadd.f32 0.0, %v2810
        %v2812 = vpop.f32.mrf.mxu0
        %2813 = vmatprep.mubr.bf16.mxu0 0
        %2814 = vmatmul.mubr.bf16.gmra.mxu0 %v2666
        %v2815 = vpop.f32.mrf.mxu0
        %v2816 = vadd.f32 0.0, %v2815
        %v2817 = vpop.f32.mrf.mxu0
        %v2818 = vpop.f32.mrf.mxu0
        %v2819 = vadd.f32 0.0, %v2818
        %v2820 = vpop.f32.mrf.mxu0
        %2821 = vmatprep.mubr.bf16.mxu0 0
        %2822 = vmatmul.mubr.bf16.gmra.mxu0 %v2669
        %v2823 = vpop.f32.mrf.mxu0
        %v2824 = vadd.f32 0.0, %v2823
        %v2825 = vpop.f32.mrf.mxu0
        %v2826 = vpop.f32.mrf.mxu0
        %v2827 = vadd.f32 0.0, %v2826
        %v2828 = vpop.f32.mrf.mxu0
        %2829 = vmatprep.mubr.bf16.mxu0 0
        %2830 = vmatmul.mubr.bf16.gmra.mxu0 %v2672
        %v2831 = vpop.f32.mrf.mxu0
        %v2832 = vadd.f32 0.0, %v2831
        %v2833 = vpop.f32.mrf.mxu0
        %v2834 = vpop.f32.mrf.mxu0
        %v2835 = vadd.f32 0.0, %v2834
        %v2836 = vpop.f32.mrf.mxu0
        %2837 = vdwg.mxu0
        %v2838 = vadd.f32 %v2451, %v2712
        %v2839 = vadd.f32 %v2454, %v2715
        %v2840 = vadd.f32 %v2459, %v2720
        %v2841 = vadd.f32 %v2462, %v2723
        %v2842 = vadd.f32 %v2467, %v2728
        %v2843 = vadd.f32 %v2470, %v2731
        %v2844 = vadd.f32 %v2475, %v2736
        %v2845 = vadd.f32 %v2478, %v2739
        %v2846 = vadd.f32 %v2483, %v2744
        %v2847 = vadd.f32 %v2486, %v2747
        %v2848 = vadd.f32 %v2491, %v2752
        %v2849 = vadd.f32 %v2494, %v2755
        %v2850 = vadd.f32 %v2499, %v2760
        %v2851 = vadd.f32 %v2502, %v2763
        %v2852 = vadd.f32 %v2507, %v2768
        %v2853 = vadd.f32 %v2510, %v2771
        %v2854 = vadd.f32 %v2515, %v2776
        %v2855 = vadd.f32 %v2518, %v2779
        %v2856 = vadd.f32 %v2523, %v2784
        %v2857 = vadd.f32 %v2526, %v2787
        %v2858 = vadd.f32 %v2531, %v2792
        %v2859 = vadd.f32 %v2534, %v2795
        %v2860 = vadd.f32 %v2539, %v2800
        %v2861 = vadd.f32 %v2542, %v2803
        %v2862 = vadd.f32 %v2547, %v2808
        %v2863 = vadd.f32 %v2550, %v2811
        %v2864 = vadd.f32 %v2555, %v2816
        %v2865 = vadd.f32 %v2558, %v2819
        %v2866 = vadd.f32 %v2563, %v2824
        %v2867 = vadd.f32 %v2566, %v2827
        %v2868 = vadd.f32 %v2571, %v2832
        %v2869 = vadd.f32 %v2574, %v2835
        %v2870 = vld [vmem:[%s2 + $0x4] sm:$0xc]
        %v2887 = vunpack.c.l.b16 %v816
        %v2888 = vunpack.c.l.b16 %v817
        %v2889 = vunpack.c.l.b16 %v818
        %v2890 = vunpack.c.l.b16 %v819
        %v2891 = vunpack.c.l.b16 %v820
        %v2892 = vunpack.c.l.b16 %v821
        %v2893 = vunpack.c.l.b16 %v822
        %v2894 = vunpack.c.l.b16 %v823
        %v2895 = vunpack.c.l.b16 %v824
        %v2896 = vunpack.c.l.b16 %v825
        %v2897 = vunpack.c.l.b16 %v826
        %v2898 = vunpack.c.l.b16 %v827
        %v2899 = vunpack.c.l.b16 %v828
        %v2900 = vunpack.c.l.b16 %v829
        %v2901 = vunpack.c.l.b16 %v830
        %v2902 = vunpack.c.l.b16 %v831
        %v2903 = vunpack.c.l.b16 %v832
        %v2904 = vunpack.c.l.b16 %v833
        %v2905 = vunpack.c.l.b16 %v834
        %v2906 = vunpack.c.l.b16 %v835
        %v2907 = vunpack.c.l.b16 %v836
        %v2908 = vunpack.c.l.b16 %v837
        %v2909 = vunpack.c.l.b16 %v838
        %v2910 = vunpack.c.l.b16 %v839
        %v2911 = vunpack.c.l.b16 %v840
        %v2912 = vunpack.c.l.b16 %v841
        %v2913 = vunpack.c.l.b16 %v842
        %v2914 = vunpack.c.l.b16 %v843
        %v2915 = vunpack.c.l.b16 %v844
        %v2916 = vunpack.c.l.b16 %v845
        %v2917 = vunpack.c.l.b16 %v846
        %v2918 = vunpack.c.l.b16 %v847
        %v2919 = vpack.c.b16 %v2888, %v2887
        %v2920 = vpack.c.b16 %v2890, %v2889
        %v2921 = vpack.c.b16 %v2892, %v2891
        %v2922 = vpack.c.b16 %v2894, %v2893
        %v2923 = vpack.c.b16 %v2896, %v2895
        %v2924 = vpack.c.b16 %v2898, %v2897
        %v2925 = vpack.c.b16 %v2900, %v2899
        %v2926 = vpack.c.b16 %v2902, %v2901
        %v2927 = vpack.c.b16 %v2904, %v2903
        %v2928 = vpack.c.b16 %v2906, %v2905
        %v2929 = vpack.c.b16 %v2908, %v2907
        %v2930 = vpack.c.b16 %v2910, %v2909
        %v2931 = vpack.c.b16 %v2912, %v2911
        %v2932 = vpack.c.b16 %v2914, %v2913
        %v2933 = vpack.c.b16 %v2916, %v2915
        %v2934 = vpack.c.b16 %v2918, %v2917
        %v2936 = vunpack.c.l.b16 %v2870
        %v2937 = vpack.c.b16 %v2936, %v2936
        %v2938 = vrot.slane %v2937, 2
        %v2940 = vsel %vm2087, %v2919, 0
        %v2943 = vsel %vm2087, %v2920, 0
        %v2946 = vsel %vm2087, %v2921, 0
        %v2949 = vsel %vm2087, %v2922, 0
        %v2952 = vsel %vm2087, %v2923, 0
        %v2955 = vsel %vm2087, %v2924, 0
        %v2958 = vsel %vm2087, %v2925, 0
        %v2961 = vsel %vm2087, %v2926, 0
        %v2964 = vsel %vm2087, %v2927, 0
        %v2967 = vsel %vm2087, %v2928, 0
        %v2970 = vsel %vm2087, %v2929, 0
        %v2973 = vsel %vm2087, %v2930, 0
        %v2976 = vsel %vm2087, %v2931, 0
        %v2979 = vsel %vm2087, %v2932, 0
        %v2982 = vsel %vm2087, %v2933, 0
        %v2985 = vsel %vm2087, %v2934, 0
        %v2988 = vsel %vm2136, %v2938, 0
        %2990 = vmatprep.subr.bf16.mxu0 0
        %2991 = vmatpush1.bf16.msra.mxu0 0
        %2992 = vmatprep.subr.bf16.mxu0 0
        %2993 = vmatpush1.bf16.msra.mxu0 0
        %2994 = vmatprep.subr.bf16.mxu0 0
        %2995 = vmatpush1.bf16.msra.mxu0 0
        %2996 = vmatprep.subr.bf16.mxu0 0
        %2997 = vmatpush1.bf16.msra.mxu0 0
        %2998 = vmatprep.subr.bf16.mxu0 0
        %2999 = vmatpush1.bf16.msra.mxu0 0
        %3000 = vmatprep.subr.bf16.mxu0 0
        %3001 = vmatpush1.bf16.msra.mxu0 0
        %3002 = vmatprep.subr.bf16.mxu0 0
        %3003 = vmatpush1.bf16.msra.mxu0 0
        %3004 = vmatprep.subr.bf16.mxu0 0
        %3005 = vmatpush1.bf16.msra.mxu0 %v2988
        %3006 = vmatprep.subr.bf16.mxu0 0
        %3007 = vmatpush2.bf16.msra.mxu0 0
        %3008 = vmatprep.subr.bf16.mxu0 0
        %3009 = vmatpush2.bf16.msra.mxu0 0
        %3010 = vmatprep.subr.bf16.mxu0 0
        %3011 = vmatpush2.bf16.msra.mxu0 0
        %3012 = vmatprep.subr.bf16.mxu0 0
        %3013 = vmatpush2.bf16.msra.mxu0 0
        %3014 = vmatprep.subr.bf16.mxu0 0
        %3015 = vmatpush2.bf16.msra.mxu0 0
        %3016 = vmatprep.subr.bf16.mxu0 0
        %3017 = vmatpush2.bf16.msra.mxu0 0
        %3018 = vmatprep.subr.bf16.mxu0 0
        %3019 = vmatpush2.bf16.msra.mxu0 0
        %3020 = vmatprep.subr.bf16.mxu0 0
        %3021 = vmatpush2.bf16.msra.mxu0 0
        %3022 = vmatprep.mubr.bf16.mxu0 0
        %3023 = vmatmul.mubr.bf16.gmra.mxu0 %v2940
        %v3024 = vpop.f32.mrf.mxu0
        %v3025 = vadd.f32 0.0, %v3024
        %v3026 = vpop.f32.mrf.mxu0
        %v3027 = vpop.f32.mrf.mxu0
        %v3028 = vadd.f32 0.0, %v3027
        %v3029 = vpop.f32.mrf.mxu0
        %3030 = vmatprep.mubr.bf16.mxu0 0
        %3031 = vmatmul.mubr.bf16.gmra.mxu0 %v2943
        %v3032 = vpop.f32.mrf.mxu0
        %v3033 = vadd.f32 0.0, %v3032
        %v3034 = vpop.f32.mrf.mxu0
        %v3035 = vpop.f32.mrf.mxu0
        %v3036 = vadd.f32 0.0, %v3035
        %v3037 = vpop.f32.mrf.mxu0
        %3038 = vmatprep.mubr.bf16.mxu0 0
        %3039 = vmatmul.mubr.bf16.gmra.mxu0 %v2946
        %v3040 = vpop.f32.mrf.mxu0
        %v3041 = vadd.f32 0.0, %v3040
        %v3042 = vpop.f32.mrf.mxu0
        %v3043 = vpop.f32.mrf.mxu0
        %v3044 = vadd.f32 0.0, %v3043
        %v3045 = vpop.f32.mrf.mxu0
        %3046 = vmatprep.mubr.bf16.mxu0 0
        %3047 = vmatmul.mubr.bf16.gmra.mxu0 %v2949
        %v3048 = vpop.f32.mrf.mxu0
        %v3049 = vadd.f32 0.0, %v3048
        %v3050 = vpop.f32.mrf.mxu0
        %v3051 = vpop.f32.mrf.mxu0
        %v3052 = vadd.f32 0.0, %v3051
        %v3053 = vpop.f32.mrf.mxu0
        %3054 = vmatprep.mubr.bf16.mxu0 0
        %3055 = vmatmul.mubr.bf16.gmra.mxu0 %v2952
        %v3056 = vpop.f32.mrf.mxu0
        %v3057 = vadd.f32 0.0, %v3056
        %v3058 = vpop.f32.mrf.mxu0
        %v3059 = vpop.f32.mrf.mxu0
        %v3060 = vadd.f32 0.0, %v3059
        %v3061 = vpop.f32.mrf.mxu0
        %3062 = vmatprep.mubr.bf16.mxu0 0
        %3063 = vmatmul.mubr.bf16.gmra.mxu0 %v2955
        %v3064 = vpop.f32.mrf.mxu0
        %v3065 = vadd.f32 0.0, %v3064
        %v3066 = vpop.f32.mrf.mxu0
        %v3067 = vpop.f32.mrf.mxu0
        %v3068 = vadd.f32 0.0, %v3067
        %v3069 = vpop.f32.mrf.mxu0
        %3070 = vmatprep.mubr.bf16.mxu0 0
        %3071 = vmatmul.mubr.bf16.gmra.mxu0 %v2958
        %v3072 = vpop.f32.mrf.mxu0
        %v3073 = vadd.f32 0.0, %v3072
        %v3074 = vpop.f32.mrf.mxu0
        %v3075 = vpop.f32.mrf.mxu0
        %v3076 = vadd.f32 0.0, %v3075
        %v3077 = vpop.f32.mrf.mxu0
        %3078 = vmatprep.mubr.bf16.mxu0 0
        %3079 = vmatmul.mubr.bf16.gmra.mxu0 %v2961
        %v3080 = vpop.f32.mrf.mxu0
        %v3081 = vadd.f32 0.0, %v3080
        %v3082 = vpop.f32.mrf.mxu0
        %v3083 = vpop.f32.mrf.mxu0
        %v3084 = vadd.f32 0.0, %v3083
        %v3085 = vpop.f32.mrf.mxu0
        %3086 = vmatprep.mubr.bf16.mxu0 0
        %3087 = vmatmul.mubr.bf16.gmra.mxu0 %v2964
        %v3088 = vpop.f32.mrf.mxu0
        %v3089 = vadd.f32 0.0, %v3088
        %v3090 = vpop.f32.mrf.mxu0
        %v3091 = vpop.f32.mrf.mxu0
        %v3092 = vadd.f32 0.0, %v3091
        %v3093 = vpop.f32.mrf.mxu0
        %3094 = vmatprep.mubr.bf16.mxu0 0
        %3095 = vmatmul.mubr.bf16.gmra.mxu0 %v2967
        %v3096 = vpop.f32.mrf.mxu0
        %v3097 = vadd.f32 0.0, %v3096
        %v3098 = vpop.f32.mrf.mxu0
        %v3099 = vpop.f32.mrf.mxu0
        %v3100 = vadd.f32 0.0, %v3099
        %v3101 = vpop.f32.mrf.mxu0
        %3102 = vmatprep.mubr.bf16.mxu0 0
        %3103 = vmatmul.mubr.bf16.gmra.mxu0 %v2970
        %v3104 = vpop.f32.mrf.mxu0
        %v3105 = vadd.f32 0.0, %v3104
        %v3106 = vpop.f32.mrf.mxu0
        %v3107 = vpop.f32.mrf.mxu0
        %v3108 = vadd.f32 0.0, %v3107
        %v3109 = vpop.f32.mrf.mxu0
        %3110 = vmatprep.mubr.bf16.mxu0 0
        %3111 = vmatmul.mubr.bf16.gmra.mxu0 %v2973
        %v3112 = vpop.f32.mrf.mxu0
        %v3113 = vadd.f32 0.0, %v3112
        %v3114 = vpop.f32.mrf.mxu0
        %v3115 = vpop.f32.mrf.mxu0
        %v3116 = vadd.f32 0.0, %v3115
        %v3117 = vpop.f32.mrf.mxu0
        %3118 = vmatprep.mubr.bf16.mxu0 0
        %3119 = vmatmul.mubr.bf16.gmra.mxu0 %v2976
        %v3120 = vpop.f32.mrf.mxu0
        %v3121 = vadd.f32 0.0, %v3120
        %v3122 = vpop.f32.mrf.mxu0
        %v3123 = vpop.f32.mrf.mxu0
        %v3124 = vadd.f32 0.0, %v3123
        %v3125 = vpop.f32.mrf.mxu0
        %3126 = vmatprep.mubr.bf16.mxu0 0
        %3127 = vmatmul.mubr.bf16.gmra.mxu0 %v2979
        %v3128 = vpop.f32.mrf.mxu0
        %v3129 = vadd.f32 0.0, %v3128
        %v3130 = vpop.f32.mrf.mxu0
        %v3131 = vpop.f32.mrf.mxu0
        %v3132 = vadd.f32 0.0, %v3131
        %v3133 = vpop.f32.mrf.mxu0
        %3134 = vmatprep.mubr.bf16.mxu0 0
        %3135 = vmatmul.mubr.bf16.gmra.mxu0 %v2982
        %v3136 = vpop.f32.mrf.mxu0
        %v3137 = vadd.f32 0.0, %v3136
        %v3138 = vpop.f32.mrf.mxu0
        %v3139 = vpop.f32.mrf.mxu0
        %v3140 = vadd.f32 0.0, %v3139
        %v3141 = vpop.f32.mrf.mxu0
        %3142 = vmatprep.mubr.bf16.mxu0 0
        %3143 = vmatmul.mubr.bf16.gmra.mxu0 %v2985
        %v3144 = vpop.f32.mrf.mxu0
        %v3145 = vadd.f32 0.0, %v3144
        %v3146 = vpop.f32.mrf.mxu0
        %v3147 = vpop.f32.mrf.mxu0
        %v3148 = vadd.f32 0.0, %v3147
        %v3149 = vpop.f32.mrf.mxu0
        %3150 = vdwg.mxu0
        %v3151 = vadd.f32 %v2838, %v3025
        %v3152 = vadd.f32 %v2839, %v3028
        %v3153 = vadd.f32 %v2840, %v3033
        %v3154 = vadd.f32 %v2841, %v3036
        %v3155 = vadd.f32 %v2842, %v3041
        %v3156 = vadd.f32 %v2843, %v3044
        %v3157 = vadd.f32 %v2844, %v3049
        %v3158 = vadd.f32 %v2845, %v3052
        %v3159 = vadd.f32 %v2846, %v3057
        %v3160 = vadd.f32 %v2847, %v3060
        %v3161 = vadd.f32 %v2848, %v3065
        %v3162 = vadd.f32 %v2849, %v3068
        %v3163 = vadd.f32 %v2850, %v3073
        %v3164 = vadd.f32 %v2851, %v3076
        %v3165 = vadd.f32 %v2852, %v3081
        %v3166 = vadd.f32 %v2853, %v3084
        %v3167 = vadd.f32 %v2854, %v3089
        %v3168 = vadd.f32 %v2855, %v3092
        %v3169 = vadd.f32 %v2856, %v3097
        %v3170 = vadd.f32 %v2857, %v3100
        %v3171 = vadd.f32 %v2858, %v3105
        %v3172 = vadd.f32 %v2859, %v3108
        %v3173 = vadd.f32 %v2860, %v3113
        %v3174 = vadd.f32 %v2861, %v3116
        %v3175 = vadd.f32 %v2862, %v3121
        %v3176 = vadd.f32 %v2863, %v3124
        %v3177 = vadd.f32 %v2864, %v3129
        %v3178 = vadd.f32 %v2865, %v3132
        %v3179 = vadd.f32 %v2866, %v3137
        %v3180 = vadd.f32 %v2867, %v3140
        %v3181 = vadd.f32 %v2868, %v3145
        %v3182 = vadd.f32 %v2869, %v3148
        %v3183 = vld [vmem:[%s2 + $0x8] sm:$0x3]
        %v3184 = vunpack.c.l.b16 %v877
        %v3185 = vunpack.c.l.b16 %v887
        %v3186 = vunpack.c.l.b16 %v901
        %v3187 = vunpack.c.l.b16 %v911
        %v3188 = vunpack.c.l.b16 %v925
        %v3189 = vunpack.c.l.b16 %v935
        %v3190 = vunpack.c.l.b16 %v949
        %v3191 = vunpack.c.l.b16 %v959
        %v3192 = vunpack.c.l.b16 %v973
        %v3193 = vunpack.c.l.b16 %v983
        %v3194 = vunpack.c.l.b16 %v997
        %v3195 = vunpack.c.l.b16 %v1007
        %v3196 = vunpack.c.l.b16 %v1021
        %v3197 = vunpack.c.l.b16 %v1031
        %v3198 = vunpack.c.l.b16 %v1045
        %v3199 = vunpack.c.l.b16 %v1055
        %v3200 = vunpack.c.l.b16 %v1069
        %v3201 = vunpack.c.l.b16 %v1079
        %v3202 = vunpack.c.l.b16 %v1093
        %v3203 = vunpack.c.l.b16 %v1103
        %v3204 = vunpack.c.l.b16 %v1117
        %v3205 = vunpack.c.l.b16 %v1127
        %v3206 = vunpack.c.l.b16 %v1141
        %v3207 = vunpack.c.l.b16 %v1151
        %v3208 = vunpack.c.l.b16 %v1165
        %v3209 = vunpack.c.l.b16 %v1175
        %v3210 = vunpack.c.l.b16 %v1189
        %v3211 = vunpack.c.l.b16 %v1199
        %v3212 = vunpack.c.l.b16 %v1213
        %v3213 = vunpack.c.l.b16 %v1223
        %v3214 = vunpack.c.l.b16 %v1237
        %v3215 = vunpack.c.l.b16 %v1247
        %v3216 = vpack.c.b16 %v3185, %v3184
        %v3217 = vpack.c.b16 %v3187, %v3186
        %v3218 = vpack.c.b16 %v3189, %v3188
        %v3219 = vpack.c.b16 %v3191, %v3190
        %v3220 = vpack.c.b16 %v3193, %v3192
        %v3221 = vpack.c.b16 %v3195, %v3194
        %v3222 = vpack.c.b16 %v3197, %v3196
        %v3223 = vpack.c.b16 %v3199, %v3198
        %v3224 = vpack.c.b16 %v3201, %v3200
        %v3225 = vpack.c.b16 %v3203, %v3202
        %v3226 = vpack.c.b16 %v3205, %v3204
        %v3227 = vpack.c.b16 %v3207, %v3206
        %v3228 = vpack.c.b16 %v3209, %v3208
        %v3229 = vpack.c.b16 %v3211, %v3210
        %v3230 = vpack.c.b16 %v3213, %v3212
        %v3231 = vpack.c.b16 %v3215, %v3214
        %v3233 = vsel %vm2087, %v3216, 0
        %v3236 = vsel %vm2087, %v3217, 0
        %v3239 = vsel %vm2087, %v3218, 0
        %v3242 = vsel %vm2087, %v3219, 0
        %v3245 = vsel %vm2087, %v3220, 0
        %v3248 = vsel %vm2087, %v3221, 0
        %v3251 = vsel %vm2087, %v3222, 0
        %v3254 = vsel %vm2087, %v3223, 0
        %v3257 = vsel %vm2087, %v3224, 0
        %v3260 = vsel %vm2087, %v3225, 0
        %v3263 = vsel %vm2087, %v3226, 0
        %v3266 = vsel %vm2087, %v3227, 0
        %v3269 = vsel %vm2087, %v3228, 0
        %v3272 = vsel %vm2087, %v3229, 0
        %v3275 = vsel %vm2087, %v3230, 0
        %v3278 = vsel %vm2087, %v3231, 0
        %v3281 = vsel %vm2136, %v3183, 0
        %3283 = vmatprep.subr.bf16.mxu0 0
        %3284 = vmatpush1.bf16.msra.mxu0 0
        %3285 = vmatprep.subr.bf16.mxu0 0
        %3286 = vmatpush1.bf16.msra.mxu0 0
        %3287 = vmatprep.subr.bf16.mxu0 0
        %3288 = vmatpush1.bf16.msra.mxu0 0
        %3289 = vmatprep.subr.bf16.mxu0 0
        %3290 = vmatpush1.bf16.msra.mxu0 0
        %3291 = vmatprep.subr.bf16.mxu0 0
        %3292 = vmatpush1.bf16.msra.mxu0 0
        %3293 = vmatprep.subr.bf16.mxu0 0
        %3294 = vmatpush1.bf16.msra.mxu0 0
        %3295 = vmatprep.subr.bf16.mxu0 0
        %3296 = vmatpush1.bf16.msra.mxu0 0
        %3297 = vmatprep.subr.bf16.mxu0 0
        %3298 = vmatpush1.bf16.msra.mxu0 %v3281
        %3299 = vmatprep.subr.bf16.mxu0 0
        %3300 = vmatpush2.bf16.msra.mxu0 0
        %3301 = vmatprep.subr.bf16.mxu0 0
        %3302 = vmatpush2.bf16.msra.mxu0 0
        %3303 = vmatprep.subr.bf16.mxu0 0
        %3304 = vmatpush2.bf16.msra.mxu0 0
        %3305 = vmatprep.subr.bf16.mxu0 0
        %3306 = vmatpush2.bf16.msra.mxu0 0
        %3307 = vmatprep.subr.bf16.mxu0 0
        %3308 = vmatpush2.bf16.msra.mxu0 0
        %3309 = vmatprep.subr.bf16.mxu0 0
        %3310 = vmatpush2.bf16.msra.mxu0 0
        %3311 = vmatprep.subr.bf16.mxu0 0
        %3312 = vmatpush2.bf16.msra.mxu0 0
        %3313 = vmatprep.subr.bf16.mxu0 0
        %3314 = vmatpush2.bf16.msra.mxu0 0
        %3315 = vmatprep.mubr.bf16.mxu0 0
        %3316 = vmatmul.mubr.bf16.gmra.mxu0 %v3233
        %v3317 = vpop.f32.mrf.mxu0
        %v3318 = vadd.f32 0.0, %v3317
        %v3319 = vpop.f32.mrf.mxu0
        %v3320 = vpop.f32.mrf.mxu0
        %v3321 = vadd.f32 0.0, %v3320
        %v3322 = vpop.f32.mrf.mxu0
        %3323 = vmatprep.mubr.bf16.mxu0 0
        %3324 = vmatmul.mubr.bf16.gmra.mxu0 %v3236
        %v3325 = vpop.f32.mrf.mxu0
        %v3326 = vadd.f32 0.0, %v3325
        %v3327 = vpop.f32.mrf.mxu0
        %v3328 = vpop.f32.mrf.mxu0
        %v3329 = vadd.f32 0.0, %v3328
        %v3330 = vpop.f32.mrf.mxu0
        %3331 = vmatprep.mubr.bf16.mxu0 0
        %3332 = vmatmul.mubr.bf16.gmra.mxu0 %v3239
        %v3333 = vpop.f32.mrf.mxu0
        %v3334 = vadd.f32 0.0, %v3333
        %v3335 = vpop.f32.mrf.mxu0
        %v3336 = vpop.f32.mrf.mxu0
        %v3337 = vadd.f32 0.0, %v3336
        %v3338 = vpop.f32.mrf.mxu0
        %3339 = vmatprep.mubr.bf16.mxu0 0
        %3340 = vmatmul.mubr.bf16.gmra.mxu0 %v3242
        %v3341 = vpop.f32.mrf.mxu0
        %v3342 = vadd.f32 0.0, %v3341
        %v3343 = vpop.f32.mrf.mxu0
        %v3344 = vpop.f32.mrf.mxu0
        %v3345 = vadd.f32 0.0, %v3344
        %v3346 = vpop.f32.mrf.mxu0
        %3347 = vmatprep.mubr.bf16.mxu0 0
        %3348 = vmatmul.mubr.bf16.gmra.mxu0 %v3245
        %v3349 = vpop.f32.mrf.mxu0
        %v3350 = vadd.f32 0.0, %v3349
        %v3351 = vpop.f32.mrf.mxu0
        %v3352 = vpop.f32.mrf.mxu0
        %v3353 = vadd.f32 0.0, %v3352
        %v3354 = vpop.f32.mrf.mxu0
        %3355 = vmatprep.mubr.bf16.mxu0 0
        %3356 = vmatmul.mubr.bf16.gmra.mxu0 %v3248
        %v3357 = vpop.f32.mrf.mxu0
        %v3358 = vadd.f32 0.0, %v3357
        %v3359 = vpop.f32.mrf.mxu0
        %v3360 = vpop.f32.mrf.mxu0
        %v3361 = vadd.f32 0.0, %v3360
        %v3362 = vpop.f32.mrf.mxu0
        %3363 = vmatprep.mubr.bf16.mxu0 0
        %3364 = vmatmul.mubr.bf16.gmra.mxu0 %v3251
        %v3365 = vpop.f32.mrf.mxu0
        %v3366 = vadd.f32 0.0, %v3365
        %v3367 = vpop.f32.mrf.mxu0
        %v3368 = vpop.f32.mrf.mxu0
        %v3369 = vadd.f32 0.0, %v3368
        %v3370 = vpop.f32.mrf.mxu0
        %3371 = vmatprep.mubr.bf16.mxu0 0
        %3372 = vmatmul.mubr.bf16.gmra.mxu0 %v3254
        %v3373 = vpop.f32.mrf.mxu0
        %v3374 = vadd.f32 0.0, %v3373
        %v3375 = vpop.f32.mrf.mxu0
        %v3376 = vpop.f32.mrf.mxu0
        %v3377 = vadd.f32 0.0, %v3376
        %v3378 = vpop.f32.mrf.mxu0
        %3379 = vmatprep.mubr.bf16.mxu0 0
        %3380 = vmatmul.mubr.bf16.gmra.mxu0 %v3257
        %v3381 = vpop.f32.mrf.mxu0
        %v3382 = vadd.f32 0.0, %v3381
        %v3383 = vpop.f32.mrf.mxu0
        %v3384 = vpop.f32.mrf.mxu0
        %v3385 = vadd.f32 0.0, %v3384
        %v3386 = vpop.f32.mrf.mxu0
        %3387 = vmatprep.mubr.bf16.mxu0 0
        %3388 = vmatmul.mubr.bf16.gmra.mxu0 %v3260
        %v3389 = vpop.f32.mrf.mxu0
        %v3390 = vadd.f32 0.0, %v3389
        %v3391 = vpop.f32.mrf.mxu0
        %v3392 = vpop.f32.mrf.mxu0
        %v3393 = vadd.f32 0.0, %v3392
        %v3394 = vpop.f32.mrf.mxu0
        %3395 = vmatprep.mubr.bf16.mxu0 0
        %3396 = vmatmul.mubr.bf16.gmra.mxu0 %v3263
        %v3397 = vpop.f32.mrf.mxu0
        %v3398 = vadd.f32 0.0, %v3397
        %v3399 = vpop.f32.mrf.mxu0
        %v3400 = vpop.f32.mrf.mxu0
        %v3401 = vadd.f32 0.0, %v3400
        %v3402 = vpop.f32.mrf.mxu0
        %3403 = vmatprep.mubr.bf16.mxu0 0
        %3404 = vmatmul.mubr.bf16.gmra.mxu0 %v3266
        %v3405 = vpop.f32.mrf.mxu0
        %v3406 = vadd.f32 0.0, %v3405
        %v3407 = vpop.f32.mrf.mxu0
        %v3408 = vpop.f32.mrf.mxu0
        %v3409 = vadd.f32 0.0, %v3408
        %v3410 = vpop.f32.mrf.mxu0
        %3411 = vmatprep.mubr.bf16.mxu0 0
        %3412 = vmatmul.mubr.bf16.gmra.mxu0 %v3269
        %v3413 = vpop.f32.mrf.mxu0
        %v3414 = vadd.f32 0.0, %v3413
        %v3415 = vpop.f32.mrf.mxu0
        %v3416 = vpop.f32.mrf.mxu0
        %v3417 = vadd.f32 0.0, %v3416
        %v3418 = vpop.f32.mrf.mxu0
        %3419 = vmatprep.mubr.bf16.mxu0 0
        %3420 = vmatmul.mubr.bf16.gmra.mxu0 %v3272
        %v3421 = vpop.f32.mrf.mxu0
        %v3422 = vadd.f32 0.0, %v3421
        %v3423 = vpop.f32.mrf.mxu0
        %v3424 = vpop.f32.mrf.mxu0
        %v3425 = vadd.f32 0.0, %v3424
        %v3426 = vpop.f32.mrf.mxu0
        %3427 = vmatprep.mubr.bf16.mxu0 0
        %3428 = vmatmul.mubr.bf16.gmra.mxu0 %v3275
        %v3429 = vpop.f32.mrf.mxu0
        %v3430 = vadd.f32 0.0, %v3429
        %v3431 = vpop.f32.mrf.mxu0
        %v3432 = vpop.f32.mrf.mxu0
        %v3433 = vadd.f32 0.0, %v3432
        %v3434 = vpop.f32.mrf.mxu0
        %3435 = vmatprep.mubr.bf16.mxu0 0
        %3436 = vmatmul.mubr.bf16.gmra.mxu0 %v3278
        %v3437 = vpop.f32.mrf.mxu0
        %v3438 = vadd.f32 0.0, %v3437
        %v3439 = vpop.f32.mrf.mxu0
        %v3440 = vpop.f32.mrf.mxu0
        %v3441 = vadd.f32 0.0, %v3440
        %v3442 = vpop.f32.mrf.mxu0
        %3443 = vdwg.mxu0
        %v3444 = vadd.f32 %v3151, %v3318
        %v3445 = vadd.f32 %v3152, %v3321
        %v3446 = vadd.f32 %v3153, %v3326
        %v3447 = vadd.f32 %v3154, %v3329
        %v3448 = vadd.f32 %v3155, %v3334
        %v3449 = vadd.f32 %v3156, %v3337
        %v3450 = vadd.f32 %v3157, %v3342
        %v3451 = vadd.f32 %v3158, %v3345
        %v3452 = vadd.f32 %v3159, %v3350
        %v3453 = vadd.f32 %v3160, %v3353
        %v3454 = vadd.f32 %v3161, %v3358
        %v3455 = vadd.f32 %v3162, %v3361
        %v3456 = vadd.f32 %v3163, %v3366
        %v3457 = vadd.f32 %v3164, %v3369
        %v3458 = vadd.f32 %v3165, %v3374
        %v3459 = vadd.f32 %v3166, %v3377
        %v3460 = vadd.f32 %v3167, %v3382
        %v3461 = vadd.f32 %v3168, %v3385
        %v3462 = vadd.f32 %v3169, %v3390
        %v3463 = vadd.f32 %v3170, %v3393
        %v3464 = vadd.f32 %v3171, %v3398
        %v3465 = vadd.f32 %v3172, %v3401
        %v3466 = vadd.f32 %v3173, %v3406
        %v3467 = vadd.f32 %v3174, %v3409
        %v3468 = vadd.f32 %v3175, %v3414
        %v3469 = vadd.f32 %v3176, %v3417
        %v3470 = vadd.f32 %v3177, %v3422
        %v3471 = vadd.f32 %v3178, %v3425
        %v3472 = vadd.f32 %v3179, %v3430
        %v3473 = vadd.f32 %v3180, %v3433
        %v3474 = vadd.f32 %v3181, %v3438
        %v3475 = vadd.f32 %v3182, %v3441
        %v3476 = vld [vmem:[%s2 + $0x8] sm:$0xc]
        %v3477 = vunpack.c.l.b16 %v1315
        %v3478 = vunpack.c.l.b16 %v1318
        %v3479 = vunpack.c.l.b16 %v1322
        %v3480 = vunpack.c.l.b16 %v1325
        %v3481 = vunpack.c.l.b16 %v1329
        %v3482 = vunpack.c.l.b16 %v1332
        %v3483 = vunpack.c.l.b16 %v1336
        %v3484 = vunpack.c.l.b16 %v1339
        %v3485 = vunpack.c.l.b16 %v1343
        %v3486 = vunpack.c.l.b16 %v1346
        %v3487 = vunpack.c.l.b16 %v1350
        %v3488 = vunpack.c.l.b16 %v1353
        %v3489 = vunpack.c.l.b16 %v1357
        %v3490 = vunpack.c.l.b16 %v1360
        %v3491 = vunpack.c.l.b16 %v1364
        %v3492 = vunpack.c.l.b16 %v1367
        %v3493 = vunpack.c.l.b16 %v1371
        %v3494 = vunpack.c.l.b16 %v1374
        %v3495 = vunpack.c.l.b16 %v1378
        %v3496 = vunpack.c.l.b16 %v1381
        %v3497 = vunpack.c.l.b16 %v1385
        %v3498 = vunpack.c.l.b16 %v1388
        %v3499 = vunpack.c.l.b16 %v1392
        %v3500 = vunpack.c.l.b16 %v1395
        %v3501 = vunpack.c.l.b16 %v1399
        %v3502 = vunpack.c.l.b16 %v1402
        %v3503 = vunpack.c.l.b16 %v1406
        %v3504 = vunpack.c.l.b16 %v1409
        %v3505 = vunpack.c.l.b16 %v1413
        %v3506 = vunpack.c.l.b16 %v1416
        %v3507 = vunpack.c.l.b16 %v1420
        %v3508 = vunpack.c.l.b16 %v1423
        %v3509 = vpack.c.b16 %v3478, %v3477
        %v3510 = vpack.c.b16 %v3480, %v3479
        %v3511 = vpack.c.b16 %v3482, %v3481
        %v3512 = vpack.c.b16 %v3484, %v3483
        %v3513 = vpack.c.b16 %v3486, %v3485
        %v3514 = vpack.c.b16 %v3488, %v3487
        %v3515 = vpack.c.b16 %v3490, %v3489
        %v3516 = vpack.c.b16 %v3492, %v3491
        %v3517 = vpack.c.b16 %v3494, %v3493
        %v3518 = vpack.c.b16 %v3496, %v3495
        %v3519 = vpack.c.b16 %v3498, %v3497
        %v3520 = vpack.c.b16 %v3500, %v3499
        %v3521 = vpack.c.b16 %v3502, %v3501
        %v3522 = vpack.c.b16 %v3504, %v3503
        %v3523 = vpack.c.b16 %v3506, %v3505
        %v3524 = vpack.c.b16 %v3508, %v3507
        %v3526 = vunpack.c.l.b16 %v3476
        %v3527 = vpack.c.b16 %v3526, %v3526
        %v3528 = vrot.slane %v3527, 2
        %v3530 = vsel %vm2087, %v3509, 0
        %v3533 = vsel %vm2087, %v3510, 0
        %v3536 = vsel %vm2087, %v3511, 0
        %v3539 = vsel %vm2087, %v3512, 0
        %v3542 = vsel %vm2087, %v3513, 0
        %v3545 = vsel %vm2087, %v3514, 0
        %v3548 = vsel %vm2087, %v3515, 0
        %v3551 = vsel %vm2087, %v3516, 0
        %v3554 = vsel %vm2087, %v3517, 0
        %v3557 = vsel %vm2087, %v3518, 0
        %v3560 = vsel %vm2087, %v3519, 0
        %v3563 = vsel %vm2087, %v3520, 0
        %v3566 = vsel %vm2087, %v3521, 0
        %v3569 = vsel %vm2087, %v3522, 0
        %v3572 = vsel %vm2087, %v3523, 0
        %v3575 = vsel %vm2087, %v3524, 0
        %v3578 = vsel %vm2136, %v3528, 0
        %3580 = vmatprep.subr.bf16.mxu0 0
        %3581 = vmatpush1.bf16.msra.mxu0 0
        %3582 = vmatprep.subr.bf16.mxu0 0
        %3583 = vmatpush1.bf16.msra.mxu0 0
        %3584 = vmatprep.subr.bf16.mxu0 0
        %3585 = vmatpush1.bf16.msra.mxu0 0
        %3586 = vmatprep.subr.bf16.mxu0 0
        %3587 = vmatpush1.bf16.msra.mxu0 0
        %3588 = vmatprep.subr.bf16.mxu0 0
        %3589 = vmatpush1.bf16.msra.mxu0 0
        %3590 = vmatprep.subr.bf16.mxu0 0
        %3591 = vmatpush1.bf16.msra.mxu0 0
        %3592 = vmatprep.subr.bf16.mxu0 0
        %3593 = vmatpush1.bf16.msra.mxu0 0
        %3594 = vmatprep.subr.bf16.mxu0 0
        %3595 = vmatpush1.bf16.msra.mxu0 %v3578
        %3596 = vmatprep.subr.bf16.mxu0 0
        %3597 = vmatpush2.bf16.msra.mxu0 0
        %3598 = vmatprep.subr.bf16.mxu0 0
        %3599 = vmatpush2.bf16.msra.mxu0 0
        %3600 = vmatprep.subr.bf16.mxu0 0
        %3601 = vmatpush2.bf16.msra.mxu0 0
        %3602 = vmatprep.subr.bf16.mxu0 0
        %3603 = vmatpush2.bf16.msra.mxu0 0
        %3604 = vmatprep.subr.bf16.mxu0 0
        %3605 = vmatpush2.bf16.msra.mxu0 0
        %3606 = vmatprep.subr.bf16.mxu0 0
        %3607 = vmatpush2.bf16.msra.mxu0 0
        %3608 = vmatprep.subr.bf16.mxu0 0
        %3609 = vmatpush2.bf16.msra.mxu0 0
        %3610 = vmatprep.subr.bf16.mxu0 0
        %3611 = vmatpush2.bf16.msra.mxu0 0
        %3612 = vmatprep.mubr.bf16.mxu0 0
        %3613 = vmatmul.mubr.bf16.gmra.mxu0 %v3530
        %v3614 = vpop.f32.mrf.mxu0
        %v3615 = vadd.f32 0.0, %v3614
        %v3616 = vpop.f32.mrf.mxu0
        %v3617 = vpop.f32.mrf.mxu0
        %v3618 = vadd.f32 0.0, %v3617
        %v3619 = vpop.f32.mrf.mxu0
        %3620 = vmatprep.mubr.bf16.mxu0 0
        %3621 = vmatmul.mubr.bf16.gmra.mxu0 %v3533
        %v3622 = vpop.f32.mrf.mxu0
        %v3623 = vadd.f32 0.0, %v3622
        %v3624 = vpop.f32.mrf.mxu0
        %v3625 = vpop.f32.mrf.mxu0
        %v3626 = vadd.f32 0.0, %v3625
        %v3627 = vpop.f32.mrf.mxu0
        %3628 = vmatprep.mubr.bf16.mxu0 0
        %3629 = vmatmul.mubr.bf16.gmra.mxu0 %v3536
        %v3630 = vpop.f32.mrf.mxu0
        %v3631 = vadd.f32 0.0, %v3630
        %v3632 = vpop.f32.mrf.mxu0
        %v3633 = vpop.f32.mrf.mxu0
        %v3634 = vadd.f32 0.0, %v3633
        %v3635 = vpop.f32.mrf.mxu0
        %3636 = vmatprep.mubr.bf16.mxu0 0
        %3637 = vmatmul.mubr.bf16.gmra.mxu0 %v3539
        %v3638 = vpop.f32.mrf.mxu0
        %v3639 = vadd.f32 0.0, %v3638
        %v3640 = vpop.f32.mrf.mxu0
        %v3641 = vpop.f32.mrf.mxu0
        %v3642 = vadd.f32 0.0, %v3641
        %v3643 = vpop.f32.mrf.mxu0
        %3644 = vmatprep.mubr.bf16.mxu0 0
        %3645 = vmatmul.mubr.bf16.gmra.mxu0 %v3542
        %v3646 = vpop.f32.mrf.mxu0
        %v3647 = vadd.f32 0.0, %v3646
        %v3648 = vpop.f32.mrf.mxu0
        %v3649 = vpop.f32.mrf.mxu0
        %v3650 = vadd.f32 0.0, %v3649
        %v3651 = vpop.f32.mrf.mxu0
        %3652 = vmatprep.mubr.bf16.mxu0 0
        %3653 = vmatmul.mubr.bf16.gmra.mxu0 %v3545
        %v3654 = vpop.f32.mrf.mxu0
        %v3655 = vadd.f32 0.0, %v3654
        %v3656 = vpop.f32.mrf.mxu0
        %v3657 = vpop.f32.mrf.mxu0
        %v3658 = vadd.f32 0.0, %v3657
        %v3659 = vpop.f32.mrf.mxu0
        %3660 = vmatprep.mubr.bf16.mxu0 0
        %3661 = vmatmul.mubr.bf16.gmra.mxu0 %v3548
        %v3662 = vpop.f32.mrf.mxu0
        %v3663 = vadd.f32 0.0, %v3662
        %v3664 = vpop.f32.mrf.mxu0
        %v3665 = vpop.f32.mrf.mxu0
        %v3666 = vadd.f32 0.0, %v3665
        %v3667 = vpop.f32.mrf.mxu0
        %3668 = vmatprep.mubr.bf16.mxu0 0
        %3669 = vmatmul.mubr.bf16.gmra.mxu0 %v3551
        %v3670 = vpop.f32.mrf.mxu0
        %v3671 = vadd.f32 0.0, %v3670
        %v3672 = vpop.f32.mrf.mxu0
        %v3673 = vpop.f32.mrf.mxu0
        %v3674 = vadd.f32 0.0, %v3673
        %v3675 = vpop.f32.mrf.mxu0
        %3676 = vmatprep.mubr.bf16.mxu0 0
        %3677 = vmatmul.mubr.bf16.gmra.mxu0 %v3554
        %v3678 = vpop.f32.mrf.mxu0
        %v3679 = vadd.f32 0.0, %v3678
        %v3680 = vpop.f32.mrf.mxu0
        %v3681 = vpop.f32.mrf.mxu0
        %v3682 = vadd.f32 0.0, %v3681
        %v3683 = vpop.f32.mrf.mxu0
        %3684 = vmatprep.mubr.bf16.mxu0 0
        %3685 = vmatmul.mubr.bf16.gmra.mxu0 %v3557
        %v3686 = vpop.f32.mrf.mxu0
        %v3687 = vadd.f32 0.0, %v3686
        %v3688 = vpop.f32.mrf.mxu0
        %v3689 = vpop.f32.mrf.mxu0
        %v3690 = vadd.f32 0.0, %v3689
        %v3691 = vpop.f32.mrf.mxu0
        %3692 = vmatprep.mubr.bf16.mxu0 0
        %3693 = vmatmul.mubr.bf16.gmra.mxu0 %v3560
        %v3694 = vpop.f32.mrf.mxu0
        %v3695 = vadd.f32 0.0, %v3694
        %v3696 = vpop.f32.mrf.mxu0
        %v3697 = vpop.f32.mrf.mxu0
        %v3698 = vadd.f32 0.0, %v3697
        %v3699 = vpop.f32.mrf.mxu0
        %3700 = vmatprep.mubr.bf16.mxu0 0
        %3701 = vmatmul.mubr.bf16.gmra.mxu0 %v3563
        %v3702 = vpop.f32.mrf.mxu0
        %v3703 = vadd.f32 0.0, %v3702
        %v3704 = vpop.f32.mrf.mxu0
        %v3705 = vpop.f32.mrf.mxu0
        %v3706 = vadd.f32 0.0, %v3705
        %v3707 = vpop.f32.mrf.mxu0
        %3708 = vmatprep.mubr.bf16.mxu0 0
        %3709 = vmatmul.mubr.bf16.gmra.mxu0 %v3566
        %v3710 = vpop.f32.mrf.mxu0
        %v3711 = vadd.f32 0.0, %v3710
        %v3712 = vpop.f32.mrf.mxu0
        %v3713 = vpop.f32.mrf.mxu0
        %v3714 = vadd.f32 0.0, %v3713
        %v3715 = vpop.f32.mrf.mxu0
        %3716 = vmatprep.mubr.bf16.mxu0 0
        %3717 = vmatmul.mubr.bf16.gmra.mxu0 %v3569
        %v3718 = vpop.f32.mrf.mxu0
        %v3719 = vadd.f32 0.0, %v3718
        %v3720 = vpop.f32.mrf.mxu0
        %v3721 = vpop.f32.mrf.mxu0
        %v3722 = vadd.f32 0.0, %v3721
        %v3723 = vpop.f32.mrf.mxu0
        %3724 = vmatprep.mubr.bf16.mxu0 0
        %3725 = vmatmul.mubr.bf16.gmra.mxu0 %v3572
        %v3726 = vpop.f32.mrf.mxu0
        %v3727 = vadd.f32 0.0, %v3726
        %v3728 = vpop.f32.mrf.mxu0
        %v3729 = vpop.f32.mrf.mxu0
        %v3730 = vadd.f32 0.0, %v3729
        %v3731 = vpop.f32.mrf.mxu0
        %3732 = vmatprep.mubr.bf16.mxu0 0
        %3733 = vmatmul.mubr.bf16.gmra.mxu0 %v3575
        %v3734 = vpop.f32.mrf.mxu0
        %v3735 = vadd.f32 0.0, %v3734
        %v3736 = vpop.f32.mrf.mxu0
        %v3737 = vpop.f32.mrf.mxu0
        %v3738 = vadd.f32 0.0, %v3737
        %v3739 = vpop.f32.mrf.mxu0
        %3740 = vdwg.mxu0
        %v3741 = vadd.f32 %v3444, %v3615
        %v3742 = vadd.f32 %v3445, %v3618
        %v3743 = vadd.f32 %v3446, %v3623
        %v3744 = vadd.f32 %v3447, %v3626
        %v3745 = vadd.f32 %v3448, %v3631
        %v3746 = vadd.f32 %v3449, %v3634
        %v3747 = vadd.f32 %v3450, %v3639
        %v3748 = vadd.f32 %v3451, %v3642
        %v3749 = vadd.f32 %v3452, %v3647
        %v3750 = vadd.f32 %v3453, %v3650
        %v3751 = vadd.f32 %v3454, %v3655
        %v3752 = vadd.f32 %v3455, %v3658
        %v3753 = vadd.f32 %v3456, %v3663
        %v3754 = vadd.f32 %v3457, %v3666
        %v3755 = vadd.f32 %v3458, %v3671
        %v3756 = vadd.f32 %v3459, %v3674
        %v3757 = vadd.f32 %v3460, %v3679
        %v3758 = vadd.f32 %v3461, %v3682
        %v3759 = vadd.f32 %v3462, %v3687
        %v3760 = vadd.f32 %v3463, %v3690
        %v3761 = vadd.f32 %v3464, %v3695
        %v3762 = vadd.f32 %v3465, %v3698
        %v3763 = vadd.f32 %v3466, %v3703
        %v3764 = vadd.f32 %v3467, %v3706
        %v3765 = vadd.f32 %v3468, %v3711
        %v3766 = vadd.f32 %v3469, %v3714
        %v3767 = vadd.f32 %v3470, %v3719
        %v3768 = vadd.f32 %v3471, %v3722
        %v3769 = vadd.f32 %v3472, %v3727
        %v3770 = vadd.f32 %v3473, %v3730
        %v3771 = vadd.f32 %v3474, %v3735
        %v3772 = vadd.f32 %v3475, %v3738
        %v3773 = vld [vmem:[%s2 + $0xc] sm:$0x3]
        %v3790 = vunpack.c.l.b16 %v1425
        %v3791 = vunpack.c.l.b16 %v1426
        %v3792 = vunpack.c.l.b16 %v1427
        %v3793 = vunpack.c.l.b16 %v1428
        %v3794 = vunpack.c.l.b16 %v1429
        %v3795 = vunpack.c.l.b16 %v1430
        %v3796 = vunpack.c.l.b16 %v1431
        %v3797 = vunpack.c.l.b16 %v1432
        %v3798 = vunpack.c.l.b16 %v1433
        %v3799 = vunpack.c.l.b16 %v1434
        %v3800 = vunpack.c.l.b16 %v1435
        %v3801 = vunpack.c.l.b16 %v1436
        %v3802 = vunpack.c.l.b16 %v1437
        %v3803 = vunpack.c.l.b16 %v1438
        %v3804 = vunpack.c.l.b16 %v1439
        %v3805 = vunpack.c.l.b16 %v1440
        %v3806 = vunpack.c.l.b16 %v1441
        %v3807 = vunpack.c.l.b16 %v1442
        %v3808 = vunpack.c.l.b16 %v1443
        %v3809 = vunpack.c.l.b16 %v1444
        %v3810 = vunpack.c.l.b16 %v1445
        %v3811 = vunpack.c.l.b16 %v1446
        %v3812 = vunpack.c.l.b16 %v1447
        %v3813 = vunpack.c.l.b16 %v1448
        %v3814 = vunpack.c.l.b16 %v1449
        %v3815 = vunpack.c.l.b16 %v1450
        %v3816 = vunpack.c.l.b16 %v1451
        %v3817 = vunpack.c.l.b16 %v1452
        %v3818 = vunpack.c.l.b16 %v1453
        %v3819 = vunpack.c.l.b16 %v1454
        %v3820 = vunpack.c.l.b16 %v1455
        %v3821 = vunpack.c.l.b16 %v1456
        %v3822 = vpack.c.b16 %v3791, %v3790
        %v3823 = vpack.c.b16 %v3793, %v3792
        %v3824 = vpack.c.b16 %v3795, %v3794
        %v3825 = vpack.c.b16 %v3797, %v3796
        %v3826 = vpack.c.b16 %v3799, %v3798
        %v3827 = vpack.c.b16 %v3801, %v3800
        %v3828 = vpack.c.b16 %v3803, %v3802
        %v3829 = vpack.c.b16 %v3805, %v3804
        %v3830 = vpack.c.b16 %v3807, %v3806
        %v3831 = vpack.c.b16 %v3809, %v3808
        %v3832 = vpack.c.b16 %v3811, %v3810
        %v3833 = vpack.c.b16 %v3813, %v3812
        %v3834 = vpack.c.b16 %v3815, %v3814
        %v3835 = vpack.c.b16 %v3817, %v3816
        %v3836 = vpack.c.b16 %v3819, %v3818
        %v3837 = vpack.c.b16 %v3821, %v3820
        %v3839 = vsel %vm2087, %v3822, 0
        %v3842 = vsel %vm2087, %v3823, 0
        %v3845 = vsel %vm2087, %v3824, 0
        %v3848 = vsel %vm2087, %v3825, 0
        %v3851 = vsel %vm2087, %v3826, 0
        %v3854 = vsel %vm2087, %v3827, 0
        %v3857 = vsel %vm2087, %v3828, 0
        %v3860 = vsel %vm2087, %v3829, 0
        %v3863 = vsel %vm2087, %v3830, 0
        %v3866 = vsel %vm2087, %v3831, 0
        %v3869 = vsel %vm2087, %v3832, 0
        %v3872 = vsel %vm2087, %v3833, 0
        %v3875 = vsel %vm2087, %v3834, 0
        %v3878 = vsel %vm2087, %v3835, 0
        %v3881 = vsel %vm2087, %v3836, 0
        %v3884 = vsel %vm2087, %v3837, 0
        %v3887 = vsel %vm2136, %v3773, 0
        %3889 = vmatprep.subr.bf16.mxu0 0
        %3890 = vmatpush1.bf16.msra.mxu0 0
        %3891 = vmatprep.subr.bf16.mxu0 0
        %3892 = vmatpush1.bf16.msra.mxu0 0
        %3893 = vmatprep.subr.bf16.mxu0 0
        %3894 = vmatpush1.bf16.msra.mxu0 0
        %3895 = vmatprep.subr.bf16.mxu0 0
        %3896 = vmatpush1.bf16.msra.mxu0 0
        %3897 = vmatprep.subr.bf16.mxu0 0
        %3898 = vmatpush1.bf16.msra.mxu0 0
        %3899 = vmatprep.subr.bf16.mxu0 0
        %3900 = vmatpush1.bf16.msra.mxu0 0
        %3901 = vmatprep.subr.bf16.mxu0 0
        %3902 = vmatpush1.bf16.msra.mxu0 0
        %3903 = vmatprep.subr.bf16.mxu0 0
        %3904 = vmatpush1.bf16.msra.mxu0 %v3887
        %3905 = vmatprep.subr.bf16.mxu0 0
        %3906 = vmatpush2.bf16.msra.mxu0 0
        %3907 = vmatprep.subr.bf16.mxu0 0
        %3908 = vmatpush2.bf16.msra.mxu0 0
        %3909 = vmatprep.subr.bf16.mxu0 0
        %3910 = vmatpush2.bf16.msra.mxu0 0
        %3911 = vmatprep.subr.bf16.mxu0 0
        %3912 = vmatpush2.bf16.msra.mxu0 0
        %3913 = vmatprep.subr.bf16.mxu0 0
        %3914 = vmatpush2.bf16.msra.mxu0 0
        %3915 = vmatprep.subr.bf16.mxu0 0
        %3916 = vmatpush2.bf16.msra.mxu0 0
        %3917 = vmatprep.subr.bf16.mxu0 0
        %3918 = vmatpush2.bf16.msra.mxu0 0
        %3919 = vmatprep.subr.bf16.mxu0 0
        %3920 = vmatpush2.bf16.msra.mxu0 0
        %3921 = vmatprep.mubr.bf16.mxu0 0
        %3922 = vmatmul.mubr.bf16.gmra.mxu0 %v3839
        %v3923 = vpop.f32.mrf.mxu0
        %v3924 = vadd.f32 0.0, %v3923
        %v3925 = vpop.f32.mrf.mxu0
        %v3926 = vpop.f32.mrf.mxu0
        %v3927 = vadd.f32 0.0, %v3926
        %v3928 = vpop.f32.mrf.mxu0
        %3929 = vmatprep.mubr.bf16.mxu0 0
        %3930 = vmatmul.mubr.bf16.gmra.mxu0 %v3842
        %v3931 = vpop.f32.mrf.mxu0
        %v3932 = vadd.f32 0.0, %v3931
        %v3933 = vpop.f32.mrf.mxu0
        %v3934 = vpop.f32.mrf.mxu0
        %v3935 = vadd.f32 0.0, %v3934
        %v3936 = vpop.f32.mrf.mxu0
        %3937 = vmatprep.mubr.bf16.mxu0 0
        %3938 = vmatmul.mubr.bf16.gmra.mxu0 %v3845
        %v3939 = vpop.f32.mrf.mxu0
        %v3940 = vadd.f32 0.0, %v3939
        %v3941 = vpop.f32.mrf.mxu0
        %v3942 = vpop.f32.mrf.mxu0
        %v3943 = vadd.f32 0.0, %v3942
        %v3944 = vpop.f32.mrf.mxu0
        %3945 = vmatprep.mubr.bf16.mxu0 0
        %3946 = vmatmul.mubr.bf16.gmra.mxu0 %v3848
        %v3947 = vpop.f32.mrf.mxu0
        %v3948 = vadd.f32 0.0, %v3947
        %v3949 = vpop.f32.mrf.mxu0
        %v3950 = vpop.f32.mrf.mxu0
        %v3951 = vadd.f32 0.0, %v3950
        %v3952 = vpop.f32.mrf.mxu0
        %3953 = vmatprep.mubr.bf16.mxu0 0
        %3954 = vmatmul.mubr.bf16.gmra.mxu0 %v3851
        %v3955 = vpop.f32.mrf.mxu0
        %v3956 = vadd.f32 0.0, %v3955
        %v3957 = vpop.f32.mrf.mxu0
        %v3958 = vpop.f32.mrf.mxu0
        %v3959 = vadd.f32 0.0, %v3958
        %v3960 = vpop.f32.mrf.mxu0
        %3961 = vmatprep.mubr.bf16.mxu0 0
        %3962 = vmatmul.mubr.bf16.gmra.mxu0 %v3854
        %v3963 = vpop.f32.mrf.mxu0
        %v3964 = vadd.f32 0.0, %v3963
        %v3965 = vpop.f32.mrf.mxu0
        %v3966 = vpop.f32.mrf.mxu0
        %v3967 = vadd.f32 0.0, %v3966
        %v3968 = vpop.f32.mrf.mxu0
        %3969 = vmatprep.mubr.bf16.mxu0 0
        %3970 = vmatmul.mubr.bf16.gmra.mxu0 %v3857
        %v3971 = vpop.f32.mrf.mxu0
        %v3972 = vadd.f32 0.0, %v3971
        %v3973 = vpop.f32.mrf.mxu0
        %v3974 = vpop.f32.mrf.mxu0
        %v3975 = vadd.f32 0.0, %v3974
        %v3976 = vpop.f32.mrf.mxu0
        %3977 = vmatprep.mubr.bf16.mxu0 0
        %3978 = vmatmul.mubr.bf16.gmra.mxu0 %v3860
        %v3979 = vpop.f32.mrf.mxu0
        %v3980 = vadd.f32 0.0, %v3979
        %v3981 = vpop.f32.mrf.mxu0
        %v3982 = vpop.f32.mrf.mxu0
        %v3983 = vadd.f32 0.0, %v3982
        %v3984 = vpop.f32.mrf.mxu0
        %3985 = vmatprep.mubr.bf16.mxu0 0
        %3986 = vmatmul.mubr.bf16.gmra.mxu0 %v3863
        %v3987 = vpop.f32.mrf.mxu0
        %v3988 = vadd.f32 0.0, %v3987
        %v3989 = vpop.f32.mrf.mxu0
        %v3990 = vpop.f32.mrf.mxu0
        %v3991 = vadd.f32 0.0, %v3990
        %v3992 = vpop.f32.mrf.mxu0
        %3993 = vmatprep.mubr.bf16.mxu0 0
        %3994 = vmatmul.mubr.bf16.gmra.mxu0 %v3866
        %v3995 = vpop.f32.mrf.mxu0
        %v3996 = vadd.f32 0.0, %v3995
        %v3997 = vpop.f32.mrf.mxu0
        %v3998 = vpop.f32.mrf.mxu0
        %v3999 = vadd.f32 0.0, %v3998
        %v4000 = vpop.f32.mrf.mxu0
        %4001 = vmatprep.mubr.bf16.mxu0 0
        %4002 = vmatmul.mubr.bf16.gmra.mxu0 %v3869
        %v4003 = vpop.f32.mrf.mxu0
        %v4004 = vadd.f32 0.0, %v4003
        %v4005 = vpop.f32.mrf.mxu0
        %v4006 = vpop.f32.mrf.mxu0
        %v4007 = vadd.f32 0.0, %v4006
        %v4008 = vpop.f32.mrf.mxu0
        %4009 = vmatprep.mubr.bf16.mxu0 0
        %4010 = vmatmul.mubr.bf16.gmra.mxu0 %v3872
        %v4011 = vpop.f32.mrf.mxu0
        %v4012 = vadd.f32 0.0, %v4011
        %v4013 = vpop.f32.mrf.mxu0
        %v4014 = vpop.f32.mrf.mxu0
        %v4015 = vadd.f32 0.0, %v4014
        %v4016 = vpop.f32.mrf.mxu0
        %4017 = vmatprep.mubr.bf16.mxu0 0
        %4018 = vmatmul.mubr.bf16.gmra.mxu0 %v3875
        %v4019 = vpop.f32.mrf.mxu0
        %v4020 = vadd.f32 0.0, %v4019
        %v4021 = vpop.f32.mrf.mxu0
        %v4022 = vpop.f32.mrf.mxu0
        %v4023 = vadd.f32 0.0, %v4022
        %v4024 = vpop.f32.mrf.mxu0
        %4025 = vmatprep.mubr.bf16.mxu0 0
        %4026 = vmatmul.mubr.bf16.gmra.mxu0 %v3878
        %v4027 = vpop.f32.mrf.mxu0
        %v4028 = vadd.f32 0.0, %v4027
        %v4029 = vpop.f32.mrf.mxu0
        %v4030 = vpop.f32.mrf.mxu0
        %v4031 = vadd.f32 0.0, %v4030
        %v4032 = vpop.f32.mrf.mxu0
        %4033 = vmatprep.mubr.bf16.mxu0 0
        %4034 = vmatmul.mubr.bf16.gmra.mxu0 %v3881
        %v4035 = vpop.f32.mrf.mxu0
        %v4036 = vadd.f32 0.0, %v4035
        %v4037 = vpop.f32.mrf.mxu0
        %v4038 = vpop.f32.mrf.mxu0
        %v4039 = vadd.f32 0.0, %v4038
        %v4040 = vpop.f32.mrf.mxu0
        %4041 = vmatprep.mubr.bf16.mxu0 0
        %4042 = vmatmul.mubr.bf16.gmra.mxu0 %v3884
        %v4043 = vpop.f32.mrf.mxu0
        %v4044 = vadd.f32 0.0, %v4043
        %v4045 = vpop.f32.mrf.mxu0
        %v4046 = vpop.f32.mrf.mxu0
        %v4047 = vadd.f32 0.0, %v4046
        %v4048 = vpop.f32.mrf.mxu0
        %4049 = vdwg.mxu0
        %v4050 = vadd.f32 %v3741, %v3924
        %v4051 = vadd.f32 %v3742, %v3927
        %v4052 = vadd.f32 %v3743, %v3932
        %v4053 = vadd.f32 %v3744, %v3935
        %v4054 = vadd.f32 %v3745, %v3940
        %v4055 = vadd.f32 %v3746, %v3943
        %v4056 = vadd.f32 %v3747, %v3948
        %v4057 = vadd.f32 %v3748, %v3951
        %v4058 = vadd.f32 %v3749, %v3956
        %v4059 = vadd.f32 %v3750, %v3959
        %v4060 = vadd.f32 %v3751, %v3964
        %v4061 = vadd.f32 %v3752, %v3967
        %v4062 = vadd.f32 %v3753, %v3972
        %v4063 = vadd.f32 %v3754, %v3975
        %v4064 = vadd.f32 %v3755, %v3980
        %v4065 = vadd.f32 %v3756, %v3983
        %v4066 = vadd.f32 %v3757, %v3988
        %v4067 = vadd.f32 %v3758, %v3991
        %v4068 = vadd.f32 %v3759, %v3996
        %v4069 = vadd.f32 %v3760, %v3999
        %v4070 = vadd.f32 %v3761, %v4004
        %v4071 = vadd.f32 %v3762, %v4007
        %v4072 = vadd.f32 %v3763, %v4012
        %v4073 = vadd.f32 %v3764, %v4015
        %v4074 = vadd.f32 %v3765, %v4020
        %v4075 = vadd.f32 %v3766, %v4023
        %v4076 = vadd.f32 %v3767, %v4028
        %v4077 = vadd.f32 %v3768, %v4031
        %v4078 = vadd.f32 %v3769, %v4036
        %v4079 = vadd.f32 %v3770, %v4039
        %v4080 = vadd.f32 %v3771, %v4044
        %v4081 = vadd.f32 %v3772, %v4047
        %v4082 = vld [vmem:[%s2 + $0xc] sm:$0xc]
        %v4083 = vunpack.c.l.b16 %v1486
        %v4084 = vunpack.c.l.b16 %v1496
        %v4085 = vunpack.c.l.b16 %v1510
        %v4086 = vunpack.c.l.b16 %v1520
        %v4087 = vunpack.c.l.b16 %v1534
        %v4088 = vunpack.c.l.b16 %v1544
        %v4089 = vunpack.c.l.b16 %v1558
        %v4090 = vunpack.c.l.b16 %v1568
        %v4091 = vunpack.c.l.b16 %v1582
        %v4092 = vunpack.c.l.b16 %v1592
        %v4093 = vunpack.c.l.b16 %v1606
        %v4094 = vunpack.c.l.b16 %v1616
        %v4095 = vunpack.c.l.b16 %v1630
        %v4096 = vunpack.c.l.b16 %v1640
        %v4097 = vunpack.c.l.b16 %v1654
        %v4098 = vunpack.c.l.b16 %v1664
        %v4099 = vunpack.c.l.b16 %v1678
        %v4100 = vunpack.c.l.b16 %v1688
        %v4101 = vunpack.c.l.b16 %v1702
        %v4102 = vunpack.c.l.b16 %v1712
        %v4103 = vunpack.c.l.b16 %v1726
        %v4104 = vunpack.c.l.b16 %v1736
        %v4105 = vunpack.c.l.b16 %v1750
        %v4106 = vunpack.c.l.b16 %v1760
        %v4107 = vunpack.c.l.b16 %v1774
        %v4108 = vunpack.c.l.b16 %v1784
        %v4109 = vunpack.c.l.b16 %v1798
        %v4110 = vunpack.c.l.b16 %v1808
        %v4111 = vunpack.c.l.b16 %v1822
        %v4112 = vunpack.c.l.b16 %v1832
        %v4113 = vunpack.c.l.b16 %v1846
        %v4114 = vunpack.c.l.b16 %v1856
        %v4115 = vpack.c.b16 %v4084, %v4083
        %v4116 = vpack.c.b16 %v4086, %v4085
        %v4117 = vpack.c.b16 %v4088, %v4087
        %v4118 = vpack.c.b16 %v4090, %v4089
        %v4119 = vpack.c.b16 %v4092, %v4091
        %v4120 = vpack.c.b16 %v4094, %v4093
        %v4121 = vpack.c.b16 %v4096, %v4095
        %v4122 = vpack.c.b16 %v4098, %v4097
        %v4123 = vpack.c.b16 %v4100, %v4099
        %v4124 = vpack.c.b16 %v4102, %v4101
        %v4125 = vpack.c.b16 %v4104, %v4103
        %v4126 = vpack.c.b16 %v4106, %v4105
        %v4127 = vpack.c.b16 %v4108, %v4107
        %v4128 = vpack.c.b16 %v4110, %v4109
        %v4129 = vpack.c.b16 %v4112, %v4111
        %v4130 = vpack.c.b16 %v4114, %v4113
        %v4132 = vunpack.c.l.b16 %v4082
        %v4133 = vpack.c.b16 %v4132, %v4132
        %v4134 = vrot.slane %v4133, 2
        %v4136 = vsel %vm2087, %v4115, 0
        %v4139 = vsel %vm2087, %v4116, 0
        %v4142 = vsel %vm2087, %v4117, 0
        %v4145 = vsel %vm2087, %v4118, 0
        %v4148 = vsel %vm2087, %v4119, 0
        %v4151 = vsel %vm2087, %v4120, 0
        %v4154 = vsel %vm2087, %v4121, 0
        %v4157 = vsel %vm2087, %v4122, 0
        %v4160 = vsel %vm2087, %v4123, 0
        %v4163 = vsel %vm2087, %v4124, 0
        %v4166 = vsel %vm2087, %v4125, 0
        %v4169 = vsel %vm2087, %v4126, 0
        %v4172 = vsel %vm2087, %v4127, 0
        %v4175 = vsel %vm2087, %v4128, 0
        %v4178 = vsel %vm2087, %v4129, 0
        %v4181 = vsel %vm2087, %v4130, 0
        %v4184 = vsel %vm2136, %v4134, 0
        %4186 = vmatprep.subr.bf16.mxu0 0
        %4187 = vmatpush1.bf16.msra.mxu0 0
        %4188 = vmatprep.subr.bf16.mxu0 0
        %4189 = vmatpush1.bf16.msra.mxu0 0
        %4190 = vmatprep.subr.bf16.mxu0 0
        %4191 = vmatpush1.bf16.msra.mxu0 0
        %4192 = vmatprep.subr.bf16.mxu0 0
        %4193 = vmatpush1.bf16.msra.mxu0 0
        %4194 = vmatprep.subr.bf16.mxu0 0
        %4195 = vmatpush1.bf16.msra.mxu0 0
        %4196 = vmatprep.subr.bf16.mxu0 0
        %4197 = vmatpush1.bf16.msra.mxu0 0
        %4198 = vmatprep.subr.bf16.mxu0 0
        %4199 = vmatpush1.bf16.msra.mxu0 0
        %4200 = vmatprep.subr.bf16.mxu0 0
        %4201 = vmatpush1.bf16.msra.mxu0 %v4184
        %4202 = vmatprep.subr.bf16.mxu0 0
        %4203 = vmatpush2.bf16.msra.mxu0 0
        %4204 = vmatprep.subr.bf16.mxu0 0
        %4205 = vmatpush2.bf16.msra.mxu0 0
        %4206 = vmatprep.subr.bf16.mxu0 0
        %4207 = vmatpush2.bf16.msra.mxu0 0
        %4208 = vmatprep.subr.bf16.mxu0 0
        %4209 = vmatpush2.bf16.msra.mxu0 0
        %4210 = vmatprep.subr.bf16.mxu0 0
        %4211 = vmatpush2.bf16.msra.mxu0 0
        %4212 = vmatprep.subr.bf16.mxu0 0
        %4213 = vmatpush2.bf16.msra.mxu0 0
        %4214 = vmatprep.subr.bf16.mxu0 0
        %4215 = vmatpush2.bf16.msra.mxu0 0
        %4216 = vmatprep.subr.bf16.mxu0 0
        %4217 = vmatpush2.bf16.msra.mxu0 0
        %4218 = vmatprep.mubr.bf16.mxu0 0
        %4219 = vmatmul.mubr.bf16.gmra.mxu0 %v4136
        %v4220 = vpop.f32.mrf.mxu0
        %v4221 = vadd.f32 0.0, %v4220
        %v4222 = vpop.f32.mrf.mxu0
        %v4223 = vpop.f32.mrf.mxu0
        %v4224 = vadd.f32 0.0, %v4223
        %v4225 = vpop.f32.mrf.mxu0
        %4226 = vmatprep.mubr.bf16.mxu0 0
        %4227 = vmatmul.mubr.bf16.gmra.mxu0 %v4139
        %v4228 = vpop.f32.mrf.mxu0
        %v4229 = vadd.f32 0.0, %v4228
        %v4230 = vpop.f32.mrf.mxu0
        %v4231 = vpop.f32.mrf.mxu0
        %v4232 = vadd.f32 0.0, %v4231
        %v4233 = vpop.f32.mrf.mxu0
        %4234 = vmatprep.mubr.bf16.mxu0 0
        %4235 = vmatmul.mubr.bf16.gmra.mxu0 %v4142
        %v4236 = vpop.f32.mrf.mxu0
        %v4237 = vadd.f32 0.0, %v4236
        %v4238 = vpop.f32.mrf.mxu0
        %v4239 = vpop.f32.mrf.mxu0
        %v4240 = vadd.f32 0.0, %v4239
        %v4241 = vpop.f32.mrf.mxu0
        %4242 = vmatprep.mubr.bf16.mxu0 0
        %4243 = vmatmul.mubr.bf16.gmra.mxu0 %v4145
        %v4244 = vpop.f32.mrf.mxu0
        %v4245 = vadd.f32 0.0, %v4244
        %v4246 = vpop.f32.mrf.mxu0
        %v4247 = vpop.f32.mrf.mxu0
        %v4248 = vadd.f32 0.0, %v4247
        %v4249 = vpop.f32.mrf.mxu0
        %4250 = vmatprep.mubr.bf16.mxu0 0
        %4251 = vmatmul.mubr.bf16.gmra.mxu0 %v4148
        %v4252 = vpop.f32.mrf.mxu0
        %v4253 = vadd.f32 0.0, %v4252
        %v4254 = vpop.f32.mrf.mxu0
        %v4255 = vpop.f32.mrf.mxu0
        %v4256 = vadd.f32 0.0, %v4255
        %v4257 = vpop.f32.mrf.mxu0
        %4258 = vmatprep.mubr.bf16.mxu0 0
        %4259 = vmatmul.mubr.bf16.gmra.mxu0 %v4151
        %v4260 = vpop.f32.mrf.mxu0
        %v4261 = vadd.f32 0.0, %v4260
        %v4262 = vpop.f32.mrf.mxu0
        %v4263 = vpop.f32.mrf.mxu0
        %v4264 = vadd.f32 0.0, %v4263
        %v4265 = vpop.f32.mrf.mxu0
        %4266 = vmatprep.mubr.bf16.mxu0 0
        %4267 = vmatmul.mubr.bf16.gmra.mxu0 %v4154
        %v4268 = vpop.f32.mrf.mxu0
        %v4269 = vadd.f32 0.0, %v4268
        %v4270 = vpop.f32.mrf.mxu0
        %v4271 = vpop.f32.mrf.mxu0
        %v4272 = vadd.f32 0.0, %v4271
        %v4273 = vpop.f32.mrf.mxu0
        %4274 = vmatprep.mubr.bf16.mxu0 0
        %4275 = vmatmul.mubr.bf16.gmra.mxu0 %v4157
        %v4276 = vpop.f32.mrf.mxu0
        %v4277 = vadd.f32 0.0, %v4276
        %v4278 = vpop.f32.mrf.mxu0
        %v4279 = vpop.f32.mrf.mxu0
        %v4280 = vadd.f32 0.0, %v4279
        %v4281 = vpop.f32.mrf.mxu0
        %4282 = vmatprep.mubr.bf16.mxu0 0
        %4283 = vmatmul.mubr.bf16.gmra.mxu0 %v4160
        %v4284 = vpop.f32.mrf.mxu0
        %v4285 = vadd.f32 0.0, %v4284
        %v4286 = vpop.f32.mrf.mxu0
        %v4287 = vpop.f32.mrf.mxu0
        %v4288 = vadd.f32 0.0, %v4287
        %v4289 = vpop.f32.mrf.mxu0
        %4290 = vmatprep.mubr.bf16.mxu0 0
        %4291 = vmatmul.mubr.bf16.gmra.mxu0 %v4163
        %v4292 = vpop.f32.mrf.mxu0
        %v4293 = vadd.f32 0.0, %v4292
        %v4294 = vpop.f32.mrf.mxu0
        %v4295 = vpop.f32.mrf.mxu0
        %v4296 = vadd.f32 0.0, %v4295
        %v4297 = vpop.f32.mrf.mxu0
        %4298 = vmatprep.mubr.bf16.mxu0 0
        %4299 = vmatmul.mubr.bf16.gmra.mxu0 %v4166
        %v4300 = vpop.f32.mrf.mxu0
        %v4301 = vadd.f32 0.0, %v4300
        %v4302 = vpop.f32.mrf.mxu0
        %v4303 = vpop.f32.mrf.mxu0
        %v4304 = vadd.f32 0.0, %v4303
        %v4305 = vpop.f32.mrf.mxu0
        %4306 = vmatprep.mubr.bf16.mxu0 0
        %4307 = vmatmul.mubr.bf16.gmra.mxu0 %v4169
        %v4308 = vpop.f32.mrf.mxu0
        %v4309 = vadd.f32 0.0, %v4308
        %v4310 = vpop.f32.mrf.mxu0
        %v4311 = vpop.f32.mrf.mxu0
        %v4312 = vadd.f32 0.0, %v4311
        %v4313 = vpop.f32.mrf.mxu0
        %4314 = vmatprep.mubr.bf16.mxu0 0
        %4315 = vmatmul.mubr.bf16.gmra.mxu0 %v4172
        %v4316 = vpop.f32.mrf.mxu0
        %v4317 = vadd.f32 0.0, %v4316
        %v4318 = vpop.f32.mrf.mxu0
        %v4319 = vpop.f32.mrf.mxu0
        %v4320 = vadd.f32 0.0, %v4319
        %v4321 = vpop.f32.mrf.mxu0
        %4322 = vmatprep.mubr.bf16.mxu0 0
        %4323 = vmatmul.mubr.bf16.gmra.mxu0 %v4175
        %v4324 = vpop.f32.mrf.mxu0
        %v4325 = vadd.f32 0.0, %v4324
        %v4326 = vpop.f32.mrf.mxu0
        %v4327 = vpop.f32.mrf.mxu0
        %v4328 = vadd.f32 0.0, %v4327
        %v4329 = vpop.f32.mrf.mxu0
        %4330 = vmatprep.mubr.bf16.mxu0 0
        %4331 = vmatmul.mubr.bf16.gmra.mxu0 %v4178
        %v4332 = vpop.f32.mrf.mxu0
        %v4333 = vadd.f32 0.0, %v4332
        %v4334 = vpop.f32.mrf.mxu0
        %v4335 = vpop.f32.mrf.mxu0
        %v4336 = vadd.f32 0.0, %v4335
        %v4337 = vpop.f32.mrf.mxu0
        %4338 = vmatprep.mubr.bf16.mxu0 0
        %4339 = vmatmul.mubr.bf16.gmra.mxu0 %v4181
        %v4340 = vpop.f32.mrf.mxu0
        %v4341 = vadd.f32 0.0, %v4340
        %v4342 = vpop.f32.mrf.mxu0
        %v4343 = vpop.f32.mrf.mxu0
        %v4344 = vadd.f32 0.0, %v4343
        %v4345 = vpop.f32.mrf.mxu0
        %4346 = vdwg.mxu0
        %v4347 = vadd.f32 %v4050, %v4221
        %v4348 = vadd.f32 %v4051, %v4224
        %v4349 = vadd.f32 %v4052, %v4229
        %v4350 = vadd.f32 %v4053, %v4232
        %v4351 = vadd.f32 %v4054, %v4237
        %v4352 = vadd.f32 %v4055, %v4240
        %v4353 = vadd.f32 %v4056, %v4245
        %v4354 = vadd.f32 %v4057, %v4248
        %v4355 = vadd.f32 %v4058, %v4253
        %v4356 = vadd.f32 %v4059, %v4256
        %v4357 = vadd.f32 %v4060, %v4261
        %v4358 = vadd.f32 %v4061, %v4264
        %v4359 = vadd.f32 %v4062, %v4269
        %v4360 = vadd.f32 %v4063, %v4272
        %v4361 = vadd.f32 %v4064, %v4277
        %v4362 = vadd.f32 %v4065, %v4280
        %v4363 = vadd.f32 %v4066, %v4285
        %v4364 = vadd.f32 %v4067, %v4288
        %v4365 = vadd.f32 %v4068, %v4293
        %v4366 = vadd.f32 %v4069, %v4296
        %v4367 = vadd.f32 %v4070, %v4301
        %v4368 = vadd.f32 %v4071, %v4304
        %v4369 = vadd.f32 %v4072, %v4309
        %v4370 = vadd.f32 %v4073, %v4312
        %v4371 = vadd.f32 %v4074, %v4317
        %v4372 = vadd.f32 %v4075, %v4320
        %v4373 = vadd.f32 %v4076, %v4325
        %v4374 = vadd.f32 %v4077, %v4328
        %v4375 = vadd.f32 %v4078, %v4333
        %v4376 = vadd.f32 %v4079, %v4336
        %v4377 = vadd.f32 %v4080, %v4341
        %v4378 = vadd.f32 %v4081, %v4344
        %v4379 = vld [vmem:[%s2 + $0x10] sm:$0x3]
        %v4380 = vunpack.c.l.b16 %v1924
        %v4381 = vunpack.c.l.b16 %v1927
        %v4382 = vunpack.c.l.b16 %v1931
        %v4383 = vunpack.c.l.b16 %v1934
        %v4384 = vunpack.c.l.b16 %v1938
        %v4385 = vunpack.c.l.b16 %v1941
        %v4386 = vunpack.c.l.b16 %v1945
        %v4387 = vunpack.c.l.b16 %v1948
        %v4388 = vunpack.c.l.b16 %v1952
        %v4389 = vunpack.c.l.b16 %v1955
        %v4390 = vunpack.c.l.b16 %v1959
        %v4391 = vunpack.c.l.b16 %v1962
        %v4392 = vunpack.c.l.b16 %v1966
        %v4393 = vunpack.c.l.b16 %v1969
        %v4394 = vunpack.c.l.b16 %v1973
        %v4395 = vunpack.c.l.b16 %v1976
        %v4396 = vunpack.c.l.b16 %v1980
        %v4397 = vunpack.c.l.b16 %v1983
        %v4398 = vunpack.c.l.b16 %v1987
        %v4399 = vunpack.c.l.b16 %v1990
        %v4400 = vunpack.c.l.b16 %v1994
        %v4401 = vunpack.c.l.b16 %v1997
        %v4402 = vunpack.c.l.b16 %v2001
        %v4403 = vunpack.c.l.b16 %v2004
        %v4404 = vunpack.c.l.b16 %v2008
        %v4405 = vunpack.c.l.b16 %v2011
        %v4406 = vunpack.c.l.b16 %v2015
        %v4407 = vunpack.c.l.b16 %v2018
        %v4408 = vunpack.c.l.b16 %v2022
        %v4409 = vunpack.c.l.b16 %v2025
        %v4410 = vunpack.c.l.b16 %v2029
        %v4411 = vunpack.c.l.b16 %v2032
        %v4412 = vpack.c.b16 %v4381, %v4380
        %v4413 = vpack.c.b16 %v4383, %v4382
        %v4414 = vpack.c.b16 %v4385, %v4384
        %v4415 = vpack.c.b16 %v4387, %v4386
        %v4416 = vpack.c.b16 %v4389, %v4388
        %v4417 = vpack.c.b16 %v4391, %v4390
        %v4418 = vpack.c.b16 %v4393, %v4392
        %v4419 = vpack.c.b16 %v4395, %v4394
        %v4420 = vpack.c.b16 %v4397, %v4396
        %v4421 = vpack.c.b16 %v4399, %v4398
        %v4422 = vpack.c.b16 %v4401, %v4400
        %v4423 = vpack.c.b16 %v4403, %v4402
        %v4424 = vpack.c.b16 %v4405, %v4404
        %v4425 = vpack.c.b16 %v4407, %v4406
        %v4426 = vpack.c.b16 %v4409, %v4408
        %v4427 = vpack.c.b16 %v4411, %v4410
        %v4429 = vsel %vm2087, %v4412, 0
        %v4432 = vsel %vm2087, %v4413, 0
        %v4435 = vsel %vm2087, %v4414, 0
        %v4438 = vsel %vm2087, %v4415, 0
        %v4441 = vsel %vm2087, %v4416, 0
        %v4444 = vsel %vm2087, %v4417, 0
        %v4447 = vsel %vm2087, %v4418, 0
        %v4450 = vsel %vm2087, %v4419, 0
        %v4453 = vsel %vm2087, %v4420, 0
        %v4456 = vsel %vm2087, %v4421, 0
        %v4459 = vsel %vm2087, %v4422, 0
        %v4462 = vsel %vm2087, %v4423, 0
        %v4465 = vsel %vm2087, %v4424, 0
        %v4468 = vsel %vm2087, %v4425, 0
        %v4471 = vsel %vm2087, %v4426, 0
        %v4474 = vsel %vm2087, %v4427, 0
        %v4477 = vsel %vm2136, %v4379, 0
        %4479 = vmatprep.subr.bf16.mxu0 0
        %4480 = vmatpush1.bf16.msra.mxu0 0
        %4481 = vmatprep.subr.bf16.mxu0 0
        %4482 = vmatpush1.bf16.msra.mxu0 0
        %4483 = vmatprep.subr.bf16.mxu0 0
        %4484 = vmatpush1.bf16.msra.mxu0 0
        %4485 = vmatprep.subr.bf16.mxu0 0
        %4486 = vmatpush1.bf16.msra.mxu0 0
        %4487 = vmatprep.subr.bf16.mxu0 0
        %4488 = vmatpush1.bf16.msra.mxu0 0
        %4489 = vmatprep.subr.bf16.mxu0 0
        %4490 = vmatpush1.bf16.msra.mxu0 0
        %4491 = vmatprep.subr.bf16.mxu0 0
        %4492 = vmatpush1.bf16.msra.mxu0 0
        %4493 = vmatprep.subr.bf16.mxu0 0
        %4494 = vmatpush1.bf16.msra.mxu0 %v4477
        %4495 = vmatprep.subr.bf16.mxu0 0
        %4496 = vmatpush2.bf16.msra.mxu0 0
        %4497 = vmatprep.subr.bf16.mxu0 0
        %4498 = vmatpush2.bf16.msra.mxu0 0
        %4499 = vmatprep.subr.bf16.mxu0 0
        %4500 = vmatpush2.bf16.msra.mxu0 0
        %4501 = vmatprep.subr.bf16.mxu0 0
        %4502 = vmatpush2.bf16.msra.mxu0 0
        %4503 = vmatprep.subr.bf16.mxu0 0
        %4504 = vmatpush2.bf16.msra.mxu0 0
        %4505 = vmatprep.subr.bf16.mxu0 0
        %4506 = vmatpush2.bf16.msra.mxu0 0
        %4507 = vmatprep.subr.bf16.mxu0 0
        %4508 = vmatpush2.bf16.msra.mxu0 0
        %4509 = vmatprep.subr.bf16.mxu0 0
        %4510 = vmatpush2.bf16.msra.mxu0 0
        %4511 = vmatprep.mubr.bf16.mxu0 0
        %4512 = vmatmul.mubr.bf16.gmra.mxu0 %v4429
        %v4513 = vpop.f32.mrf.mxu0
        %v4514 = vadd.f32 0.0, %v4513
        %v4515 = vpop.f32.mrf.mxu0
        %v4516 = vpop.f32.mrf.mxu0
        %v4517 = vadd.f32 0.0, %v4516
        %v4518 = vpop.f32.mrf.mxu0
        %4519 = vmatprep.mubr.bf16.mxu0 0
        %4520 = vmatmul.mubr.bf16.gmra.mxu0 %v4432
        %v4521 = vpop.f32.mrf.mxu0
        %v4522 = vadd.f32 0.0, %v4521
        %v4523 = vpop.f32.mrf.mxu0
        %v4524 = vpop.f32.mrf.mxu0
        %v4525 = vadd.f32 0.0, %v4524
        %v4526 = vpop.f32.mrf.mxu0
        %4527 = vmatprep.mubr.bf16.mxu0 0
        %4528 = vmatmul.mubr.bf16.gmra.mxu0 %v4435
        %v4529 = vpop.f32.mrf.mxu0
        %v4530 = vadd.f32 0.0, %v4529
        %v4531 = vpop.f32.mrf.mxu0
        %v4532 = vpop.f32.mrf.mxu0
        %v4533 = vadd.f32 0.0, %v4532
        %v4534 = vpop.f32.mrf.mxu0
        %4535 = vmatprep.mubr.bf16.mxu0 0
        %4536 = vmatmul.mubr.bf16.gmra.mxu0 %v4438
        %v4537 = vpop.f32.mrf.mxu0
        %v4538 = vadd.f32 0.0, %v4537
        %v4539 = vpop.f32.mrf.mxu0
        %v4540 = vpop.f32.mrf.mxu0
        %v4541 = vadd.f32 0.0, %v4540
        %v4542 = vpop.f32.mrf.mxu0
        %4543 = vmatprep.mubr.bf16.mxu0 0
        %4544 = vmatmul.mubr.bf16.gmra.mxu0 %v4441
        %v4545 = vpop.f32.mrf.mxu0
        %v4546 = vadd.f32 0.0, %v4545
        %v4547 = vpop.f32.mrf.mxu0
        %v4548 = vpop.f32.mrf.mxu0
        %v4549 = vadd.f32 0.0, %v4548
        %v4550 = vpop.f32.mrf.mxu0
        %4551 = vmatprep.mubr.bf16.mxu0 0
        %4552 = vmatmul.mubr.bf16.gmra.mxu0 %v4444
        %v4553 = vpop.f32.mrf.mxu0
        %v4554 = vadd.f32 0.0, %v4553
        %v4555 = vpop.f32.mrf.mxu0
        %v4556 = vpop.f32.mrf.mxu0
        %v4557 = vadd.f32 0.0, %v4556
        %v4558 = vpop.f32.mrf.mxu0
        %4559 = vmatprep.mubr.bf16.mxu0 0
        %4560 = vmatmul.mubr.bf16.gmra.mxu0 %v4447
        %v4561 = vpop.f32.mrf.mxu0
        %v4562 = vadd.f32 0.0, %v4561
        %v4563 = vpop.f32.mrf.mxu0
        %v4564 = vpop.f32.mrf.mxu0
        %v4565 = vadd.f32 0.0, %v4564
        %v4566 = vpop.f32.mrf.mxu0
        %4567 = vmatprep.mubr.bf16.mxu0 0
        %4568 = vmatmul.mubr.bf16.gmra.mxu0 %v4450
        %v4569 = vpop.f32.mrf.mxu0
        %v4570 = vadd.f32 0.0, %v4569
        %v4571 = vpop.f32.mrf.mxu0
        %v4572 = vpop.f32.mrf.mxu0
        %v4573 = vadd.f32 0.0, %v4572
        %v4574 = vpop.f32.mrf.mxu0
        %4575 = vmatprep.mubr.bf16.mxu0 0
        %4576 = vmatmul.mubr.bf16.gmra.mxu0 %v4453
        %v4577 = vpop.f32.mrf.mxu0
        %v4578 = vadd.f32 0.0, %v4577
        %v4579 = vpop.f32.mrf.mxu0
        %v4580 = vpop.f32.mrf.mxu0
        %v4581 = vadd.f32 0.0, %v4580
        %v4582 = vpop.f32.mrf.mxu0
        %4583 = vmatprep.mubr.bf16.mxu0 0
        %4584 = vmatmul.mubr.bf16.gmra.mxu0 %v4456
        %v4585 = vpop.f32.mrf.mxu0
        %v4586 = vadd.f32 0.0, %v4585
        %v4587 = vpop.f32.mrf.mxu0
        %v4588 = vpop.f32.mrf.mxu0
        %v4589 = vadd.f32 0.0, %v4588
        %v4590 = vpop.f32.mrf.mxu0
        %4591 = vmatprep.mubr.bf16.mxu0 0
        %4592 = vmatmul.mubr.bf16.gmra.mxu0 %v4459
        %v4593 = vpop.f32.mrf.mxu0
        %v4594 = vadd.f32 0.0, %v4593
        %v4595 = vpop.f32.mrf.mxu0
        %v4596 = vpop.f32.mrf.mxu0
        %v4597 = vadd.f32 0.0, %v4596
        %v4598 = vpop.f32.mrf.mxu0
        %4599 = vmatprep.mubr.bf16.mxu0 0
        %4600 = vmatmul.mubr.bf16.gmra.mxu0 %v4462
        %v4601 = vpop.f32.mrf.mxu0
        %v4602 = vadd.f32 0.0, %v4601
        %v4603 = vpop.f32.mrf.mxu0
        %v4604 = vpop.f32.mrf.mxu0
        %v4605 = vadd.f32 0.0, %v4604
        %v4606 = vpop.f32.mrf.mxu0
        %4607 = vmatprep.mubr.bf16.mxu0 0
        %4608 = vmatmul.mubr.bf16.gmra.mxu0 %v4465
        %v4609 = vpop.f32.mrf.mxu0
        %v4610 = vadd.f32 0.0, %v4609
        %v4611 = vpop.f32.mrf.mxu0
        %v4612 = vpop.f32.mrf.mxu0
        %v4613 = vadd.f32 0.0, %v4612
        %v4614 = vpop.f32.mrf.mxu0
        %4615 = vmatprep.mubr.bf16.mxu0 0
        %4616 = vmatmul.mubr.bf16.gmra.mxu0 %v4468
        %v4617 = vpop.f32.mrf.mxu0
        %v4618 = vadd.f32 0.0, %v4617
        %v4619 = vpop.f32.mrf.mxu0
        %v4620 = vpop.f32.mrf.mxu0
        %v4621 = vadd.f32 0.0, %v4620
        %v4622 = vpop.f32.mrf.mxu0
        %4623 = vmatprep.mubr.bf16.mxu0 0
        %4624 = vmatmul.mubr.bf16.gmra.mxu0 %v4471
        %v4625 = vpop.f32.mrf.mxu0
        %v4626 = vadd.f32 0.0, %v4625
        %v4627 = vpop.f32.mrf.mxu0
        %v4628 = vpop.f32.mrf.mxu0
        %v4629 = vadd.f32 0.0, %v4628
        %v4630 = vpop.f32.mrf.mxu0
        %4631 = vmatprep.mubr.bf16.mxu0 0
        %4632 = vmatmul.mubr.bf16.gmra.mxu0 %v4474
        %v4633 = vpop.f32.mrf.mxu0
        %v4634 = vadd.f32 0.0, %v4633
        %v4635 = vpop.f32.mrf.mxu0
        %v4636 = vpop.f32.mrf.mxu0
        %v4637 = vadd.f32 0.0, %v4636
        %v4638 = vpop.f32.mrf.mxu0
        %4639 = vdwg.mxu0
        %v4640 = vadd.f32 %v4347, %v4514
        %v4641 = vadd.f32 %v4348, %v4517
        %v4642 = vadd.f32 %v4349, %v4522
        %v4643 = vadd.f32 %v4350, %v4525
        %v4644 = vadd.f32 %v4351, %v4530
        %v4645 = vadd.f32 %v4352, %v4533
        %v4646 = vadd.f32 %v4353, %v4538
        %v4647 = vadd.f32 %v4354, %v4541
        %v4648 = vadd.f32 %v4355, %v4546
        %v4649 = vadd.f32 %v4356, %v4549
        %v4650 = vadd.f32 %v4357, %v4554
        %v4651 = vadd.f32 %v4358, %v4557
        %v4652 = vadd.f32 %v4359, %v4562
        %v4653 = vadd.f32 %v4360, %v4565
        %v4654 = vadd.f32 %v4361, %v4570
        %v4655 = vadd.f32 %v4362, %v4573
        %v4656 = vadd.f32 %v4363, %v4578
        %v4657 = vadd.f32 %v4364, %v4581
        %v4658 = vadd.f32 %v4365, %v4586
        %v4659 = vadd.f32 %v4366, %v4589
        %v4660 = vadd.f32 %v4367, %v4594
        %v4661 = vadd.f32 %v4368, %v4597
        %v4662 = vadd.f32 %v4369, %v4602
        %v4663 = vadd.f32 %v4370, %v4605
        %v4664 = vadd.f32 %v4371, %v4610
        %v4665 = vadd.f32 %v4372, %v4613
        %v4666 = vadd.f32 %v4373, %v4618
        %v4667 = vadd.f32 %v4374, %v4621
        %v4668 = vadd.f32 %v4375, %v4626
        %v4669 = vadd.f32 %v4376, %v4629
        %v4670 = vadd.f32 %v4377, %v4634
        %v4671 = vadd.f32 %v4378, %v4637
        %v4672 = vld [vmem:[%s3] sm:$0x1]
        %v4674 = vlaneseq
        %v4675 = vshrl.u32 %v4674, 7
        %v4676 = vsub.s32 0, %v4675
        %v4677 = vrot.slane %v4672, %v4676
        %v4679 = vadd.f32 %v4640, %v4677
        %v4680 = vadd.f32 %v4641, %v4677
        %v4681 = vadd.f32 %v4642, %v4677
        %v4682 = vadd.f32 %v4643, %v4677
        %v4683 = vadd.f32 %v4644, %v4677
        %v4684 = vadd.f32 %v4645, %v4677
        %v4685 = vadd.f32 %v4646, %v4677
        %v4686 = vadd.f32 %v4647, %v4677
        %v4687 = vadd.f32 %v4648, %v4677
        %v4688 = vadd.f32 %v4649, %v4677
        %v4689 = vadd.f32 %v4650, %v4677
        %v4690 = vadd.f32 %v4651, %v4677
        %v4691 = vadd.f32 %v4652, %v4677
        %v4692 = vadd.f32 %v4653, %v4677
        %v4693 = vadd.f32 %v4654, %v4677
        %v4694 = vadd.f32 %v4655, %v4677
        %v4695 = vadd.f32 %v4656, %v4677
        %v4696 = vadd.f32 %v4657, %v4677
        %v4697 = vadd.f32 %v4658, %v4677
        %v4698 = vadd.f32 %v4659, %v4677
        %v4699 = vadd.f32 %v4660, %v4677
        %v4700 = vadd.f32 %v4661, %v4677
        %v4701 = vadd.f32 %v4662, %v4677
        %v4702 = vadd.f32 %v4663, %v4677
        %v4703 = vadd.f32 %v4664, %v4677
        %v4704 = vadd.f32 %v4665, %v4677
        %v4705 = vadd.f32 %v4666, %v4677
        %v4706 = vadd.f32 %v4667, %v4677
        %v4707 = vadd.f32 %v4668, %v4677
        %v4708 = vadd.f32 %v4669, %v4677
        %v4709 = vadd.f32 %v4670, %v4677
        %v4710 = vadd.f32 %v4671, %v4677
        %s4711 = sld [smem:[#allocation3]]
        %vm4712 = vcmp.ge.f32.partialorder %v4679, 0.0
        %vm4713 = vcmp.ge.f32.partialorder %v4680, 0.0
        %vm4714 = vcmp.ge.f32.partialorder %v4681, 0.0
        %vm4715 = vcmp.ge.f32.partialorder %v4682, 0.0
        %vm4716 = vcmp.ge.f32.partialorder %v4683, 0.0
        %vm4717 = vcmp.ge.f32.partialorder %v4684, 0.0
        %vm4718 = vcmp.ge.f32.partialorder %v4685, 0.0
        %vm4719 = vcmp.ge.f32.partialorder %v4686, 0.0
        %vm4720 = vcmp.ge.f32.partialorder %v4687, 0.0
        %vm4721 = vcmp.ge.f32.partialorder %v4688, 0.0
        %vm4722 = vcmp.ge.f32.partialorder %v4689, 0.0
        %vm4723 = vcmp.ge.f32.partialorder %v4690, 0.0
        %vm4724 = vcmp.ge.f32.partialorder %v4691, 0.0
        %vm4725 = vcmp.ge.f32.partialorder %v4692, 0.0
        %vm4726 = vcmp.ge.f32.partialorder %v4693, 0.0
        %vm4727 = vcmp.ge.f32.partialorder %v4694, 0.0
        %vm4728 = vcmp.ge.f32.partialorder %v4695, 0.0
        %vm4729 = vcmp.ge.f32.partialorder %v4696, 0.0
        %vm4730 = vcmp.ge.f32.partialorder %v4697, 0.0
        %vm4731 = vcmp.ge.f32.partialorder %v4698, 0.0
        %vm4732 = vcmp.ge.f32.partialorder %v4699, 0.0
        %vm4733 = vcmp.ge.f32.partialorder %v4700, 0.0
        %vm4734 = vcmp.ge.f32.partialorder %v4701, 0.0
        %vm4735 = vcmp.ge.f32.partialorder %v4702, 0.0
        %vm4736 = vcmp.ge.f32.partialorder %v4703, 0.0
        %vm4737 = vcmp.ge.f32.partialorder %v4704, 0.0
        %vm4738 = vcmp.ge.f32.partialorder %v4705, 0.0
        %vm4739 = vcmp.ge.f32.partialorder %v4706, 0.0
        %vm4740 = vcmp.ge.f32.partialorder %v4707, 0.0
        %vm4741 = vcmp.ge.f32.partialorder %v4708, 0.0
        %vm4742 = vcmp.ge.f32.partialorder %v4709, 0.0
        %vm4743 = vcmp.ge.f32.partialorder %v4710, 0.0
        %v4744 = vstv %s4711
        %v4745 = vmul.f32 %v4744, %v4679
        %v4746 = vmul.f32 %v4744, %v4680
        %v4747 = vmul.f32 %v4744, %v4681
        %v4748 = vmul.f32 %v4744, %v4682
        %v4749 = vmul.f32 %v4744, %v4683
        %v4750 = vmul.f32 %v4744, %v4684
        %v4751 = vmul.f32 %v4744, %v4685
        %v4752 = vmul.f32 %v4744, %v4686
        %v4753 = vmul.f32 %v4744, %v4687
        %v4754 = vmul.f32 %v4744, %v4688
        %v4755 = vmul.f32 %v4744, %v4689
        %v4756 = vmul.f32 %v4744, %v4690
        %v4757 = vmul.f32 %v4744, %v4691
        %v4758 = vmul.f32 %v4744, %v4692
        %v4759 = vmul.f32 %v4744, %v4693
        %v4760 = vmul.f32 %v4744, %v4694
        %v4761 = vmul.f32 %v4744, %v4695
        %v4762 = vmul.f32 %v4744, %v4696
        %v4763 = vmul.f32 %v4744, %v4697
        %v4764 = vmul.f32 %v4744, %v4698
        %v4765 = vmul.f32 %v4744, %v4699
        %v4766 = vmul.f32 %v4744, %v4700
        %v4767 = vmul.f32 %v4744, %v4701
        %v4768 = vmul.f32 %v4744, %v4702
        %v4769 = vmul.f32 %v4744, %v4703
        %v4770 = vmul.f32 %v4744, %v4704
        %v4771 = vmul.f32 %v4744, %v4705
        %v4772 = vmul.f32 %v4744, %v4706
        %v4773 = vmul.f32 %v4744, %v4707
        %v4774 = vmul.f32 %v4744, %v4708
        %v4775 = vmul.f32 %v4744, %v4709
        %v4776 = vmul.f32 %v4744, %v4710
        %v4777 = vsel %vm4712, %v4679, %v4745
        %v4778 = vsel %vm4713, %v4680, %v4746
        %v4779 = vsel %vm4714, %v4681, %v4747
        %v4780 = vsel %vm4715, %v4682, %v4748
        %v4781 = vsel %vm4716, %v4683, %v4749
        %v4782 = vsel %vm4717, %v4684, %v4750
        %v4783 = vsel %vm4718, %v4685, %v4751
        %v4784 = vsel %vm4719, %v4686, %v4752
        %v4785 = vsel %vm4720, %v4687, %v4753
        %v4786 = vsel %vm4721, %v4688, %v4754
        %v4787 = vsel %vm4722, %v4689, %v4755
        %v4788 = vsel %vm4723, %v4690, %v4756
        %v4789 = vsel %vm4724, %v4691, %v4757
        %v4790 = vsel %vm4725, %v4692, %v4758
        %v4791 = vsel %vm4726, %v4693, %v4759
        %v4792 = vsel %vm4727, %v4694, %v4760
        %v4793 = vsel %vm4728, %v4695, %v4761
        %v4794 = vsel %vm4729, %v4696, %v4762
        %v4795 = vsel %vm4730, %v4697, %v4763
        %v4796 = vsel %vm4731, %v4698, %v4764
        %v4797 = vsel %vm4732, %v4699, %v4765
        %v4798 = vsel %vm4733, %v4700, %v4766
        %v4799 = vsel %vm4734, %v4701, %v4767
        %v4800 = vsel %vm4735, %v4702, %v4768
        %v4801 = vsel %vm4736, %v4703, %v4769
        %v4802 = vsel %vm4737, %v4704, %v4770
        %v4803 = vsel %vm4738, %v4705, %v4771
        %v4804 = vsel %vm4739, %v4706, %v4772
        %v4805 = vsel %vm4740, %v4707, %v4773
        %v4806 = vsel %vm4741, %v4708, %v4774
        %v4807 = vsel %vm4742, %v4709, %v4775
        %v4808 = vsel %vm4743, %v4710, %v4776
        %v4809 = vpack.c.bf16 %v4778, %v4777
        %v4810 = vpack.c.bf16 %v4780, %v4779
        %v4811 = vpack.c.bf16 %v4782, %v4781
        %v4812 = vpack.c.bf16 %v4784, %v4783
        %v4813 = vpack.c.bf16 %v4786, %v4785
        %v4814 = vpack.c.bf16 %v4788, %v4787
        %v4815 = vpack.c.bf16 %v4790, %v4789
        %v4816 = vpack.c.bf16 %v4792, %v4791
        %v4817 = vpack.c.bf16 %v4794, %v4793
        %v4818 = vpack.c.bf16 %v4796, %v4795
        %v4819 = vpack.c.bf16 %v4798, %v4797
        %v4820 = vpack.c.bf16 %v4800, %v4799
        %v4821 = vpack.c.bf16 %v4802, %v4801
        %v4822 = vpack.c.bf16 %v4804, %v4803
        %v4823 = vpack.c.bf16 %v4806, %v4805
        %v4824 = vpack.c.bf16 %v4808, %v4807
        %v4841 = vunpack.c.l.b16 %v4809
        %v4842 = vunpack.c.h.b16 %v4809
        %v4843 = vunpack.c.l.b16 %v4810
        %v4844 = vunpack.c.h.b16 %v4810
        %v4845 = vunpack.c.l.b16 %v4811
        %v4846 = vunpack.c.h.b16 %v4811
        %v4847 = vunpack.c.l.b16 %v4812
        %v4848 = vunpack.c.h.b16 %v4812
        %v4849 = vunpack.c.l.b16 %v4813
        %v4850 = vunpack.c.h.b16 %v4813
        %v4851 = vunpack.c.l.b16 %v4814
        %v4852 = vunpack.c.h.b16 %v4814
        %v4853 = vunpack.c.l.b16 %v4815
        %v4854 = vunpack.c.h.b16 %v4815
        %v4855 = vunpack.c.l.b16 %v4816
        %v4856 = vunpack.c.h.b16 %v4816
        %v4857 = vunpack.c.l.b16 %v4817
        %v4858 = vunpack.c.h.b16 %v4817
        %v4859 = vunpack.c.l.b16 %v4818
        %v4860 = vunpack.c.h.b16 %v4818
        %v4861 = vunpack.c.l.b16 %v4819
        %v4862 = vunpack.c.h.b16 %v4819
        %v4863 = vunpack.c.l.b16 %v4820
        %v4864 = vunpack.c.h.b16 %v4820
        %v4865 = vunpack.c.l.b16 %v4821
        %v4866 = vunpack.c.h.b16 %v4821
        %v4867 = vunpack.c.l.b16 %v4822
        %v4868 = vunpack.c.h.b16 %v4822
        %v4869 = vunpack.c.l.b16 %v4823
        %v4870 = vunpack.c.h.b16 %v4823
        %v4871 = vunpack.c.l.b16 %v4824
        %v4872 = vunpack.c.h.b16 %v4824
        %v4873 = vpack.c.b16 %v4841, %v4841
        %v4874 = vpack.c.b16 %v4842, %v4842
        %v4875 = vpack.c.b16 %v4843, %v4843
        %v4876 = vpack.c.b16 %v4844, %v4844
        %v4877 = vpack.c.b16 %v4845, %v4845
        %v4878 = vpack.c.b16 %v4846, %v4846
        %v4879 = vpack.c.b16 %v4847, %v4847
        %v4880 = vpack.c.b16 %v4848, %v4848
        %v4881 = vpack.c.b16 %v4849, %v4849
        %v4882 = vpack.c.b16 %v4850, %v4850
        %v4883 = vpack.c.b16 %v4851, %v4851
        %v4884 = vpack.c.b16 %v4852, %v4852
        %v4885 = vpack.c.b16 %v4853, %v4853
        %v4886 = vpack.c.b16 %v4854, %v4854
        %v4887 = vpack.c.b16 %v4855, %v4855
        %v4888 = vpack.c.b16 %v4856, %v4856
        %v4889 = vpack.c.b16 %v4857, %v4857
        %v4890 = vpack.c.b16 %v4858, %v4858
        %v4891 = vpack.c.b16 %v4859, %v4859
        %v4892 = vpack.c.b16 %v4860, %v4860
        %v4893 = vpack.c.b16 %v4861, %v4861
        %v4894 = vpack.c.b16 %v4862, %v4862
        %v4895 = vpack.c.b16 %v4863, %v4863
        %v4896 = vpack.c.b16 %v4864, %v4864
        %v4897 = vpack.c.b16 %v4865, %v4865
        %v4898 = vpack.c.b16 %v4866, %v4866
        %v4899 = vpack.c.b16 %v4867, %v4867
        %v4900 = vpack.c.b16 %v4868, %v4868
        %v4901 = vpack.c.b16 %v4869, %v4869
        %v4902 = vpack.c.b16 %v4870, %v4870
        %v4903 = vpack.c.b16 %v4871, %v4871
        %v4904 = vpack.c.b16 %v4872, %v4872
        %4937 = vst [vmem:[%s189] sm:$0xf] %v4873
        %4938 = vst [vmem:[%s189 + $0x4] sm:$0xf] %v4874
        %4939 = vst [vmem:[%s189 + $0x8] sm:$0xf] %v4875
        %4940 = vst [vmem:[%s189 + $0xc] sm:$0xf] %v4876
        %4941 = vst [vmem:[%s189 + $0x10] sm:$0xf] %v4877
        %4942 = vst [vmem:[%s189 + $0x14] sm:$0xf] %v4878
        %4943 = vst [vmem:[%s189 + $0x18] sm:$0xf] %v4879
        %4944 = vst [vmem:[%s189 + $0x1c] sm:$0xf] %v4880
        %4945 = vst [vmem:[%s189 + $0x20] sm:$0xf] %v4881
        %4946 = vst [vmem:[%s189 + $0x24] sm:$0xf] %v4882
        %4947 = vst [vmem:[%s189 + $0x28] sm:$0xf] %v4883
        %4948 = vst [vmem:[%s189 + $0x2c] sm:$0xf] %v4884
        %4949 = vst [vmem:[%s189 + $0x30] sm:$0xf] %v4885
        %4950 = vst [vmem:[%s189 + $0x34] sm:$0xf] %v4886
        %4951 = vst [vmem:[%s189 + $0x38] sm:$0xf] %v4887
        %4952 = vst [vmem:[%s189 + $0x3c] sm:$0xf] %v4888
        %4953 = vst [vmem:[%s189 + $0x40] sm:$0xf] %v4889
        %4954 = vst [vmem:[%s189 + $0x44] sm:$0xf] %v4890
        %4955 = vst [vmem:[%s189 + $0x48] sm:$0xf] %v4891
        %4956 = vst [vmem:[%s189 + $0x4c] sm:$0xf] %v4892
        %4957 = vst [vmem:[%s189 + $0x50] sm:$0xf] %v4893
        %4958 = vst [vmem:[%s189 + $0x54] sm:$0xf] %v4894
        %4959 = vst [vmem:[%s189 + $0x58] sm:$0xf] %v4895
        %4960 = vst [vmem:[%s189 + $0x5c] sm:$0xf] %v4896
        %4961 = vst [vmem:[%s189 + $0x60] sm:$0xf] %v4897
        %4962 = vst [vmem:[%s189 + $0x64] sm:$0xf] %v4898
        %4963 = vst [vmem:[%s189 + $0x68] sm:$0xf] %v4899
        %4964 = vst [vmem:[%s189 + $0x6c] sm:$0xf] %v4900
        %4965 = vst [vmem:[%s189 + $0x70] sm:$0xf] %v4901
        %4966 = vst [vmem:[%s189 + $0x74] sm:$0xf] %v4902
        %4967 = vst [vmem:[%s189 + $0x78] sm:$0xf] %v4903
        %4968 = vst [vmem:[%s189 + $0x7c] sm:$0xf] %v4904
        %s4969 = sand.u32 %s111, 1
        %s4970 = scalar_lea.sflag [#allocation5], %s4969
        %s4971 = sand.u32 %s111, 1
        %s4972 = smul.addr %s4971, 128
        %s4973 = scalar_lea.vmem [#allocation4], %s4972
        // Predicated region
        $region33: #{tpu_custom_call.1} parent=31 // pred_check
          %p4974 = pneg %p121
        $region34: #{tpu_custom_call.1} parent=31 // pred_check_branch
          %4976 = sbr.rel (%p4974) target = $region36
        $region35: #{tpu_custom_call.1} parent=31 // pred_region
          %s4977 = smul.u32 32, %s24
          %s4979 = ssub.s32 2048, 2048
          %4980 = vsyncadd %s4970, %s4979
          %s4981 = smul.addr %s23, 32
          %s4982 = sadd.s32 %s4977, %s4981
          %s4983 = smul.addr %s4982, 64
          %s4984 = scalar_lea.hbm %s4, %s4983
          %s4985 = sshll.u32 %s4973, 4
          %s4986 = int_to_ptr.vmem [resolvable:$true] %s4985
          %4991 = dma.vmem_to_hbm [thread:$0]  %s4986, 2048, %s4984, %s4970, 64, 64, 4
        $region36: #{tpu_custom_call.1} parent=31 // pred_fallthru
          _
      $region32: #{tpu_custom_call.1} parent=5 // pred_fallthru
        _
      %p4992 = scmp.le.s32.totalorder 2, %s14
      // Predicated region
      $region37: #{tpu_custom_call.1} parent=5 // pred_check
        %p4993 = pneg %p4992
      $region38: #{tpu_custom_call.1} parent=5 // pred_check_branch
        %4995 = sbr.rel (%p4993) target = $region40
      $region39: #{tpu_custom_call.1} parent=5 // pred_region
        %s4996 = ssub.s32 %s14, 2
        // Predicated region
        $region41: #{tpu_custom_call.1} parent=39 // pred_check
          %p4997 = pneg %p127
        $region42: #{tpu_custom_call.1} parent=39 // pred_check_branch
          %4999 = sbr.rel (%p4997) target = $region44
        $region43: #{tpu_custom_call.1} parent=39 // pred_region
          %s5000 = sand.u32 %s112, 1
          %s5001 = scalar_lea.sflag [#allocation5], %s5000
          %s5002 = sand.u32 %s112, 1
          %s5003 = smul.addr %s5002, 128
          %s5004 = scalar_lea.vmem [#allocation4], %s5003
          %5005 = dma.done %s5001, 2048
        $region44: #{tpu_custom_call.1} parent=39 // pred_fallthru
          _
      $region40: #{tpu_custom_call.1} parent=5 // pred_fallthru
        _
    $region6: #{tpu_custom_call.1} parent=1 // loop_footer
      %s18 = sadd.s32 1, %s14
    $region7: #{tpu_custom_call.1} parent=1 // loop_footer_branch
      %13 = sbr.rel target = $region3
    $region8: #{tpu_custom_call.1} parent=1 // loop_exit
      _
    %5006 = vsyncpa [#allocation5], 1
    %s5007 = scalar_lea.sflag [#allocation5], 1
    %5008 = vsyncpa %s5007, 1

</llo_original>
